<compile_context>
chip_gen: v7x
topology: tpu7x:2x2x1
jax: 0.10.0
libtpu: 0.0.40
codegen_flags: <defaults>
</compile_context>

<pallas_src>
import functools
import math

import jax
import jax.numpy as jnp
import numpy as np
from jax.experimental import pallas as pl
from jax.experimental.pallas import tpu as pltpu

EPS = 1e-6
VMEM_LIMIT = 48 * 1024 * 1024   # fits v5e/v6e (128 MiB) and v7x (64 MiB per TC)


def _round_up(x, m):
    return (x + m - 1) // m * m


def _pick_tile(m, target):
    """Row tile and padded row count (tile multiple of 8, big when possible)."""
    if m >= target:
        return target, _round_up(m, target)
    tm = _round_up(max(m, 8), 8)
    return tm, tm


# ----------------------------------------------------------------------------
# Kernels
# ----------------------------------------------------------------------------
def embed_norm_kernel(x_ref, w_ref, b_ref, g_ref, beta_ref, o_ref):
    """y = Normalize(x @ W + b) over last dim (torch unbiased variance)."""
    y = jnp.dot(x_ref[...], w_ref[...], preferred_element_type=jnp.float32) + b_ref[...]
    h = y.shape[-1]
    mu = jnp.mean(y, axis=-1, keepdims=True)
    d = y - mu
    var = jnp.sum(d * d, axis=-1, keepdims=True) * (1.0 / (h - 1))   # unbiased (ddof=1)
    sigma = jnp.sqrt(var + EPS)
    inv = pl.reciprocal(sigma + EPS, approx=True)                    # EUP slot
    o_ref[...] = g_ref[...] * d * inv + beta_ref[...]


def mpnn_kernel(h_ref, nei_ref, he_ref, vmask_ref, mask_ref,
                w1s_ref, w1n_ref, w1e_ref, b1_ref,
                w2_ref, b2_ref, w3_ref, b3_ref,
                g_ref, beta_ref, o_ref, *, k, compute_dtype):
    """One fused MPNNLayer step. Edge tensors arrive pre-flattened as (tm*k, H)."""
    tm, hd = h_ref.shape
    h = h_ref[...]                                                   # (tm, H) f32

    # Self contribution of W1 (+ bias folded in): computed once per node,
    # broadcast over the K neighbors below.
    self_bias = (jnp.dot(h.astype(compute_dtype), w1s_ref[...],
                         preferred_element_type=jnp.float32)
                 + b1_ref[...])                                      # (tm, H)

    # Per-edge part of the first Linear (no 3H concat ever built).
    x = (jnp.dot(nei_ref[...], w1n_ref[...], preferred_element_type=jnp.float32)
         + jnp.dot(he_ref[...], w1e_ref[...], preferred_element_type=jnp.float32))
    x = x.reshape(tm, k, hd) + self_bias[:, None, :]
    x = jnp.maximum(x, 0.0).reshape(tm * k, hd)

    x = jnp.maximum(
        jnp.dot(x.astype(compute_dtype), w2_ref[...],
                preferred_element_type=jnp.float32) + b2_ref[...], 0.0)
    x = jnp.dot(x.astype(compute_dtype), w3_ref[...],
                preferred_element_type=jnp.float32) + b3_ref[...]    # (tm*k, H)

    msg = x * vmask_ref[...]                                         # mask_attend
    dh = jnp.sum(msg.reshape(tm, k, hd), axis=1) * (1.0 / k)         # mean over K
    y = h + dh                                                       # residual (dropout = id)

    mu = jnp.mean(y, axis=-1, keepdims=True)
    d = y - mu
    var = jnp.sum(d * d, axis=-1, keepdims=True) * (1.0 / (hd - 1))
    sigma = jnp.sqrt(var + EPS)
    inv = pl.reciprocal(sigma + EPS, approx=True)
    out = g_ref[...] * d * inv + beta_ref[...]
    o_ref[...] = out * mask_ref[...]                                 # node mask (applied here only)


# ----------------------------------------------------------------------------
# Pallas wrappers
# ----------------------------------------------------------------------------
def embed_norm_pallas(x2d, w, b, gain, beta, *, target_tm=512,
                      compute_dtype=jnp.float32):
    m, din = x2d.shape
    h = w.shape[1]
    tm, m_pad = _pick_tile(m, target_tm)
    if m_pad != m:
        x2d = jnp.pad(x2d, ((0, m_pad - m), (0, 0)))
    x2d = x2d.astype(compute_dtype)
    w = w.astype(compute_dtype)

    out = pl.pallas_call(
        embed_norm_kernel,
        out_shape=jax.ShapeDtypeStruct((m_pad, h), jnp.float32),
        grid_spec=pltpu.PrefetchScalarGridSpec(
            num_scalar_prefetch=0,
            grid=(m_pad // tm,),
            in_specs=[
                pl.BlockSpec((tm, din), lambda i: (i, 0)),
                pl.BlockSpec((din, h), lambda i: (0, 0)),
                pl.BlockSpec((1, h), lambda i: (0, 0)),
                pl.BlockSpec((1, h), lambda i: (0, 0)),
                pl.BlockSpec((1, h), lambda i: (0, 0)),
            ],
            out_specs=pl.BlockSpec((tm, h), lambda i: (i, 0)),
        ),
        compiler_params=pltpu.CompilerParams(
            dimension_semantics=("parallel",),
            vmem_limit_bytes=VMEM_LIMIT),
    )(x2d, w, b.reshape(1, h), gain.reshape(1, h), beta.reshape(1, h))
    return out[:m]


def mpnn_layer_pallas(h_flat, nei_flat, he_flat, vmask_flat, mask_flat,
                      layer_params, *, tm, k, compute_dtype):
    """h_flat (Mp,H) f32; nei/he (Mp*K,H); vmask (Mp*K,1); mask (Mp,1) -> (Mp,H)."""
    m_pad, hd = h_flat.shape
    w1, b1, w2, b2, w3, b3, gain, beta = layer_params
    # Split W1 rows to match torch.cat([h_self, nei_v, h_e], -1) @ W1.
    w1s = w1[:hd].astype(compute_dtype)
    w1n = w1[hd:2 * hd].astype(compute_dtype)
    w1e = w1[2 * hd:].astype(compute_dtype)
    w2c = w2.astype(compute_dtype)
    w3c = w3.astype(compute_dtype)
    row = lambda p: p.reshape(1, hd)

    kernel = functools.partial(mpnn_kernel, k=k, compute_dtype=compute_dtype)
    return pl.pallas_call(
        kernel,
        out_shape=jax.ShapeDtypeStruct((m_pad, hd), jnp.float32),
        grid_spec=pltpu.PrefetchScalarGridSpec(
            num_scalar_prefetch=0,
            grid=(m_pad // tm,),
            in_specs=[
                pl.BlockSpec((tm, hd), lambda i: (i, 0)),        # h
                pl.BlockSpec((tm * k, hd), lambda i: (i, 0)),    # nei_v (flattened)
                pl.BlockSpec((tm * k, hd), lambda i: (i, 0)),    # h_e   (flattened)
                pl.BlockSpec((tm * k, 1), lambda i: (i, 0)),     # attend mask
                pl.BlockSpec((tm, 1), lambda i: (i, 0)),         # node mask
                pl.BlockSpec((hd, hd), lambda i: (0, 0)),        # W1_self
                pl.BlockSpec((hd, hd), lambda i: (0, 0)),        # W1_nei
                pl.BlockSpec((hd, hd), lambda i: (0, 0)),        # W1_edge
                pl.BlockSpec((1, hd), lambda i: (0, 0)),         # b1
                pl.BlockSpec((hd, hd), lambda i: (0, 0)),        # W2
                pl.BlockSpec((1, hd), lambda i: (0, 0)),         # b2
                pl.BlockSpec((hd, hd), lambda i: (0, 0)),        # W3
                pl.BlockSpec((1, hd), lambda i: (0, 0)),         # b3
                pl.BlockSpec((1, hd), lambda i: (0, 0)),         # gain
                pl.BlockSpec((1, hd), lambda i: (0, 0)),         # beta
            ],
            out_specs=pl.BlockSpec((tm, hd), lambda i: (i, 0)),
        ),
        compiler_params=pltpu.CompilerParams(
            dimension_semantics=("parallel",),
            vmem_limit_bytes=VMEM_LIMIT),
    )(h_flat, nei_flat, he_flat, vmask_flat, mask_flat,
      w1s, w1n, w1e, row(b1), w2c, row(b2), w3c, row(b3), row(gain), row(beta))


# ----------------------------------------------------------------------------
# JAX glue (gather) + full encoder forward
# ----------------------------------------------------------------------------
def gather_nodes_jax(nodes, e_idx):
    """nodes [B,N,C], e_idx [B,N,K] -> [B,N,K,C] (torch gather_nodes)."""
    b, n, k = e_idx.shape
    flat = e_idx.reshape(b, n * k)
    g = jnp.take_along_axis(nodes, flat[:, :, None], axis=1)
    return g.reshape(b, n, k, nodes.shape[-1])


def encoder_forward_pallas(V, E, E_idx, mask, params, *, target_tm=512,
                           compute_dtype=jnp.float32):
    b, n, _ = V.shape
    k = E_idx.shape[2]
    hd = params["Wv"].shape[1]
    m = b * n
    tm, m_pad = _pick_tile(m, target_tm)
    pad_rows = m_pad - m

    vmask = gather_nodes_jax(mask[..., None], E_idx)[..., 0]          # [B,N,K]
    vmask_flat = vmask.reshape(m * k, 1)
    mask_flat = mask.reshape(m, 1)
    if pad_rows:
        vmask_flat = jnp.pad(vmask_flat, ((0, pad_rows * k), (0, 0)))
        mask_flat = jnp.pad(mask_flat, ((0, pad_rows), (0, 0)))

    h_v = embed_norm_pallas(V.reshape(m, -1), params["Wv"], params["bv"],
                            params["gv"], params["betav"],
                            target_tm=target_tm,
                            compute_dtype=compute_dtype).reshape(b, n, hd)
    h_e = embed_norm_pallas(E.reshape(m * k, -1), params["We"], params["be"],
                            params["ge"], params["betae"],
                            target_tm=target_tm,
                            compute_dtype=compute_dtype)              # (m*k, H) f32

    he_flat = h_e.astype(compute_dtype)                               # layer-invariant
    if pad_rows:
        he_flat = jnp.pad(he_flat, ((0, pad_rows * k), (0, 0)))

    h = h_v
    for layer in params["layers"]:
        # TODO(synk): neighbor gather stays in XLA (take_along_axis); an in-kernel
        # gather of a VMEM-resident h would remove this HBM round-trip per layer.
        nei_flat = gather_nodes_jax(h, E_idx).reshape(m * k, hd).astype(compute_dtype)
        h_flat = h.reshape(m, hd)
        if pad_rows:
            nei_flat = jnp.pad(nei_flat, ((0, pad_rows * k), (0, 0)))
            h_flat = jnp.pad(h_flat, ((0, pad_rows), (0, 0)))
        h_new = mpnn_layer_pallas(h_flat, nei_flat, he_flat, vmask_flat, mask_flat,
                                  layer, tm=tm, k=k, compute_dtype=compute_dtype)
        h = h_new[:m].reshape(b, n, hd)     # node mask already applied in the kernel
    return h


# ----------------------------------------------------------------------------
# Pure-JAX reference (mirrors the PyTorch forward, eval mode)
# ----------------------------------------------------------------------------
def normalize_ref(x, gain, beta):
    mu = jnp.mean(x, axis=-1, keepdims=True)
    var = jnp.var(x, axis=-1, ddof=1, keepdims=True)
    sigma = jnp.sqrt(var + EPS)
    return gain * (x - mu) / (sigma + EPS) + beta


def encoder_forward_ref(V, E, E_idx, mask, params):
    b, n, _ = V.shape
    k = E_idx.shape[2]
    hd = params["Wv"].shape[1]
    vmask = gather_nodes_jax(mask[..., None], E_idx)[..., 0]
    h_v = normalize_ref(V @ params["Wv"] + params["bv"], params["gv"], params["betav"])
    h_e = normalize_ref(E @ params["We"] + params["be"], params["ge"], params["betae"])
    h = h_v
    for (w1, b1, w2, b2, w3, b3, gain, beta) in params["layers"]:
        nei_v = gather_nodes_jax(h, E_idx)
        h_exp = jnp.broadcast_to(h[:, :, None, :], (b, n, k, hd))
        h_ev = jnp.concatenate([h_exp, nei_v, h_e], axis=-1)
        x = jnp.maximum(h_ev @ w1 + b1, 0.0)
        x = jnp.maximum(x @ w2 + b2, 0.0)
        x = x @ w3 + b3
        msg = x * vmask[..., None]
        dh = jnp.mean(msg, axis=-2)
        h = normalize_ref(h + dh, gain, beta)
        h = h * mask[..., None]
    return h


# ----------------------------------------------------------------------------
# Deterministic parameter init (Xavier-uniform weights, zero biases,
# Normalize gain=1 / bias=0), mimicking the module __init__.
# ----------------------------------------------------------------------------
def xavier_uniform(key, fan_in, fan_out):
    bound = math.sqrt(6.0 / (fan_in + fan_out))
    return jax.random.uniform(key, (fan_in, fan_out), jnp.float32, -bound, bound)


def init_params(key, node_in, edge_in, hidden, depth):
    keys = jax.random.split(key, 2 + 3 * depth)
    params = {
        "Wv": xavier_uniform(keys[0], node_in, hidden),
        "bv": jnp.zeros((hidden,), jnp.float32),
        "gv": jnp.ones((hidden,), jnp.float32),
        "betav": jnp.zeros((hidden,), jnp.float32),
        "We": xavier_uniform(keys[1], edge_in, hidden),
        "be": jnp.zeros((hidden,), jnp.float32),
        "ge": jnp.ones((hidden,), jnp.float32),
        "betae": jnp.zeros((hidden,), jnp.float32),
        "layers": [],
    }
    for d in range(depth):
        k1, k2, k3 = keys[2 + 3 * d: 5 + 3 * d]
        params["layers"].append((
            xavier_uniform(k1, 3 * hidden, hidden), jnp.zeros((hidden,), jnp.float32),
            xavier_uniform(k2, hidden, hidden), jnp.zeros((hidden,), jnp.float32),
            xavier_uniform(k3, hidden, hidden), jnp.zeros((hidden,), jnp.float32),
            jnp.ones((hidden,), jnp.float32), jnp.zeros((hidden,), jnp.float32),
        ))
    return params


# ----------------------------------------------------------------------------
if __name__ == "__main__":
    B, N, K = 2, 16, 8
    NODE_IN, EDGE_IN, HIDDEN, DEPTH = 16, 16, 32, 2

    key = jax.random.PRNGKey(0)
    kV, kE, kI, kM, kP = jax.random.split(key, 5)

    V = jax.random.normal(kV, (B, N, NODE_IN), jnp.float32)
    E = jax.random.normal(kE, (B, N, K, EDGE_IN), jnp.float32)
    E_idx = jax.random.randint(kI, (B, N, K), 0, N, jnp.int32)
    mask = (jax.random.uniform(kM, (B, N)) > 0.2).astype(jnp.float32)

    params = init_params(kP, NODE_IN, EDGE_IN, HIDDEN, DEPTH)

    fwd_f32 = jax.jit(functools.partial(encoder_forward_pallas,
                                        compute_dtype=jnp.float32))
    fwd_bf16 = jax.jit(functools.partial(encoder_forward_pallas,
                                         compute_dtype=jnp.bfloat16))

    out = jax.block_until_ready(fwd_f32(V, E, E_idx, mask, params))
    ref = jax.block_until_ready(encoder_forward_ref(V, E, E_idx, mask, params))
    # f32 path (approx reciprocal on the norm) — tight check.
    np.testing.assert_allclose(np.asarray(out), np.asarray(ref), rtol=5e-3, atol=5e-3)

    # bf16 MXU path (v6e/v7x oriented) — loose sanity check, stats stay in f32.
    out_bf16 = jax.block_until_ready(fwd_bf16(V, E, E_idx, mask, params))
    np.testing.assert_allclose(np.asarray(out_bf16), np.asarray(ref), rtol=1e-1, atol=1e-1)

    print("KERNEL_OK")
</pallas_src>

<mosaic_0001>
module attributes {stable_mosaic.version = 11 : i64} {
  func.func @embed_norm_kernel(%arg0: i32, %arg1: memref<32x16xf32, #tpu.memory_space<vmem>>, %arg2: memref<16x32xf32, #tpu.memory_space<vmem>>, %arg3: memref<1x32xf32, #tpu.memory_space<vmem>>, %arg4: memref<1x32xf32, #tpu.memory_space<vmem>>, %arg5: memref<1x32xf32, #tpu.memory_space<vmem>>, %arg6: memref<32x32xf32, #tpu.memory_space<vmem>>) attributes {dimension_semantics = [#tpu.dimension_semantics<parallel>], iteration_bounds = array<i64: 1>, scalar_prefetch = 0 : i64, scratch_operands = 0 : i64, tpu.core_type = #tpu.core_type<tc>, window_params = [{transform_indices = @transform_0, window_bounds = array<i64: 32, 16>}, {pipeline_mode = #tpu.pipeline_mode<synchronous>, transform_indices = @transform_1, window_bounds = array<i64: 16, 32>}, {pipeline_mode = #tpu.pipeline_mode<synchronous>, transform_indices = @transform_2, window_bounds = array<i64: 1, 32>}, {pipeline_mode = #tpu.pipeline_mode<synchronous>, transform_indices = @transform_3, window_bounds = array<i64: 1, 32>}, {pipeline_mode = #tpu.pipeline_mode<synchronous>, transform_indices = @transform_4, window_bounds = array<i64: 1, 32>}, {transform_indices = @transform_5, window_bounds = array<i64: 32, 32>}]} {
    %c0 = arith.constant 0 : index
    %c0_0 = arith.constant 0 : index
    %0 = vector.load %arg1[%c0, %c0_0] : memref<32x16xf32, #tpu.memory_space<vmem>>, vector<32x16xf32>
    %c0_1 = arith.constant 0 : index
    %c0_2 = arith.constant 0 : index
    %1 = vector.load %arg2[%c0_1, %c0_2] : memref<16x32xf32, #tpu.memory_space<vmem>>, vector<16x32xf32>
    %cst = arith.constant dense<0.000000e+00> : vector<32x32xf32>
    %2 = tpu.matmul %0, %1, %cst {dimension_numbers = #tpu.dot_dimension_numbers<[1], [0], [0], [1], [0, 0, 1, 1], [], []>} : vector<32x16xf32>, vector<16x32xf32>, vector<32x32xf32> -> vector<32x32xf32>
    %c0_3 = arith.constant 0 : index
    %c0_4 = arith.constant 0 : index
    %3 = vector.load %arg3[%c0_3, %c0_4] : memref<1x32xf32, #tpu.memory_space<vmem>>, vector<1x32xf32>
    %4 = vector.broadcast %3 : vector<1x32xf32> to vector<32x32xf32>
    %5 = arith.addf %2, %4 : vector<32x32xf32>
    %cst_5 = arith.constant dense<0.000000e+00> : vector<32xf32>
    %6 = vector.multi_reduction <add>, %5, %cst_5 [1] : vector<32x32xf32> to vector<32xf32>
    %7 = vector.shape_cast %6 : vector<32xf32> to vector<32x1xf32>
    %cst_6 = arith.constant 3.200000e+01 : f32
    %8 = vector.broadcast %cst_6 : f32 to vector<32x1xf32>
    %9 = arith.divf %7, %8 : vector<32x1xf32>
    %10 = vector.broadcast %9 : vector<32x1xf32> to vector<32x32xf32>
    %11 = arith.subf %5, %10 : vector<32x32xf32>
    %12 = arith.mulf %11, %11 : vector<32x32xf32>
    %cst_7 = arith.constant dense<0.000000e+00> : vector<32xf32>
    %13 = vector.multi_reduction <add>, %12, %cst_7 [1] : vector<32x32xf32> to vector<32xf32>
    %14 = vector.shape_cast %13 : vector<32xf32> to vector<32x1xf32>
    %cst_8 = arith.constant 0.0322580636 : f32
    %15 = vector.broadcast %cst_8 : f32 to vector<32x1xf32>
    %16 = arith.mulf %14, %15 : vector<32x1xf32>
    %cst_9 = arith.constant 9.99999997E-7 : f32
    %17 = vector.broadcast %cst_9 : f32 to vector<32x1xf32>
    %18 = arith.addf %16, %17 : vector<32x1xf32>
    %19 = math.sqrt %18 : vector<32x1xf32>
    %cst_10 = arith.constant 9.99999997E-7 : f32
    %20 = vector.broadcast %cst_10 : f32 to vector<32x1xf32>
    %21 = arith.addf %19, %20 : vector<32x1xf32>
    %22 = tpu.reciprocal %21 {approx = true} : vector<32x1xf32> -> vector<32x1xf32>
    %c0_11 = arith.constant 0 : index
    %c0_12 = arith.constant 0 : index
    %23 = vector.load %arg4[%c0_11, %c0_12] : memref<1x32xf32, #tpu.memory_space<vmem>>, vector<1x32xf32>
    %24 = vector.broadcast %23 : vector<1x32xf32> to vector<32x32xf32>
    %25 = arith.mulf %24, %11 : vector<32x32xf32>
    %26 = vector.broadcast %22 : vector<32x1xf32> to vector<32x32xf32>
    %27 = arith.mulf %25, %26 : vector<32x32xf32>
    %c0_13 = arith.constant 0 : index
    %c0_14 = arith.constant 0 : index
    %28 = vector.load %arg5[%c0_13, %c0_14] : memref<1x32xf32, #tpu.memory_space<vmem>>, vector<1x32xf32>
    %29 = vector.broadcast %28 : vector<1x32xf32> to vector<32x32xf32>
    %30 = arith.addf %27, %29 : vector<32x32xf32>
    %c0_15 = arith.constant 0 : index
    %c0_16 = arith.constant 0 : index
    %31 = vector.load %arg6[%c0_15, %c0_16] : memref<32x32xf32, #tpu.memory_space<vmem>>, vector<32x32xf32>
    tpu.vector_store %arg6[%c0_15, %c0_16], %30 {strides = array<i32>} : memref<32x32xf32, #tpu.memory_space<vmem>>, vector<32x32xf32>,
    return
  }
  func.func @transform_0(%arg0: i32) -> (i32, i32) {
    %c0_i32 = arith.constant 0 : i32
    %c0_i32_0 = arith.constant 0 : i32
    return %arg0, %c0_i32 : i32, i32
  }
  func.func @transform_1(%arg0: i32) -> (i32, i32) {
    %c0_i32 = arith.constant 0 : i32
    %c0_i32_0 = arith.constant 0 : i32
    %c0_i32_1 = arith.constant 0 : i32
    return %c0_i32, %c0_i32_0 : i32, i32
  }
  func.func @transform_2(%arg0: i32) -> (i32, i32) {
    %c0_i32 = arith.constant 0 : i32
    %c0_i32_0 = arith.constant 0 : i32
    %c0_i32_1 = arith.constant 0 : i32
    return %c0_i32, %c0_i32_0 : i32, i32
  }
  func.func @transform_3(%arg0: i32) -> (i32, i32) {
    %c0_i32 = arith.constant 0 : i32
    %c0_i32_0 = arith.constant 0 : i32
    %c0_i32_1 = arith.constant 0 : i32
    return %c0_i32, %c0_i32_0 : i32, i32
  }
  func.func @transform_4(%arg0: i32) -> (i32, i32) {
    %c0_i32 = arith.constant 0 : i32
    %c0_i32_0 = arith.constant 0 : i32
    %c0_i32_1 = arith.constant 0 : i32
    return %c0_i32, %c0_i32_0 : i32, i32
  }
  func.func @transform_5(%arg0: i32) -> (i32, i32) {
    %c0_i32 = arith.constant 0 : i32
    %c0_i32_0 = arith.constant 0 : i32
    return %arg0, %c0_i32 : i32, i32
  }
}

module attributes {stable_mosaic.version = 11 : i64} {
  func.func @mpnn_kernel(%arg0: i32, %arg1: memref<32x32xf32, #tpu.memory_space<vmem>>, %arg2: memref<256x32xf32, #tpu.memory_space<vmem>>, %arg3: memref<256x32xf32, #tpu.memory_space<vmem>>, %arg4: memref<256x1xf32, #tpu.memory_space<vmem>>, %arg5: memref<32x1xf32, #tpu.memory_space<vmem>>, %arg6: memref<32x32xf32, #tpu.memory_space<vmem>>, %arg7: memref<32x32xf32, #tpu.memory_space<vmem>>, %arg8: memref<32x32xf32, #tpu.memory_space<vmem>>, %arg9: memref<1x32xf32, #tpu.memory_space<vmem>>, %arg10: memref<32x32xf32, #tpu.memory_space<vmem>>, %arg11: memref<1x32xf32, #tpu.memory_space<vmem>>, %arg12: memref<32x32xf32, #tpu.memory_space<vmem>>, %arg13: memref<1x32xf32, #tpu.memory_space<vmem>>, %arg14: memref<1x32xf32, #tpu.memory_space<vmem>>, %arg15: memref<1x32xf32, #tpu.memory_space<vmem>>, %arg16: memref<32x32xf32, #tpu.memory_space<vmem>>) attributes {dimension_semantics = [#tpu.dimension_semantics<parallel>], iteration_bounds = array<i64: 1>, scalar_prefetch = 0 : i64, scratch_operands = 0 : i64, tpu.core_type = #tpu.core_type<tc>, window_params = [{transform_indices = @transform_0, window_bounds = array<i64: 32, 32>}, {transform_indices = @transform_1, window_bounds = array<i64: 256, 32>}, {transform_indices = @transform_2, window_bounds = array<i64: 256, 32>}, {transform_indices = @transform_3, window_bounds = array<i64: 256, 1>}, {transform_indices = @transform_4, window_bounds = array<i64: 32, 1>}, {pipeline_mode = #tpu.pipeline_mode<synchronous>, transform_indices = @transform_5, window_bounds = array<i64: 32, 32>}, {pipeline_mode = #tpu.pipeline_mode<synchronous>, transform_indices = @transform_6, window_bounds = array<i64: 32, 32>}, {pipeline_mode = #tpu.pipeline_mode<synchronous>, transform_indices = @transform_7, window_bounds = array<i64: 32, 32>}, {pipeline_mode = #tpu.pipeline_mode<synchronous>, transform_indices = @transform_8, window_bounds = array<i64: 1, 32>}, {pipeline_mode = #tpu.pipeline_mode<synchronous>, transform_indices = @transform_9, window_bounds = array<i64: 32, 32>}, {pipeline_mode = #tpu.pipeline_mode<synchronous>, transform_indices = @transform_10, window_bounds = array<i64: 1, 32>}, {pipeline_mode = #tpu.pipeline_mode<synchronous>, transform_indices = @transform_11, window_bounds = array<i64: 32, 32>}, {pipeline_mode = #tpu.pipeline_mode<synchronous>, transform_indices = @transform_12, window_bounds = array<i64: 1, 32>}, {pipeline_mode = #tpu.pipeline_mode<synchronous>, transform_indices = @transform_13, window_bounds = array<i64: 1, 32>}, {pipeline_mode = #tpu.pipeline_mode<synchronous>, transform_indices = @transform_14, window_bounds = array<i64: 1, 32>}, {transform_indices = @transform_15, window_bounds = array<i64: 32, 32>}]} {
    %c0 = arith.constant 0 : index
    %c0_0 = arith.constant 0 : index
    %0 = vector.load %arg1[%c0, %c0_0] : memref<32x32xf32, #tpu.memory_space<vmem>>, vector<32x32xf32>
    %c0_1 = arith.constant 0 : index
    %c0_2 = arith.constant 0 : index
    %1 = vector.load %arg6[%c0_1, %c0_2] : memref<32x32xf32, #tpu.memory_space<vmem>>, vector<32x32xf32>
    %cst = arith.constant dense<0.000000e+00> : vector<32x32xf32>
    %2 = tpu.matmul %0, %1, %cst {dimension_numbers = #tpu.dot_dimension_numbers<[1], [0], [0], [1], [0, 0, 1, 1], [], []>} : vector<32x32xf32>, vector<32x32xf32>, vector<32x32xf32> -> vector<32x32xf32>
    %c0_3 = arith.constant 0 : index
    %c0_4 = arith.constant 0 : index
    %3 = vector.load %arg9[%c0_3, %c0_4] : memref<1x32xf32, #tpu.memory_space<vmem>>, vector<1x32xf32>
    %4 = vector.broadcast %3 : vector<1x32xf32> to vector<32x32xf32>
    %5 = arith.addf %2, %4 : vector<32x32xf32>
    %c0_5 = arith.constant 0 : index
    %c0_6 = arith.constant 0 : index
    %6 = vector.load %arg2[%c0_5, %c0_6] : memref<256x32xf32, #tpu.memory_space<vmem>>, vector<256x32xf32>
    %c0_7 = arith.constant 0 : index
    %c0_8 = arith.constant 0 : index
    %7 = vector.load %arg7[%c0_7, %c0_8] : memref<32x32xf32, #tpu.memory_space<vmem>>, vector<32x32xf32>
    %cst_9 = arith.constant dense<0.000000e+00> : vector<256x32xf32>
    %8 = tpu.matmul %6, %7, %cst_9 {dimension_numbers = #tpu.dot_dimension_numbers<[1], [0], [0], [1], [0, 0, 1, 1], [], []>} : vector<256x32xf32>, vector<32x32xf32>, vector<256x32xf32> -> vector<256x32xf32>
    %c0_10 = arith.constant 0 : index
    %c0_11 = arith.constant 0 : index
    %9 = vector.load %arg3[%c0_10, %c0_11] : memref<256x32xf32, #tpu.memory_space<vmem>>, vector<256x32xf32>
    %c0_12 = arith.constant 0 : index
    %c0_13 = arith.constant 0 : index
    %10 = vector.load %arg8[%c0_12, %c0_13] : memref<32x32xf32, #tpu.memory_space<vmem>>, vector<32x32xf32>
    %cst_14 = arith.constant dense<0.000000e+00> : vector<256x32xf32>
    %11 = tpu.matmul %9, %10, %cst_14 {dimension_numbers = #tpu.dot_dimension_numbers<[1], [0], [0], [1], [0, 0, 1, 1], [], []>} : vector<256x32xf32>, vector<32x32xf32>, vector<256x32xf32> -> vector<256x32xf32>
    %12 = arith.addf %8, %11 : vector<256x32xf32>
    %13 = vector.shape_cast %12 : vector<256x32xf32> to vector<32x8x32xf32>
    %14 = vector.shape_cast %5 : vector<32x32xf32> to vector<32x1x32xf32>
    %15 = vector.broadcast %14 : vector<32x1x32xf32> to vector<32x8x32xf32>
    %16 = arith.addf %13, %15 : vector<32x8x32xf32>
    %cst_15 = arith.constant 0.000000e+00 : f32
    %17 = vector.broadcast %cst_15 : f32 to vector<32x8x32xf32>
    %18 = arith.maximumf %16, %17 : vector<32x8x32xf32>
    %19 = vector.shape_cast %18 : vector<32x8x32xf32> to vector<256x32xf32>
    %c0_16 = arith.constant 0 : index
    %c0_17 = arith.constant 0 : index
    %20 = vector.load %arg10[%c0_16, %c0_17] : memref<32x32xf32, #tpu.memory_space<vmem>>, vector<32x32xf32>
    %cst_18 = arith.constant dense<0.000000e+00> : vector<256x32xf32>
    %21 = tpu.matmul %19, %20, %cst_18 {dimension_numbers = #tpu.dot_dimension_numbers<[1], [0], [0], [1], [0, 0, 1, 1], [], []>} : vector<256x32xf32>, vector<32x32xf32>, vector<256x32xf32> -> vector<256x32xf32>
    %c0_19 = arith.constant 0 : index
    %c0_20 = arith.constant 0 : index
    %22 = vector.load %arg11[%c0_19, %c0_20] : memref<1x32xf32, #tpu.memory_space<vmem>>, vector<1x32xf32>
    %23 = vector.broadcast %22 : vector<1x32xf32> to vector<256x32xf32>
    %24 = arith.addf %21, %23 : vector<256x32xf32>
    %cst_21 = arith.constant 0.000000e+00 : f32
    %25 = vector.broadcast %cst_21 : f32 to vector<256x32xf32>
    %26 = arith.maximumf %24, %25 : vector<256x32xf32>
    %c0_22 = arith.constant 0 : index
    %c0_23 = arith.constant 0 : index
    %27 = vector.load %arg12[%c0_22, %c0_23] : memref<32x32xf32, #tpu.memory_space<vmem>>, vector<32x32xf32>
    %cst_24 = arith.constant dense<0.000000e+00> : vector<256x32xf32>
    %28 = tpu.matmul %26, %27, %cst_24 {dimension_numbers = #tpu.dot_dimension_numbers<[1], [0], [0], [1], [0, 0, 1, 1], [], []>} : vector<256x32xf32>, vector<32x32xf32>, vector<256x32xf32> -> vector<256x32xf32>
    %c0_25 = arith.constant 0 : index
    %c0_26 = arith.constant 0 : index
    %29 = vector.load %arg13[%c0_25, %c0_26] : memref<1x32xf32, #tpu.memory_space<vmem>>, vector<1x32xf32>
    %30 = vector.broadcast %29 : vector<1x32xf32> to vector<256x32xf32>
    %31 = arith.addf %28, %30 : vector<256x32xf32>
    %c0_27 = arith.constant 0 : index
    %c0_28 = arith.constant 0 : index
    %32 = vector.load %arg4[%c0_27, %c0_28] : memref<256x1xf32, #tpu.memory_space<vmem>>, vector<256x1xf32>
    %33 = vector.broadcast %32 : vector<256x1xf32> to vector<256x32xf32>
    %34 = arith.mulf %31, %33 : vector<256x32xf32>
    %35 = vector.shape_cast %34 : vector<256x32xf32> to vector<32x8x32xf32>
    %cst_29 = arith.constant dense<0.000000e+00> : vector<32x32xf32>
    %36 = vector.multi_reduction <add>, %35, %cst_29 [1] : vector<32x8x32xf32> to vector<32x32xf32>
    %cst_30 = arith.constant 1.250000e-01 : f32
    %37 = vector.broadcast %cst_30 : f32 to vector<32x32xf32>
    %38 = arith.mulf %36, %37 : vector<32x32xf32>
    %39 = arith.addf %0, %38 : vector<32x32xf32>
    %cst_31 = arith.constant dense<0.000000e+00> : vector<32xf32>
    %40 = vector.multi_reduction <add>, %39, %cst_31 [1] : vector<32x32xf32> to vector<32xf32>
    %41 = vector.shape_cast %40 : vector<32xf32> to vector<32x1xf32>
    %cst_32 = arith.constant 3.200000e+01 : f32
    %42 = vector.broadcast %cst_32 : f32 to vector<32x1xf32>
    %43 = arith.divf %41, %42 : vector<32x1xf32>
    %44 = vector.broadcast %43 : vector<32x1xf32> to vector<32x32xf32>
    %45 = arith.subf %39, %44 : vector<32x32xf32>
    %46 = arith.mulf %45, %45 : vector<32x32xf32>
    %cst_33 = arith.constant dense<0.000000e+00> : vector<32xf32>
    %47 = vector.multi_reduction <add>, %46, %cst_33 [1] : vector<32x32xf32> to vector<32xf32>
    %48 = vector.shape_cast %47 : vector<32xf32> to vector<32x1xf32>
    %cst_34 = arith.constant 0.0322580636 : f32
    %49 = vector.broadcast %cst_34 : f32 to vector<32x1xf32>
    %50 = arith.mulf %48, %49 : vector<32x1xf32>
    %cst_35 = arith.constant 9.99999997E-7 : f32
    %51 = vector.broadcast %cst_35 : f32 to vector<32x1xf32>
    %52 = arith.addf %50, %51 : vector<32x1xf32>
    %53 = math.sqrt %52 : vector<32x1xf32>
    %cst_36 = arith.constant 9.99999997E-7 : f32
    %54 = vector.broadcast %cst_36 : f32 to vector<32x1xf32>
    %55 = arith.addf %53, %54 : vector<32x1xf32>
    %56 = tpu.reciprocal %55 {approx = true} : vector<32x1xf32> -> vector<32x1xf32>
    %c0_37 = arith.constant 0 : index
    %c0_38 = arith.constant 0 : index
    %57 = vector.load %arg14[%c0_37, %c0_38] : memref<1x32xf32, #tpu.memory_space<vmem>>, vector<1x32xf32>
    %58 = vector.broadcast %57 : vector<1x32xf32> to vector<32x32xf32>
    %59 = arith.mulf %58, %45 : vector<32x32xf32>
    %60 = vector.broadcast %56 : vector<32x1xf32> to vector<32x32xf32>
    %61 = arith.mulf %59, %60 : vector<32x32xf32>
    %c0_39 = arith.constant 0 : index
    %c0_40 = arith.constant 0 : index
    %62 = vector.load %arg15[%c0_39, %c0_40] : memref<1x32xf32, #tpu.memory_space<vmem>>, vector<1x32xf32>
    %63 = vector.broadcast %62 : vector<1x32xf32> to vector<32x32xf32>
    %64 = arith.addf %61, %63 : vector<32x32xf32>
    %c0_41 = arith.constant 0 : index
    %c0_42 = arith.constant 0 : index
    %65 = vector.load %arg5[%c0_41, %c0_42] : memref<32x1xf32, #tpu.memory_space<vmem>>, vector<32x1xf32>
    %66 = vector.broadcast %65 : vector<32x1xf32> to vector<32x32xf32>
    %67 = arith.mulf %64, %66 : vector<32x32xf32>
    %c0_43 = arith.constant 0 : index
    %c0_44 = arith.constant 0 : index
    %68 = vector.load %arg16[%c0_43, %c0_44] : memref<32x32xf32, #tpu.memory_space<vmem>>, vector<32x32xf32>
    tpu.vector_store %arg16[%c0_43, %c0_44], %67 {strides = array<i32>} : memref<32x32xf32, #tpu.memory_space<vmem>>, vector<32x32xf32>,
    return
  }
  func.func @transform_0(%arg0: i32) -> (i32, i32) {
    %c0_i32 = arith.constant 0 : i32
    %c0_i32_0 = arith.constant 0 : i32
    return %arg0, %c0_i32 : i32, i32
  }
  func.func @transform_1(%arg0: i32) -> (i32, i32) {
    %c0_i32 = arith.constant 0 : i32
    %c0_i32_0 = arith.constant 0 : i32
    return %arg0, %c0_i32 : i32, i32
  }
  func.func @transform_2(%arg0: i32) -> (i32, i32) {
    %c0_i32 = arith.constant 0 : i32
    %c0_i32_0 = arith.constant 0 : i32
    return %arg0, %c0_i32 : i32, i32
  }
  func.func @transform_3(%arg0: i32) -> (i32, i32) {
    %c0_i32 = arith.constant 0 : i32
    %c0_i32_0 = arith.constant 0 : i32
    return %arg0, %c0_i32 : i32, i32
  }
  func.func @transform_4(%arg0: i32) -> (i32, i32) {
    %c0_i32 = arith.constant 0 : i32
    %c0_i32_0 = arith.constant 0 : i32
    return %arg0, %c0_i32 : i32, i32
  }
  func.func @transform_5(%arg0: i32) -> (i32, i32) {
    %c0_i32 = arith.constant 0 : i32
    %c0_i32_0 = arith.constant 0 : i32
    %c0_i32_1 = arith.constant 0 : i32
    return %c0_i32, %c0_i32_0 : i32, i32
  }
  func.func @transform_6(%arg0: i32) -> (i32, i32) {
    %c0_i32 = arith.constant 0 : i32
    %c0_i32_0 = arith.constant 0 : i32
    %c0_i32_1 = arith.constant 0 : i32
    return %c0_i32, %c0_i32_0 : i32, i32
  }
  func.func @transform_7(%arg0: i32) -> (i32, i32) {
    %c0_i32 = arith.constant 0 : i32
    %c0_i32_0 = arith.constant 0 : i32
    %c0_i32_1 = arith.constant 0 : i32
    return %c0_i32, %c0_i32_0 : i32, i32
  }
  func.func @transform_8(%arg0: i32) -> (i32, i32) {
    %c0_i32 = arith.constant 0 : i32
    %c0_i32_0 = arith.constant 0 : i32
    %c0_i32_1 = arith.constant 0 : i32
    return %c0_i32, %c0_i32_0 : i32, i32
  }
  func.func @transform_9(%arg0: i32) -> (i32, i32) {
    %c0_i32 = arith.constant 0 : i32
    %c0_i32_0 = arith.constant 0 : i32
    %c0_i32_1 = arith.constant 0 : i32
    return %c0_i32, %c0_i32_0 : i32, i32
  }
  func.func @transform_10(%arg0: i32) -> (i32, i32) {
    %c0_i32 = arith.constant 0 : i32
    %c0_i32_0 = arith.constant 0 : i32
    %c0_i32_1 = arith.constant 0 : i32
    return %c0_i32, %c0_i32_0 : i32, i32
  }
  func.func @transform_11(%arg0: i32) -> (i32, i32) {
    %c0_i32 = arith.constant 0 : i32
    %c0_i32_0 = arith.constant 0 : i32
    %c0_i32_1 = arith.constant 0 : i32
    return %c0_i32, %c0_i32_0 : i32, i32
  }
  func.func @transform_12(%arg0: i32) -> (i32, i32) {
    %c0_i32 = arith.constant 0 : i32
    %c0_i32_0 = arith.constant 0 : i32
    %c0_i32_1 = arith.constant 0 : i32
    return %c0_i32, %c0_i32_0 : i32, i32
  }
  func.func @transform_13(%arg0: i32) -> (i32, i32) {
    %c0_i32 = arith.constant 0 : i32
    %c0_i32_0 = arith.constant 0 : i32
    %c0_i32_1 = arith.constant 0 : i32
    return %c0_i32, %c0_i32_0 : i32, i32
  }
  func.func @transform_14(%arg0: i32) -> (i32, i32) {
    %c0_i32 = arith.constant 0 : i32
    %c0_i32_0 = arith.constant 0 : i32
    %c0_i32_1 = arith.constant 0 : i32
    return %c0_i32, %c0_i32_0 : i32, i32
  }
  func.func @transform_15(%arg0: i32) -> (i32, i32) {
    %c0_i32 = arith.constant 0 : i32
    %c0_i32_0 = arith.constant 0 : i32
    return %arg0, %c0_i32 : i32, i32
  }
}

module attributes {stable_mosaic.version = 11 : i64} {
  func.func @embed_norm_kernel(%arg0: i32, %arg1: memref<256x16xf32, #tpu.memory_space<vmem>>, %arg2: memref<16x32xf32, #tpu.memory_space<vmem>>, %arg3: memref<1x32xf32, #tpu.memory_space<vmem>>, %arg4: memref<1x32xf32, #tpu.memory_space<vmem>>, %arg5: memref<1x32xf32, #tpu.memory_space<vmem>>, %arg6: memref<256x32xf32, #tpu.memory_space<vmem>>) attributes {dimension_semantics = [#tpu.dimension_semantics<parallel>], iteration_bounds = array<i64: 1>, scalar_prefetch = 0 : i64, scratch_operands = 0 : i64, tpu.core_type = #tpu.core_type<tc>, window_params = [{transform_indices = @transform_0, window_bounds = array<i64: 256, 16>}, {pipeline_mode = #tpu.pipeline_mode<synchronous>, transform_indices = @transform_1, window_bounds = array<i64: 16, 32>}, {pipeline_mode = #tpu.pipeline_mode<synchronous>, transform_indices = @transform_2, window_bounds = array<i64: 1, 32>}, {pipeline_mode = #tpu.pipeline_mode<synchronous>, transform_indices = @transform_3, window_bounds = array<i64: 1, 32>}, {pipeline_mode = #tpu.pipeline_mode<synchronous>, transform_indices = @transform_4, window_bounds = array<i64: 1, 32>}, {transform_indices = @transform_5, window_bounds = array<i64: 256, 32>}]} {
    %c0 = arith.constant 0 : index
    %c0_0 = arith.constant 0 : index
    %0 = vector.load %arg1[%c0, %c0_0] : memref<256x16xf32, #tpu.memory_space<vmem>>, vector<256x16xf32>
    %c0_1 = arith.constant 0 : index
    %c0_2 = arith.constant 0 : index
    %1 = vector.load %arg2[%c0_1, %c0_2] : memref<16x32xf32, #tpu.memory_space<vmem>>, vector<16x32xf32>
    %cst = arith.constant dense<0.000000e+00> : vector<256x32xf32>
    %2 = tpu.matmul %0, %1, %cst {dimension_numbers = #tpu.dot_dimension_numbers<[1], [0], [0], [1], [0, 0, 1, 1], [], []>} : vector<256x16xf32>, vector<16x32xf32>, vector<256x32xf32> -> vector<256x32xf32>
    %c0_3 = arith.constant 0 : index
    %c0_4 = arith.constant 0 : index
    %3 = vector.load %arg3[%c0_3, %c0_4] : memref<1x32xf32, #tpu.memory_space<vmem>>, vector<1x32xf32>
    %4 = vector.broadcast %3 : vector<1x32xf32> to vector<256x32xf32>
    %5 = arith.addf %2, %4 : vector<256x32xf32>
    %cst_5 = arith.constant dense<0.000000e+00> : vector<256xf32>
    %6 = vector.multi_reduction <add>, %5, %cst_5 [1] : vector<256x32xf32> to vector<256xf32>
    %7 = vector.shape_cast %6 : vector<256xf32> to vector<256x1xf32>
    %cst_6 = arith.constant 3.200000e+01 : f32
    %8 = vector.broadcast %cst_6 : f32 to vector<256x1xf32>
    %9 = arith.divf %7, %8 : vector<256x1xf32>
    %10 = vector.broadcast %9 : vector<256x1xf32> to vector<256x32xf32>
    %11 = arith.subf %5, %10 : vector<256x32xf32>
    %12 = arith.mulf %11, %11 : vector<256x32xf32>
    %cst_7 = arith.constant dense<0.000000e+00> : vector<256xf32>
    %13 = vector.multi_reduction <add>, %12, %cst_7 [1] : vector<256x32xf32> to vector<256xf32>
    %14 = vector.shape_cast %13 : vector<256xf32> to vector<256x1xf32>
    %cst_8 = arith.constant 0.0322580636 : f32
    %15 = vector.broadcast %cst_8 : f32 to vector<256x1xf32>
    %16 = arith.mulf %14, %15 : vector<256x1xf32>
    %cst_9 = arith.constant 9.99999997E-7 : f32
    %17 = vector.broadcast %cst_9 : f32 to vector<256x1xf32>
    %18 = arith.addf %16, %17 : vector<256x1xf32>
    %19 = math.sqrt %18 : vector<256x1xf32>
    %cst_10 = arith.constant 9.99999997E-7 : f32
    %20 = vector.broadcast %cst_10 : f32 to vector<256x1xf32>
    %21 = arith.addf %19, %20 : vector<256x1xf32>
    %22 = tpu.reciprocal %21 {approx = true} : vector<256x1xf32> -> vector<256x1xf32>
    %c0_11 = arith.constant 0 : index
    %c0_12 = arith.constant 0 : index
    %23 = vector.load %arg4[%c0_11, %c0_12] : memref<1x32xf32, #tpu.memory_space<vmem>>, vector<1x32xf32>
    %24 = vector.broadcast %23 : vector<1x32xf32> to vector<256x32xf32>
    %25 = arith.mulf %24, %11 : vector<256x32xf32>
    %26 = vector.broadcast %22 : vector<256x1xf32> to vector<256x32xf32>
    %27 = arith.mulf %25, %26 : vector<256x32xf32>
    %c0_13 = arith.constant 0 : index
    %c0_14 = arith.constant 0 : index
    %28 = vector.load %arg5[%c0_13, %c0_14] : memref<1x32xf32, #tpu.memory_space<vmem>>, vector<1x32xf32>
    %29 = vector.broadcast %28 : vector<1x32xf32> to vector<256x32xf32>
    %30 = arith.addf %27, %29 : vector<256x32xf32>
    %c0_15 = arith.constant 0 : index
    %c0_16 = arith.constant 0 : index
    %31 = vector.load %arg6[%c0_15, %c0_16] : memref<256x32xf32, #tpu.memory_space<vmem>>, vector<256x32xf32>
    tpu.vector_store %arg6[%c0_15, %c0_16], %30 {strides = array<i32>} : memref<256x32xf32, #tpu.memory_space<vmem>>, vector<256x32xf32>,
    return
  }
  func.func @transform_0(%arg0: i32) -> (i32, i32) {
    %c0_i32 = arith.constant 0 : i32
    %c0_i32_0 = arith.constant 0 : i32
    return %arg0, %c0_i32 : i32, i32
  }
  func.func @transform_1(%arg0: i32) -> (i32, i32) {
    %c0_i32 = arith.constant 0 : i32
    %c0_i32_0 = arith.constant 0 : i32
    %c0_i32_1 = arith.constant 0 : i32
    return %c0_i32, %c0_i32_0 : i32, i32
  }
  func.func @transform_2(%arg0: i32) -> (i32, i32) {
    %c0_i32 = arith.constant 0 : i32
    %c0_i32_0 = arith.constant 0 : i32
    %c0_i32_1 = arith.constant 0 : i32
    return %c0_i32, %c0_i32_0 : i32, i32
  }
  func.func @transform_3(%arg0: i32) -> (i32, i32) {
    %c0_i32 = arith.constant 0 : i32
    %c0_i32_0 = arith.constant 0 : i32
    %c0_i32_1 = arith.constant 0 : i32
    return %c0_i32, %c0_i32_0 : i32, i32
  }
  func.func @transform_4(%arg0: i32) -> (i32, i32) {
    %c0_i32 = arith.constant 0 : i32
    %c0_i32_0 = arith.constant 0 : i32
    %c0_i32_1 = arith.constant 0 : i32
    return %c0_i32, %c0_i32_0 : i32, i32
  }
  func.func @transform_5(%arg0: i32) -> (i32, i32) {
    %c0_i32 = arith.constant 0 : i32
    %c0_i32_0 = arith.constant 0 : i32
    return %arg0, %c0_i32 : i32, i32
  }
}

module attributes {stable_mosaic.version = 11 : i64} {
  func.func @mpnn_kernel(%arg0: i32, %arg1: memref<32x32xf32, #tpu.memory_space<vmem>>, %arg2: memref<256x32xf32, #tpu.memory_space<vmem>>, %arg3: memref<256x32xf32, #tpu.memory_space<vmem>>, %arg4: memref<256x1xf32, #tpu.memory_space<vmem>>, %arg5: memref<32x1xf32, #tpu.memory_space<vmem>>, %arg6: memref<32x32xf32, #tpu.memory_space<vmem>>, %arg7: memref<32x32xf32, #tpu.memory_space<vmem>>, %arg8: memref<32x32xf32, #tpu.memory_space<vmem>>, %arg9: memref<1x32xf32, #tpu.memory_space<vmem>>, %arg10: memref<32x32xf32, #tpu.memory_space<vmem>>, %arg11: memref<1x32xf32, #tpu.memory_space<vmem>>, %arg12: memref<32x32xf32, #tpu.memory_space<vmem>>, %arg13: memref<1x32xf32, #tpu.memory_space<vmem>>, %arg14: memref<1x32xf32, #tpu.memory_space<vmem>>, %arg15: memref<1x32xf32, #tpu.memory_space<vmem>>, %arg16: memref<32x32xf32, #tpu.memory_space<vmem>>) attributes {dimension_semantics = [#tpu.dimension_semantics<parallel>], iteration_bounds = array<i64: 1>, scalar_prefetch = 0 : i64, scratch_operands = 0 : i64, tpu.core_type = #tpu.core_type<tc>, window_params = [{transform_indices = @transform_0, window_bounds = array<i64: 32, 32>}, {transform_indices = @transform_1, window_bounds = array<i64: 256, 32>}, {transform_indices = @transform_2, window_bounds = array<i64: 256, 32>}, {transform_indices = @transform_3, window_bounds = array<i64: 256, 1>}, {transform_indices = @transform_4, window_bounds = array<i64: 32, 1>}, {pipeline_mode = #tpu.pipeline_mode<synchronous>, transform_indices = @transform_5, window_bounds = array<i64: 32, 32>}, {pipeline_mode = #tpu.pipeline_mode<synchronous>, transform_indices = @transform_6, window_bounds = array<i64: 32, 32>}, {pipeline_mode = #tpu.pipeline_mode<synchronous>, transform_indices = @transform_7, window_bounds = array<i64: 32, 32>}, {pipeline_mode = #tpu.pipeline_mode<synchronous>, transform_indices = @transform_8, window_bounds = array<i64: 1, 32>}, {pipeline_mode = #tpu.pipeline_mode<synchronous>, transform_indices = @transform_9, window_bounds = array<i64: 32, 32>}, {pipeline_mode = #tpu.pipeline_mode<synchronous>, transform_indices = @transform_10, window_bounds = array<i64: 1, 32>}, {pipeline_mode = #tpu.pipeline_mode<synchronous>, transform_indices = @transform_11, window_bounds = array<i64: 32, 32>}, {pipeline_mode = #tpu.pipeline_mode<synchronous>, transform_indices = @transform_12, window_bounds = array<i64: 1, 32>}, {pipeline_mode = #tpu.pipeline_mode<synchronous>, transform_indices = @transform_13, window_bounds = array<i64: 1, 32>}, {pipeline_mode = #tpu.pipeline_mode<synchronous>, transform_indices = @transform_14, window_bounds = array<i64: 1, 32>}, {transform_indices = @transform_15, window_bounds = array<i64: 32, 32>}]} {
    %c0 = arith.constant 0 : index
    %c0_0 = arith.constant 0 : index
    %0 = vector.load %arg1[%c0, %c0_0] : memref<32x32xf32, #tpu.memory_space<vmem>>, vector<32x32xf32>
    %c0_1 = arith.constant 0 : index
    %c0_2 = arith.constant 0 : index
    %1 = vector.load %arg6[%c0_1, %c0_2] : memref<32x32xf32, #tpu.memory_space<vmem>>, vector<32x32xf32>
    %cst = arith.constant dense<0.000000e+00> : vector<32x32xf32>
    %2 = tpu.matmul %0, %1, %cst {dimension_numbers = #tpu.dot_dimension_numbers<[1], [0], [0], [1], [0, 0, 1, 1], [], []>} : vector<32x32xf32>, vector<32x32xf32>, vector<32x32xf32> -> vector<32x32xf32>
    %c0_3 = arith.constant 0 : index
    %c0_4 = arith.constant 0 : index
    %3 = vector.load %arg9[%c0_3, %c0_4] : memref<1x32xf32, #tpu.memory_space<vmem>>, vector<1x32xf32>
    %4 = vector.broadcast %3 : vector<1x32xf32> to vector<32x32xf32>
    %5 = arith.addf %2, %4 : vector<32x32xf32>
    %c0_5 = arith.constant 0 : index
    %c0_6 = arith.constant 0 : index
    %6 = vector.load %arg2[%c0_5, %c0_6] : memref<256x32xf32, #tpu.memory_space<vmem>>, vector<256x32xf32>
    %c0_7 = arith.constant 0 : index
    %c0_8 = arith.constant 0 : index
    %7 = vector.load %arg7[%c0_7, %c0_8] : memref<32x32xf32, #tpu.memory_space<vmem>>, vector<32x32xf32>
    %cst_9 = arith.constant dense<0.000000e+00> : vector<256x32xf32>
    %8 = tpu.matmul %6, %7, %cst_9 {dimension_numbers = #tpu.dot_dimension_numbers<[1], [0], [0], [1], [0, 0, 1, 1], [], []>} : vector<256x32xf32>, vector<32x32xf32>, vector<256x32xf32> -> vector<256x32xf32>
    %c0_10 = arith.constant 0 : index
    %c0_11 = arith.constant 0 : index
    %9 = vector.load %arg3[%c0_10, %c0_11] : memref<256x32xf32, #tpu.memory_space<vmem>>, vector<256x32xf32>
    %c0_12 = arith.constant 0 : index
    %c0_13 = arith.constant 0 : index
    %10 = vector.load %arg8[%c0_12, %c0_13] : memref<32x32xf32, #tpu.memory_space<vmem>>, vector<32x32xf32>
    %cst_14 = arith.constant dense<0.000000e+00> : vector<256x32xf32>
    %11 = tpu.matmul %9, %10, %cst_14 {dimension_numbers = #tpu.dot_dimension_numbers<[1], [0], [0], [1], [0, 0, 1, 1], [], []>} : vector<256x32xf32>, vector<32x32xf32>, vector<256x32xf32> -> vector<256x32xf32>
    %12 = arith.addf %8, %11 : vector<256x32xf32>
    %13 = vector.shape_cast %12 : vector<256x32xf32> to vector<32x8x32xf32>
    %14 = vector.shape_cast %5 : vector<32x32xf32> to vector<32x1x32xf32>
    %15 = vector.broadcast %14 : vector<32x1x32xf32> to vector<32x8x32xf32>
    %16 = arith.addf %13, %15 : vector<32x8x32xf32>
    %cst_15 = arith.constant 0.000000e+00 : f32
    %17 = vector.broadcast %cst_15 : f32 to vector<32x8x32xf32>
    %18 = arith.maximumf %16, %17 : vector<32x8x32xf32>
    %19 = vector.shape_cast %18 : vector<32x8x32xf32> to vector<256x32xf32>
    %c0_16 = arith.constant 0 : index
    %c0_17 = arith.constant 0 : index
    %20 = vector.load %arg10[%c0_16, %c0_17] : memref<32x32xf32, #tpu.memory_space<vmem>>, vector<32x32xf32>
    %cst_18 = arith.constant dense<0.000000e+00> : vector<256x32xf32>
    %21 = tpu.matmul %19, %20, %cst_18 {dimension_numbers = #tpu.dot_dimension_numbers<[1], [0], [0], [1], [0, 0, 1, 1], [], []>} : vector<256x32xf32>, vector<32x32xf32>, vector<256x32xf32> -> vector<256x32xf32>
    %c0_19 = arith.constant 0 : index
    %c0_20 = arith.constant 0 : index
    %22 = vector.load %arg11[%c0_19, %c0_20] : memref<1x32xf32, #tpu.memory_space<vmem>>, vector<1x32xf32>
    %23 = vector.broadcast %22 : vector<1x32xf32> to vector<256x32xf32>
    %24 = arith.addf %21, %23 : vector<256x32xf32>
    %cst_21 = arith.constant 0.000000e+00 : f32
    %25 = vector.broadcast %cst_21 : f32 to vector<256x32xf32>
    %26 = arith.maximumf %24, %25 : vector<256x32xf32>
    %c0_22 = arith.constant 0 : index
    %c0_23 = arith.constant 0 : index
    %27 = vector.load %arg12[%c0_22, %c0_23] : memref<32x32xf32, #tpu.memory_space<vmem>>, vector<32x32xf32>
    %cst_24 = arith.constant dense<0.000000e+00> : vector<256x32xf32>
    %28 = tpu.matmul %26, %27, %cst_24 {dimension_numbers = #tpu.dot_dimension_numbers<[1], [0], [0], [1], [0, 0, 1, 1], [], []>} : vector<256x32xf32>, vector<32x32xf32>, vector<256x32xf32> -> vector<256x32xf32>
    %c0_25 = arith.constant 0 : index
    %c0_26 = arith.constant 0 : index
    %29 = vector.load %arg13[%c0_25, %c0_26] : memref<1x32xf32, #tpu.memory_space<vmem>>, vector<1x32xf32>
    %30 = vector.broadcast %29 : vector<1x32xf32> to vector<256x32xf32>
    %31 = arith.addf %28, %30 : vector<256x32xf32>
    %c0_27 = arith.constant 0 : index
    %c0_28 = arith.constant 0 : index
    %32 = vector.load %arg4[%c0_27, %c0_28] : memref<256x1xf32, #tpu.memory_space<vmem>>, vector<256x1xf32>
    %33 = vector.broadcast %32 : vector<256x1xf32> to vector<256x32xf32>
    %34 = arith.mulf %31, %33 : vector<256x32xf32>
    %35 = vector.shape_cast %34 : vector<256x32xf32> to vector<32x8x32xf32>
    %cst_29 = arith.constant dense<0.000000e+00> : vector<32x32xf32>
    %36 = vector.multi_reduction <add>, %35, %cst_29 [1] : vector<32x8x32xf32> to vector<32x32xf32>
    %cst_30 = arith.constant 1.250000e-01 : f32
    %37 = vector.broadcast %cst_30 : f32 to vector<32x32xf32>
    %38 = arith.mulf %36, %37 : vector<32x32xf32>
    %39 = arith.addf %0, %38 : vector<32x32xf32>
    %cst_31 = arith.constant dense<0.000000e+00> : vector<32xf32>
    %40 = vector.multi_reduction <add>, %39, %cst_31 [1] : vector<32x32xf32> to vector<32xf32>
    %41 = vector.shape_cast %40 : vector<32xf32> to vector<32x1xf32>
    %cst_32 = arith.constant 3.200000e+01 : f32
    %42 = vector.broadcast %cst_32 : f32 to vector<32x1xf32>
    %43 = arith.divf %41, %42 : vector<32x1xf32>
    %44 = vector.broadcast %43 : vector<32x1xf32> to vector<32x32xf32>
    %45 = arith.subf %39, %44 : vector<32x32xf32>
    %46 = arith.mulf %45, %45 : vector<32x32xf32>
    %cst_33 = arith.constant dense<0.000000e+00> : vector<32xf32>
    %47 = vector.multi_reduction <add>, %46, %cst_33 [1] : vector<32x32xf32> to vector<32xf32>
    %48 = vector.shape_cast %47 : vector<32xf32> to vector<32x1xf32>
    %cst_34 = arith.constant 0.0322580636 : f32
    %49 = vector.broadcast %cst_34 : f32 to vector<32x1xf32>
    %50 = arith.mulf %48, %49 : vector<32x1xf32>
    %cst_35 = arith.constant 9.99999997E-7 : f32
    %51 = vector.broadcast %cst_35 : f32 to vector<32x1xf32>
    %52 = arith.addf %50, %51 : vector<32x1xf32>
    %53 = math.sqrt %52 : vector<32x1xf32>
    %cst_36 = arith.constant 9.99999997E-7 : f32
    %54 = vector.broadcast %cst_36 : f32 to vector<32x1xf32>
    %55 = arith.addf %53, %54 : vector<32x1xf32>
    %56 = tpu.reciprocal %55 {approx = true} : vector<32x1xf32> -> vector<32x1xf32>
    %c0_37 = arith.constant 0 : index
    %c0_38 = arith.constant 0 : index
    %57 = vector.load %arg14[%c0_37, %c0_38] : memref<1x32xf32, #tpu.memory_space<vmem>>, vector<1x32xf32>
    %58 = vector.broadcast %57 : vector<1x32xf32> to vector<32x32xf32>
    %59 = arith.mulf %58, %45 : vector<32x32xf32>
    %60 = vector.broadcast %56 : vector<32x1xf32> to vector<32x32xf32>
    %61 = arith.mulf %59, %60 : vector<32x32xf32>
    %c0_39 = arith.constant 0 : index
    %c0_40 = arith.constant 0 : index
    %62 = vector.load %arg15[%c0_39, %c0_40] : memref<1x32xf32, #tpu.memory_space<vmem>>, vector<1x32xf32>
    %63 = vector.broadcast %62 : vector<1x32xf32> to vector<32x32xf32>
    %64 = arith.addf %61, %63 : vector<32x32xf32>
    %c0_41 = arith.constant 0 : index
    %c0_42 = arith.constant 0 : index
    %65 = vector.load %arg5[%c0_41, %c0_42] : memref<32x1xf32, #tpu.memory_space<vmem>>, vector<32x1xf32>
    %66 = vector.broadcast %65 : vector<32x1xf32> to vector<32x32xf32>
    %67 = arith.mulf %64, %66 : vector<32x32xf32>
    %c0_43 = arith.constant 0 : index
    %c0_44 = arith.constant 0 : index
    %68 = vector.load %arg16[%c0_43, %c0_44] : memref<32x32xf32, #tpu.memory_space<vmem>>, vector<32x32xf32>
    tpu.vector_store %arg16[%c0_43, %c0_44], %67 {strides = array<i32>} : memref<32x32xf32, #tpu.memory_space<vmem>>, vector<32x32xf32>,
    return
  }
  func.func @transform_0(%arg0: i32) -> (i32, i32) {
    %c0_i32 = arith.constant 0 : i32
    %c0_i32_0 = arith.constant 0 : i32
    return %arg0, %c0_i32 : i32, i32
  }
  func.func @transform_1(%arg0: i32) -> (i32, i32) {
    %c0_i32 = arith.constant 0 : i32
    %c0_i32_0 = arith.constant 0 : i32
    return %arg0, %c0_i32 : i32, i32
  }
  func.func @transform_2(%arg0: i32) -> (i32, i32) {
    %c0_i32 = arith.constant 0 : i32
    %c0_i32_0 = arith.constant 0 : i32
    return %arg0, %c0_i32 : i32, i32
  }
  func.func @transform_3(%arg0: i32) -> (i32, i32) {
    %c0_i32 = arith.constant 0 : i32
    %c0_i32_0 = arith.constant 0 : i32
    return %arg0, %c0_i32 : i32, i32
  }
  func.func @transform_4(%arg0: i32) -> (i32, i32) {
    %c0_i32 = arith.constant 0 : i32
    %c0_i32_0 = arith.constant 0 : i32
    return %arg0, %c0_i32 : i32, i32
  }
  func.func @transform_5(%arg0: i32) -> (i32, i32) {
    %c0_i32 = arith.constant 0 : i32
    %c0_i32_0 = arith.constant 0 : i32
    %c0_i32_1 = arith.constant 0 : i32
    return %c0_i32, %c0_i32_0 : i32, i32
  }
  func.func @transform_6(%arg0: i32) -> (i32, i32) {
    %c0_i32 = arith.constant 0 : i32
    %c0_i32_0 = arith.constant 0 : i32
    %c0_i32_1 = arith.constant 0 : i32
    return %c0_i32, %c0_i32_0 : i32, i32
  }
  func.func @transform_7(%arg0: i32) -> (i32, i32) {
    %c0_i32 = arith.constant 0 : i32
    %c0_i32_0 = arith.constant 0 : i32
    %c0_i32_1 = arith.constant 0 : i32
    return %c0_i32, %c0_i32_0 : i32, i32
  }
  func.func @transform_8(%arg0: i32) -> (i32, i32) {
    %c0_i32 = arith.constant 0 : i32
    %c0_i32_0 = arith.constant 0 : i32
    %c0_i32_1 = arith.constant 0 : i32
    return %c0_i32, %c0_i32_0 : i32, i32
  }
  func.func @transform_9(%arg0: i32) -> (i32, i32) {
    %c0_i32 = arith.constant 0 : i32
    %c0_i32_0 = arith.constant 0 : i32
    %c0_i32_1 = arith.constant 0 : i32
    return %c0_i32, %c0_i32_0 : i32, i32
  }
  func.func @transform_10(%arg0: i32) -> (i32, i32) {
    %c0_i32 = arith.constant 0 : i32
    %c0_i32_0 = arith.constant 0 : i32
    %c0_i32_1 = arith.constant 0 : i32
    return %c0_i32, %c0_i32_0 : i32, i32
  }
  func.func @transform_11(%arg0: i32) -> (i32, i32) {
    %c0_i32 = arith.constant 0 : i32
    %c0_i32_0 = arith.constant 0 : i32
    %c0_i32_1 = arith.constant 0 : i32
    return %c0_i32, %c0_i32_0 : i32, i32
  }
  func.func @transform_12(%arg0: i32) -> (i32, i32) {
    %c0_i32 = arith.constant 0 : i32
    %c0_i32_0 = arith.constant 0 : i32
    %c0_i32_1 = arith.constant 0 : i32
    return %c0_i32, %c0_i32_0 : i32, i32
  }
  func.func @transform_13(%arg0: i32) -> (i32, i32) {
    %c0_i32 = arith.constant 0 : i32
    %c0_i32_0 = arith.constant 0 : i32
    %c0_i32_1 = arith.constant 0 : i32
    return %c0_i32, %c0_i32_0 : i32, i32
  }
  func.func @transform_14(%arg0: i32) -> (i32, i32) {
    %c0_i32 = arith.constant 0 : i32
    %c0_i32_0 = arith.constant 0 : i32
    %c0_i32_1 = arith.constant 0 : i32
    return %c0_i32, %c0_i32_0 : i32, i32
  }
  func.func @transform_15(%arg0: i32) -> (i32, i32) {
    %c0_i32 = arith.constant 0 : i32
    %c0_i32_0 = arith.constant 0 : i32
    return %arg0, %c0_i32 : i32, i32
  }
}

</mosaic_0001>

<llo_original>
// kernel: encoder_forward_pallas.4
$region0: #{encoder_forward_pallas.4}
  #allocation0 [shape = 'u32[]', space=smem, size = 0x4, offset = 0x4, fixed_abs, tag = 'smem constant byte address 0x4 - core index']
  #allocation1 [shape = 'u32[144,128]{1,0:T(1,128)}', space=vmem, size = 0x12000, scoped, tag = 'internal scratch']
  %s0 = inlined_call_operand.vmem [shape: f32[32,16], index: 0, kind: input, shape index: {}]
  %s1 = inlined_call_operand.vmem [shape: f32[16,32], index: 1, kind: input, shape index: {}]
  %s2 = inlined_call_operand.vmem [shape: f32[1,32], index: 2, kind: input, shape index: {}]
  %s3 = inlined_call_operand.vmem [shape: f32[1,32], index: 3, kind: input, shape index: {}]
  %s4 = inlined_call_operand.vmem [shape: f32[1,32], index: 4, kind: input, shape index: {}]
  %s5 = inlined_call_operand.vmem [shape: f32[32,32], index: 5, kind: output, shape index: {}]
  %s6 = sld [smem:[#allocation0]]
  $region30: #{encoder_forward_pallas.4} parent=0
    _
  %s8 = ssub.s32 1, %s6
  %s9 = scalar_select 0, %s8, %s6
  // Predicated region
  $region2: #{encoder_forward_pallas.4} parent=0 // pred_check
    _
  $region3: #{encoder_forward_pallas.4} parent=0 // pred_check_branch
    %11 = sbr.rel (0) target = $region5
  $region4: #{encoder_forward_pallas.4} parent=0 // pred_region
    _
  $region5: #{encoder_forward_pallas.4} parent=0 // pred_fallthru
    _
  // Predicated region
  $region6: #{encoder_forward_pallas.4} parent=0 // pred_check
    _
  $region7: #{encoder_forward_pallas.4} parent=0 // pred_check_branch
    %13 = sbr.rel (0) target = $region9
  $region8: #{encoder_forward_pallas.4} parent=0 // pred_region
    _
  $region9: #{encoder_forward_pallas.4} parent=0 // pred_fallthru
    _
  // Predicated region
  $region10: #{encoder_forward_pallas.4} parent=0 // pred_check
    _
  $region11: #{encoder_forward_pallas.4} parent=0 // pred_check_branch
    %15 = sbr.rel (0) target = $region13
  $region12: #{encoder_forward_pallas.4} parent=0 // pred_region
    _
  $region13: #{encoder_forward_pallas.4} parent=0 // pred_fallthru
    _
  // Predicated region
  $region14: #{encoder_forward_pallas.4} parent=0 // pred_check
    _
  $region15: #{encoder_forward_pallas.4} parent=0 // pred_check_branch
    %17 = sbr.rel (0) target = $region17
  $region16: #{encoder_forward_pallas.4} parent=0 // pred_region
    _
  $region17: #{encoder_forward_pallas.4} parent=0 // pred_fallthru
    _
  // Predicated region
  $region18: #{encoder_forward_pallas.4} parent=0 // pred_check
    _
  $region19: #{encoder_forward_pallas.4} parent=0 // pred_check_branch
    %19 = sbr.rel (0) target = $region21
  $region20: #{encoder_forward_pallas.4} parent=0 // pred_region
    _
  $region21: #{encoder_forward_pallas.4} parent=0 // pred_fallthru
    _
  %v20 = vld [vmem:[%s0] sm:$0xff]
  %v21 = vld [vmem:[%s0 + $0x8] sm:$0xff]
  %v22 = vld [vmem:[%s0 + $0x10] sm:$0xff]
  %v23 = vld [vmem:[%s0 + $0x18] sm:$0xff]
  %v24 = vld [vmem:[%s1] sm:$0xff]
  %v25 = vld [vmem:[%s1 + $0x8] sm:$0xff]
  %v26 = vld [vmem:[%s2] sm:$0x1]
  %v28 = vlaneseq
  %v29 = vshrl.u32 %v28, 7
  %v30 = vsub.s32 0, %v29
  %v31 = vrot.slane %v26, %v30
  %vm33 = vcmask 130048
  %v35 = vsel %vm33, %v20, 0
  %v38 = vsel %vm33, %v21, 0
  %v41 = vsel %vm33, %v22, 0
  %v44 = vsel %vm33, %v23, 0
  %46 = vmatprep.subr.mxu0 0.0
  %47 = vmatpush1.msra.mxu0 %v24
  %48 = vmatprep.subr.mxu0 0.0
  %49 = vmatpush1.msra.mxu0 %v25
  %50 = vmatprep.subr.mxu0 0.0
  %51 = vmatpush1.msra.mxu0 0.0
  %52 = vmatprep.subr.mxu0 0.0
  %53 = vmatpush1.msra.mxu0 0.0
  %54 = vmatprep.subr.mxu0 0.0
  %55 = vmatpush1.msra.mxu0 0.0
  %56 = vmatprep.subr.mxu0 0.0
  %57 = vmatpush1.msra.mxu0 0.0
  %58 = vmatprep.subr.mxu0 0.0
  %59 = vmatpush1.msra.mxu0 0.0
  %60 = vmatprep.subr.mxu0 0.0
  %61 = vmatpush1.msra.mxu0 0.0
  %62 = vmatprep.subr.mxu0 0.0
  %63 = vmatpush1.msra.mxu0 0.0
  %64 = vmatprep.subr.mxu0 0.0
  %65 = vmatpush1.msra.mxu0 0.0
  %66 = vmatprep.subr.mxu0 0.0
  %67 = vmatpush1.msra.mxu0 0.0
  %68 = vmatprep.subr.mxu0 0.0
  %69 = vmatpush1.msra.mxu0 0.0
  %70 = vmatprep.subr.mxu0 0.0
  %71 = vmatpush1.msra.mxu0 0.0
  %72 = vmatprep.subr.mxu0 0.0
  %73 = vmatpush1.msra.mxu0 0.0
  %74 = vmatprep.subr.mxu0 0.0
  %75 = vmatpush1.msra.mxu0 0.0
  %76 = vmatprep.subr.mxu0 0.0
  %77 = vmatpush1.msra.mxu0 0.0
  %78 = vmatprep.subr.mxu0 0.0
  %79 = vmatpush1.msra.mxu0 0.0
  %80 = vmatprep.subr.mxu0 0.0
  %81 = vmatpush1.msra.mxu0 0.0
  %82 = vmatprep.subr.mxu0 0.0
  %83 = vmatpush1.msra.mxu0 0.0
  %84 = vmatprep.subr.mxu0 0.0
  %85 = vmatpush1.msra.mxu0 0.0
  %86 = vmatprep.subr.mxu0 0.0
  %87 = vmatpush1.msra.mxu0 0.0
  %88 = vmatprep.subr.mxu0 0.0
  %89 = vmatpush1.msra.mxu0 0.0
  %90 = vmatprep.subr.mxu0 0.0
  %91 = vmatpush1.msra.mxu0 0.0
  %92 = vmatprep.subr.mxu0 0.0
  %93 = vmatpush1.msra.mxu0 0.0
  %94 = vmatprep.subr.mxu0 0.0
  %95 = vmatpush1.msra.mxu0 0.0
  %96 = vmatprep.subr.mxu0 0.0
  %97 = vmatpush1.msra.mxu0 0.0
  %98 = vmatprep.subr.mxu0 0.0
  %99 = vmatpush1.msra.mxu0 0.0
  %100 = vmatprep.subr.mxu0 0.0
  %101 = vmatpush1.msra.mxu0 0.0
  %102 = vmatprep.subr.mxu0 0.0
  %103 = vmatpush1.msra.mxu0 0.0
  %104 = vmatprep.subr.mxu0 0.0
  %105 = vmatpush1.msra.mxu0 0.0
  %106 = vmatprep.subr.mxu0 0.0
  %107 = vmatpush1.msra.mxu0 0.0
  %108 = vmatprep.subr.mxu0 0.0
  %109 = vmatpush1.msra.mxu0 0.0
  %110 = vmatprep.mubr.f32.mxu0 0.0
  %111 = vmatmul.mubr.f32.gmra.mrb[0].mxu0 %v35
  %v112 = vpop.f32.mrb[0].mxu0
  %v113 = vadd.f32 %v31, %v112
  %v114 = vpop.f32.mrb[0].mxu0
  %115 = vmatprep.mubr.f32.mxu0 0.0
  %116 = vmatmul.mubr.f32.gmra.mrb[0].mxu0 %v38
  %v117 = vpop.f32.mrb[0].mxu0
  %v118 = vadd.f32 %v31, %v117
  %v119 = vpop.f32.mrb[0].mxu0
  %120 = vmatprep.mubr.f32.mxu0 0.0
  %121 = vmatmul.mubr.f32.gmra.mrb[0].mxu0 %v41
  %v122 = vpop.f32.mrb[0].mxu0
  %v123 = vadd.f32 %v31, %v122
  %v124 = vpop.f32.mrb[0].mxu0
  %125 = vmatprep.mubr.f32.mxu0 0.0
  %126 = vmatmul.mubr.f32.gmra.mrb[0].mxu0 %v44
  %v127 = vpop.f32.mrb[0].mxu0
  %v128 = vadd.f32 %v31, %v127
  %v129 = vpop.f32.mrb[0].mxu0
  %130 = vdwg.mxu0
  %vm131 = vcmask 261120
  %v132 = vsel %vm131, %v113, 0.0
  %133 = vadd.xlane.f32.xlu0 %v132
  %v134 = vpop.xlane.xlu0 %133
  %v135 = vsel %vm131, %v118, 0.0
  %136 = vadd.xlane.f32.xlu0 %v135
  %v137 = vpop.xlane.xlu0 %136
  %v138 = vsel %vm131, %v123, 0.0
  %139 = vadd.xlane.f32.xlu0 %v138
  %v140 = vpop.xlane.xlu0 %139
  %v141 = vsel %vm131, %v128, 0.0
  %142 = vadd.xlane.f32.xlu0 %v141
  %v143 = vpop.xlane.xlu0 %142
  %v144 = vrcp.pop 32.0
  %v145 = vmul.f32 %v134, %v144
  %v146 = vmul.f32 %v137, %v144
  %v147 = vmul.f32 %v140, %v144
  %v148 = vmul.f32 %v143, %v144
  %v149 = vsub.f32 %v113, %v145
  %v150 = vsub.f32 %v118, %v146
  %v151 = vsub.f32 %v123, %v147
  %v152 = vsub.f32 %v128, %v148
  %v153 = vmul.f32 %v149, %v149
  %v154 = vmul.f32 %v150, %v150
  %v155 = vmul.f32 %v151, %v151
  %v156 = vmul.f32 %v152, %v152
  %v157 = vsel %vm131, %v153, 0.0
  %158 = vadd.xlane.f32.xlu0 %v157
  %v159 = vpop.xlane.xlu0 %158
  %v160 = vsel %vm131, %v154, 0.0
  %161 = vadd.xlane.f32.xlu0 %v160
  %v162 = vpop.xlane.xlu0 %161
  %v163 = vsel %vm131, %v155, 0.0
  %164 = vadd.xlane.f32.xlu0 %v163
  %v165 = vpop.xlane.xlu0 %164
  %v166 = vsel %vm131, %v156, 0.0
  %167 = vadd.xlane.f32.xlu0 %v166
  %v168 = vpop.xlane.xlu0 %167
  %v169 = vmul.f32 %v159, 0.032258064
  %v170 = vmul.f32 %v162, 0.032258064
  %v171 = vmul.f32 %v165, 0.032258064
  %v172 = vmul.f32 %v168, 0.032258064
  %v173 = vadd.f32 %v169, 1e-06
  %v174 = vadd.f32 %v170, 1e-06
  %v175 = vadd.f32 %v171, 1e-06
  %v176 = vadd.f32 %v172, 1e-06
  %v177 = vrsqrt.pop %v173
  %v178 = vmul.f32 %v173, %v177
  %vm179 = vcmp.eq.f32.partialorder %v173, inf
  %v180 = vsel %vm179, %v173, %v178
  %vm181 = vcmp.eq.f32.partialorder %v173, 0.0
  %v182 = vand.u32 %v173, 2147483648
  %v183 = vsel %vm181, %v182, %v180
  %v184 = vrsqrt.pop %v174
  %v185 = vmul.f32 %v174, %v184
  %vm186 = vcmp.eq.f32.partialorder %v174, inf
  %v187 = vsel %vm186, %v174, %v185
  %vm188 = vcmp.eq.f32.partialorder %v174, 0.0
  %v189 = vand.u32 %v174, 2147483648
  %v190 = vsel %vm188, %v189, %v187
  %v191 = vrsqrt.pop %v175
  %v192 = vmul.f32 %v175, %v191
  %vm193 = vcmp.eq.f32.partialorder %v175, inf
  %v194 = vsel %vm193, %v175, %v192
  %vm195 = vcmp.eq.f32.partialorder %v175, 0.0
  %v196 = vand.u32 %v175, 2147483648
  %v197 = vsel %vm195, %v196, %v194
  %v198 = vrsqrt.pop %v176
  %v199 = vmul.f32 %v176, %v198
  %vm200 = vcmp.eq.f32.partialorder %v176, inf
  %v201 = vsel %vm200, %v176, %v199
  %vm202 = vcmp.eq.f32.partialorder %v176, 0.0
  %v203 = vand.u32 %v176, 2147483648
  %v204 = vsel %vm202, %v203, %v201
  %v205 = vadd.f32 %v183, 1e-06
  %v206 = vadd.f32 %v190, 1e-06
  %v207 = vadd.f32 %v197, 1e-06
  %v208 = vadd.f32 %v204, 1e-06
  %v209 = vrcp.pop %v205
  %v210 = vrcp.pop %v206
  %v211 = vrcp.pop %v207
  %v212 = vrcp.pop %v208
  %v213 = vld [vmem:[%s3] sm:$0x1]
  %v215 = vlaneseq
  %v216 = vshrl.u32 %v215, 7
  %v217 = vsub.s32 0, %v216
  %v218 = vrot.slane %v213, %v217
  %v220 = vmul.f32 %v218, %v149
  %v221 = vmul.f32 %v218, %v150
  %v222 = vmul.f32 %v218, %v151
  %v223 = vmul.f32 %v218, %v152
  %v224 = vmul.f32 %v220, %v209
  %v225 = vmul.f32 %v221, %v210
  %v226 = vmul.f32 %v222, %v211
  %v227 = vmul.f32 %v223, %v212
  %v228 = vld [vmem:[%s4] sm:$0x1]
  %v230 = vlaneseq
  %v231 = vshrl.u32 %v230, 7
  %v232 = vsub.s32 0, %v231
  %v233 = vrot.slane %v228, %v232
  %v235 = vadd.f32 %v224, %v233
  %v236 = vadd.f32 %v225, %v233
  %v237 = vadd.f32 %v226, %v233
  %v238 = vadd.f32 %v227, %v233
  %239 = vst.msk [vmem:[%s5] sm:$0xff] %vm131, %v235
  %240 = vst.msk [vmem:[%s5 + $0x8] sm:$0xff] %vm131, %v236
  %241 = vst.msk [vmem:[%s5 + $0x10] sm:$0xff] %vm131, %v237
  %242 = vst.msk [vmem:[%s5 + $0x18] sm:$0xff] %vm131, %v238
  // Predicated region
  $region22: #{encoder_forward_pallas.4} parent=0 // pred_check
    _
  $region23: #{encoder_forward_pallas.4} parent=0 // pred_check_branch
    %244 = sbr.rel (0) target = $region25
  $region24: #{encoder_forward_pallas.4} parent=0 // pred_region
    _
  $region25: #{encoder_forward_pallas.4} parent=0 // pred_fallthru
    _
  // Predicated region
  $region26: #{encoder_forward_pallas.4} parent=0 // pred_check
    _
  $region27: #{encoder_forward_pallas.4} parent=0 // pred_check_branch
    %246 = sbr.rel (0) target = $region29
  $region28: #{encoder_forward_pallas.4} parent=0 // pred_region
    _
  $region29: #{encoder_forward_pallas.4} parent=0 // pred_fallthru
    _

// kernel: encoder_forward_pallas.5
$region0: #{encoder_forward_pallas.5}
  #allocation0 [shape = 'u32[]', space=smem, size = 0x4, offset = 0x4, fixed_abs, tag = 'smem constant byte address 0x4 - core index']
  #allocation1 [shape = 'u32[144,128]{1,0:T(1,128)}', space=vmem, size = 0x12000, scoped, tag = 'internal scratch']
  %s0 = inlined_call_operand.vmem [shape: f32[256,16], index: 0, kind: input, shape index: {}]
  %s1 = inlined_call_operand.vmem [shape: f32[16,32], index: 1, kind: input, shape index: {}]
  %s2 = inlined_call_operand.vmem [shape: f32[1,32], index: 2, kind: input, shape index: {}]
  %s3 = inlined_call_operand.vmem [shape: f32[1,32], index: 3, kind: input, shape index: {}]
  %s4 = inlined_call_operand.vmem [shape: f32[1,32], index: 4, kind: input, shape index: {}]
  %s5 = inlined_call_operand.vmem [shape: f32[256,32], index: 5, kind: output, shape index: {}]
  %s6 = sld [smem:[#allocation0]]
  $region30: #{encoder_forward_pallas.5} parent=0
    _
  %s8 = ssub.s32 1, %s6
  %s9 = scalar_select 0, %s8, %s6
  // Predicated region
  $region2: #{encoder_forward_pallas.5} parent=0 // pred_check
    _
  $region3: #{encoder_forward_pallas.5} parent=0 // pred_check_branch
    %11 = sbr.rel (0) target = $region5
  $region4: #{encoder_forward_pallas.5} parent=0 // pred_region
    _
  $region5: #{encoder_forward_pallas.5} parent=0 // pred_fallthru
    _
  // Predicated region
  $region6: #{encoder_forward_pallas.5} parent=0 // pred_check
    _
  $region7: #{encoder_forward_pallas.5} parent=0 // pred_check_branch
    %13 = sbr.rel (0) target = $region9
  $region8: #{encoder_forward_pallas.5} parent=0 // pred_region
    _
  $region9: #{encoder_forward_pallas.5} parent=0 // pred_fallthru
    _
  // Predicated region
  $region10: #{encoder_forward_pallas.5} parent=0 // pred_check
    _
  $region11: #{encoder_forward_pallas.5} parent=0 // pred_check_branch
    %15 = sbr.rel (0) target = $region13
  $region12: #{encoder_forward_pallas.5} parent=0 // pred_region
    _
  $region13: #{encoder_forward_pallas.5} parent=0 // pred_fallthru
    _
  // Predicated region
  $region14: #{encoder_forward_pallas.5} parent=0 // pred_check
    _
  $region15: #{encoder_forward_pallas.5} parent=0 // pred_check_branch
    %17 = sbr.rel (0) target = $region17
  $region16: #{encoder_forward_pallas.5} parent=0 // pred_region
    _
  $region17: #{encoder_forward_pallas.5} parent=0 // pred_fallthru
    _
  // Predicated region
  $region18: #{encoder_forward_pallas.5} parent=0 // pred_check
    _
  $region19: #{encoder_forward_pallas.5} parent=0 // pred_check_branch
    %19 = sbr.rel (0) target = $region21
  $region20: #{encoder_forward_pallas.5} parent=0 // pred_region
    _
  $region21: #{encoder_forward_pallas.5} parent=0 // pred_fallthru
    _
  %v20 = vld [vmem:[%s0] sm:$0xff]
  %v21 = vld [vmem:[%s0 + $0x8] sm:$0xff]
  %v22 = vld [vmem:[%s0 + $0x10] sm:$0xff]
  %v23 = vld [vmem:[%s0 + $0x18] sm:$0xff]
  %v24 = vld [vmem:[%s0 + $0x20] sm:$0xff]
  %v25 = vld [vmem:[%s0 + $0x28] sm:$0xff]
  %v26 = vld [vmem:[%s0 + $0x30] sm:$0xff]
  %v27 = vld [vmem:[%s0 + $0x38] sm:$0xff]
  %v28 = vld [vmem:[%s0 + $0x40] sm:$0xff]
  %v29 = vld [vmem:[%s0 + $0x48] sm:$0xff]
  %v30 = vld [vmem:[%s0 + $0x50] sm:$0xff]
  %v31 = vld [vmem:[%s0 + $0x58] sm:$0xff]
  %v32 = vld [vmem:[%s0 + $0x60] sm:$0xff]
  %v33 = vld [vmem:[%s0 + $0x68] sm:$0xff]
  %v34 = vld [vmem:[%s0 + $0x70] sm:$0xff]
  %v35 = vld [vmem:[%s0 + $0x78] sm:$0xff]
  %v36 = vld [vmem:[%s0 + $0x80] sm:$0xff]
  %v37 = vld [vmem:[%s0 + $0x88] sm:$0xff]
  %v38 = vld [vmem:[%s0 + $0x90] sm:$0xff]
  %v39 = vld [vmem:[%s0 + $0x98] sm:$0xff]
  %v40 = vld [vmem:[%s0 + $0xa0] sm:$0xff]
  %v41 = vld [vmem:[%s0 + $0xa8] sm:$0xff]
  %v42 = vld [vmem:[%s0 + $0xb0] sm:$0xff]
  %v43 = vld [vmem:[%s0 + $0xb8] sm:$0xff]
  %v44 = vld [vmem:[%s0 + $0xc0] sm:$0xff]
  %v45 = vld [vmem:[%s0 + $0xc8] sm:$0xff]
  %v46 = vld [vmem:[%s0 + $0xd0] sm:$0xff]
  %v47 = vld [vmem:[%s0 + $0xd8] sm:$0xff]
  %v48 = vld [vmem:[%s0 + $0xe0] sm:$0xff]
  %v49 = vld [vmem:[%s0 + $0xe8] sm:$0xff]
  %v50 = vld [vmem:[%s0 + $0xf0] sm:$0xff]
  %v51 = vld [vmem:[%s0 + $0xf8] sm:$0xff]
  %v52 = vld [vmem:[%s1] sm:$0xff]
  %v53 = vld [vmem:[%s1 + $0x8] sm:$0xff]
  %v54 = vld [vmem:[%s2] sm:$0x1]
  %v56 = vlaneseq
  %v57 = vshrl.u32 %v56, 7
  %v58 = vsub.s32 0, %v57
  %v59 = vrot.slane %v54, %v58
  %vm61 = vcmask 130048
  %v63 = vsel %vm61, %v20, 0
  %v66 = vsel %vm61, %v21, 0
  %v69 = vsel %vm61, %v22, 0
  %v72 = vsel %vm61, %v23, 0
  %v75 = vsel %vm61, %v24, 0
  %v78 = vsel %vm61, %v25, 0
  %v81 = vsel %vm61, %v26, 0
  %v84 = vsel %vm61, %v27, 0
  %v87 = vsel %vm61, %v28, 0
  %v90 = vsel %vm61, %v29, 0
  %v93 = vsel %vm61, %v30, 0
  %v96 = vsel %vm61, %v31, 0
  %v99 = vsel %vm61, %v32, 0
  %v102 = vsel %vm61, %v33, 0
  %v105 = vsel %vm61, %v34, 0
  %v108 = vsel %vm61, %v35, 0
  %v111 = vsel %vm61, %v36, 0
  %v114 = vsel %vm61, %v37, 0
  %v117 = vsel %vm61, %v38, 0
  %v120 = vsel %vm61, %v39, 0
  %v123 = vsel %vm61, %v40, 0
  %v126 = vsel %vm61, %v41, 0
  %v129 = vsel %vm61, %v42, 0
  %v132 = vsel %vm61, %v43, 0
  %v135 = vsel %vm61, %v44, 0
  %v138 = vsel %vm61, %v45, 0
  %v141 = vsel %vm61, %v46, 0
  %v144 = vsel %vm61, %v47, 0
  %v147 = vsel %vm61, %v48, 0
  %v150 = vsel %vm61, %v49, 0
  %v153 = vsel %vm61, %v50, 0
  %v156 = vsel %vm61, %v51, 0
  %158 = vmatprep.subr.mxu0 0.0
  %159 = vmatpush1.msra.mxu0 %v52
  %160 = vmatprep.subr.mxu0 0.0
  %161 = vmatpush1.msra.mxu0 %v53
  %162 = vmatprep.subr.mxu0 0.0
  %163 = vmatpush1.msra.mxu0 0.0
  %164 = vmatprep.subr.mxu0 0.0
  %165 = vmatpush1.msra.mxu0 0.0
  %166 = vmatprep.subr.mxu0 0.0
  %167 = vmatpush1.msra.mxu0 0.0
  %168 = vmatprep.subr.mxu0 0.0
  %169 = vmatpush1.msra.mxu0 0.0
  %170 = vmatprep.subr.mxu0 0.0
  %171 = vmatpush1.msra.mxu0 0.0
  %172 = vmatprep.subr.mxu0 0.0
  %173 = vmatpush1.msra.mxu0 0.0
  %174 = vmatprep.subr.mxu0 0.0
  %175 = vmatpush1.msra.mxu0 0.0
  %176 = vmatprep.subr.mxu0 0.0
  %177 = vmatpush1.msra.mxu0 0.0
  %178 = vmatprep.subr.mxu0 0.0
  %179 = vmatpush1.msra.mxu0 0.0
  %180 = vmatprep.subr.mxu0 0.0
  %181 = vmatpush1.msra.mxu0 0.0
  %182 = vmatprep.subr.mxu0 0.0
  %183 = vmatpush1.msra.mxu0 0.0
  %184 = vmatprep.subr.mxu0 0.0
  %185 = vmatpush1.msra.mxu0 0.0
  %186 = vmatprep.subr.mxu0 0.0
  %187 = vmatpush1.msra.mxu0 0.0
  %188 = vmatprep.subr.mxu0 0.0
  %189 = vmatpush1.msra.mxu0 0.0
  %190 = vmatprep.subr.mxu0 0.0
  %191 = vmatpush1.msra.mxu0 0.0
  %192 = vmatprep.subr.mxu0 0.0
  %193 = vmatpush1.msra.mxu0 0.0
  %194 = vmatprep.subr.mxu0 0.0
  %195 = vmatpush1.msra.mxu0 0.0
  %196 = vmatprep.subr.mxu0 0.0
  %197 = vmatpush1.msra.mxu0 0.0
  %198 = vmatprep.subr.mxu0 0.0
  %199 = vmatpush1.msra.mxu0 0.0
  %200 = vmatprep.subr.mxu0 0.0
  %201 = vmatpush1.msra.mxu0 0.0
  %202 = vmatprep.subr.mxu0 0.0
  %203 = vmatpush1.msra.mxu0 0.0
  %204 = vmatprep.subr.mxu0 0.0
  %205 = vmatpush1.msra.mxu0 0.0
  %206 = vmatprep.subr.mxu0 0.0
  %207 = vmatpush1.msra.mxu0 0.0
  %208 = vmatprep.subr.mxu0 0.0
  %209 = vmatpush1.msra.mxu0 0.0
  %210 = vmatprep.subr.mxu0 0.0
  %211 = vmatpush1.msra.mxu0 0.0
  %212 = vmatprep.subr.mxu0 0.0
  %213 = vmatpush1.msra.mxu0 0.0
  %214 = vmatprep.subr.mxu0 0.0
  %215 = vmatpush1.msra.mxu0 0.0
  %216 = vmatprep.subr.mxu0 0.0
  %217 = vmatpush1.msra.mxu0 0.0
  %218 = vmatprep.subr.mxu0 0.0
  %219 = vmatpush1.msra.mxu0 0.0
  %220 = vmatprep.subr.mxu0 0.0
  %221 = vmatpush1.msra.mxu0 0.0
  %222 = vmatprep.mubr.f32.mxu0 0.0
  %223 = vmatmul.mubr.f32.gmra.mrb[0].mxu0 %v63
  %v224 = vpop.f32.mrb[0].mxu0
  %v225 = vadd.f32 %v59, %v224
  %v226 = vpop.f32.mrb[0].mxu0
  %227 = vmatprep.mubr.f32.mxu0 0.0
  %228 = vmatmul.mubr.f32.gmra.mrb[0].mxu0 %v66
  %v229 = vpop.f32.mrb[0].mxu0
  %v230 = vadd.f32 %v59, %v229
  %v231 = vpop.f32.mrb[0].mxu0
  %232 = vmatprep.mubr.f32.mxu0 0.0
  %233 = vmatmul.mubr.f32.gmra.mrb[0].mxu0 %v69
  %v234 = vpop.f32.mrb[0].mxu0
  %v235 = vadd.f32 %v59, %v234
  %v236 = vpop.f32.mrb[0].mxu0
  %237 = vmatprep.mubr.f32.mxu0 0.0
  %238 = vmatmul.mubr.f32.gmra.mrb[0].mxu0 %v72
  %v239 = vpop.f32.mrb[0].mxu0
  %v240 = vadd.f32 %v59, %v239
  %v241 = vpop.f32.mrb[0].mxu0
  %242 = vmatprep.mubr.f32.mxu0 0.0
  %243 = vmatmul.mubr.f32.gmra.mrb[0].mxu0 %v75
  %v244 = vpop.f32.mrb[0].mxu0
  %v245 = vadd.f32 %v59, %v244
  %v246 = vpop.f32.mrb[0].mxu0
  %247 = vmatprep.mubr.f32.mxu0 0.0
  %248 = vmatmul.mubr.f32.gmra.mrb[0].mxu0 %v78
  %v249 = vpop.f32.mrb[0].mxu0
  %v250 = vadd.f32 %v59, %v249
  %v251 = vpop.f32.mrb[0].mxu0
  %252 = vmatprep.mubr.f32.mxu0 0.0
  %253 = vmatmul.mubr.f32.gmra.mrb[0].mxu0 %v81
  %v254 = vpop.f32.mrb[0].mxu0
  %v255 = vadd.f32 %v59, %v254
  %v256 = vpop.f32.mrb[0].mxu0
  %257 = vmatprep.mubr.f32.mxu0 0.0
  %258 = vmatmul.mubr.f32.gmra.mrb[0].mxu0 %v84
  %v259 = vpop.f32.mrb[0].mxu0
  %v260 = vadd.f32 %v59, %v259
  %v261 = vpop.f32.mrb[0].mxu0
  %262 = vmatprep.mubr.f32.mxu0 0.0
  %263 = vmatmul.mubr.f32.gmra.mrb[0].mxu0 %v87
  %v264 = vpop.f32.mrb[0].mxu0
  %v265 = vadd.f32 %v59, %v264
  %v266 = vpop.f32.mrb[0].mxu0
  %267 = vmatprep.mubr.f32.mxu0 0.0
  %268 = vmatmul.mubr.f32.gmra.mrb[0].mxu0 %v90
  %v269 = vpop.f32.mrb[0].mxu0
  %v270 = vadd.f32 %v59, %v269
  %v271 = vpop.f32.mrb[0].mxu0
  %272 = vmatprep.mubr.f32.mxu0 0.0
  %273 = vmatmul.mubr.f32.gmra.mrb[0].mxu0 %v93
  %v274 = vpop.f32.mrb[0].mxu0
  %v275 = vadd.f32 %v59, %v274
  %v276 = vpop.f32.mrb[0].mxu0
  %277 = vmatprep.mubr.f32.mxu0 0.0
  %278 = vmatmul.mubr.f32.gmra.mrb[0].mxu0 %v96
  %v279 = vpop.f32.mrb[0].mxu0
  %v280 = vadd.f32 %v59, %v279
  %v281 = vpop.f32.mrb[0].mxu0
  %282 = vmatprep.mubr.f32.mxu0 0.0
  %283 = vmatmul.mubr.f32.gmra.mrb[0].mxu0 %v99
  %v284 = vpop.f32.mrb[0].mxu0
  %v285 = vadd.f32 %v59, %v284
  %v286 = vpop.f32.mrb[0].mxu0
  %287 = vmatprep.mubr.f32.mxu0 0.0
  %288 = vmatmul.mubr.f32.gmra.mrb[0].mxu0 %v102
  %v289 = vpop.f32.mrb[0].mxu0
  %v290 = vadd.f32 %v59, %v289
  %v291 = vpop.f32.mrb[0].mxu0
  %292 = vmatprep.mubr.f32.mxu0 0.0
  %293 = vmatmul.mubr.f32.gmra.mrb[0].mxu0 %v105
  %v294 = vpop.f32.mrb[0].mxu0
  %v295 = vadd.f32 %v59, %v294
  %v296 = vpop.f32.mrb[0].mxu0
  %297 = vmatprep.mubr.f32.mxu0 0.0
  %298 = vmatmul.mubr.f32.gmra.mrb[0].mxu0 %v108
  %v299 = vpop.f32.mrb[0].mxu0
  %v300 = vadd.f32 %v59, %v299
  %v301 = vpop.f32.mrb[0].mxu0
  %302 = vmatprep.mubr.f32.mxu0 0.0
  %303 = vmatmul.mubr.f32.gmra.mrb[0].mxu0 %v111
  %v304 = vpop.f32.mrb[0].mxu0
  %v305 = vadd.f32 %v59, %v304
  %v306 = vpop.f32.mrb[0].mxu0
  %307 = vmatprep.mubr.f32.mxu0 0.0
  %308 = vmatmul.mubr.f32.gmra.mrb[0].mxu0 %v114
  %v309 = vpop.f32.mrb[0].mxu0
  %v310 = vadd.f32 %v59, %v309
  %v311 = vpop.f32.mrb[0].mxu0
  %312 = vmatprep.mubr.f32.mxu0 0.0
  %313 = vmatmul.mubr.f32.gmra.mrb[0].mxu0 %v117
  %v314 = vpop.f32.mrb[0].mxu0
  %v315 = vadd.f32 %v59, %v314
  %v316 = vpop.f32.mrb[0].mxu0
  %317 = vmatprep.mubr.f32.mxu0 0.0
  %318 = vmatmul.mubr.f32.gmra.mrb[0].mxu0 %v120
  %v319 = vpop.f32.mrb[0].mxu0
  %v320 = vadd.f32 %v59, %v319
  %v321 = vpop.f32.mrb[0].mxu0
  %322 = vmatprep.mubr.f32.mxu0 0.0
  %323 = vmatmul.mubr.f32.gmra.mrb[0].mxu0 %v123
  %v324 = vpop.f32.mrb[0].mxu0
  %v325 = vadd.f32 %v59, %v324
  %v326 = vpop.f32.mrb[0].mxu0
  %327 = vmatprep.mubr.f32.mxu0 0.0
  %328 = vmatmul.mubr.f32.gmra.mrb[0].mxu0 %v126
  %v329 = vpop.f32.mrb[0].mxu0
  %v330 = vadd.f32 %v59, %v329
  %v331 = vpop.f32.mrb[0].mxu0
  %332 = vmatprep.mubr.f32.mxu0 0.0
  %333 = vmatmul.mubr.f32.gmra.mrb[0].mxu0 %v129
  %v334 = vpop.f32.mrb[0].mxu0
  %v335 = vadd.f32 %v59, %v334
  %v336 = vpop.f32.mrb[0].mxu0
  %337 = vmatprep.mubr.f32.mxu0 0.0
  %338 = vmatmul.mubr.f32.gmra.mrb[0].mxu0 %v132
  %v339 = vpop.f32.mrb[0].mxu0
  %v340 = vadd.f32 %v59, %v339
  %v341 = vpop.f32.mrb[0].mxu0
  %342 = vmatprep.mubr.f32.mxu0 0.0
  %343 = vmatmul.mubr.f32.gmra.mrb[0].mxu0 %v135
  %v344 = vpop.f32.mrb[0].mxu0
  %v345 = vadd.f32 %v59, %v344
  %v346 = vpop.f32.mrb[0].mxu0
  %347 = vmatprep.mubr.f32.mxu0 0.0
  %348 = vmatmul.mubr.f32.gmra.mrb[0].mxu0 %v138
  %v349 = vpop.f32.mrb[0].mxu0
  %v350 = vadd.f32 %v59, %v349
  %v351 = vpop.f32.mrb[0].mxu0
  %352 = vmatprep.mubr.f32.mxu0 0.0
  %353 = vmatmul.mubr.f32.gmra.mrb[0].mxu0 %v141
  %v354 = vpop.f32.mrb[0].mxu0
  %v355 = vadd.f32 %v59, %v354
  %v356 = vpop.f32.mrb[0].mxu0
  %357 = vmatprep.mubr.f32.mxu0 0.0
  %358 = vmatmul.mubr.f32.gmra.mrb[0].mxu0 %v144
  %v359 = vpop.f32.mrb[0].mxu0
  %v360 = vadd.f32 %v59, %v359
  %v361 = vpop.f32.mrb[0].mxu0
  %362 = vmatprep.mubr.f32.mxu0 0.0
  %363 = vmatmul.mubr.f32.gmra.mrb[0].mxu0 %v147
  %v364 = vpop.f32.mrb[0].mxu0
  %v365 = vadd.f32 %v59, %v364
  %v366 = vpop.f32.mrb[0].mxu0
  %367 = vmatprep.mubr.f32.mxu0 0.0
  %368 = vmatmul.mubr.f32.gmra.mrb[0].mxu0 %v150
  %v369 = vpop.f32.mrb[0].mxu0
  %v370 = vadd.f32 %v59, %v369
  %v371 = vpop.f32.mrb[0].mxu0
  %372 = vmatprep.mubr.f32.mxu0 0.0
  %373 = vmatmul.mubr.f32.gmra.mrb[0].mxu0 %v153
  %v374 = vpop.f32.mrb[0].mxu0
  %v375 = vadd.f32 %v59, %v374
  %v376 = vpop.f32.mrb[0].mxu0
  %377 = vmatprep.mubr.f32.mxu0 0.0
  %378 = vmatmul.mubr.f32.gmra.mrb[0].mxu0 %v156
  %v379 = vpop.f32.mrb[0].mxu0
  %v380 = vadd.f32 %v59, %v379
  %v381 = vpop.f32.mrb[0].mxu0
  %382 = vdwg.mxu0
  %vm383 = vcmask 261120
  %v384 = vsel %vm383, %v225, 0.0
  %385 = vadd.xlane.f32.xlu0 %v384
  %v386 = vpop.xlane.xlu0 %385
  %v387 = vsel %vm383, %v230, 0.0
  %388 = vadd.xlane.f32.xlu0 %v387
  %v389 = vpop.xlane.xlu0 %388
  %v390 = vsel %vm383, %v235, 0.0
  %391 = vadd.xlane.f32.xlu0 %v390
  %v392 = vpop.xlane.xlu0 %391
  %v393 = vsel %vm383, %v240, 0.0
  %394 = vadd.xlane.f32.xlu0 %v393
  %v395 = vpop.xlane.xlu0 %394
  %v396 = vsel %vm383, %v245, 0.0
  %397 = vadd.xlane.f32.xlu0 %v396
  %v398 = vpop.xlane.xlu0 %397
  %v399 = vsel %vm383, %v250, 0.0
  %400 = vadd.xlane.f32.xlu0 %v399
  %v401 = vpop.xlane.xlu0 %400
  %v402 = vsel %vm383, %v255, 0.0
  %403 = vadd.xlane.f32.xlu0 %v402
  %v404 = vpop.xlane.xlu0 %403
  %v405 = vsel %vm383, %v260, 0.0
  %406 = vadd.xlane.f32.xlu0 %v405
  %v407 = vpop.xlane.xlu0 %406
  %v408 = vsel %vm383, %v265, 0.0
  %409 = vadd.xlane.f32.xlu0 %v408
  %v410 = vpop.xlane.xlu0 %409
  %v411 = vsel %vm383, %v270, 0.0
  %412 = vadd.xlane.f32.xlu0 %v411
  %v413 = vpop.xlane.xlu0 %412
  %v414 = vsel %vm383, %v275, 0.0
  %415 = vadd.xlane.f32.xlu0 %v414
  %v416 = vpop.xlane.xlu0 %415
  %v417 = vsel %vm383, %v280, 0.0
  %418 = vadd.xlane.f32.xlu0 %v417
  %v419 = vpop.xlane.xlu0 %418
  %v420 = vsel %vm383, %v285, 0.0
  %421 = vadd.xlane.f32.xlu0 %v420
  %v422 = vpop.xlane.xlu0 %421
  %v423 = vsel %vm383, %v290, 0.0
  %424 = vadd.xlane.f32.xlu0 %v423
  %v425 = vpop.xlane.xlu0 %424
  %v426 = vsel %vm383, %v295, 0.0
  %427 = vadd.xlane.f32.xlu0 %v426
  %v428 = vpop.xlane.xlu0 %427
  %v429 = vsel %vm383, %v300, 0.0
  %430 = vadd.xlane.f32.xlu0 %v429
  %v431 = vpop.xlane.xlu0 %430
  %v432 = vsel %vm383, %v305, 0.0
  %433 = vadd.xlane.f32.xlu0 %v432
  %v434 = vpop.xlane.xlu0 %433
  %v435 = vsel %vm383, %v310, 0.0
  %436 = vadd.xlane.f32.xlu0 %v435
  %v437 = vpop.xlane.xlu0 %436
  %v438 = vsel %vm383, %v315, 0.0
  %439 = vadd.xlane.f32.xlu0 %v438
  %v440 = vpop.xlane.xlu0 %439
  %v441 = vsel %vm383, %v320, 0.0
  %442 = vadd.xlane.f32.xlu0 %v441
  %v443 = vpop.xlane.xlu0 %442
  %v444 = vsel %vm383, %v325, 0.0
  %445 = vadd.xlane.f32.xlu0 %v444
  %v446 = vpop.xlane.xlu0 %445
  %v447 = vsel %vm383, %v330, 0.0
  %448 = vadd.xlane.f32.xlu0 %v447
  %v449 = vpop.xlane.xlu0 %448
  %v450 = vsel %vm383, %v335, 0.0
  %451 = vadd.xlane.f32.xlu0 %v450
  %v452 = vpop.xlane.xlu0 %451
  %v453 = vsel %vm383, %v340, 0.0
  %454 = vadd.xlane.f32.xlu0 %v453
  %v455 = vpop.xlane.xlu0 %454
  %v456 = vsel %vm383, %v345, 0.0
  %457 = vadd.xlane.f32.xlu0 %v456
  %v458 = vpop.xlane.xlu0 %457
  %v459 = vsel %vm383, %v350, 0.0
  %460 = vadd.xlane.f32.xlu0 %v459
  %v461 = vpop.xlane.xlu0 %460
  %v462 = vsel %vm383, %v355, 0.0
  %463 = vadd.xlane.f32.xlu0 %v462
  %v464 = vpop.xlane.xlu0 %463
  %v465 = vsel %vm383, %v360, 0.0
  %466 = vadd.xlane.f32.xlu0 %v465
  %v467 = vpop.xlane.xlu0 %466
  %v468 = vsel %vm383, %v365, 0.0
  %469 = vadd.xlane.f32.xlu0 %v468
  %v470 = vpop.xlane.xlu0 %469
  %v471 = vsel %vm383, %v370, 0.0
  %472 = vadd.xlane.f32.xlu0 %v471
  %v473 = vpop.xlane.xlu0 %472
  %v474 = vsel %vm383, %v375, 0.0
  %475 = vadd.xlane.f32.xlu0 %v474
  %v476 = vpop.xlane.xlu0 %475
  %v477 = vsel %vm383, %v380, 0.0
  %478 = vadd.xlane.f32.xlu0 %v477
  %v479 = vpop.xlane.xlu0 %478
  %v480 = vrcp.pop 32.0
  %v481 = vmul.f32 %v386, %v480
  %v482 = vmul.f32 %v389, %v480
  %v483 = vmul.f32 %v392, %v480
  %v484 = vmul.f32 %v395, %v480
  %v485 = vmul.f32 %v398, %v480
  %v486 = vmul.f32 %v401, %v480
  %v487 = vmul.f32 %v404, %v480
  %v488 = vmul.f32 %v407, %v480
  %v489 = vmul.f32 %v410, %v480
  %v490 = vmul.f32 %v413, %v480
  %v491 = vmul.f32 %v416, %v480
  %v492 = vmul.f32 %v419, %v480
  %v493 = vmul.f32 %v422, %v480
  %v494 = vmul.f32 %v425, %v480
  %v495 = vmul.f32 %v428, %v480
  %v496 = vmul.f32 %v431, %v480
  %v497 = vmul.f32 %v434, %v480
  %v498 = vmul.f32 %v437, %v480
  %v499 = vmul.f32 %v440, %v480
  %v500 = vmul.f32 %v443, %v480
  %v501 = vmul.f32 %v446, %v480
  %v502 = vmul.f32 %v449, %v480
  %v503 = vmul.f32 %v452, %v480
  %v504 = vmul.f32 %v455, %v480
  %v505 = vmul.f32 %v458, %v480
  %v506 = vmul.f32 %v461, %v480
  %v507 = vmul.f32 %v464, %v480
  %v508 = vmul.f32 %v467, %v480
  %v509 = vmul.f32 %v470, %v480
  %v510 = vmul.f32 %v473, %v480
  %v511 = vmul.f32 %v476, %v480
  %v512 = vmul.f32 %v479, %v480
  %v513 = vsub.f32 %v225, %v481
  %v514 = vsub.f32 %v230, %v482
  %v515 = vsub.f32 %v235, %v483
  %v516 = vsub.f32 %v240, %v484
  %v517 = vsub.f32 %v245, %v485
  %v518 = vsub.f32 %v250, %v486
  %v519 = vsub.f32 %v255, %v487
  %v520 = vsub.f32 %v260, %v488
  %v521 = vsub.f32 %v265, %v489
  %v522 = vsub.f32 %v270, %v490
  %v523 = vsub.f32 %v275, %v491
  %v524 = vsub.f32 %v280, %v492
  %v525 = vsub.f32 %v285, %v493
  %v526 = vsub.f32 %v290, %v494
  %v527 = vsub.f32 %v295, %v495
  %v528 = vsub.f32 %v300, %v496
  %v529 = vsub.f32 %v305, %v497
  %v530 = vsub.f32 %v310, %v498
  %v531 = vsub.f32 %v315, %v499
  %v532 = vsub.f32 %v320, %v500
  %v533 = vsub.f32 %v325, %v501
  %v534 = vsub.f32 %v330, %v502
  %v535 = vsub.f32 %v335, %v503
  %v536 = vsub.f32 %v340, %v504
  %v537 = vsub.f32 %v345, %v505
  %v538 = vsub.f32 %v350, %v506
  %v539 = vsub.f32 %v355, %v507
  %v540 = vsub.f32 %v360, %v508
  %v541 = vsub.f32 %v365, %v509
  %v542 = vsub.f32 %v370, %v510
  %v543 = vsub.f32 %v375, %v511
  %v544 = vsub.f32 %v380, %v512
  %v545 = vmul.f32 %v513, %v513
  %v546 = vmul.f32 %v514, %v514
  %v547 = vmul.f32 %v515, %v515
  %v548 = vmul.f32 %v516, %v516
  %v549 = vmul.f32 %v517, %v517
  %v550 = vmul.f32 %v518, %v518
  %v551 = vmul.f32 %v519, %v519
  %v552 = vmul.f32 %v520, %v520
  %v553 = vmul.f32 %v521, %v521
  %v554 = vmul.f32 %v522, %v522
  %v555 = vmul.f32 %v523, %v523
  %v556 = vmul.f32 %v524, %v524
  %v557 = vmul.f32 %v525, %v525
  %v558 = vmul.f32 %v526, %v526
  %v559 = vmul.f32 %v527, %v527
  %v560 = vmul.f32 %v528, %v528
  %v561 = vmul.f32 %v529, %v529
  %v562 = vmul.f32 %v530, %v530
  %v563 = vmul.f32 %v531, %v531
  %v564 = vmul.f32 %v532, %v532
  %v565 = vmul.f32 %v533, %v533
  %v566 = vmul.f32 %v534, %v534
  %v567 = vmul.f32 %v535, %v535
  %v568 = vmul.f32 %v536, %v536
  %v569 = vmul.f32 %v537, %v537
  %v570 = vmul.f32 %v538, %v538
  %v571 = vmul.f32 %v539, %v539
  %v572 = vmul.f32 %v540, %v540
  %v573 = vmul.f32 %v541, %v541
  %v574 = vmul.f32 %v542, %v542
  %v575 = vmul.f32 %v543, %v543
  %v576 = vmul.f32 %v544, %v544
  %v577 = vsel %vm383, %v545, 0.0
  %578 = vadd.xlane.f32.xlu0 %v577
  %v579 = vpop.xlane.xlu0 %578
  %v580 = vsel %vm383, %v546, 0.0
  %581 = vadd.xlane.f32.xlu0 %v580
  %v582 = vpop.xlane.xlu0 %581
  %v583 = vsel %vm383, %v547, 0.0
  %584 = vadd.xlane.f32.xlu0 %v583
  %v585 = vpop.xlane.xlu0 %584
  %v586 = vsel %vm383, %v548, 0.0
  %587 = vadd.xlane.f32.xlu0 %v586
  %v588 = vpop.xlane.xlu0 %587
  %v589 = vsel %vm383, %v549, 0.0
  %590 = vadd.xlane.f32.xlu0 %v589
  %v591 = vpop.xlane.xlu0 %590
  %v592 = vsel %vm383, %v550, 0.0
  %593 = vadd.xlane.f32.xlu0 %v592
  %v594 = vpop.xlane.xlu0 %593
  %v595 = vsel %vm383, %v551, 0.0
  %596 = vadd.xlane.f32.xlu0 %v595
  %v597 = vpop.xlane.xlu0 %596
  %v598 = vsel %vm383, %v552, 0.0
  %599 = vadd.xlane.f32.xlu0 %v598
  %v600 = vpop.xlane.xlu0 %599
  %v601 = vsel %vm383, %v553, 0.0
  %602 = vadd.xlane.f32.xlu0 %v601
  %v603 = vpop.xlane.xlu0 %602
  %v604 = vsel %vm383, %v554, 0.0
  %605 = vadd.xlane.f32.xlu0 %v604
  %v606 = vpop.xlane.xlu0 %605
  %v607 = vsel %vm383, %v555, 0.0
  %608 = vadd.xlane.f32.xlu0 %v607
  %v609 = vpop.xlane.xlu0 %608
  %v610 = vsel %vm383, %v556, 0.0
  %611 = vadd.xlane.f32.xlu0 %v610
  %v612 = vpop.xlane.xlu0 %611
  %v613 = vsel %vm383, %v557, 0.0
  %614 = vadd.xlane.f32.xlu0 %v613
  %v615 = vpop.xlane.xlu0 %614
  %v616 = vsel %vm383, %v558, 0.0
  %617 = vadd.xlane.f32.xlu0 %v616
  %v618 = vpop.xlane.xlu0 %617
  %v619 = vsel %vm383, %v559, 0.0
  %620 = vadd.xlane.f32.xlu0 %v619
  %v621 = vpop.xlane.xlu0 %620
  %v622 = vsel %vm383, %v560, 0.0
  %623 = vadd.xlane.f32.xlu0 %v622
  %v624 = vpop.xlane.xlu0 %623
  %v625 = vsel %vm383, %v561, 0.0
  %626 = vadd.xlane.f32.xlu0 %v625
  %v627 = vpop.xlane.xlu0 %626
  %v628 = vsel %vm383, %v562, 0.0
  %629 = vadd.xlane.f32.xlu0 %v628
  %v630 = vpop.xlane.xlu0 %629
  %v631 = vsel %vm383, %v563, 0.0
  %632 = vadd.xlane.f32.xlu0 %v631
  %v633 = vpop.xlane.xlu0 %632
  %v634 = vsel %vm383, %v564, 0.0
  %635 = vadd.xlane.f32.xlu0 %v634
  %v636 = vpop.xlane.xlu0 %635
  %v637 = vsel %vm383, %v565, 0.0
  %638 = vadd.xlane.f32.xlu0 %v637
  %v639 = vpop.xlane.xlu0 %638
  %v640 = vsel %vm383, %v566, 0.0
  %641 = vadd.xlane.f32.xlu0 %v640
  %v642 = vpop.xlane.xlu0 %641
  %v643 = vsel %vm383, %v567, 0.0
  %644 = vadd.xlane.f32.xlu0 %v643
  %v645 = vpop.xlane.xlu0 %644
  %v646 = vsel %vm383, %v568, 0.0
  %647 = vadd.xlane.f32.xlu0 %v646
  %v648 = vpop.xlane.xlu0 %647
  %v649 = vsel %vm383, %v569, 0.0
  %650 = vadd.xlane.f32.xlu0 %v649
  %v651 = vpop.xlane.xlu0 %650
  %v652 = vsel %vm383, %v570, 0.0
  %653 = vadd.xlane.f32.xlu0 %v652
  %v654 = vpop.xlane.xlu0 %653
  %v655 = vsel %vm383, %v571, 0.0
  %656 = vadd.xlane.f32.xlu0 %v655
  %v657 = vpop.xlane.xlu0 %656
  %v658 = vsel %vm383, %v572, 0.0
  %659 = vadd.xlane.f32.xlu0 %v658
  %v660 = vpop.xlane.xlu0 %659
  %v661 = vsel %vm383, %v573, 0.0
  %662 = vadd.xlane.f32.xlu0 %v661
  %v663 = vpop.xlane.xlu0 %662
  %v664 = vsel %vm383, %v574, 0.0
  %665 = vadd.xlane.f32.xlu0 %v664
  %v666 = vpop.xlane.xlu0 %665
  %v667 = vsel %vm383, %v575, 0.0
  %668 = vadd.xlane.f32.xlu0 %v667
  %v669 = vpop.xlane.xlu0 %668
  %v670 = vsel %vm383, %v576, 0.0
  %671 = vadd.xlane.f32.xlu0 %v670
  %v672 = vpop.xlane.xlu0 %671
  %v673 = vmul.f32 %v579, 0.032258064
  %v674 = vmul.f32 %v582, 0.032258064
  %v675 = vmul.f32 %v585, 0.032258064
  %v676 = vmul.f32 %v588, 0.032258064
  %v677 = vmul.f32 %v591, 0.032258064
  %v678 = vmul.f32 %v594, 0.032258064
  %v679 = vmul.f32 %v597, 0.032258064
  %v680 = vmul.f32 %v600, 0.032258064
  %v681 = vmul.f32 %v603, 0.032258064
  %v682 = vmul.f32 %v606, 0.032258064
  %v683 = vmul.f32 %v609, 0.032258064
  %v684 = vmul.f32 %v612, 0.032258064
  %v685 = vmul.f32 %v615, 0.032258064
  %v686 = vmul.f32 %v618, 0.032258064
  %v687 = vmul.f32 %v621, 0.032258064
  %v688 = vmul.f32 %v624, 0.032258064
  %v689 = vmul.f32 %v627, 0.032258064
  %v690 = vmul.f32 %v630, 0.032258064
  %v691 = vmul.f32 %v633, 0.032258064
  %v692 = vmul.f32 %v636, 0.032258064
  %v693 = vmul.f32 %v639, 0.032258064
  %v694 = vmul.f32 %v642, 0.032258064
  %v695 = vmul.f32 %v645, 0.032258064
  %v696 = vmul.f32 %v648, 0.032258064
  %v697 = vmul.f32 %v651, 0.032258064
  %v698 = vmul.f32 %v654, 0.032258064
  %v699 = vmul.f32 %v657, 0.032258064
  %v700 = vmul.f32 %v660, 0.032258064
  %v701 = vmul.f32 %v663, 0.032258064
  %v702 = vmul.f32 %v666, 0.032258064
  %v703 = vmul.f32 %v669, 0.032258064
  %v704 = vmul.f32 %v672, 0.032258064
  %v705 = vadd.f32 %v673, 1e-06
  %v706 = vadd.f32 %v674, 1e-06
  %v707 = vadd.f32 %v675, 1e-06
  %v708 = vadd.f32 %v676, 1e-06
  %v709 = vadd.f32 %v677, 1e-06
  %v710 = vadd.f32 %v678, 1e-06
  %v711 = vadd.f32 %v679, 1e-06
  %v712 = vadd.f32 %v680, 1e-06
  %v713 = vadd.f32 %v681, 1e-06
  %v714 = vadd.f32 %v682, 1e-06
  %v715 = vadd.f32 %v683, 1e-06
  %v716 = vadd.f32 %v684, 1e-06
  %v717 = vadd.f32 %v685, 1e-06
  %v718 = vadd.f32 %v686, 1e-06
  %v719 = vadd.f32 %v687, 1e-06
  %v720 = vadd.f32 %v688, 1e-06
  %v721 = vadd.f32 %v689, 1e-06
  %v722 = vadd.f32 %v690, 1e-06
  %v723 = vadd.f32 %v691, 1e-06
  %v724 = vadd.f32 %v692, 1e-06
  %v725 = vadd.f32 %v693, 1e-06
  %v726 = vadd.f32 %v694, 1e-06
  %v727 = vadd.f32 %v695, 1e-06
  %v728 = vadd.f32 %v696, 1e-06
  %v729 = vadd.f32 %v697, 1e-06
  %v730 = vadd.f32 %v698, 1e-06
  %v731 = vadd.f32 %v699, 1e-06
  %v732 = vadd.f32 %v700, 1e-06
  %v733 = vadd.f32 %v701, 1e-06
  %v734 = vadd.f32 %v702, 1e-06
  %v735 = vadd.f32 %v703, 1e-06
  %v736 = vadd.f32 %v704, 1e-06
  %v737 = vrsqrt.pop %v705
  %v738 = vmul.f32 %v705, %v737
  %vm739 = vcmp.eq.f32.partialorder %v705, inf
  %v740 = vsel %vm739, %v705, %v738
  %vm741 = vcmp.eq.f32.partialorder %v705, 0.0
  %v742 = vand.u32 %v705, 2147483648
  %v743 = vsel %vm741, %v742, %v740
  %v744 = vrsqrt.pop %v706
  %v745 = vmul.f32 %v706, %v744
  %vm746 = vcmp.eq.f32.partialorder %v706, inf
  %v747 = vsel %vm746, %v706, %v745
  %vm748 = vcmp.eq.f32.partialorder %v706, 0.0
  %v749 = vand.u32 %v706, 2147483648
  %v750 = vsel %vm748, %v749, %v747
  %v751 = vrsqrt.pop %v707
  %v752 = vmul.f32 %v707, %v751
  %vm753 = vcmp.eq.f32.partialorder %v707, inf
  %v754 = vsel %vm753, %v707, %v752
  %vm755 = vcmp.eq.f32.partialorder %v707, 0.0
  %v756 = vand.u32 %v707, 2147483648
  %v757 = vsel %vm755, %v756, %v754
  %v758 = vrsqrt.pop %v708
  %v759 = vmul.f32 %v708, %v758
  %vm760 = vcmp.eq.f32.partialorder %v708, inf
  %v761 = vsel %vm760, %v708, %v759
  %vm762 = vcmp.eq.f32.partialorder %v708, 0.0
  %v763 = vand.u32 %v708, 2147483648
  %v764 = vsel %vm762, %v763, %v761
  %v765 = vrsqrt.pop %v709
  %v766 = vmul.f32 %v709, %v765
  %vm767 = vcmp.eq.f32.partialorder %v709, inf
  %v768 = vsel %vm767, %v709, %v766
  %vm769 = vcmp.eq.f32.partialorder %v709, 0.0
  %v770 = vand.u32 %v709, 2147483648
  %v771 = vsel %vm769, %v770, %v768
  %v772 = vrsqrt.pop %v710
  %v773 = vmul.f32 %v710, %v772
  %vm774 = vcmp.eq.f32.partialorder %v710, inf
  %v775 = vsel %vm774, %v710, %v773
  %vm776 = vcmp.eq.f32.partialorder %v710, 0.0
  %v777 = vand.u32 %v710, 2147483648
  %v778 = vsel %vm776, %v777, %v775
  %v779 = vrsqrt.pop %v711
  %v780 = vmul.f32 %v711, %v779
  %vm781 = vcmp.eq.f32.partialorder %v711, inf
  %v782 = vsel %vm781, %v711, %v780
  %vm783 = vcmp.eq.f32.partialorder %v711, 0.0
  %v784 = vand.u32 %v711, 2147483648
  %v785 = vsel %vm783, %v784, %v782
  %v786 = vrsqrt.pop %v712
  %v787 = vmul.f32 %v712, %v786
  %vm788 = vcmp.eq.f32.partialorder %v712, inf
  %v789 = vsel %vm788, %v712, %v787
  %vm790 = vcmp.eq.f32.partialorder %v712, 0.0
  %v791 = vand.u32 %v712, 2147483648
  %v792 = vsel %vm790, %v791, %v789
  %v793 = vrsqrt.pop %v713
  %v794 = vmul.f32 %v713, %v793
  %vm795 = vcmp.eq.f32.partialorder %v713, inf
  %v796 = vsel %vm795, %v713, %v794
  %vm797 = vcmp.eq.f32.partialorder %v713, 0.0
  %v798 = vand.u32 %v713, 2147483648
  %v799 = vsel %vm797, %v798, %v796
  %v800 = vrsqrt.pop %v714
  %v801 = vmul.f32 %v714, %v800
  %vm802 = vcmp.eq.f32.partialorder %v714, inf
  %v803 = vsel %vm802, %v714, %v801
  %vm804 = vcmp.eq.f32.partialorder %v714, 0.0
  %v805 = vand.u32 %v714, 2147483648
  %v806 = vsel %vm804, %v805, %v803
  %v807 = vrsqrt.pop %v715
  %v808 = vmul.f32 %v715, %v807
  %vm809 = vcmp.eq.f32.partialorder %v715, inf
  %v810 = vsel %vm809, %v715, %v808
  %vm811 = vcmp.eq.f32.partialorder %v715, 0.0
  %v812 = vand.u32 %v715, 2147483648
  %v813 = vsel %vm811, %v812, %v810
  %v814 = vrsqrt.pop %v716
  %v815 = vmul.f32 %v716, %v814
  %vm816 = vcmp.eq.f32.partialorder %v716, inf
  %v817 = vsel %vm816, %v716, %v815
  %vm818 = vcmp.eq.f32.partialorder %v716, 0.0
  %v819 = vand.u32 %v716, 2147483648
  %v820 = vsel %vm818, %v819, %v817
  %v821 = vrsqrt.pop %v717
  %v822 = vmul.f32 %v717, %v821
  %vm823 = vcmp.eq.f32.partialorder %v717, inf
  %v824 = vsel %vm823, %v717, %v822
  %vm825 = vcmp.eq.f32.partialorder %v717, 0.0
  %v826 = vand.u32 %v717, 2147483648
  %v827 = vsel %vm825, %v826, %v824
  %v828 = vrsqrt.pop %v718
  %v829 = vmul.f32 %v718, %v828
  %vm830 = vcmp.eq.f32.partialorder %v718, inf
  %v831 = vsel %vm830, %v718, %v829
  %vm832 = vcmp.eq.f32.partialorder %v718, 0.0
  %v833 = vand.u32 %v718, 2147483648
  %v834 = vsel %vm832, %v833, %v831
  %v835 = vrsqrt.pop %v719
  %v836 = vmul.f32 %v719, %v835
  %vm837 = vcmp.eq.f32.partialorder %v719, inf
  %v838 = vsel %vm837, %v719, %v836
  %vm839 = vcmp.eq.f32.partialorder %v719, 0.0
  %v840 = vand.u32 %v719, 2147483648
  %v841 = vsel %vm839, %v840, %v838
  %v842 = vrsqrt.pop %v720
  %v843 = vmul.f32 %v720, %v842
  %vm844 = vcmp.eq.f32.partialorder %v720, inf
  %v845 = vsel %vm844, %v720, %v843
  %vm846 = vcmp.eq.f32.partialorder %v720, 0.0
  %v847 = vand.u32 %v720, 2147483648
  %v848 = vsel %vm846, %v847, %v845
  %v849 = vrsqrt.pop %v721
  %v850 = vmul.f32 %v721, %v849
  %vm851 = vcmp.eq.f32.partialorder %v721, inf
  %v852 = vsel %vm851, %v721, %v850
  %vm853 = vcmp.eq.f32.partialorder %v721, 0.0
  %v854 = vand.u32 %v721, 2147483648
  %v855 = vsel %vm853, %v854, %v852
  %v856 = vrsqrt.pop %v722
  %v857 = vmul.f32 %v722, %v856
  %vm858 = vcmp.eq.f32.partialorder %v722, inf
  %v859 = vsel %vm858, %v722, %v857
  %vm860 = vcmp.eq.f32.partialorder %v722, 0.0
  %v861 = vand.u32 %v722, 2147483648
  %v862 = vsel %vm860, %v861, %v859
  %v863 = vrsqrt.pop %v723
  %v864 = vmul.f32 %v723, %v863
  %vm865 = vcmp.eq.f32.partialorder %v723, inf
  %v866 = vsel %vm865, %v723, %v864
  %vm867 = vcmp.eq.f32.partialorder %v723, 0.0
  %v868 = vand.u32 %v723, 2147483648
  %v869 = vsel %vm867, %v868, %v866
  %v870 = vrsqrt.pop %v724
  %v871 = vmul.f32 %v724, %v870
  %vm872 = vcmp.eq.f32.partialorder %v724, inf
  %v873 = vsel %vm872, %v724, %v871
  %vm874 = vcmp.eq.f32.partialorder %v724, 0.0
  %v875 = vand.u32 %v724, 2147483648
  %v876 = vsel %vm874, %v875, %v873
  %v877 = vrsqrt.pop %v725
  %v878 = vmul.f32 %v725, %v877
  %vm879 = vcmp.eq.f32.partialorder %v725, inf
  %v880 = vsel %vm879, %v725, %v878
  %vm881 = vcmp.eq.f32.partialorder %v725, 0.0
  %v882 = vand.u32 %v725, 2147483648
  %v883 = vsel %vm881, %v882, %v880
  %v884 = vrsqrt.pop %v726
  %v885 = vmul.f32 %v726, %v884
  %vm886 = vcmp.eq.f32.partialorder %v726, inf
  %v887 = vsel %vm886, %v726, %v885
  %vm888 = vcmp.eq.f32.partialorder %v726, 0.0
  %v889 = vand.u32 %v726, 2147483648
  %v890 = vsel %vm888, %v889, %v887
  %v891 = vrsqrt.pop %v727
  %v892 = vmul.f32 %v727, %v891
  %vm893 = vcmp.eq.f32.partialorder %v727, inf
  %v894 = vsel %vm893, %v727, %v892
  %vm895 = vcmp.eq.f32.partialorder %v727, 0.0
  %v896 = vand.u32 %v727, 2147483648
  %v897 = vsel %vm895, %v896, %v894
  %v898 = vrsqrt.pop %v728
  %v899 = vmul.f32 %v728, %v898
  %vm900 = vcmp.eq.f32.partialorder %v728, inf
  %v901 = vsel %vm900, %v728, %v899
  %vm902 = vcmp.eq.f32.partialorder %v728, 0.0
  %v903 = vand.u32 %v728, 2147483648
  %v904 = vsel %vm902, %v903, %v901
  %v905 = vrsqrt.pop %v729
  %v906 = vmul.f32 %v729, %v905
  %vm907 = vcmp.eq.f32.partialorder %v729, inf
  %v908 = vsel %vm907, %v729, %v906
  %vm909 = vcmp.eq.f32.partialorder %v729, 0.0
  %v910 = vand.u32 %v729, 2147483648
  %v911 = vsel %vm909, %v910, %v908
  %v912 = vrsqrt.pop %v730
  %v913 = vmul.f32 %v730, %v912
  %vm914 = vcmp.eq.f32.partialorder %v730, inf
  %v915 = vsel %vm914, %v730, %v913
  %vm916 = vcmp.eq.f32.partialorder %v730, 0.0
  %v917 = vand.u32 %v730, 2147483648
  %v918 = vsel %vm916, %v917, %v915
  %v919 = vrsqrt.pop %v731
  %v920 = vmul.f32 %v731, %v919
  %vm921 = vcmp.eq.f32.partialorder %v731, inf
  %v922 = vsel %vm921, %v731, %v920
  %vm923 = vcmp.eq.f32.partialorder %v731, 0.0
  %v924 = vand.u32 %v731, 2147483648
  %v925 = vsel %vm923, %v924, %v922
  %v926 = vrsqrt.pop %v732
  %v927 = vmul.f32 %v732, %v926
  %vm928 = vcmp.eq.f32.partialorder %v732, inf
  %v929 = vsel %vm928, %v732, %v927
  %vm930 = vcmp.eq.f32.partialorder %v732, 0.0
  %v931 = vand.u32 %v732, 2147483648
  %v932 = vsel %vm930, %v931, %v929
  %v933 = vrsqrt.pop %v733
  %v934 = vmul.f32 %v733, %v933
  %vm935 = vcmp.eq.f32.partialorder %v733, inf
  %v936 = vsel %vm935, %v733, %v934
  %vm937 = vcmp.eq.f32.partialorder %v733, 0.0
  %v938 = vand.u32 %v733, 2147483648
  %v939 = vsel %vm937, %v938, %v936
  %v940 = vrsqrt.pop %v734
  %v941 = vmul.f32 %v734, %v940
  %vm942 = vcmp.eq.f32.partialorder %v734, inf
  %v943 = vsel %vm942, %v734, %v941
  %vm944 = vcmp.eq.f32.partialorder %v734, 0.0
  %v945 = vand.u32 %v734, 2147483648
  %v946 = vsel %vm944, %v945, %v943
  %v947 = vrsqrt.pop %v735
  %v948 = vmul.f32 %v735, %v947
  %vm949 = vcmp.eq.f32.partialorder %v735, inf
  %v950 = vsel %vm949, %v735, %v948
  %vm951 = vcmp.eq.f32.partialorder %v735, 0.0
  %v952 = vand.u32 %v735, 2147483648
  %v953 = vsel %vm951, %v952, %v950
  %v954 = vrsqrt.pop %v736
  %v955 = vmul.f32 %v736, %v954
  %vm956 = vcmp.eq.f32.partialorder %v736, inf
  %v957 = vsel %vm956, %v736, %v955
  %vm958 = vcmp.eq.f32.partialorder %v736, 0.0
  %v959 = vand.u32 %v736, 2147483648
  %v960 = vsel %vm958, %v959, %v957
  %v961 = vadd.f32 %v743, 1e-06
  %v962 = vadd.f32 %v750, 1e-06
  %v963 = vadd.f32 %v757, 1e-06
  %v964 = vadd.f32 %v764, 1e-06
  %v965 = vadd.f32 %v771, 1e-06
  %v966 = vadd.f32 %v778, 1e-06
  %v967 = vadd.f32 %v785, 1e-06
  %v968 = vadd.f32 %v792, 1e-06
  %v969 = vadd.f32 %v799, 1e-06
  %v970 = vadd.f32 %v806, 1e-06
  %v971 = vadd.f32 %v813, 1e-06
  %v972 = vadd.f32 %v820, 1e-06
  %v973 = vadd.f32 %v827, 1e-06
  %v974 = vadd.f32 %v834, 1e-06
  %v975 = vadd.f32 %v841, 1e-06
  %v976 = vadd.f32 %v848, 1e-06
  %v977 = vadd.f32 %v855, 1e-06
  %v978 = vadd.f32 %v862, 1e-06
  %v979 = vadd.f32 %v869, 1e-06
  %v980 = vadd.f32 %v876, 1e-06
  %v981 = vadd.f32 %v883, 1e-06
  %v982 = vadd.f32 %v890, 1e-06
  %v983 = vadd.f32 %v897, 1e-06
  %v984 = vadd.f32 %v904, 1e-06
  %v985 = vadd.f32 %v911, 1e-06
  %v986 = vadd.f32 %v918, 1e-06
  %v987 = vadd.f32 %v925, 1e-06
  %v988 = vadd.f32 %v932, 1e-06
  %v989 = vadd.f32 %v939, 1e-06
  %v990 = vadd.f32 %v946, 1e-06
  %v991 = vadd.f32 %v953, 1e-06
  %v992 = vadd.f32 %v960, 1e-06
  %v993 = vrcp.pop %v961
  %v994 = vrcp.pop %v962
  %v995 = vrcp.pop %v963
  %v996 = vrcp.pop %v964
  %v997 = vrcp.pop %v965
  %v998 = vrcp.pop %v966
  %v999 = vrcp.pop %v967
  %v1000 = vrcp.pop %v968
  %v1001 = vrcp.pop %v969
  %v1002 = vrcp.pop %v970
  %v1003 = vrcp.pop %v971
  %v1004 = vrcp.pop %v972
  %v1005 = vrcp.pop %v973
  %v1006 = vrcp.pop %v974
  %v1007 = vrcp.pop %v975
  %v1008 = vrcp.pop %v976
  %v1009 = vrcp.pop %v977
  %v1010 = vrcp.pop %v978
  %v1011 = vrcp.pop %v979
  %v1012 = vrcp.pop %v980
  %v1013 = vrcp.pop %v981
  %v1014 = vrcp.pop %v982
  %v1015 = vrcp.pop %v983
  %v1016 = vrcp.pop %v984
  %v1017 = vrcp.pop %v985
  %v1018 = vrcp.pop %v986
  %v1019 = vrcp.pop %v987
  %v1020 = vrcp.pop %v988
  %v1021 = vrcp.pop %v989
  %v1022 = vrcp.pop %v990
  %v1023 = vrcp.pop %v991
  %v1024 = vrcp.pop %v992
  %v1025 = vld [vmem:[%s3] sm:$0x1]
  %v1027 = vlaneseq
  %v1028 = vshrl.u32 %v1027, 7
  %v1029 = vsub.s32 0, %v1028
  %v1030 = vrot.slane %v1025, %v1029
  %v1032 = vmul.f32 %v1030, %v513
  %v1033 = vmul.f32 %v1030, %v514
  %v1034 = vmul.f32 %v1030, %v515
  %v1035 = vmul.f32 %v1030, %v516
  %v1036 = vmul.f32 %v1030, %v517
  %v1037 = vmul.f32 %v1030, %v518
  %v1038 = vmul.f32 %v1030, %v519
  %v1039 = vmul.f32 %v1030, %v520
  %v1040 = vmul.f32 %v1030, %v521
  %v1041 = vmul.f32 %v1030, %v522
  %v1042 = vmul.f32 %v1030, %v523
  %v1043 = vmul.f32 %v1030, %v524
  %v1044 = vmul.f32 %v1030, %v525
  %v1045 = vmul.f32 %v1030, %v526
  %v1046 = vmul.f32 %v1030, %v527
  %v1047 = vmul.f32 %v1030, %v528
  %v1048 = vmul.f32 %v1030, %v529
  %v1049 = vmul.f32 %v1030, %v530
  %v1050 = vmul.f32 %v1030, %v531
  %v1051 = vmul.f32 %v1030, %v532
  %v1052 = vmul.f32 %v1030, %v533
  %v1053 = vmul.f32 %v1030, %v534
  %v1054 = vmul.f32 %v1030, %v535
  %v1055 = vmul.f32 %v1030, %v536
  %v1056 = vmul.f32 %v1030, %v537
  %v1057 = vmul.f32 %v1030, %v538
  %v1058 = vmul.f32 %v1030, %v539
  %v1059 = vmul.f32 %v1030, %v540
  %v1060 = vmul.f32 %v1030, %v541
  %v1061 = vmul.f32 %v1030, %v542
  %v1062 = vmul.f32 %v1030, %v543
  %v1063 = vmul.f32 %v1030, %v544
  %v1064 = vmul.f32 %v1032, %v993
  %v1065 = vmul.f32 %v1033, %v994
  %v1066 = vmul.f32 %v1034, %v995
  %v1067 = vmul.f32 %v1035, %v996
  %v1068 = vmul.f32 %v1036, %v997
  %v1069 = vmul.f32 %v1037, %v998
  %v1070 = vmul.f32 %v1038, %v999
  %v1071 = vmul.f32 %v1039, %v1000
  %v1072 = vmul.f32 %v1040, %v1001
  %v1073 = vmul.f32 %v1041, %v1002
  %v1074 = vmul.f32 %v1042, %v1003
  %v1075 = vmul.f32 %v1043, %v1004
  %v1076 = vmul.f32 %v1044, %v1005
  %v1077 = vmul.f32 %v1045, %v1006
  %v1078 = vmul.f32 %v1046, %v1007
  %v1079 = vmul.f32 %v1047, %v1008
  %v1080 = vmul.f32 %v1048, %v1009
  %v1081 = vmul.f32 %v1049, %v1010
  %v1082 = vmul.f32 %v1050, %v1011
  %v1083 = vmul.f32 %v1051, %v1012
  %v1084 = vmul.f32 %v1052, %v1013
  %v1085 = vmul.f32 %v1053, %v1014
  %v1086 = vmul.f32 %v1054, %v1015
  %v1087 = vmul.f32 %v1055, %v1016
  %v1088 = vmul.f32 %v1056, %v1017
  %v1089 = vmul.f32 %v1057, %v1018
  %v1090 = vmul.f32 %v1058, %v1019
  %v1091 = vmul.f32 %v1059, %v1020
  %v1092 = vmul.f32 %v1060, %v1021
  %v1093 = vmul.f32 %v1061, %v1022
  %v1094 = vmul.f32 %v1062, %v1023
  %v1095 = vmul.f32 %v1063, %v1024
  %v1096 = vld [vmem:[%s4] sm:$0x1]
  %v1098 = vlaneseq
  %v1099 = vshrl.u32 %v1098, 7
  %v1100 = vsub.s32 0, %v1099
  %v1101 = vrot.slane %v1096, %v1100
  %v1103 = vadd.f32 %v1064, %v1101
  %v1104 = vadd.f32 %v1065, %v1101
  %v1105 = vadd.f32 %v1066, %v1101
  %v1106 = vadd.f32 %v1067, %v1101
  %v1107 = vadd.f32 %v1068, %v1101
  %v1108 = vadd.f32 %v1069, %v1101
  %v1109 = vadd.f32 %v1070, %v1101
  %v1110 = vadd.f32 %v1071, %v1101
  %v1111 = vadd.f32 %v1072, %v1101
  %v1112 = vadd.f32 %v1073, %v1101
  %v1113 = vadd.f32 %v1074, %v1101
  %v1114 = vadd.f32 %v1075, %v1101
  %v1115 = vadd.f32 %v1076, %v1101
  %v1116 = vadd.f32 %v1077, %v1101
  %v1117 = vadd.f32 %v1078, %v1101
  %v1118 = vadd.f32 %v1079, %v1101
  %v1119 = vadd.f32 %v1080, %v1101
  %v1120 = vadd.f32 %v1081, %v1101
  %v1121 = vadd.f32 %v1082, %v1101
  %v1122 = vadd.f32 %v1083, %v1101
  %v1123 = vadd.f32 %v1084, %v1101
  %v1124 = vadd.f32 %v1085, %v1101
  %v1125 = vadd.f32 %v1086, %v1101
  %v1126 = vadd.f32 %v1087, %v1101
  %v1127 = vadd.f32 %v1088, %v1101
  %v1128 = vadd.f32 %v1089, %v1101
  %v1129 = vadd.f32 %v1090, %v1101
  %v1130 = vadd.f32 %v1091, %v1101
  %v1131 = vadd.f32 %v1092, %v1101
  %v1132 = vadd.f32 %v1093, %v1101
  %v1133 = vadd.f32 %v1094, %v1101
  %v1134 = vadd.f32 %v1095, %v1101
  %1135 = vst.msk [vmem:[%s5] sm:$0xff] %vm383, %v1103
  %1136 = vst.msk [vmem:[%s5 + $0x8] sm:$0xff] %vm383, %v1104
  %1137 = vst.msk [vmem:[%s5 + $0x10] sm:$0xff] %vm383, %v1105
  %1138 = vst.msk [vmem:[%s5 + $0x18] sm:$0xff] %vm383, %v1106
  %1139 = vst.msk [vmem:[%s5 + $0x20] sm:$0xff] %vm383, %v1107
  %1140 = vst.msk [vmem:[%s5 + $0x28] sm:$0xff] %vm383, %v1108
  %1141 = vst.msk [vmem:[%s5 + $0x30] sm:$0xff] %vm383, %v1109
  %1142 = vst.msk [vmem:[%s5 + $0x38] sm:$0xff] %vm383, %v1110
  %1143 = vst.msk [vmem:[%s5 + $0x40] sm:$0xff] %vm383, %v1111
  %1144 = vst.msk [vmem:[%s5 + $0x48] sm:$0xff] %vm383, %v1112
  %1145 = vst.msk [vmem:[%s5 + $0x50] sm:$0xff] %vm383, %v1113
  %1146 = vst.msk [vmem:[%s5 + $0x58] sm:$0xff] %vm383, %v1114
  %1147 = vst.msk [vmem:[%s5 + $0x60] sm:$0xff] %vm383, %v1115
  %1148 = vst.msk [vmem:[%s5 + $0x68] sm:$0xff] %vm383, %v1116
  %1149 = vst.msk [vmem:[%s5 + $0x70] sm:$0xff] %vm383, %v1117
  %1150 = vst.msk [vmem:[%s5 + $0x78] sm:$0xff] %vm383, %v1118
  %1151 = vst.msk [vmem:[%s5 + $0x80] sm:$0xff] %vm383, %v1119
  %1152 = vst.msk [vmem:[%s5 + $0x88] sm:$0xff] %vm383, %v1120
  %1153 = vst.msk [vmem:[%s5 + $0x90] sm:$0xff] %vm383, %v1121
  %1154 = vst.msk [vmem:[%s5 + $0x98] sm:$0xff] %vm383, %v1122
  %1155 = vst.msk [vmem:[%s5 + $0xa0] sm:$0xff] %vm383, %v1123
  %1156 = vst.msk [vmem:[%s5 + $0xa8] sm:$0xff] %vm383, %v1124
  %1157 = vst.msk [vmem:[%s5 + $0xb0] sm:$0xff] %vm383, %v1125
  %1158 = vst.msk [vmem:[%s5 + $0xb8] sm:$0xff] %vm383, %v1126
  %1159 = vst.msk [vmem:[%s5 + $0xc0] sm:$0xff] %vm383, %v1127
  %1160 = vst.msk [vmem:[%s5 + $0xc8] sm:$0xff] %vm383, %v1128
  %1161 = vst.msk [vmem:[%s5 + $0xd0] sm:$0xff] %vm383, %v1129
  %1162 = vst.msk [vmem:[%s5 + $0xd8] sm:$0xff] %vm383, %v1130
  %1163 = vst.msk [vmem:[%s5 + $0xe0] sm:$0xff] %vm383, %v1131
  %1164 = vst.msk [vmem:[%s5 + $0xe8] sm:$0xff] %vm383, %v1132
  %1165 = vst.msk [vmem:[%s5 + $0xf0] sm:$0xff] %vm383, %v1133
  %1166 = vst.msk [vmem:[%s5 + $0xf8] sm:$0xff] %vm383, %v1134
  // Predicated region
  $region22: #{encoder_forward_pallas.5} parent=0 // pred_check
    _
  $region23: #{encoder_forward_pallas.5} parent=0 // pred_check_branch
    %1168 = sbr.rel (0) target = $region25
  $region24: #{encoder_forward_pallas.5} parent=0 // pred_region
    _
  $region25: #{encoder_forward_pallas.5} parent=0 // pred_fallthru
    _
  // Predicated region
  $region26: #{encoder_forward_pallas.5} parent=0 // pred_check
    _
  $region27: #{encoder_forward_pallas.5} parent=0 // pred_check_branch
    %1170 = sbr.rel (0) target = $region29
  $region28: #{encoder_forward_pallas.5} parent=0 // pred_region
    _
  $region29: #{encoder_forward_pallas.5} parent=0 // pred_fallthru
    _

// kernel: encoder_forward_pallas.6
$region0: #{encoder_forward_pallas.6}
  #allocation0 [shape = 'u32[]', space=smem, size = 0x4, offset = 0x4, fixed_abs, tag = 'smem constant byte address 0x4 - core index']
  #allocation1 [shape = 'u32[144,128]{1,0:T(1,128)}', space=vmem, size = 0x12000, scoped, tag = 'internal scratch']
  %s0 = inlined_call_operand.vmem [shape: f32[32,32], index: 0, kind: input, shape index: {}]
  %s1 = inlined_call_operand.vmem [shape: f32[256,32], index: 1, kind: input, shape index: {}]
  %s2 = inlined_call_operand.vmem [shape: f32[256,32], index: 2, kind: input, shape index: {}]
  %s3 = inlined_call_operand.vmem [shape: f32[256,1], index: 3, kind: input, shape index: {}]
  %s4 = inlined_call_operand.vmem [shape: f32[32,1], index: 4, kind: input, shape index: {}]
  %s5 = inlined_call_operand.vmem [shape: f32[32,32], index: 5, kind: input, shape index: {}]
  %s6 = inlined_call_operand.vmem [shape: f32[32,32], index: 6, kind: input, shape index: {}]
  %s7 = inlined_call_operand.vmem [shape: f32[32,32], index: 7, kind: input, shape index: {}]
  %s8 = inlined_call_operand.vmem [shape: f32[1,32], index: 8, kind: input, shape index: {}]
  %s9 = inlined_call_operand.vmem [shape: f32[32,32], index: 9, kind: input, shape index: {}]
  %s10 = inlined_call_operand.vmem [shape: f32[1,32], index: 10, kind: input, shape index: {}]
  %s11 = inlined_call_operand.vmem [shape: f32[32,32], index: 11, kind: input, shape index: {}]
  %s12 = inlined_call_operand.vmem [shape: f32[1,32], index: 12, kind: input, shape index: {}]
  %s13 = inlined_call_operand.vmem [shape: f32[1,32], index: 13, kind: input, shape index: {}]
  %s14 = inlined_call_operand.vmem [shape: f32[1,32], index: 14, kind: input, shape index: {}]
  %s15 = inlined_call_operand.vmem [shape: f32[32,32], index: 15, kind: output, shape index: {}]
  %s16 = sld [smem:[#allocation0]]
  $region70: #{encoder_forward_pallas.6} parent=0
    _
  %s18 = ssub.s32 1, %s16
  %s19 = scalar_select 0, %s18, %s16
  // Predicated region
  $region2: #{encoder_forward_pallas.6} parent=0 // pred_check
    _
  $region3: #{encoder_forward_pallas.6} parent=0 // pred_check_branch
    %21 = sbr.rel (0) target = $region5
  $region4: #{encoder_forward_pallas.6} parent=0 // pred_region
    _
  $region5: #{encoder_forward_pallas.6} parent=0 // pred_fallthru
    _
  // Predicated region
  $region6: #{encoder_forward_pallas.6} parent=0 // pred_check
    _
  $region7: #{encoder_forward_pallas.6} parent=0 // pred_check_branch
    %23 = sbr.rel (0) target = $region9
  $region8: #{encoder_forward_pallas.6} parent=0 // pred_region
    _
  $region9: #{encoder_forward_pallas.6} parent=0 // pred_fallthru
    _
  // Predicated region
  $region10: #{encoder_forward_pallas.6} parent=0 // pred_check
    _
  $region11: #{encoder_forward_pallas.6} parent=0 // pred_check_branch
    %25 = sbr.rel (0) target = $region13
  $region12: #{encoder_forward_pallas.6} parent=0 // pred_region
    _
  $region13: #{encoder_forward_pallas.6} parent=0 // pred_fallthru
    _
  // Predicated region
  $region14: #{encoder_forward_pallas.6} parent=0 // pred_check
    _
  $region15: #{encoder_forward_pallas.6} parent=0 // pred_check_branch
    %27 = sbr.rel (0) target = $region17
  $region16: #{encoder_forward_pallas.6} parent=0 // pred_region
    _
  $region17: #{encoder_forward_pallas.6} parent=0 // pred_fallthru
    _
  // Predicated region
  $region18: #{encoder_forward_pallas.6} parent=0 // pred_check
    _
  $region19: #{encoder_forward_pallas.6} parent=0 // pred_check_branch
    %29 = sbr.rel (0) target = $region21
  $region20: #{encoder_forward_pallas.6} parent=0 // pred_region
    _
  $region21: #{encoder_forward_pallas.6} parent=0 // pred_fallthru
    _
  // Predicated region
  $region22: #{encoder_forward_pallas.6} parent=0 // pred_check
    _
  $region23: #{encoder_forward_pallas.6} parent=0 // pred_check_branch
    %31 = sbr.rel (0) target = $region25
  $region24: #{encoder_forward_pallas.6} parent=0 // pred_region
    _
  $region25: #{encoder_forward_pallas.6} parent=0 // pred_fallthru
    _
  // Predicated region
  $region26: #{encoder_forward_pallas.6} parent=0 // pred_check
    _
  $region27: #{encoder_forward_pallas.6} parent=0 // pred_check_branch
    %33 = sbr.rel (0) target = $region29
  $region28: #{encoder_forward_pallas.6} parent=0 // pred_region
    _
  $region29: #{encoder_forward_pallas.6} parent=0 // pred_fallthru
    _
  // Predicated region
  $region30: #{encoder_forward_pallas.6} parent=0 // pred_check
    _
  $region31: #{encoder_forward_pallas.6} parent=0 // pred_check_branch
    %35 = sbr.rel (0) target = $region33
  $region32: #{encoder_forward_pallas.6} parent=0 // pred_region
    _
  $region33: #{encoder_forward_pallas.6} parent=0 // pred_fallthru
    _
  // Predicated region
  $region34: #{encoder_forward_pallas.6} parent=0 // pred_check
    _
  $region35: #{encoder_forward_pallas.6} parent=0 // pred_check_branch
    %37 = sbr.rel (0) target = $region37
  $region36: #{encoder_forward_pallas.6} parent=0 // pred_region
    _
  $region37: #{encoder_forward_pallas.6} parent=0 // pred_fallthru
    _
  // Predicated region
  $region38: #{encoder_forward_pallas.6} parent=0 // pred_check
    _
  $region39: #{encoder_forward_pallas.6} parent=0 // pred_check_branch
    %39 = sbr.rel (0) target = $region41
  $region40: #{encoder_forward_pallas.6} parent=0 // pred_region
    _
  $region41: #{encoder_forward_pallas.6} parent=0 // pred_fallthru
    _
  // Predicated region
  $region42: #{encoder_forward_pallas.6} parent=0 // pred_check
    _
  $region43: #{encoder_forward_pallas.6} parent=0 // pred_check_branch
    %41 = sbr.rel (0) target = $region45
  $region44: #{encoder_forward_pallas.6} parent=0 // pred_region
    _
  $region45: #{encoder_forward_pallas.6} parent=0 // pred_fallthru
    _
  // Predicated region
  $region46: #{encoder_forward_pallas.6} parent=0 // pred_check
    _
  $region47: #{encoder_forward_pallas.6} parent=0 // pred_check_branch
    %43 = sbr.rel (0) target = $region49
  $region48: #{encoder_forward_pallas.6} parent=0 // pred_region
    _
  $region49: #{encoder_forward_pallas.6} parent=0 // pred_fallthru
    _
  // Predicated region
  $region50: #{encoder_forward_pallas.6} parent=0 // pred_check
    _
  $region51: #{encoder_forward_pallas.6} parent=0 // pred_check_branch
    %45 = sbr.rel (0) target = $region53
  $region52: #{encoder_forward_pallas.6} parent=0 // pred_region
    _
  $region53: #{encoder_forward_pallas.6} parent=0 // pred_fallthru
    _
  // Predicated region
  $region54: #{encoder_forward_pallas.6} parent=0 // pred_check
    _
  $region55: #{encoder_forward_pallas.6} parent=0 // pred_check_branch
    %47 = sbr.rel (0) target = $region57
  $region56: #{encoder_forward_pallas.6} parent=0 // pred_region
    _
  $region57: #{encoder_forward_pallas.6} parent=0 // pred_fallthru
    _
  // Predicated region
  $region58: #{encoder_forward_pallas.6} parent=0 // pred_check
    _
  $region59: #{encoder_forward_pallas.6} parent=0 // pred_check_branch
    %49 = sbr.rel (0) target = $region61
  $region60: #{encoder_forward_pallas.6} parent=0 // pred_region
    _
  $region61: #{encoder_forward_pallas.6} parent=0 // pred_fallthru
    _
  %v50 = vld [vmem:[%s0] sm:$0xff]
  %v51 = vld [vmem:[%s0 + $0x8] sm:$0xff]
  %v52 = vld [vmem:[%s0 + $0x10] sm:$0xff]
  %v53 = vld [vmem:[%s0 + $0x18] sm:$0xff]
  %v54 = vld [vmem:[%s5] sm:$0xff]
  %v55 = vld [vmem:[%s5 + $0x8] sm:$0xff]
  %v56 = vld [vmem:[%s5 + $0x10] sm:$0xff]
  %v57 = vld [vmem:[%s5 + $0x18] sm:$0xff]
  %v58 = vld [vmem:[%s8] sm:$0x1]
  %v60 = vlaneseq
  %v61 = vshrl.u32 %v60, 7
  %v62 = vsub.s32 0, %v61
  %v63 = vrot.slane %v58, %v62
  %vm65 = vcmask 261120
  %v67 = vsel %vm65, %v50, 0
  %v70 = vsel %vm65, %v51, 0
  %v73 = vsel %vm65, %v52, 0
  %v76 = vsel %vm65, %v53, 0
  %78 = vmatprep.subr.mxu0 0.0
  %79 = vmatpush1.msra.mxu0 %v54
  %80 = vmatprep.subr.mxu0 0.0
  %81 = vmatpush1.msra.mxu0 %v55
  %82 = vmatprep.subr.mxu0 0.0
  %83 = vmatpush1.msra.mxu0 %v56
  %84 = vmatprep.subr.mxu0 0.0
  %85 = vmatpush1.msra.mxu0 %v57
  %86 = vmatprep.subr.mxu0 0.0
  %87 = vmatpush1.msra.mxu0 0.0
  %88 = vmatprep.subr.mxu0 0.0
  %89 = vmatpush1.msra.mxu0 0.0
  %90 = vmatprep.subr.mxu0 0.0
  %91 = vmatpush1.msra.mxu0 0.0
  %92 = vmatprep.subr.mxu0 0.0
  %93 = vmatpush1.msra.mxu0 0.0
  %94 = vmatprep.subr.mxu0 0.0
  %95 = vmatpush1.msra.mxu0 0.0
  %96 = vmatprep.subr.mxu0 0.0
  %97 = vmatpush1.msra.mxu0 0.0
  %98 = vmatprep.subr.mxu0 0.0
  %99 = vmatpush1.msra.mxu0 0.0
  %100 = vmatprep.subr.mxu0 0.0
  %101 = vmatpush1.msra.mxu0 0.0
  %102 = vmatprep.subr.mxu0 0.0
  %103 = vmatpush1.msra.mxu0 0.0
  %104 = vmatprep.subr.mxu0 0.0
  %105 = vmatpush1.msra.mxu0 0.0
  %106 = vmatprep.subr.mxu0 0.0
  %107 = vmatpush1.msra.mxu0 0.0
  %108 = vmatprep.subr.mxu0 0.0
  %109 = vmatpush1.msra.mxu0 0.0
  %110 = vmatprep.subr.mxu0 0.0
  %111 = vmatpush1.msra.mxu0 0.0
  %112 = vmatprep.subr.mxu0 0.0
  %113 = vmatpush1.msra.mxu0 0.0
  %114 = vmatprep.subr.mxu0 0.0
  %115 = vmatpush1.msra.mxu0 0.0
  %116 = vmatprep.subr.mxu0 0.0
  %117 = vmatpush1.msra.mxu0 0.0
  %118 = vmatprep.subr.mxu0 0.0
  %119 = vmatpush1.msra.mxu0 0.0
  %120 = vmatprep.subr.mxu0 0.0
  %121 = vmatpush1.msra.mxu0 0.0
  %122 = vmatprep.subr.mxu0 0.0
  %123 = vmatpush1.msra.mxu0 0.0
  %124 = vmatprep.subr.mxu0 0.0
  %125 = vmatpush1.msra.mxu0 0.0
  %126 = vmatprep.subr.mxu0 0.0
  %127 = vmatpush1.msra.mxu0 0.0
  %128 = vmatprep.subr.mxu0 0.0
  %129 = vmatpush1.msra.mxu0 0.0
  %130 = vmatprep.subr.mxu0 0.0
  %131 = vmatpush1.msra.mxu0 0.0
  %132 = vmatprep.subr.mxu0 0.0
  %133 = vmatpush1.msra.mxu0 0.0
  %134 = vmatprep.subr.mxu0 0.0
  %135 = vmatpush1.msra.mxu0 0.0
  %136 = vmatprep.subr.mxu0 0.0
  %137 = vmatpush1.msra.mxu0 0.0
  %138 = vmatprep.subr.mxu0 0.0
  %139 = vmatpush1.msra.mxu0 0.0
  %140 = vmatprep.subr.mxu0 0.0
  %141 = vmatpush1.msra.mxu0 0.0
  %142 = vmatprep.mubr.f32.mxu0 0.0
  %143 = vmatmul.mubr.f32.gmra.mrb[0].mxu0 %v67
  %v144 = vpop.f32.mrb[0].mxu0
  %v145 = vadd.f32 %v63, %v144
  %v146 = vpop.f32.mrb[0].mxu0
  %147 = vmatprep.mubr.f32.mxu0 0.0
  %148 = vmatmul.mubr.f32.gmra.mrb[0].mxu0 %v70
  %v149 = vpop.f32.mrb[0].mxu0
  %v150 = vadd.f32 %v63, %v149
  %v151 = vpop.f32.mrb[0].mxu0
  %152 = vmatprep.mubr.f32.mxu0 0.0
  %153 = vmatmul.mubr.f32.gmra.mrb[0].mxu0 %v73
  %v154 = vpop.f32.mrb[0].mxu0
  %v155 = vadd.f32 %v63, %v154
  %v156 = vpop.f32.mrb[0].mxu0
  %157 = vmatprep.mubr.f32.mxu0 0.0
  %158 = vmatmul.mubr.f32.gmra.mrb[0].mxu0 %v76
  %v159 = vpop.f32.mrb[0].mxu0
  %v160 = vadd.f32 %v63, %v159
  %v161 = vpop.f32.mrb[0].mxu0
  %162 = vdwg.mxu0
  %v163 = vld [vmem:[%s1] sm:$0xff]
  %v164 = vld [vmem:[%s1 + $0x8] sm:$0xff]
  %v165 = vld [vmem:[%s1 + $0x10] sm:$0xff]
  %v166 = vld [vmem:[%s1 + $0x18] sm:$0xff]
  %v167 = vld [vmem:[%s1 + $0x20] sm:$0xff]
  %v168 = vld [vmem:[%s1 + $0x28] sm:$0xff]
  %v169 = vld [vmem:[%s1 + $0x30] sm:$0xff]
  %v170 = vld [vmem:[%s1 + $0x38] sm:$0xff]
  %v171 = vld [vmem:[%s1 + $0x40] sm:$0xff]
  %v172 = vld [vmem:[%s1 + $0x48] sm:$0xff]
  %v173 = vld [vmem:[%s1 + $0x50] sm:$0xff]
  %v174 = vld [vmem:[%s1 + $0x58] sm:$0xff]
  %v175 = vld [vmem:[%s1 + $0x60] sm:$0xff]
  %v176 = vld [vmem:[%s1 + $0x68] sm:$0xff]
  %v177 = vld [vmem:[%s1 + $0x70] sm:$0xff]
  %v178 = vld [vmem:[%s1 + $0x78] sm:$0xff]
  %v179 = vld [vmem:[%s1 + $0x80] sm:$0xff]
  %v180 = vld [vmem:[%s1 + $0x88] sm:$0xff]
  %v181 = vld [vmem:[%s1 + $0x90] sm:$0xff]
  %v182 = vld [vmem:[%s1 + $0x98] sm:$0xff]
  %v183 = vld [vmem:[%s1 + $0xa0] sm:$0xff]
  %v184 = vld [vmem:[%s1 + $0xa8] sm:$0xff]
  %v185 = vld [vmem:[%s1 + $0xb0] sm:$0xff]
  %v186 = vld [vmem:[%s1 + $0xb8] sm:$0xff]
  %v187 = vld [vmem:[%s1 + $0xc0] sm:$0xff]
  %v188 = vld [vmem:[%s1 + $0xc8] sm:$0xff]
  %v189 = vld [vmem:[%s1 + $0xd0] sm:$0xff]
  %v190 = vld [vmem:[%s1 + $0xd8] sm:$0xff]
  %v191 = vld [vmem:[%s1 + $0xe0] sm:$0xff]
  %v192 = vld [vmem:[%s1 + $0xe8] sm:$0xff]
  %v193 = vld [vmem:[%s1 + $0xf0] sm:$0xff]
  %v194 = vld [vmem:[%s1 + $0xf8] sm:$0xff]
  %v195 = vld [vmem:[%s6] sm:$0xff]
  %v196 = vld [vmem:[%s6 + $0x8] sm:$0xff]
  %v197 = vld [vmem:[%s6 + $0x10] sm:$0xff]
  %v198 = vld [vmem:[%s6 + $0x18] sm:$0xff]
  %v199 = vld [vmem:[%s2] sm:$0xff]
  %v200 = vld [vmem:[%s2 + $0x8] sm:$0xff]
  %v201 = vld [vmem:[%s2 + $0x10] sm:$0xff]
  %v202 = vld [vmem:[%s2 + $0x18] sm:$0xff]
  %v203 = vld [vmem:[%s2 + $0x20] sm:$0xff]
  %v204 = vld [vmem:[%s2 + $0x28] sm:$0xff]
  %v205 = vld [vmem:[%s2 + $0x30] sm:$0xff]
  %v206 = vld [vmem:[%s2 + $0x38] sm:$0xff]
  %v207 = vld [vmem:[%s2 + $0x40] sm:$0xff]
  %v208 = vld [vmem:[%s2 + $0x48] sm:$0xff]
  %v209 = vld [vmem:[%s2 + $0x50] sm:$0xff]
  %v210 = vld [vmem:[%s2 + $0x58] sm:$0xff]
  %v211 = vld [vmem:[%s2 + $0x60] sm:$0xff]
  %v212 = vld [vmem:[%s2 + $0x68] sm:$0xff]
  %v213 = vld [vmem:[%s2 + $0x70] sm:$0xff]
  %v214 = vld [vmem:[%s2 + $0x78] sm:$0xff]
  %v215 = vld [vmem:[%s2 + $0x80] sm:$0xff]
  %v216 = vld [vmem:[%s2 + $0x88] sm:$0xff]
  %v217 = vld [vmem:[%s2 + $0x90] sm:$0xff]
  %v218 = vld [vmem:[%s2 + $0x98] sm:$0xff]
  %v219 = vld [vmem:[%s2 + $0xa0] sm:$0xff]
  %v220 = vld [vmem:[%s2 + $0xa8] sm:$0xff]
  %v221 = vld [vmem:[%s2 + $0xb0] sm:$0xff]
  %v222 = vld [vmem:[%s2 + $0xb8] sm:$0xff]
  %v223 = vld [vmem:[%s2 + $0xc0] sm:$0xff]
  %v224 = vld [vmem:[%s2 + $0xc8] sm:$0xff]
  %v225 = vld [vmem:[%s2 + $0xd0] sm:$0xff]
  %v226 = vld [vmem:[%s2 + $0xd8] sm:$0xff]
  %v227 = vld [vmem:[%s2 + $0xe0] sm:$0xff]
  %v228 = vld [vmem:[%s2 + $0xe8] sm:$0xff]
  %v229 = vld [vmem:[%s2 + $0xf0] sm:$0xff]
  %v230 = vld [vmem:[%s2 + $0xf8] sm:$0xff]
  %v231 = vld [vmem:[%s7] sm:$0xff]
  %v232 = vld [vmem:[%s7 + $0x8] sm:$0xff]
  %v233 = vld [vmem:[%s7 + $0x10] sm:$0xff]
  %v234 = vld [vmem:[%s7 + $0x18] sm:$0xff]
  %v236 = vsel %vm65, %v199, 0
  %v239 = vsel %vm65, %v200, 0
  %v242 = vsel %vm65, %v201, 0
  %v245 = vsel %vm65, %v202, 0
  %v248 = vsel %vm65, %v203, 0
  %v251 = vsel %vm65, %v204, 0
  %v254 = vsel %vm65, %v205, 0
  %v257 = vsel %vm65, %v206, 0
  %v260 = vsel %vm65, %v207, 0
  %v263 = vsel %vm65, %v208, 0
  %v266 = vsel %vm65, %v209, 0
  %v269 = vsel %vm65, %v210, 0
  %v272 = vsel %vm65, %v211, 0
  %v275 = vsel %vm65, %v212, 0
  %v278 = vsel %vm65, %v213, 0
  %v281 = vsel %vm65, %v214, 0
  %v284 = vsel %vm65, %v215, 0
  %v287 = vsel %vm65, %v216, 0
  %v290 = vsel %vm65, %v217, 0
  %v293 = vsel %vm65, %v218, 0
  %v296 = vsel %vm65, %v219, 0
  %v299 = vsel %vm65, %v220, 0
  %v302 = vsel %vm65, %v221, 0
  %v305 = vsel %vm65, %v222, 0
  %v308 = vsel %vm65, %v223, 0
  %v311 = vsel %vm65, %v224, 0
  %v314 = vsel %vm65, %v225, 0
  %v317 = vsel %vm65, %v226, 0
  %v320 = vsel %vm65, %v227, 0
  %v323 = vsel %vm65, %v228, 0
  %v326 = vsel %vm65, %v229, 0
  %v329 = vsel %vm65, %v230, 0
  %331 = vmatprep.subr.mxu0 0.0
  %332 = vmatpush1.msra.mxu0 %v231
  %333 = vmatprep.subr.mxu0 0.0
  %334 = vmatpush1.msra.mxu0 %v232
  %335 = vmatprep.subr.mxu0 0.0
  %336 = vmatpush1.msra.mxu0 %v233
  %337 = vmatprep.subr.mxu0 0.0
  %338 = vmatpush1.msra.mxu0 %v234
  %339 = vmatprep.subr.mxu0 0.0
  %340 = vmatpush1.msra.mxu0 0.0
  %341 = vmatprep.subr.mxu0 0.0
  %342 = vmatpush1.msra.mxu0 0.0
  %343 = vmatprep.subr.mxu0 0.0
  %344 = vmatpush1.msra.mxu0 0.0
  %345 = vmatprep.subr.mxu0 0.0
  %346 = vmatpush1.msra.mxu0 0.0
  %347 = vmatprep.subr.mxu0 0.0
  %348 = vmatpush1.msra.mxu0 0.0
  %349 = vmatprep.subr.mxu0 0.0
  %350 = vmatpush1.msra.mxu0 0.0
  %351 = vmatprep.subr.mxu0 0.0
  %352 = vmatpush1.msra.mxu0 0.0
  %353 = vmatprep.subr.mxu0 0.0
  %354 = vmatpush1.msra.mxu0 0.0
  %355 = vmatprep.subr.mxu0 0.0
  %356 = vmatpush1.msra.mxu0 0.0
  %357 = vmatprep.subr.mxu0 0.0
  %358 = vmatpush1.msra.mxu0 0.0
  %359 = vmatprep.subr.mxu0 0.0
  %360 = vmatpush1.msra.mxu0 0.0
  %361 = vmatprep.subr.mxu0 0.0
  %362 = vmatpush1.msra.mxu0 0.0
  %363 = vmatprep.subr.mxu0 0.0
  %364 = vmatpush1.msra.mxu0 0.0
  %365 = vmatprep.subr.mxu0 0.0
  %366 = vmatpush1.msra.mxu0 0.0
  %367 = vmatprep.subr.mxu0 0.0
  %368 = vmatpush1.msra.mxu0 0.0
  %369 = vmatprep.subr.mxu0 0.0
  %370 = vmatpush1.msra.mxu0 0.0
  %371 = vmatprep.subr.mxu0 0.0
  %372 = vmatpush1.msra.mxu0 0.0
  %373 = vmatprep.subr.mxu0 0.0
  %374 = vmatpush1.msra.mxu0 0.0
  %375 = vmatprep.subr.mxu0 0.0
  %376 = vmatpush1.msra.mxu0 0.0
  %377 = vmatprep.subr.mxu0 0.0
  %378 = vmatpush1.msra.mxu0 0.0
  %379 = vmatprep.subr.mxu0 0.0
  %380 = vmatpush1.msra.mxu0 0.0
  %381 = vmatprep.subr.mxu0 0.0
  %382 = vmatpush1.msra.mxu0 0.0
  %383 = vmatprep.subr.mxu0 0.0
  %384 = vmatpush1.msra.mxu0 0.0
  %385 = vmatprep.subr.mxu0 0.0
  %386 = vmatpush1.msra.mxu0 0.0
  %387 = vmatprep.subr.mxu0 0.0
  %388 = vmatpush1.msra.mxu0 0.0
  %389 = vmatprep.subr.mxu0 0.0
  %390 = vmatpush1.msra.mxu0 0.0
  %391 = vmatprep.subr.mxu0 0.0
  %392 = vmatpush1.msra.mxu0 0.0
  %393 = vmatprep.subr.mxu0 0.0
  %394 = vmatpush1.msra.mxu0 0.0
  %395 = vmatprep.mubr.f32.mxu0 0.0
  %396 = vmatmul.mubr.f32.gmra.mrb[0].mxu0 %v236
  %v397 = vpop.f32.mrb[0].mxu0
  %v398 = vadd.f32 0.0, %v397
  %v399 = vpop.f32.mrb[0].mxu0
  %400 = vmatprep.mubr.f32.mxu0 0.0
  %401 = vmatmul.mubr.f32.gmra.mrb[0].mxu0 %v239
  %v402 = vpop.f32.mrb[0].mxu0
  %v403 = vadd.f32 0.0, %v402
  %v404 = vpop.f32.mrb[0].mxu0
  %405 = vmatprep.mubr.f32.mxu0 0.0
  %406 = vmatmul.mubr.f32.gmra.mrb[0].mxu0 %v242
  %v407 = vpop.f32.mrb[0].mxu0
  %v408 = vadd.f32 0.0, %v407
  %v409 = vpop.f32.mrb[0].mxu0
  %410 = vmatprep.mubr.f32.mxu0 0.0
  %411 = vmatmul.mubr.f32.gmra.mrb[0].mxu0 %v245
  %v412 = vpop.f32.mrb[0].mxu0
  %v413 = vadd.f32 0.0, %v412
  %v414 = vpop.f32.mrb[0].mxu0
  %415 = vmatprep.mubr.f32.mxu0 0.0
  %416 = vmatmul.mubr.f32.gmra.mrb[0].mxu0 %v248
  %v417 = vpop.f32.mrb[0].mxu0
  %v418 = vadd.f32 0.0, %v417
  %v419 = vpop.f32.mrb[0].mxu0
  %420 = vmatprep.mubr.f32.mxu0 0.0
  %421 = vmatmul.mubr.f32.gmra.mrb[0].mxu0 %v251
  %v422 = vpop.f32.mrb[0].mxu0
  %v423 = vadd.f32 0.0, %v422
  %v424 = vpop.f32.mrb[0].mxu0
  %425 = vmatprep.mubr.f32.mxu0 0.0
  %426 = vmatmul.mubr.f32.gmra.mrb[0].mxu0 %v254
  %v427 = vpop.f32.mrb[0].mxu0
  %v428 = vadd.f32 0.0, %v427
  %v429 = vpop.f32.mrb[0].mxu0
  %430 = vmatprep.mubr.f32.mxu0 0.0
  %431 = vmatmul.mubr.f32.gmra.mrb[0].mxu0 %v257
  %v432 = vpop.f32.mrb[0].mxu0
  %v433 = vadd.f32 0.0, %v432
  %v434 = vpop.f32.mrb[0].mxu0
  %435 = vmatprep.mubr.f32.mxu0 0.0
  %436 = vmatmul.mubr.f32.gmra.mrb[0].mxu0 %v260
  %v437 = vpop.f32.mrb[0].mxu0
  %v438 = vadd.f32 0.0, %v437
  %v439 = vpop.f32.mrb[0].mxu0
  %440 = vmatprep.mubr.f32.mxu0 0.0
  %441 = vmatmul.mubr.f32.gmra.mrb[0].mxu0 %v263
  %v442 = vpop.f32.mrb[0].mxu0
  %v443 = vadd.f32 0.0, %v442
  %v444 = vpop.f32.mrb[0].mxu0
  %445 = vmatprep.mubr.f32.mxu0 0.0
  %446 = vmatmul.mubr.f32.gmra.mrb[0].mxu0 %v266
  %v447 = vpop.f32.mrb[0].mxu0
  %v448 = vadd.f32 0.0, %v447
  %v449 = vpop.f32.mrb[0].mxu0
  %450 = vmatprep.mubr.f32.mxu0 0.0
  %451 = vmatmul.mubr.f32.gmra.mrb[0].mxu0 %v269
  %v452 = vpop.f32.mrb[0].mxu0
  %v453 = vadd.f32 0.0, %v452
  %v454 = vpop.f32.mrb[0].mxu0
  %455 = vmatprep.mubr.f32.mxu0 0.0
  %456 = vmatmul.mubr.f32.gmra.mrb[0].mxu0 %v272
  %v457 = vpop.f32.mrb[0].mxu0
  %v458 = vadd.f32 0.0, %v457
  %v459 = vpop.f32.mrb[0].mxu0
  %460 = vmatprep.mubr.f32.mxu0 0.0
  %461 = vmatmul.mubr.f32.gmra.mrb[0].mxu0 %v275
  %v462 = vpop.f32.mrb[0].mxu0
  %v463 = vadd.f32 0.0, %v462
  %v464 = vpop.f32.mrb[0].mxu0
  %465 = vmatprep.mubr.f32.mxu0 0.0
  %466 = vmatmul.mubr.f32.gmra.mrb[0].mxu0 %v278
  %v467 = vpop.f32.mrb[0].mxu0
  %v468 = vadd.f32 0.0, %v467
  %v469 = vpop.f32.mrb[0].mxu0
  %470 = vmatprep.mubr.f32.mxu0 0.0
  %471 = vmatmul.mubr.f32.gmra.mrb[0].mxu0 %v281
  %v472 = vpop.f32.mrb[0].mxu0
  %v473 = vadd.f32 0.0, %v472
  %v474 = vpop.f32.mrb[0].mxu0
  %475 = vmatprep.mubr.f32.mxu0 0.0
  %476 = vmatmul.mubr.f32.gmra.mrb[0].mxu0 %v284
  %v477 = vpop.f32.mrb[0].mxu0
  %v478 = vadd.f32 0.0, %v477
  %v479 = vpop.f32.mrb[0].mxu0
  %480 = vmatprep.mubr.f32.mxu0 0.0
  %481 = vmatmul.mubr.f32.gmra.mrb[0].mxu0 %v287
  %v482 = vpop.f32.mrb[0].mxu0
  %v483 = vadd.f32 0.0, %v482
  %v484 = vpop.f32.mrb[0].mxu0
  %485 = vmatprep.mubr.f32.mxu0 0.0
  %486 = vmatmul.mubr.f32.gmra.mrb[0].mxu0 %v290
  %v487 = vpop.f32.mrb[0].mxu0
  %v488 = vadd.f32 0.0, %v487
  %v489 = vpop.f32.mrb[0].mxu0
  %490 = vmatprep.mubr.f32.mxu0 0.0
  %491 = vmatmul.mubr.f32.gmra.mrb[0].mxu0 %v293
  %v492 = vpop.f32.mrb[0].mxu0
  %v493 = vadd.f32 0.0, %v492
  %v494 = vpop.f32.mrb[0].mxu0
  %495 = vmatprep.mubr.f32.mxu0 0.0
  %496 = vmatmul.mubr.f32.gmra.mrb[0].mxu0 %v296
  %v497 = vpop.f32.mrb[0].mxu0
  %v498 = vadd.f32 0.0, %v497
  %v499 = vpop.f32.mrb[0].mxu0
  %500 = vmatprep.mubr.f32.mxu0 0.0
  %501 = vmatmul.mubr.f32.gmra.mrb[0].mxu0 %v299
  %v502 = vpop.f32.mrb[0].mxu0
  %v503 = vadd.f32 0.0, %v502
  %v504 = vpop.f32.mrb[0].mxu0
  %505 = vmatprep.mubr.f32.mxu0 0.0
  %506 = vmatmul.mubr.f32.gmra.mrb[0].mxu0 %v302
  %v507 = vpop.f32.mrb[0].mxu0
  %v508 = vadd.f32 0.0, %v507
  %v509 = vpop.f32.mrb[0].mxu0
  %510 = vmatprep.mubr.f32.mxu0 0.0
  %511 = vmatmul.mubr.f32.gmra.mrb[0].mxu0 %v305
  %v512 = vpop.f32.mrb[0].mxu0
  %v513 = vadd.f32 0.0, %v512
  %v514 = vpop.f32.mrb[0].mxu0
  %515 = vmatprep.mubr.f32.mxu0 0.0
  %516 = vmatmul.mubr.f32.gmra.mrb[0].mxu0 %v308
  %v517 = vpop.f32.mrb[0].mxu0
  %v518 = vadd.f32 0.0, %v517
  %v519 = vpop.f32.mrb[0].mxu0
  %520 = vmatprep.mubr.f32.mxu0 0.0
  %521 = vmatmul.mubr.f32.gmra.mrb[0].mxu0 %v311
  %v522 = vpop.f32.mrb[0].mxu0
  %v523 = vadd.f32 0.0, %v522
  %v524 = vpop.f32.mrb[0].mxu0
  %525 = vmatprep.mubr.f32.mxu0 0.0
  %526 = vmatmul.mubr.f32.gmra.mrb[0].mxu0 %v314
  %v527 = vpop.f32.mrb[0].mxu0
  %v528 = vadd.f32 0.0, %v527
  %v529 = vpop.f32.mrb[0].mxu0
  %530 = vmatprep.mubr.f32.mxu0 0.0
  %531 = vmatmul.mubr.f32.gmra.mrb[0].mxu0 %v317
  %v532 = vpop.f32.mrb[0].mxu0
  %v533 = vadd.f32 0.0, %v532
  %v534 = vpop.f32.mrb[0].mxu0
  %535 = vmatprep.mubr.f32.mxu0 0.0
  %536 = vmatmul.mubr.f32.gmra.mrb[0].mxu0 %v320
  %v537 = vpop.f32.mrb[0].mxu0
  %v538 = vadd.f32 0.0, %v537
  %v539 = vpop.f32.mrb[0].mxu0
  %540 = vmatprep.mubr.f32.mxu0 0.0
  %541 = vmatmul.mubr.f32.gmra.mrb[0].mxu0 %v323
  %v542 = vpop.f32.mrb[0].mxu0
  %v543 = vadd.f32 0.0, %v542
  %v544 = vpop.f32.mrb[0].mxu0
  %545 = vmatprep.mubr.f32.mxu0 0.0
  %546 = vmatmul.mubr.f32.gmra.mrb[0].mxu0 %v326
  %v547 = vpop.f32.mrb[0].mxu0
  %v548 = vadd.f32 0.0, %v547
  %v549 = vpop.f32.mrb[0].mxu0
  %550 = vmatprep.mubr.f32.mxu0 0.0
  %551 = vmatmul.mubr.f32.gmra.mrb[0].mxu0 %v329
  %v552 = vpop.f32.mrb[0].mxu0
  %v553 = vadd.f32 0.0, %v552
  %v554 = vpop.f32.mrb[0].mxu0
  %555 = vdwg.mxu0
  %v557 = vsel %vm65, %v163, 0
  %v560 = vsel %vm65, %v164, 0
  %v563 = vsel %vm65, %v165, 0
  %v566 = vsel %vm65, %v166, 0
  %v569 = vsel %vm65, %v167, 0
  %v572 = vsel %vm65, %v168, 0
  %v575 = vsel %vm65, %v169, 0
  %v578 = vsel %vm65, %v170, 0
  %v581 = vsel %vm65, %v171, 0
  %v584 = vsel %vm65, %v172, 0
  %v587 = vsel %vm65, %v173, 0
  %v590 = vsel %vm65, %v174, 0
  %v593 = vsel %vm65, %v175, 0
  %v596 = vsel %vm65, %v176, 0
  %v599 = vsel %vm65, %v177, 0
  %v602 = vsel %vm65, %v178, 0
  %v605 = vsel %vm65, %v179, 0
  %v608 = vsel %vm65, %v180, 0
  %v611 = vsel %vm65, %v181, 0
  %v614 = vsel %vm65, %v182, 0
  %v617 = vsel %vm65, %v183, 0
  %v620 = vsel %vm65, %v184, 0
  %v623 = vsel %vm65, %v185, 0
  %v626 = vsel %vm65, %v186, 0
  %v629 = vsel %vm65, %v187, 0
  %v632 = vsel %vm65, %v188, 0
  %v635 = vsel %vm65, %v189, 0
  %v638 = vsel %vm65, %v190, 0
  %v641 = vsel %vm65, %v191, 0
  %v644 = vsel %vm65, %v192, 0
  %v647 = vsel %vm65, %v193, 0
  %v650 = vsel %vm65, %v194, 0
  %652 = vmatprep.subr.mxu0 0.0
  %653 = vmatpush1.msra.mxu0 %v195
  %654 = vmatprep.subr.mxu0 0.0
  %655 = vmatpush1.msra.mxu0 %v196
  %656 = vmatprep.subr.mxu0 0.0
  %657 = vmatpush1.msra.mxu0 %v197
  %658 = vmatprep.subr.mxu0 0.0
  %659 = vmatpush1.msra.mxu0 %v198
  %660 = vmatprep.subr.mxu0 0.0
  %661 = vmatpush1.msra.mxu0 0.0
  %662 = vmatprep.subr.mxu0 0.0
  %663 = vmatpush1.msra.mxu0 0.0
  %664 = vmatprep.subr.mxu0 0.0
  %665 = vmatpush1.msra.mxu0 0.0
  %666 = vmatprep.subr.mxu0 0.0
  %667 = vmatpush1.msra.mxu0 0.0
  %668 = vmatprep.subr.mxu0 0.0
  %669 = vmatpush1.msra.mxu0 0.0
  %670 = vmatprep.subr.mxu0 0.0
  %671 = vmatpush1.msra.mxu0 0.0
  %672 = vmatprep.subr.mxu0 0.0
  %673 = vmatpush1.msra.mxu0 0.0
  %674 = vmatprep.subr.mxu0 0.0
  %675 = vmatpush1.msra.mxu0 0.0
  %676 = vmatprep.subr.mxu0 0.0
  %677 = vmatpush1.msra.mxu0 0.0
  %678 = vmatprep.subr.mxu0 0.0
  %679 = vmatpush1.msra.mxu0 0.0
  %680 = vmatprep.subr.mxu0 0.0
  %681 = vmatpush1.msra.mxu0 0.0
  %682 = vmatprep.subr.mxu0 0.0
  %683 = vmatpush1.msra.mxu0 0.0
  %684 = vmatprep.subr.mxu0 0.0
  %685 = vmatpush1.msra.mxu0 0.0
  %686 = vmatprep.subr.mxu0 0.0
  %687 = vmatpush1.msra.mxu0 0.0
  %688 = vmatprep.subr.mxu0 0.0
  %689 = vmatpush1.msra.mxu0 0.0
  %690 = vmatprep.subr.mxu0 0.0
  %691 = vmatpush1.msra.mxu0 0.0
  %692 = vmatprep.subr.mxu0 0.0
  %693 = vmatpush1.msra.mxu0 0.0
  %694 = vmatprep.subr.mxu0 0.0
  %695 = vmatpush1.msra.mxu0 0.0
  %696 = vmatprep.subr.mxu0 0.0
  %697 = vmatpush1.msra.mxu0 0.0
  %698 = vmatprep.subr.mxu0 0.0
  %699 = vmatpush1.msra.mxu0 0.0
  %700 = vmatprep.subr.mxu0 0.0
  %701 = vmatpush1.msra.mxu0 0.0
  %702 = vmatprep.subr.mxu0 0.0
  %703 = vmatpush1.msra.mxu0 0.0
  %704 = vmatprep.subr.mxu0 0.0
  %705 = vmatpush1.msra.mxu0 0.0
  %706 = vmatprep.subr.mxu0 0.0
  %707 = vmatpush1.msra.mxu0 0.0
  %708 = vmatprep.subr.mxu0 0.0
  %709 = vmatpush1.msra.mxu0 0.0
  %710 = vmatprep.subr.mxu0 0.0
  %711 = vmatpush1.msra.mxu0 0.0
  %712 = vmatprep.subr.mxu0 0.0
  %713 = vmatpush1.msra.mxu0 0.0
  %714 = vmatprep.subr.mxu0 0.0
  %715 = vmatpush1.msra.mxu0 0.0
  %716 = vmatprep.mubr.f32.mxu0 0.0
  %717 = vmatmul.mubr.f32.gmra.mrb[0].mxu0 %v557
  %v718 = vpop.f32.mrb[0].mxu0
  %v719 = vadd.f32 %v398, %v718
  %v720 = vpop.f32.mrb[0].mxu0
  %721 = vmatprep.mubr.f32.mxu0 0.0
  %722 = vmatmul.mubr.f32.gmra.mrb[0].mxu0 %v560
  %v723 = vpop.f32.mrb[0].mxu0
  %v724 = vadd.f32 %v403, %v723
  %v725 = vpop.f32.mrb[0].mxu0
  %726 = vmatprep.mubr.f32.mxu0 0.0
  %727 = vmatmul.mubr.f32.gmra.mrb[0].mxu0 %v563
  %v728 = vpop.f32.mrb[0].mxu0
  %v729 = vadd.f32 %v408, %v728
  %v730 = vpop.f32.mrb[0].mxu0
  %731 = vmatprep.mubr.f32.mxu0 0.0
  %732 = vmatmul.mubr.f32.gmra.mrb[0].mxu0 %v566
  %v733 = vpop.f32.mrb[0].mxu0
  %v734 = vadd.f32 %v413, %v733
  %v735 = vpop.f32.mrb[0].mxu0
  %736 = vmatprep.mubr.f32.mxu0 0.0
  %737 = vmatmul.mubr.f32.gmra.mrb[0].mxu0 %v569
  %v738 = vpop.f32.mrb[0].mxu0
  %v739 = vadd.f32 %v418, %v738
  %v740 = vpop.f32.mrb[0].mxu0
  %741 = vmatprep.mubr.f32.mxu0 0.0
  %742 = vmatmul.mubr.f32.gmra.mrb[0].mxu0 %v572
  %v743 = vpop.f32.mrb[0].mxu0
  %v744 = vadd.f32 %v423, %v743
  %v745 = vpop.f32.mrb[0].mxu0
  %746 = vmatprep.mubr.f32.mxu0 0.0
  %747 = vmatmul.mubr.f32.gmra.mrb[0].mxu0 %v575
  %v748 = vpop.f32.mrb[0].mxu0
  %v749 = vadd.f32 %v428, %v748
  %v750 = vpop.f32.mrb[0].mxu0
  %751 = vmatprep.mubr.f32.mxu0 0.0
  %752 = vmatmul.mubr.f32.gmra.mrb[0].mxu0 %v578
  %v753 = vpop.f32.mrb[0].mxu0
  %v754 = vadd.f32 %v433, %v753
  %v755 = vpop.f32.mrb[0].mxu0
  %756 = vmatprep.mubr.f32.mxu0 0.0
  %757 = vmatmul.mubr.f32.gmra.mrb[0].mxu0 %v581
  %v758 = vpop.f32.mrb[0].mxu0
  %v759 = vadd.f32 %v438, %v758
  %v760 = vpop.f32.mrb[0].mxu0
  %761 = vmatprep.mubr.f32.mxu0 0.0
  %762 = vmatmul.mubr.f32.gmra.mrb[0].mxu0 %v584
  %v763 = vpop.f32.mrb[0].mxu0
  %v764 = vadd.f32 %v443, %v763
  %v765 = vpop.f32.mrb[0].mxu0
  %766 = vmatprep.mubr.f32.mxu0 0.0
  %767 = vmatmul.mubr.f32.gmra.mrb[0].mxu0 %v587
  %v768 = vpop.f32.mrb[0].mxu0
  %v769 = vadd.f32 %v448, %v768
  %v770 = vpop.f32.mrb[0].mxu0
  %771 = vmatprep.mubr.f32.mxu0 0.0
  %772 = vmatmul.mubr.f32.gmra.mrb[0].mxu0 %v590
  %v773 = vpop.f32.mrb[0].mxu0
  %v774 = vadd.f32 %v453, %v773
  %v775 = vpop.f32.mrb[0].mxu0
  %776 = vmatprep.mubr.f32.mxu0 0.0
  %777 = vmatmul.mubr.f32.gmra.mrb[0].mxu0 %v593
  %v778 = vpop.f32.mrb[0].mxu0
  %v779 = vadd.f32 %v458, %v778
  %v780 = vpop.f32.mrb[0].mxu0
  %781 = vmatprep.mubr.f32.mxu0 0.0
  %782 = vmatmul.mubr.f32.gmra.mrb[0].mxu0 %v596
  %v783 = vpop.f32.mrb[0].mxu0
  %v784 = vadd.f32 %v463, %v783
  %v785 = vpop.f32.mrb[0].mxu0
  %786 = vmatprep.mubr.f32.mxu0 0.0
  %787 = vmatmul.mubr.f32.gmra.mrb[0].mxu0 %v599
  %v788 = vpop.f32.mrb[0].mxu0
  %v789 = vadd.f32 %v468, %v788
  %v790 = vpop.f32.mrb[0].mxu0
  %791 = vmatprep.mubr.f32.mxu0 0.0
  %792 = vmatmul.mubr.f32.gmra.mrb[0].mxu0 %v602
  %v793 = vpop.f32.mrb[0].mxu0
  %v794 = vadd.f32 %v473, %v793
  %v795 = vpop.f32.mrb[0].mxu0
  %796 = vmatprep.mubr.f32.mxu0 0.0
  %797 = vmatmul.mubr.f32.gmra.mrb[0].mxu0 %v605
  %v798 = vpop.f32.mrb[0].mxu0
  %v799 = vadd.f32 %v478, %v798
  %v800 = vpop.f32.mrb[0].mxu0
  %801 = vmatprep.mubr.f32.mxu0 0.0
  %802 = vmatmul.mubr.f32.gmra.mrb[0].mxu0 %v608
  %v803 = vpop.f32.mrb[0].mxu0
  %v804 = vadd.f32 %v483, %v803
  %v805 = vpop.f32.mrb[0].mxu0
  %806 = vmatprep.mubr.f32.mxu0 0.0
  %807 = vmatmul.mubr.f32.gmra.mrb[0].mxu0 %v611
  %v808 = vpop.f32.mrb[0].mxu0
  %v809 = vadd.f32 %v488, %v808
  %v810 = vpop.f32.mrb[0].mxu0
  %811 = vmatprep.mubr.f32.mxu0 0.0
  %812 = vmatmul.mubr.f32.gmra.mrb[0].mxu0 %v614
  %v813 = vpop.f32.mrb[0].mxu0
  %v814 = vadd.f32 %v493, %v813
  %v815 = vpop.f32.mrb[0].mxu0
  %816 = vmatprep.mubr.f32.mxu0 0.0
  %817 = vmatmul.mubr.f32.gmra.mrb[0].mxu0 %v617
  %v818 = vpop.f32.mrb[0].mxu0
  %v819 = vadd.f32 %v498, %v818
  %v820 = vpop.f32.mrb[0].mxu0
  %821 = vmatprep.mubr.f32.mxu0 0.0
  %822 = vmatmul.mubr.f32.gmra.mrb[0].mxu0 %v620
  %v823 = vpop.f32.mrb[0].mxu0
  %v824 = vadd.f32 %v503, %v823
  %v825 = vpop.f32.mrb[0].mxu0
  %826 = vmatprep.mubr.f32.mxu0 0.0
  %827 = vmatmul.mubr.f32.gmra.mrb[0].mxu0 %v623
  %v828 = vpop.f32.mrb[0].mxu0
  %v829 = vadd.f32 %v508, %v828
  %v830 = vpop.f32.mrb[0].mxu0
  %831 = vmatprep.mubr.f32.mxu0 0.0
  %832 = vmatmul.mubr.f32.gmra.mrb[0].mxu0 %v626
  %v833 = vpop.f32.mrb[0].mxu0
  %v834 = vadd.f32 %v513, %v833
  %v835 = vpop.f32.mrb[0].mxu0
  %836 = vmatprep.mubr.f32.mxu0 0.0
  %837 = vmatmul.mubr.f32.gmra.mrb[0].mxu0 %v629
  %v838 = vpop.f32.mrb[0].mxu0
  %v839 = vadd.f32 %v518, %v838
  %v840 = vpop.f32.mrb[0].mxu0
  %841 = vmatprep.mubr.f32.mxu0 0.0
  %842 = vmatmul.mubr.f32.gmra.mrb[0].mxu0 %v632
  %v843 = vpop.f32.mrb[0].mxu0
  %v844 = vadd.f32 %v523, %v843
  %v845 = vpop.f32.mrb[0].mxu0
  %846 = vmatprep.mubr.f32.mxu0 0.0
  %847 = vmatmul.mubr.f32.gmra.mrb[0].mxu0 %v635
  %v848 = vpop.f32.mrb[0].mxu0
  %v849 = vadd.f32 %v528, %v848
  %v850 = vpop.f32.mrb[0].mxu0
  %851 = vmatprep.mubr.f32.mxu0 0.0
  %852 = vmatmul.mubr.f32.gmra.mrb[0].mxu0 %v638
  %v853 = vpop.f32.mrb[0].mxu0
  %v854 = vadd.f32 %v533, %v853
  %v855 = vpop.f32.mrb[0].mxu0
  %856 = vmatprep.mubr.f32.mxu0 0.0
  %857 = vmatmul.mubr.f32.gmra.mrb[0].mxu0 %v641
  %v858 = vpop.f32.mrb[0].mxu0
  %v859 = vadd.f32 %v538, %v858
  %v860 = vpop.f32.mrb[0].mxu0
  %861 = vmatprep.mubr.f32.mxu0 0.0
  %862 = vmatmul.mubr.f32.gmra.mrb[0].mxu0 %v644
  %v863 = vpop.f32.mrb[0].mxu0
  %v864 = vadd.f32 %v543, %v863
  %v865 = vpop.f32.mrb[0].mxu0
  %866 = vmatprep.mubr.f32.mxu0 0.0
  %867 = vmatmul.mubr.f32.gmra.mrb[0].mxu0 %v647
  %v868 = vpop.f32.mrb[0].mxu0
  %v869 = vadd.f32 %v548, %v868
  %v870 = vpop.f32.mrb[0].mxu0
  %871 = vmatprep.mubr.f32.mxu0 0.0
  %872 = vmatmul.mubr.f32.gmra.mrb[0].mxu0 %v650
  %v873 = vpop.f32.mrb[0].mxu0
  %v874 = vadd.f32 %v553, %v873
  %v875 = vpop.f32.mrb[0].mxu0
  %876 = vdwg.mxu0
  %v881 = vcombine.high %v145, %v145
  %v883 = vunpack.c.l.s4 1966171168
  %v884 = vunpack.c.0.s8 %v883
  %v885 = vlaneseq
  %v886 = vshrl.u32 %v885, 7
  %v887 = vsub.s32 %v884, %v886
  %v888 = vrot.slane %v145, %v887
  %v890 = vunpack.c.l.s4 1966171168
  %v891 = vunpack.c.0.s8 %v890
  %v892 = vlaneseq
  %v893 = vshrl.u32 %v892, 7
  %v894 = vsub.s32 %v891, %v893
  %v895 = vrot.slane %v881, %v894
  %v896 = vcombine.high %v888, %v888
  %v897 = vcombine.high %v895, %v895
  %v899 = vunpack.c.l.s4 1966171168
  %v900 = vunpack.c.0.s8 %v899
  %v901 = vlaneseq
  %v902 = vshrl.u32 %v901, 7
  %v903 = vsub.s32 %v900, %v902
  %v904 = vrot.slane %v888, %v903
  %v906 = vunpack.c.l.s4 1966171168
  %v907 = vunpack.c.0.s8 %v906
  %v908 = vlaneseq
  %v909 = vshrl.u32 %v908, 7
  %v910 = vsub.s32 %v907, %v909
  %v911 = vrot.slane %v895, %v910
  %v913 = vunpack.c.l.s4 1966171168
  %v914 = vunpack.c.0.s8 %v913
  %v915 = vlaneseq
  %v916 = vshrl.u32 %v915, 7
  %v917 = vsub.s32 %v914, %v916
  %v918 = vrot.slane %v896, %v917
  %v920 = vunpack.c.l.s4 1966171168
  %v921 = vunpack.c.0.s8 %v920
  %v922 = vlaneseq
  %v923 = vshrl.u32 %v922, 7
  %v924 = vsub.s32 %v921, %v923
  %v925 = vrot.slane %v897, %v924
  %v926 = vcombine.high %v904, %v904
  %v927 = vcombine.high %v911, %v911
  %v928 = vcombine.high %v918, %v918
  %v929 = vcombine.high %v925, %v925
  %v930 = vcombine.high %v150, %v150
  %v932 = vunpack.c.l.s4 1966171168
  %v933 = vunpack.c.0.s8 %v932
  %v934 = vlaneseq
  %v935 = vshrl.u32 %v934, 7
  %v936 = vsub.s32 %v933, %v935
  %v937 = vrot.slane %v150, %v936
  %v939 = vunpack.c.l.s4 1966171168
  %v940 = vunpack.c.0.s8 %v939
  %v941 = vlaneseq
  %v942 = vshrl.u32 %v941, 7
  %v943 = vsub.s32 %v940, %v942
  %v944 = vrot.slane %v930, %v943
  %v945 = vcombine.high %v937, %v937
  %v946 = vcombine.high %v944, %v944
  %v948 = vunpack.c.l.s4 1966171168
  %v949 = vunpack.c.0.s8 %v948
  %v950 = vlaneseq
  %v951 = vshrl.u32 %v950, 7
  %v952 = vsub.s32 %v949, %v951
  %v953 = vrot.slane %v937, %v952
  %v955 = vunpack.c.l.s4 1966171168
  %v956 = vunpack.c.0.s8 %v955
  %v957 = vlaneseq
  %v958 = vshrl.u32 %v957, 7
  %v959 = vsub.s32 %v956, %v958
  %v960 = vrot.slane %v944, %v959
  %v962 = vunpack.c.l.s4 1966171168
  %v963 = vunpack.c.0.s8 %v962
  %v964 = vlaneseq
  %v965 = vshrl.u32 %v964, 7
  %v966 = vsub.s32 %v963, %v965
  %v967 = vrot.slane %v945, %v966
  %v969 = vunpack.c.l.s4 1966171168
  %v970 = vunpack.c.0.s8 %v969
  %v971 = vlaneseq
  %v972 = vshrl.u32 %v971, 7
  %v973 = vsub.s32 %v970, %v972
  %v974 = vrot.slane %v946, %v973
  %v975 = vcombine.high %v953, %v953
  %v976 = vcombine.high %v960, %v960
  %v977 = vcombine.high %v967, %v967
  %v978 = vcombine.high %v974, %v974
  %v979 = vcombine.high %v155, %v155
  %v981 = vunpack.c.l.s4 1966171168
  %v982 = vunpack.c.0.s8 %v981
  %v983 = vlaneseq
  %v984 = vshrl.u32 %v983, 7
  %v985 = vsub.s32 %v982, %v984
  %v986 = vrot.slane %v155, %v985
  %v988 = vunpack.c.l.s4 1966171168
  %v989 = vunpack.c.0.s8 %v988
  %v990 = vlaneseq
  %v991 = vshrl.u32 %v990, 7
  %v992 = vsub.s32 %v989, %v991
  %v993 = vrot.slane %v979, %v992
  %v994 = vcombine.high %v986, %v986
  %v995 = vcombine.high %v993, %v993
  %v997 = vunpack.c.l.s4 1966171168
  %v998 = vunpack.c.0.s8 %v997
  %v999 = vlaneseq
  %v1000 = vshrl.u32 %v999, 7
  %v1001 = vsub.s32 %v998, %v1000
  %v1002 = vrot.slane %v986, %v1001
  %v1004 = vunpack.c.l.s4 1966171168
  %v1005 = vunpack.c.0.s8 %v1004
  %v1006 = vlaneseq
  %v1007 = vshrl.u32 %v1006, 7
  %v1008 = vsub.s32 %v1005, %v1007
  %v1009 = vrot.slane %v993, %v1008
  %v1011 = vunpack.c.l.s4 1966171168
  %v1012 = vunpack.c.0.s8 %v1011
  %v1013 = vlaneseq
  %v1014 = vshrl.u32 %v1013, 7
  %v1015 = vsub.s32 %v1012, %v1014
  %v1016 = vrot.slane %v994, %v1015
  %v1018 = vunpack.c.l.s4 1966171168
  %v1019 = vunpack.c.0.s8 %v1018
  %v1020 = vlaneseq
  %v1021 = vshrl.u32 %v1020, 7
  %v1022 = vsub.s32 %v1019, %v1021
  %v1023 = vrot.slane %v995, %v1022
  %v1024 = vcombine.high %v1002, %v1002
  %v1025 = vcombine.high %v1009, %v1009
  %v1026 = vcombine.high %v1016, %v1016
  %v1027 = vcombine.high %v1023, %v1023
  %v1028 = vcombine.high %v160, %v160
  %v1030 = vunpack.c.l.s4 1966171168
  %v1031 = vunpack.c.0.s8 %v1030
  %v1032 = vlaneseq
  %v1033 = vshrl.u32 %v1032, 7
  %v1034 = vsub.s32 %v1031, %v1033
  %v1035 = vrot.slane %v160, %v1034
  %v1037 = vunpack.c.l.s4 1966171168
  %v1038 = vunpack.c.0.s8 %v1037
  %v1039 = vlaneseq
  %v1040 = vshrl.u32 %v1039, 7
  %v1041 = vsub.s32 %v1038, %v1040
  %v1042 = vrot.slane %v1028, %v1041
  %v1043 = vcombine.high %v1035, %v1035
  %v1044 = vcombine.high %v1042, %v1042
  %v1046 = vunpack.c.l.s4 1966171168
  %v1047 = vunpack.c.0.s8 %v1046
  %v1048 = vlaneseq
  %v1049 = vshrl.u32 %v1048, 7
  %v1050 = vsub.s32 %v1047, %v1049
  %v1051 = vrot.slane %v1035, %v1050
  %v1053 = vunpack.c.l.s4 1966171168
  %v1054 = vunpack.c.0.s8 %v1053
  %v1055 = vlaneseq
  %v1056 = vshrl.u32 %v1055, 7
  %v1057 = vsub.s32 %v1054, %v1056
  %v1058 = vrot.slane %v1042, %v1057
  %v1060 = vunpack.c.l.s4 1966171168
  %v1061 = vunpack.c.0.s8 %v1060
  %v1062 = vlaneseq
  %v1063 = vshrl.u32 %v1062, 7
  %v1064 = vsub.s32 %v1061, %v1063
  %v1065 = vrot.slane %v1043, %v1064
  %v1067 = vunpack.c.l.s4 1966171168
  %v1068 = vunpack.c.0.s8 %v1067
  %v1069 = vlaneseq
  %v1070 = vshrl.u32 %v1069, 7
  %v1071 = vsub.s32 %v1068, %v1070
  %v1072 = vrot.slane %v1044, %v1071
  %v1073 = vcombine.high %v1051, %v1051
  %v1074 = vcombine.high %v1058, %v1058
  %v1075 = vcombine.high %v1065, %v1065
  %v1076 = vcombine.high %v1072, %v1072
  %v1077 = vlaneseq
  %v1078 = vshrl.u32 %v1077, 7
  %v1079 = vsub.s32 0, %v1078
  %v1080 = vrot.slane %v904, %v1079
  %v1081 = vlaneseq
  %v1082 = vshrl.u32 %v1081, 7
  %v1083 = vsub.s32 0, %v1082
  %v1084 = vrot.slane %v918, %v1083
  %v1085 = vlaneseq
  %v1086 = vshrl.u32 %v1085, 7
  %v1087 = vsub.s32 0, %v1086
  %v1088 = vrot.slane %v926, %v1087
  %v1089 = vlaneseq
  %v1090 = vshrl.u32 %v1089, 7
  %v1091 = vsub.s32 0, %v1090
  %v1092 = vrot.slane %v928, %v1091
  %v1093 = vlaneseq
  %v1094 = vshrl.u32 %v1093, 7
  %v1095 = vsub.s32 0, %v1094
  %v1096 = vrot.slane %v911, %v1095
  %v1097 = vlaneseq
  %v1098 = vshrl.u32 %v1097, 7
  %v1099 = vsub.s32 0, %v1098
  %v1100 = vrot.slane %v925, %v1099
  %v1101 = vlaneseq
  %v1102 = vshrl.u32 %v1101, 7
  %v1103 = vsub.s32 0, %v1102
  %v1104 = vrot.slane %v927, %v1103
  %v1105 = vlaneseq
  %v1106 = vshrl.u32 %v1105, 7
  %v1107 = vsub.s32 0, %v1106
  %v1108 = vrot.slane %v929, %v1107
  %v1109 = vlaneseq
  %v1110 = vshrl.u32 %v1109, 7
  %v1111 = vsub.s32 0, %v1110
  %v1112 = vrot.slane %v953, %v1111
  %v1113 = vlaneseq
  %v1114 = vshrl.u32 %v1113, 7
  %v1115 = vsub.s32 0, %v1114
  %v1116 = vrot.slane %v967, %v1115
  %v1117 = vlaneseq
  %v1118 = vshrl.u32 %v1117, 7
  %v1119 = vsub.s32 0, %v1118
  %v1120 = vrot.slane %v975, %v1119
  %v1121 = vlaneseq
  %v1122 = vshrl.u32 %v1121, 7
  %v1123 = vsub.s32 0, %v1122
  %v1124 = vrot.slane %v977, %v1123
  %v1125 = vlaneseq
  %v1126 = vshrl.u32 %v1125, 7
  %v1127 = vsub.s32 0, %v1126
  %v1128 = vrot.slane %v960, %v1127
  %v1129 = vlaneseq
  %v1130 = vshrl.u32 %v1129, 7
  %v1131 = vsub.s32 0, %v1130
  %v1132 = vrot.slane %v974, %v1131
  %v1133 = vlaneseq
  %v1134 = vshrl.u32 %v1133, 7
  %v1135 = vsub.s32 0, %v1134
  %v1136 = vrot.slane %v976, %v1135
  %v1137 = vlaneseq
  %v1138 = vshrl.u32 %v1137, 7
  %v1139 = vsub.s32 0, %v1138
  %v1140 = vrot.slane %v978, %v1139
  %v1141 = vlaneseq
  %v1142 = vshrl.u32 %v1141, 7
  %v1143 = vsub.s32 0, %v1142
  %v1144 = vrot.slane %v1002, %v1143
  %v1145 = vlaneseq
  %v1146 = vshrl.u32 %v1145, 7
  %v1147 = vsub.s32 0, %v1146
  %v1148 = vrot.slane %v1016, %v1147
  %v1149 = vlaneseq
  %v1150 = vshrl.u32 %v1149, 7
  %v1151 = vsub.s32 0, %v1150
  %v1152 = vrot.slane %v1024, %v1151
  %v1153 = vlaneseq
  %v1154 = vshrl.u32 %v1153, 7
  %v1155 = vsub.s32 0, %v1154
  %v1156 = vrot.slane %v1026, %v1155
  %v1157 = vlaneseq
  %v1158 = vshrl.u32 %v1157, 7
  %v1159 = vsub.s32 0, %v1158
  %v1160 = vrot.slane %v1009, %v1159
  %v1161 = vlaneseq
  %v1162 = vshrl.u32 %v1161, 7
  %v1163 = vsub.s32 0, %v1162
  %v1164 = vrot.slane %v1023, %v1163
  %v1165 = vlaneseq
  %v1166 = vshrl.u32 %v1165, 7
  %v1167 = vsub.s32 0, %v1166
  %v1168 = vrot.slane %v1025, %v1167
  %v1169 = vlaneseq
  %v1170 = vshrl.u32 %v1169, 7
  %v1171 = vsub.s32 0, %v1170
  %v1172 = vrot.slane %v1027, %v1171
  %v1173 = vlaneseq
  %v1174 = vshrl.u32 %v1173, 7
  %v1175 = vsub.s32 0, %v1174
  %v1176 = vrot.slane %v1051, %v1175
  %v1177 = vlaneseq
  %v1178 = vshrl.u32 %v1177, 7
  %v1179 = vsub.s32 0, %v1178
  %v1180 = vrot.slane %v1065, %v1179
  %v1181 = vlaneseq
  %v1182 = vshrl.u32 %v1181, 7
  %v1183 = vsub.s32 0, %v1182
  %v1184 = vrot.slane %v1073, %v1183
  %v1185 = vlaneseq
  %v1186 = vshrl.u32 %v1185, 7
  %v1187 = vsub.s32 0, %v1186
  %v1188 = vrot.slane %v1075, %v1187
  %v1189 = vlaneseq
  %v1190 = vshrl.u32 %v1189, 7
  %v1191 = vsub.s32 0, %v1190
  %v1192 = vrot.slane %v1058, %v1191
  %v1193 = vlaneseq
  %v1194 = vshrl.u32 %v1193, 7
  %v1195 = vsub.s32 0, %v1194
  %v1196 = vrot.slane %v1072, %v1195
  %v1197 = vlaneseq
  %v1198 = vshrl.u32 %v1197, 7
  %v1199 = vsub.s32 0, %v1198
  %v1200 = vrot.slane %v1074, %v1199
  %v1201 = vlaneseq
  %v1202 = vshrl.u32 %v1201, 7
  %v1203 = vsub.s32 0, %v1202
  %v1204 = vrot.slane %v1076, %v1203
  %v1237 = vadd.f32 %v719, %v1080
  %v1238 = vadd.f32 %v724, %v1084
  %v1239 = vadd.f32 %v729, %v1088
  %v1240 = vadd.f32 %v734, %v1092
  %v1241 = vadd.f32 %v739, %v1096
  %v1242 = vadd.f32 %v744, %v1100
  %v1243 = vadd.f32 %v749, %v1104
  %v1244 = vadd.f32 %v754, %v1108
  %v1245 = vadd.f32 %v759, %v1112
  %v1246 = vadd.f32 %v764, %v1116
  %v1247 = vadd.f32 %v769, %v1120
  %v1248 = vadd.f32 %v774, %v1124
  %v1249 = vadd.f32 %v779, %v1128
  %v1250 = vadd.f32 %v784, %v1132
  %v1251 = vadd.f32 %v789, %v1136
  %v1252 = vadd.f32 %v794, %v1140
  %v1253 = vadd.f32 %v799, %v1144
  %v1254 = vadd.f32 %v804, %v1148
  %v1255 = vadd.f32 %v809, %v1152
  %v1256 = vadd.f32 %v814, %v1156
  %v1257 = vadd.f32 %v819, %v1160
  %v1258 = vadd.f32 %v824, %v1164
  %v1259 = vadd.f32 %v829, %v1168
  %v1260 = vadd.f32 %v834, %v1172
  %v1261 = vadd.f32 %v839, %v1176
  %v1262 = vadd.f32 %v844, %v1180
  %v1263 = vadd.f32 %v849, %v1184
  %v1264 = vadd.f32 %v854, %v1188
  %v1265 = vadd.f32 %v859, %v1192
  %v1266 = vadd.f32 %v864, %v1196
  %v1267 = vadd.f32 %v869, %v1200
  %v1268 = vadd.f32 %v874, %v1204
  %v1269 = vmax.f32 %v1237, 0.0
  %v1270 = vmax.f32 %v1238, 0.0
  %v1271 = vmax.f32 %v1239, 0.0
  %v1272 = vmax.f32 %v1240, 0.0
  %v1273 = vmax.f32 %v1241, 0.0
  %v1274 = vmax.f32 %v1242, 0.0
  %v1275 = vmax.f32 %v1243, 0.0
  %v1276 = vmax.f32 %v1244, 0.0
  %v1277 = vmax.f32 %v1245, 0.0
  %v1278 = vmax.f32 %v1246, 0.0
  %v1279 = vmax.f32 %v1247, 0.0
  %v1280 = vmax.f32 %v1248, 0.0
  %v1281 = vmax.f32 %v1249, 0.0
  %v1282 = vmax.f32 %v1250, 0.0
  %v1283 = vmax.f32 %v1251, 0.0
  %v1284 = vmax.f32 %v1252, 0.0
  %v1285 = vmax.f32 %v1253, 0.0
  %v1286 = vmax.f32 %v1254, 0.0
  %v1287 = vmax.f32 %v1255, 0.0
  %v1288 = vmax.f32 %v1256, 0.0
  %v1289 = vmax.f32 %v1257, 0.0
  %v1290 = vmax.f32 %v1258, 0.0
  %v1291 = vmax.f32 %v1259, 0.0
  %v1292 = vmax.f32 %v1260, 0.0
  %v1293 = vmax.f32 %v1261, 0.0
  %v1294 = vmax.f32 %v1262, 0.0
  %v1295 = vmax.f32 %v1263, 0.0
  %v1296 = vmax.f32 %v1264, 0.0
  %v1297 = vmax.f32 %v1265, 0.0
  %v1298 = vmax.f32 %v1266, 0.0
  %v1299 = vmax.f32 %v1267, 0.0
  %v1300 = vmax.f32 %v1268, 0.0
  %v1301 = vld [vmem:[%s9] sm:$0xff]
  %v1302 = vld [vmem:[%s9 + $0x8] sm:$0xff]
  %v1303 = vld [vmem:[%s9 + $0x10] sm:$0xff]
  %v1304 = vld [vmem:[%s9 + $0x18] sm:$0xff]
  %v1305 = vld [vmem:[%s10] sm:$0x1]
  %v1307 = vlaneseq
  %v1308 = vshrl.u32 %v1307, 7
  %v1309 = vsub.s32 0, %v1308
  %v1310 = vrot.slane %v1305, %v1309
  %v1313 = vsel %vm65, %v1269, 0
  %v1316 = vsel %vm65, %v1270, 0
  %v1319 = vsel %vm65, %v1271, 0
  %v1322 = vsel %vm65, %v1272, 0
  %v1325 = vsel %vm65, %v1273, 0
  %v1328 = vsel %vm65, %v1274, 0
  %v1331 = vsel %vm65, %v1275, 0
  %v1334 = vsel %vm65, %v1276, 0
  %v1337 = vsel %vm65, %v1277, 0
  %v1340 = vsel %vm65, %v1278, 0
  %v1343 = vsel %vm65, %v1279, 0
  %v1346 = vsel %vm65, %v1280, 0
  %v1349 = vsel %vm65, %v1281, 0
  %v1352 = vsel %vm65, %v1282, 0
  %v1355 = vsel %vm65, %v1283, 0
  %v1358 = vsel %vm65, %v1284, 0
  %v1361 = vsel %vm65, %v1285, 0
  %v1364 = vsel %vm65, %v1286, 0
  %v1367 = vsel %vm65, %v1287, 0
  %v1370 = vsel %vm65, %v1288, 0
  %v1373 = vsel %vm65, %v1289, 0
  %v1376 = vsel %vm65, %v1290, 0
  %v1379 = vsel %vm65, %v1291, 0
  %v1382 = vsel %vm65, %v1292, 0
  %v1385 = vsel %vm65, %v1293, 0
  %v1388 = vsel %vm65, %v1294, 0
  %v1391 = vsel %vm65, %v1295, 0
  %v1394 = vsel %vm65, %v1296, 0
  %v1397 = vsel %vm65, %v1297, 0
  %v1400 = vsel %vm65, %v1298, 0
  %v1403 = vsel %vm65, %v1299, 0
  %v1406 = vsel %vm65, %v1300, 0
  %1408 = vmatprep.subr.mxu0 0.0
  %1409 = vmatpush1.msra.mxu0 %v1301
  %1410 = vmatprep.subr.mxu0 0.0
  %1411 = vmatpush1.msra.mxu0 %v1302
  %1412 = vmatprep.subr.mxu0 0.0
  %1413 = vmatpush1.msra.mxu0 %v1303
  %1414 = vmatprep.subr.mxu0 0.0
  %1415 = vmatpush1.msra.mxu0 %v1304
  %1416 = vmatprep.subr.mxu0 0.0
  %1417 = vmatpush1.msra.mxu0 0.0
  %1418 = vmatprep.subr.mxu0 0.0
  %1419 = vmatpush1.msra.mxu0 0.0
  %1420 = vmatprep.subr.mxu0 0.0
  %1421 = vmatpush1.msra.mxu0 0.0
  %1422 = vmatprep.subr.mxu0 0.0
  %1423 = vmatpush1.msra.mxu0 0.0
  %1424 = vmatprep.subr.mxu0 0.0
  %1425 = vmatpush1.msra.mxu0 0.0
  %1426 = vmatprep.subr.mxu0 0.0
  %1427 = vmatpush1.msra.mxu0 0.0
  %1428 = vmatprep.subr.mxu0 0.0
  %1429 = vmatpush1.msra.mxu0 0.0
  %1430 = vmatprep.subr.mxu0 0.0
  %1431 = vmatpush1.msra.mxu0 0.0
  %1432 = vmatprep.subr.mxu0 0.0
  %1433 = vmatpush1.msra.mxu0 0.0
  %1434 = vmatprep.subr.mxu0 0.0
  %1435 = vmatpush1.msra.mxu0 0.0
  %1436 = vmatprep.subr.mxu0 0.0
  %1437 = vmatpush1.msra.mxu0 0.0
  %1438 = vmatprep.subr.mxu0 0.0
  %1439 = vmatpush1.msra.mxu0 0.0
  %1440 = vmatprep.subr.mxu0 0.0
  %1441 = vmatpush1.msra.mxu0 0.0
  %1442 = vmatprep.subr.mxu0 0.0
  %1443 = vmatpush1.msra.mxu0 0.0
  %1444 = vmatprep.subr.mxu0 0.0
  %1445 = vmatpush1.msra.mxu0 0.0
  %1446 = vmatprep.subr.mxu0 0.0
  %1447 = vmatpush1.msra.mxu0 0.0
  %1448 = vmatprep.subr.mxu0 0.0
  %1449 = vmatpush1.msra.mxu0 0.0
  %1450 = vmatprep.subr.mxu0 0.0
  %1451 = vmatpush1.msra.mxu0 0.0
  %1452 = vmatprep.subr.mxu0 0.0
  %1453 = vmatpush1.msra.mxu0 0.0
  %1454 = vmatprep.subr.mxu0 0.0
  %1455 = vmatpush1.msra.mxu0 0.0
  %1456 = vmatprep.subr.mxu0 0.0
  %1457 = vmatpush1.msra.mxu0 0.0
  %1458 = vmatprep.subr.mxu0 0.0
  %1459 = vmatpush1.msra.mxu0 0.0
  %1460 = vmatprep.subr.mxu0 0.0
  %1461 = vmatpush1.msra.mxu0 0.0
  %1462 = vmatprep.subr.mxu0 0.0
  %1463 = vmatpush1.msra.mxu0 0.0
  %1464 = vmatprep.subr.mxu0 0.0
  %1465 = vmatpush1.msra.mxu0 0.0
  %1466 = vmatprep.subr.mxu0 0.0
  %1467 = vmatpush1.msra.mxu0 0.0
  %1468 = vmatprep.subr.mxu0 0.0
  %1469 = vmatpush1.msra.mxu0 0.0
  %1470 = vmatprep.subr.mxu0 0.0
  %1471 = vmatpush1.msra.mxu0 0.0
  %1472 = vmatprep.mubr.f32.mxu0 0.0
  %1473 = vmatmul.mubr.f32.gmra.mrb[0].mxu0 %v1313
  %v1474 = vpop.f32.mrb[0].mxu0
  %v1475 = vadd.f32 %v1310, %v1474
  %v1476 = vpop.f32.mrb[0].mxu0
  %1477 = vmatprep.mubr.f32.mxu0 0.0
  %1478 = vmatmul.mubr.f32.gmra.mrb[0].mxu0 %v1316
  %v1479 = vpop.f32.mrb[0].mxu0
  %v1480 = vadd.f32 %v1310, %v1479
  %v1481 = vpop.f32.mrb[0].mxu0
  %1482 = vmatprep.mubr.f32.mxu0 0.0
  %1483 = vmatmul.mubr.f32.gmra.mrb[0].mxu0 %v1319
  %v1484 = vpop.f32.mrb[0].mxu0
  %v1485 = vadd.f32 %v1310, %v1484
  %v1486 = vpop.f32.mrb[0].mxu0
  %1487 = vmatprep.mubr.f32.mxu0 0.0
  %1488 = vmatmul.mubr.f32.gmra.mrb[0].mxu0 %v1322
  %v1489 = vpop.f32.mrb[0].mxu0
  %v1490 = vadd.f32 %v1310, %v1489
  %v1491 = vpop.f32.mrb[0].mxu0
  %1492 = vmatprep.mubr.f32.mxu0 0.0
  %1493 = vmatmul.mubr.f32.gmra.mrb[0].mxu0 %v1325
  %v1494 = vpop.f32.mrb[0].mxu0
  %v1495 = vadd.f32 %v1310, %v1494
  %v1496 = vpop.f32.mrb[0].mxu0
  %1497 = vmatprep.mubr.f32.mxu0 0.0
  %1498 = vmatmul.mubr.f32.gmra.mrb[0].mxu0 %v1328
  %v1499 = vpop.f32.mrb[0].mxu0
  %v1500 = vadd.f32 %v1310, %v1499
  %v1501 = vpop.f32.mrb[0].mxu0
  %1502 = vmatprep.mubr.f32.mxu0 0.0
  %1503 = vmatmul.mubr.f32.gmra.mrb[0].mxu0 %v1331
  %v1504 = vpop.f32.mrb[0].mxu0
  %v1505 = vadd.f32 %v1310, %v1504
  %v1506 = vpop.f32.mrb[0].mxu0
  %1507 = vmatprep.mubr.f32.mxu0 0.0
  %1508 = vmatmul.mubr.f32.gmra.mrb[0].mxu0 %v1334
  %v1509 = vpop.f32.mrb[0].mxu0
  %v1510 = vadd.f32 %v1310, %v1509
  %v1511 = vpop.f32.mrb[0].mxu0
  %1512 = vmatprep.mubr.f32.mxu0 0.0
  %1513 = vmatmul.mubr.f32.gmra.mrb[0].mxu0 %v1337
  %v1514 = vpop.f32.mrb[0].mxu0
  %v1515 = vadd.f32 %v1310, %v1514
  %v1516 = vpop.f32.mrb[0].mxu0
  %1517 = vmatprep.mubr.f32.mxu0 0.0
  %1518 = vmatmul.mubr.f32.gmra.mrb[0].mxu0 %v1340
  %v1519 = vpop.f32.mrb[0].mxu0
  %v1520 = vadd.f32 %v1310, %v1519
  %v1521 = vpop.f32.mrb[0].mxu0
  %1522 = vmatprep.mubr.f32.mxu0 0.0
  %1523 = vmatmul.mubr.f32.gmra.mrb[0].mxu0 %v1343
  %v1524 = vpop.f32.mrb[0].mxu0
  %v1525 = vadd.f32 %v1310, %v1524
  %v1526 = vpop.f32.mrb[0].mxu0
  %1527 = vmatprep.mubr.f32.mxu0 0.0
  %1528 = vmatmul.mubr.f32.gmra.mrb[0].mxu0 %v1346
  %v1529 = vpop.f32.mrb[0].mxu0
  %v1530 = vadd.f32 %v1310, %v1529
  %v1531 = vpop.f32.mrb[0].mxu0
  %1532 = vmatprep.mubr.f32.mxu0 0.0
  %1533 = vmatmul.mubr.f32.gmra.mrb[0].mxu0 %v1349
  %v1534 = vpop.f32.mrb[0].mxu0
  %v1535 = vadd.f32 %v1310, %v1534
  %v1536 = vpop.f32.mrb[0].mxu0
  %1537 = vmatprep.mubr.f32.mxu0 0.0
  %1538 = vmatmul.mubr.f32.gmra.mrb[0].mxu0 %v1352
  %v1539 = vpop.f32.mrb[0].mxu0
  %v1540 = vadd.f32 %v1310, %v1539
  %v1541 = vpop.f32.mrb[0].mxu0
  %1542 = vmatprep.mubr.f32.mxu0 0.0
  %1543 = vmatmul.mubr.f32.gmra.mrb[0].mxu0 %v1355
  %v1544 = vpop.f32.mrb[0].mxu0
  %v1545 = vadd.f32 %v1310, %v1544
  %v1546 = vpop.f32.mrb[0].mxu0
  %1547 = vmatprep.mubr.f32.mxu0 0.0
  %1548 = vmatmul.mubr.f32.gmra.mrb[0].mxu0 %v1358
  %v1549 = vpop.f32.mrb[0].mxu0
  %v1550 = vadd.f32 %v1310, %v1549
  %v1551 = vpop.f32.mrb[0].mxu0
  %1552 = vmatprep.mubr.f32.mxu0 0.0
  %1553 = vmatmul.mubr.f32.gmra.mrb[0].mxu0 %v1361
  %v1554 = vpop.f32.mrb[0].mxu0
  %v1555 = vadd.f32 %v1310, %v1554
  %v1556 = vpop.f32.mrb[0].mxu0
  %1557 = vmatprep.mubr.f32.mxu0 0.0
  %1558 = vmatmul.mubr.f32.gmra.mrb[0].mxu0 %v1364
  %v1559 = vpop.f32.mrb[0].mxu0
  %v1560 = vadd.f32 %v1310, %v1559
  %v1561 = vpop.f32.mrb[0].mxu0
  %1562 = vmatprep.mubr.f32.mxu0 0.0
  %1563 = vmatmul.mubr.f32.gmra.mrb[0].mxu0 %v1367
  %v1564 = vpop.f32.mrb[0].mxu0
  %v1565 = vadd.f32 %v1310, %v1564
  %v1566 = vpop.f32.mrb[0].mxu0
  %1567 = vmatprep.mubr.f32.mxu0 0.0
  %1568 = vmatmul.mubr.f32.gmra.mrb[0].mxu0 %v1370
  %v1569 = vpop.f32.mrb[0].mxu0
  %v1570 = vadd.f32 %v1310, %v1569
  %v1571 = vpop.f32.mrb[0].mxu0
  %1572 = vmatprep.mubr.f32.mxu0 0.0
  %1573 = vmatmul.mubr.f32.gmra.mrb[0].mxu0 %v1373
  %v1574 = vpop.f32.mrb[0].mxu0
  %v1575 = vadd.f32 %v1310, %v1574
  %v1576 = vpop.f32.mrb[0].mxu0
  %1577 = vmatprep.mubr.f32.mxu0 0.0
  %1578 = vmatmul.mubr.f32.gmra.mrb[0].mxu0 %v1376
  %v1579 = vpop.f32.mrb[0].mxu0
  %v1580 = vadd.f32 %v1310, %v1579
  %v1581 = vpop.f32.mrb[0].mxu0
  %1582 = vmatprep.mubr.f32.mxu0 0.0
  %1583 = vmatmul.mubr.f32.gmra.mrb[0].mxu0 %v1379
  %v1584 = vpop.f32.mrb[0].mxu0
  %v1585 = vadd.f32 %v1310, %v1584
  %v1586 = vpop.f32.mrb[0].mxu0
  %1587 = vmatprep.mubr.f32.mxu0 0.0
  %1588 = vmatmul.mubr.f32.gmra.mrb[0].mxu0 %v1382
  %v1589 = vpop.f32.mrb[0].mxu0
  %v1590 = vadd.f32 %v1310, %v1589
  %v1591 = vpop.f32.mrb[0].mxu0
  %1592 = vmatprep.mubr.f32.mxu0 0.0
  %1593 = vmatmul.mubr.f32.gmra.mrb[0].mxu0 %v1385
  %v1594 = vpop.f32.mrb[0].mxu0
  %v1595 = vadd.f32 %v1310, %v1594
  %v1596 = vpop.f32.mrb[0].mxu0
  %1597 = vmatprep.mubr.f32.mxu0 0.0
  %1598 = vmatmul.mubr.f32.gmra.mrb[0].mxu0 %v1388
  %v1599 = vpop.f32.mrb[0].mxu0
  %v1600 = vadd.f32 %v1310, %v1599
  %v1601 = vpop.f32.mrb[0].mxu0
  %1602 = vmatprep.mubr.f32.mxu0 0.0
  %1603 = vmatmul.mubr.f32.gmra.mrb[0].mxu0 %v1391
  %v1604 = vpop.f32.mrb[0].mxu0
  %v1605 = vadd.f32 %v1310, %v1604
  %v1606 = vpop.f32.mrb[0].mxu0
  %1607 = vmatprep.mubr.f32.mxu0 0.0
  %1608 = vmatmul.mubr.f32.gmra.mrb[0].mxu0 %v1394
  %v1609 = vpop.f32.mrb[0].mxu0
  %v1610 = vadd.f32 %v1310, %v1609
  %v1611 = vpop.f32.mrb[0].mxu0
  %1612 = vmatprep.mubr.f32.mxu0 0.0
  %1613 = vmatmul.mubr.f32.gmra.mrb[0].mxu0 %v1397
  %v1614 = vpop.f32.mrb[0].mxu0
  %v1615 = vadd.f32 %v1310, %v1614
  %v1616 = vpop.f32.mrb[0].mxu0
  %1617 = vmatprep.mubr.f32.mxu0 0.0
  %1618 = vmatmul.mubr.f32.gmra.mrb[0].mxu0 %v1400
  %v1619 = vpop.f32.mrb[0].mxu0
  %v1620 = vadd.f32 %v1310, %v1619
  %v1621 = vpop.f32.mrb[0].mxu0
  %1622 = vmatprep.mubr.f32.mxu0 0.0
  %1623 = vmatmul.mubr.f32.gmra.mrb[0].mxu0 %v1403
  %v1624 = vpop.f32.mrb[0].mxu0
  %v1625 = vadd.f32 %v1310, %v1624
  %v1626 = vpop.f32.mrb[0].mxu0
  %1627 = vmatprep.mubr.f32.mxu0 0.0
  %1628 = vmatmul.mubr.f32.gmra.mrb[0].mxu0 %v1406
  %v1629 = vpop.f32.mrb[0].mxu0
  %v1630 = vadd.f32 %v1310, %v1629
  %v1631 = vpop.f32.mrb[0].mxu0
  %1632 = vdwg.mxu0
  %v1633 = vmax.f32 %v1475, 0.0
  %v1634 = vmax.f32 %v1480, 0.0
  %v1635 = vmax.f32 %v1485, 0.0
  %v1636 = vmax.f32 %v1490, 0.0
  %v1637 = vmax.f32 %v1495, 0.0
  %v1638 = vmax.f32 %v1500, 0.0
  %v1639 = vmax.f32 %v1505, 0.0
  %v1640 = vmax.f32 %v1510, 0.0
  %v1641 = vmax.f32 %v1515, 0.0
  %v1642 = vmax.f32 %v1520, 0.0
  %v1643 = vmax.f32 %v1525, 0.0
  %v1644 = vmax.f32 %v1530, 0.0
  %v1645 = vmax.f32 %v1535, 0.0
  %v1646 = vmax.f32 %v1540, 0.0
  %v1647 = vmax.f32 %v1545, 0.0
  %v1648 = vmax.f32 %v1550, 0.0
  %v1649 = vmax.f32 %v1555, 0.0
  %v1650 = vmax.f32 %v1560, 0.0
  %v1651 = vmax.f32 %v1565, 0.0
  %v1652 = vmax.f32 %v1570, 0.0
  %v1653 = vmax.f32 %v1575, 0.0
  %v1654 = vmax.f32 %v1580, 0.0
  %v1655 = vmax.f32 %v1585, 0.0
  %v1656 = vmax.f32 %v1590, 0.0
  %v1657 = vmax.f32 %v1595, 0.0
  %v1658 = vmax.f32 %v1600, 0.0
  %v1659 = vmax.f32 %v1605, 0.0
  %v1660 = vmax.f32 %v1610, 0.0
  %v1661 = vmax.f32 %v1615, 0.0
  %v1662 = vmax.f32 %v1620, 0.0
  %v1663 = vmax.f32 %v1625, 0.0
  %v1664 = vmax.f32 %v1630, 0.0
  %v1665 = vld [vmem:[%s11] sm:$0xff]
  %v1666 = vld [vmem:[%s11 + $0x8] sm:$0xff]
  %v1667 = vld [vmem:[%s11 + $0x10] sm:$0xff]
  %v1668 = vld [vmem:[%s11 + $0x18] sm:$0xff]
  %v1669 = vld [vmem:[%s12] sm:$0x1]
  %v1671 = vlaneseq
  %v1672 = vshrl.u32 %v1671, 7
  %v1673 = vsub.s32 0, %v1672
  %v1674 = vrot.slane %v1669, %v1673
  %v1677 = vsel %vm65, %v1633, 0
  %v1680 = vsel %vm65, %v1634, 0
  %v1683 = vsel %vm65, %v1635, 0
  %v1686 = vsel %vm65, %v1636, 0
  %v1689 = vsel %vm65, %v1637, 0
  %v1692 = vsel %vm65, %v1638, 0
  %v1695 = vsel %vm65, %v1639, 0
  %v1698 = vsel %vm65, %v1640, 0
  %v1701 = vsel %vm65, %v1641, 0
  %v1704 = vsel %vm65, %v1642, 0
  %v1707 = vsel %vm65, %v1643, 0
  %v1710 = vsel %vm65, %v1644, 0
  %v1713 = vsel %vm65, %v1645, 0
  %v1716 = vsel %vm65, %v1646, 0
  %v1719 = vsel %vm65, %v1647, 0
  %v1722 = vsel %vm65, %v1648, 0
  %v1725 = vsel %vm65, %v1649, 0
  %v1728 = vsel %vm65, %v1650, 0
  %v1731 = vsel %vm65, %v1651, 0
  %v1734 = vsel %vm65, %v1652, 0
  %v1737 = vsel %vm65, %v1653, 0
  %v1740 = vsel %vm65, %v1654, 0
  %v1743 = vsel %vm65, %v1655, 0
  %v1746 = vsel %vm65, %v1656, 0
  %v1749 = vsel %vm65, %v1657, 0
  %v1752 = vsel %vm65, %v1658, 0
  %v1755 = vsel %vm65, %v1659, 0
  %v1758 = vsel %vm65, %v1660, 0
  %v1761 = vsel %vm65, %v1661, 0
  %v1764 = vsel %vm65, %v1662, 0
  %v1767 = vsel %vm65, %v1663, 0
  %v1770 = vsel %vm65, %v1664, 0
  %1772 = vmatprep.subr.mxu0 0.0
  %1773 = vmatpush1.msra.mxu0 %v1665
  %1774 = vmatprep.subr.mxu0 0.0
  %1775 = vmatpush1.msra.mxu0 %v1666
  %1776 = vmatprep.subr.mxu0 0.0
  %1777 = vmatpush1.msra.mxu0 %v1667
  %1778 = vmatprep.subr.mxu0 0.0
  %1779 = vmatpush1.msra.mxu0 %v1668
  %1780 = vmatprep.subr.mxu0 0.0
  %1781 = vmatpush1.msra.mxu0 0.0
  %1782 = vmatprep.subr.mxu0 0.0
  %1783 = vmatpush1.msra.mxu0 0.0
  %1784 = vmatprep.subr.mxu0 0.0
  %1785 = vmatpush1.msra.mxu0 0.0
  %1786 = vmatprep.subr.mxu0 0.0
  %1787 = vmatpush1.msra.mxu0 0.0
  %1788 = vmatprep.subr.mxu0 0.0
  %1789 = vmatpush1.msra.mxu0 0.0
  %1790 = vmatprep.subr.mxu0 0.0
  %1791 = vmatpush1.msra.mxu0 0.0
  %1792 = vmatprep.subr.mxu0 0.0
  %1793 = vmatpush1.msra.mxu0 0.0
  %1794 = vmatprep.subr.mxu0 0.0
  %1795 = vmatpush1.msra.mxu0 0.0
  %1796 = vmatprep.subr.mxu0 0.0
  %1797 = vmatpush1.msra.mxu0 0.0
  %1798 = vmatprep.subr.mxu0 0.0
  %1799 = vmatpush1.msra.mxu0 0.0
  %1800 = vmatprep.subr.mxu0 0.0
  %1801 = vmatpush1.msra.mxu0 0.0
  %1802 = vmatprep.subr.mxu0 0.0
  %1803 = vmatpush1.msra.mxu0 0.0
  %1804 = vmatprep.subr.mxu0 0.0
  %1805 = vmatpush1.msra.mxu0 0.0
  %1806 = vmatprep.subr.mxu0 0.0
  %1807 = vmatpush1.msra.mxu0 0.0
  %1808 = vmatprep.subr.mxu0 0.0
  %1809 = vmatpush1.msra.mxu0 0.0
  %1810 = vmatprep.subr.mxu0 0.0
  %1811 = vmatpush1.msra.mxu0 0.0
  %1812 = vmatprep.subr.mxu0 0.0
  %1813 = vmatpush1.msra.mxu0 0.0
  %1814 = vmatprep.subr.mxu0 0.0
  %1815 = vmatpush1.msra.mxu0 0.0
  %1816 = vmatprep.subr.mxu0 0.0
  %1817 = vmatpush1.msra.mxu0 0.0
  %1818 = vmatprep.subr.mxu0 0.0
  %1819 = vmatpush1.msra.mxu0 0.0
  %1820 = vmatprep.subr.mxu0 0.0
  %1821 = vmatpush1.msra.mxu0 0.0
  %1822 = vmatprep.subr.mxu0 0.0
  %1823 = vmatpush1.msra.mxu0 0.0
  %1824 = vmatprep.subr.mxu0 0.0
  %1825 = vmatpush1.msra.mxu0 0.0
  %1826 = vmatprep.subr.mxu0 0.0
  %1827 = vmatpush1.msra.mxu0 0.0
  %1828 = vmatprep.subr.mxu0 0.0
  %1829 = vmatpush1.msra.mxu0 0.0
  %1830 = vmatprep.subr.mxu0 0.0
  %1831 = vmatpush1.msra.mxu0 0.0
  %1832 = vmatprep.subr.mxu0 0.0
  %1833 = vmatpush1.msra.mxu0 0.0
  %1834 = vmatprep.subr.mxu0 0.0
  %1835 = vmatpush1.msra.mxu0 0.0
  %1836 = vmatprep.mubr.f32.mxu0 0.0
  %1837 = vmatmul.mubr.f32.gmra.mrb[0].mxu0 %v1677
  %v1838 = vpop.f32.mrb[0].mxu0
  %v1839 = vadd.f32 %v1674, %v1838
  %v1840 = vpop.f32.mrb[0].mxu0
  %1841 = vmatprep.mubr.f32.mxu0 0.0
  %1842 = vmatmul.mubr.f32.gmra.mrb[0].mxu0 %v1680
  %v1843 = vpop.f32.mrb[0].mxu0
  %v1844 = vadd.f32 %v1674, %v1843
  %v1845 = vpop.f32.mrb[0].mxu0
  %1846 = vmatprep.mubr.f32.mxu0 0.0
  %1847 = vmatmul.mubr.f32.gmra.mrb[0].mxu0 %v1683
  %v1848 = vpop.f32.mrb[0].mxu0
  %v1849 = vadd.f32 %v1674, %v1848
  %v1850 = vpop.f32.mrb[0].mxu0
  %1851 = vmatprep.mubr.f32.mxu0 0.0
  %1852 = vmatmul.mubr.f32.gmra.mrb[0].mxu0 %v1686
  %v1853 = vpop.f32.mrb[0].mxu0
  %v1854 = vadd.f32 %v1674, %v1853
  %v1855 = vpop.f32.mrb[0].mxu0
  %1856 = vmatprep.mubr.f32.mxu0 0.0
  %1857 = vmatmul.mubr.f32.gmra.mrb[0].mxu0 %v1689
  %v1858 = vpop.f32.mrb[0].mxu0
  %v1859 = vadd.f32 %v1674, %v1858
  %v1860 = vpop.f32.mrb[0].mxu0
  %1861 = vmatprep.mubr.f32.mxu0 0.0
  %1862 = vmatmul.mubr.f32.gmra.mrb[0].mxu0 %v1692
  %v1863 = vpop.f32.mrb[0].mxu0
  %v1864 = vadd.f32 %v1674, %v1863
  %v1865 = vpop.f32.mrb[0].mxu0
  %1866 = vmatprep.mubr.f32.mxu0 0.0
  %1867 = vmatmul.mubr.f32.gmra.mrb[0].mxu0 %v1695
  %v1868 = vpop.f32.mrb[0].mxu0
  %v1869 = vadd.f32 %v1674, %v1868
  %v1870 = vpop.f32.mrb[0].mxu0
  %1871 = vmatprep.mubr.f32.mxu0 0.0
  %1872 = vmatmul.mubr.f32.gmra.mrb[0].mxu0 %v1698
  %v1873 = vpop.f32.mrb[0].mxu0
  %v1874 = vadd.f32 %v1674, %v1873
  %v1875 = vpop.f32.mrb[0].mxu0
  %1876 = vmatprep.mubr.f32.mxu0 0.0
  %1877 = vmatmul.mubr.f32.gmra.mrb[0].mxu0 %v1701
  %v1878 = vpop.f32.mrb[0].mxu0
  %v1879 = vadd.f32 %v1674, %v1878
  %v1880 = vpop.f32.mrb[0].mxu0
  %1881 = vmatprep.mubr.f32.mxu0 0.0
  %1882 = vmatmul.mubr.f32.gmra.mrb[0].mxu0 %v1704
  %v1883 = vpop.f32.mrb[0].mxu0
  %v1884 = vadd.f32 %v1674, %v1883
  %v1885 = vpop.f32.mrb[0].mxu0
  %1886 = vmatprep.mubr.f32.mxu0 0.0
  %1887 = vmatmul.mubr.f32.gmra.mrb[0].mxu0 %v1707
  %v1888 = vpop.f32.mrb[0].mxu0
  %v1889 = vadd.f32 %v1674, %v1888
  %v1890 = vpop.f32.mrb[0].mxu0
  %1891 = vmatprep.mubr.f32.mxu0 0.0
  %1892 = vmatmul.mubr.f32.gmra.mrb[0].mxu0 %v1710
  %v1893 = vpop.f32.mrb[0].mxu0
  %v1894 = vadd.f32 %v1674, %v1893
  %v1895 = vpop.f32.mrb[0].mxu0
  %1896 = vmatprep.mubr.f32.mxu0 0.0
  %1897 = vmatmul.mubr.f32.gmra.mrb[0].mxu0 %v1713
  %v1898 = vpop.f32.mrb[0].mxu0
  %v1899 = vadd.f32 %v1674, %v1898
  %v1900 = vpop.f32.mrb[0].mxu0
  %1901 = vmatprep.mubr.f32.mxu0 0.0
  %1902 = vmatmul.mubr.f32.gmra.mrb[0].mxu0 %v1716
  %v1903 = vpop.f32.mrb[0].mxu0
  %v1904 = vadd.f32 %v1674, %v1903
  %v1905 = vpop.f32.mrb[0].mxu0
  %1906 = vmatprep.mubr.f32.mxu0 0.0
  %1907 = vmatmul.mubr.f32.gmra.mrb[0].mxu0 %v1719
  %v1908 = vpop.f32.mrb[0].mxu0
  %v1909 = vadd.f32 %v1674, %v1908
  %v1910 = vpop.f32.mrb[0].mxu0
  %1911 = vmatprep.mubr.f32.mxu0 0.0
  %1912 = vmatmul.mubr.f32.gmra.mrb[0].mxu0 %v1722
  %v1913 = vpop.f32.mrb[0].mxu0
  %v1914 = vadd.f32 %v1674, %v1913
  %v1915 = vpop.f32.mrb[0].mxu0
  %1916 = vmatprep.mubr.f32.mxu0 0.0
  %1917 = vmatmul.mubr.f32.gmra.mrb[0].mxu0 %v1725
  %v1918 = vpop.f32.mrb[0].mxu0
  %v1919 = vadd.f32 %v1674, %v1918
  %v1920 = vpop.f32.mrb[0].mxu0
  %1921 = vmatprep.mubr.f32.mxu0 0.0
  %1922 = vmatmul.mubr.f32.gmra.mrb[0].mxu0 %v1728
  %v1923 = vpop.f32.mrb[0].mxu0
  %v1924 = vadd.f32 %v1674, %v1923
  %v1925 = vpop.f32.mrb[0].mxu0
  %1926 = vmatprep.mubr.f32.mxu0 0.0
  %1927 = vmatmul.mubr.f32.gmra.mrb[0].mxu0 %v1731
  %v1928 = vpop.f32.mrb[0].mxu0
  %v1929 = vadd.f32 %v1674, %v1928
  %v1930 = vpop.f32.mrb[0].mxu0
  %1931 = vmatprep.mubr.f32.mxu0 0.0
  %1932 = vmatmul.mubr.f32.gmra.mrb[0].mxu0 %v1734
  %v1933 = vpop.f32.mrb[0].mxu0
  %v1934 = vadd.f32 %v1674, %v1933
  %v1935 = vpop.f32.mrb[0].mxu0
  %1936 = vmatprep.mubr.f32.mxu0 0.0
  %1937 = vmatmul.mubr.f32.gmra.mrb[0].mxu0 %v1737
  %v1938 = vpop.f32.mrb[0].mxu0
  %v1939 = vadd.f32 %v1674, %v1938
  %v1940 = vpop.f32.mrb[0].mxu0
  %1941 = vmatprep.mubr.f32.mxu0 0.0
  %1942 = vmatmul.mubr.f32.gmra.mrb[0].mxu0 %v1740
  %v1943 = vpop.f32.mrb[0].mxu0
  %v1944 = vadd.f32 %v1674, %v1943
  %v1945 = vpop.f32.mrb[0].mxu0
  %1946 = vmatprep.mubr.f32.mxu0 0.0
  %1947 = vmatmul.mubr.f32.gmra.mrb[0].mxu0 %v1743
  %v1948 = vpop.f32.mrb[0].mxu0
  %v1949 = vadd.f32 %v1674, %v1948
  %v1950 = vpop.f32.mrb[0].mxu0
  %1951 = vmatprep.mubr.f32.mxu0 0.0
  %1952 = vmatmul.mubr.f32.gmra.mrb[0].mxu0 %v1746
  %v1953 = vpop.f32.mrb[0].mxu0
  %v1954 = vadd.f32 %v1674, %v1953
  %v1955 = vpop.f32.mrb[0].mxu0
  %1956 = vmatprep.mubr.f32.mxu0 0.0
  %1957 = vmatmul.mubr.f32.gmra.mrb[0].mxu0 %v1749
  %v1958 = vpop.f32.mrb[0].mxu0
  %v1959 = vadd.f32 %v1674, %v1958
  %v1960 = vpop.f32.mrb[0].mxu0
  %1961 = vmatprep.mubr.f32.mxu0 0.0
  %1962 = vmatmul.mubr.f32.gmra.mrb[0].mxu0 %v1752
  %v1963 = vpop.f32.mrb[0].mxu0
  %v1964 = vadd.f32 %v1674, %v1963
  %v1965 = vpop.f32.mrb[0].mxu0
  %1966 = vmatprep.mubr.f32.mxu0 0.0
  %1967 = vmatmul.mubr.f32.gmra.mrb[0].mxu0 %v1755
  %v1968 = vpop.f32.mrb[0].mxu0
  %v1969 = vadd.f32 %v1674, %v1968
  %v1970 = vpop.f32.mrb[0].mxu0
  %1971 = vmatprep.mubr.f32.mxu0 0.0
  %1972 = vmatmul.mubr.f32.gmra.mrb[0].mxu0 %v1758
  %v1973 = vpop.f32.mrb[0].mxu0
  %v1974 = vadd.f32 %v1674, %v1973
  %v1975 = vpop.f32.mrb[0].mxu0
  %1976 = vmatprep.mubr.f32.mxu0 0.0
  %1977 = vmatmul.mubr.f32.gmra.mrb[0].mxu0 %v1761
  %v1978 = vpop.f32.mrb[0].mxu0
  %v1979 = vadd.f32 %v1674, %v1978
  %v1980 = vpop.f32.mrb[0].mxu0
  %1981 = vmatprep.mubr.f32.mxu0 0.0
  %1982 = vmatmul.mubr.f32.gmra.mrb[0].mxu0 %v1764
  %v1983 = vpop.f32.mrb[0].mxu0
  %v1984 = vadd.f32 %v1674, %v1983
  %v1985 = vpop.f32.mrb[0].mxu0
  %1986 = vmatprep.mubr.f32.mxu0 0.0
  %1987 = vmatmul.mubr.f32.gmra.mrb[0].mxu0 %v1767
  %v1988 = vpop.f32.mrb[0].mxu0
  %v1989 = vadd.f32 %v1674, %v1988
  %v1990 = vpop.f32.mrb[0].mxu0
  %1991 = vmatprep.mubr.f32.mxu0 0.0
  %1992 = vmatmul.mubr.f32.gmra.mrb[0].mxu0 %v1770
  %v1993 = vpop.f32.mrb[0].mxu0
  %v1994 = vadd.f32 %v1674, %v1993
  %v1995 = vpop.f32.mrb[0].mxu0
  %1996 = vdwg.mxu0
  %v1997 = vld [vmem:[%s3] sm:$0xff]
  %v1998 = vld [vmem:[%s3 + $0x8] sm:$0xff]
  %v1999 = vld [vmem:[%s3 + $0x10] sm:$0xff]
  %v2000 = vld [vmem:[%s3 + $0x18] sm:$0xff]
  %v2001 = vld [vmem:[%s3 + $0x20] sm:$0xff]
  %v2002 = vld [vmem:[%s3 + $0x28] sm:$0xff]
  %v2003 = vld [vmem:[%s3 + $0x30] sm:$0xff]
  %v2004 = vld [vmem:[%s3 + $0x38] sm:$0xff]
  %v2005 = vld [vmem:[%s3 + $0x40] sm:$0xff]
  %v2006 = vld [vmem:[%s3 + $0x48] sm:$0xff]
  %v2007 = vld [vmem:[%s3 + $0x50] sm:$0xff]
  %v2008 = vld [vmem:[%s3 + $0x58] sm:$0xff]
  %v2009 = vld [vmem:[%s3 + $0x60] sm:$0xff]
  %v2010 = vld [vmem:[%s3 + $0x68] sm:$0xff]
  %v2011 = vld [vmem:[%s3 + $0x70] sm:$0xff]
  %v2012 = vld [vmem:[%s3 + $0x78] sm:$0xff]
  %v2013 = vld [vmem:[%s3 + $0x80] sm:$0xff]
  %v2014 = vld [vmem:[%s3 + $0x88] sm:$0xff]
  %v2015 = vld [vmem:[%s3 + $0x90] sm:$0xff]
  %v2016 = vld [vmem:[%s3 + $0x98] sm:$0xff]
  %v2017 = vld [vmem:[%s3 + $0xa0] sm:$0xff]
  %v2018 = vld [vmem:[%s3 + $0xa8] sm:$0xff]
  %v2019 = vld [vmem:[%s3 + $0xb0] sm:$0xff]
  %v2020 = vld [vmem:[%s3 + $0xb8] sm:$0xff]
  %v2021 = vld [vmem:[%s3 + $0xc0] sm:$0xff]
  %v2022 = vld [vmem:[%s3 + $0xc8] sm:$0xff]
  %v2023 = vld [vmem:[%s3 + $0xd0] sm:$0xff]
  %v2024 = vld [vmem:[%s3 + $0xd8] sm:$0xff]
  %v2025 = vld [vmem:[%s3 + $0xe0] sm:$0xff]
  %v2026 = vld [vmem:[%s3 + $0xe8] sm:$0xff]
  %v2027 = vld [vmem:[%s3 + $0xf0] sm:$0xff]
  %v2028 = vld [vmem:[%s3 + $0xf8] sm:$0xff]
  %2030 = vset.pattern.permute.xlu0 0
  %2031 = vperm.xlu0 %2030, %v1997
  %v2032 = vpop.permute.xlu0 %2031
  %2035 = vset.pattern.permute.xlu0 0
  %2036 = vperm.xlu0 %2035, %v1998
  %v2037 = vpop.permute.xlu0 %2036
  %2040 = vset.pattern.permute.xlu0 0
  %2041 = vperm.xlu0 %2040, %v1999
  %v2042 = vpop.permute.xlu0 %2041
  %2045 = vset.pattern.permute.xlu0 0
  %2046 = vperm.xlu0 %2045, %v2000
  %v2047 = vpop.permute.xlu0 %2046
  %2050 = vset.pattern.permute.xlu0 0
  %2051 = vperm.xlu0 %2050, %v2001
  %v2052 = vpop.permute.xlu0 %2051
  %2055 = vset.pattern.permute.xlu0 0
  %2056 = vperm.xlu0 %2055, %v2002
  %v2057 = vpop.permute.xlu0 %2056
  %2060 = vset.pattern.permute.xlu0 0
  %2061 = vperm.xlu0 %2060, %v2003
  %v2062 = vpop.permute.xlu0 %2061
  %2065 = vset.pattern.permute.xlu0 0
  %2066 = vperm.xlu0 %2065, %v2004
  %v2067 = vpop.permute.xlu0 %2066
  %2070 = vset.pattern.permute.xlu0 0
  %2071 = vperm.xlu0 %2070, %v2005
  %v2072 = vpop.permute.xlu0 %2071
  %2075 = vset.pattern.permute.xlu0 0
  %2076 = vperm.xlu0 %2075, %v2006
  %v2077 = vpop.permute.xlu0 %2076
  %2080 = vset.pattern.permute.xlu0 0
  %2081 = vperm.xlu0 %2080, %v2007
  %v2082 = vpop.permute.xlu0 %2081
  %2085 = vset.pattern.permute.xlu0 0
  %2086 = vperm.xlu0 %2085, %v2008
  %v2087 = vpop.permute.xlu0 %2086
  %2090 = vset.pattern.permute.xlu0 0
  %2091 = vperm.xlu0 %2090, %v2009
  %v2092 = vpop.permute.xlu0 %2091
  %2095 = vset.pattern.permute.xlu0 0
  %2096 = vperm.xlu0 %2095, %v2010
  %v2097 = vpop.permute.xlu0 %2096
  %2100 = vset.pattern.permute.xlu0 0
  %2101 = vperm.xlu0 %2100, %v2011
  %v2102 = vpop.permute.xlu0 %2101
  %2105 = vset.pattern.permute.xlu0 0
  %2106 = vperm.xlu0 %2105, %v2012
  %v2107 = vpop.permute.xlu0 %2106
  %2110 = vset.pattern.permute.xlu0 0
  %2111 = vperm.xlu0 %2110, %v2013
  %v2112 = vpop.permute.xlu0 %2111
  %2115 = vset.pattern.permute.xlu0 0
  %2116 = vperm.xlu0 %2115, %v2014
  %v2117 = vpop.permute.xlu0 %2116
  %2120 = vset.pattern.permute.xlu0 0
  %2121 = vperm.xlu0 %2120, %v2015
  %v2122 = vpop.permute.xlu0 %2121
  %2125 = vset.pattern.permute.xlu0 0
  %2126 = vperm.xlu0 %2125, %v2016
  %v2127 = vpop.permute.xlu0 %2126
  %2130 = vset.pattern.permute.xlu0 0
  %2131 = vperm.xlu0 %2130, %v2017
  %v2132 = vpop.permute.xlu0 %2131
  %2135 = vset.pattern.permute.xlu0 0
  %2136 = vperm.xlu0 %2135, %v2018
  %v2137 = vpop.permute.xlu0 %2136
  %2140 = vset.pattern.permute.xlu0 0
  %2141 = vperm.xlu0 %2140, %v2019
  %v2142 = vpop.permute.xlu0 %2141
  %2145 = vset.pattern.permute.xlu0 0
  %2146 = vperm.xlu0 %2145, %v2020
  %v2147 = vpop.permute.xlu0 %2146
  %2150 = vset.pattern.permute.xlu0 0
  %2151 = vperm.xlu0 %2150, %v2021
  %v2152 = vpop.permute.xlu0 %2151
  %2155 = vset.pattern.permute.xlu0 0
  %2156 = vperm.xlu0 %2155, %v2022
  %v2157 = vpop.permute.xlu0 %2156
  %2160 = vset.pattern.permute.xlu0 0
  %2161 = vperm.xlu0 %2160, %v2023
  %v2162 = vpop.permute.xlu0 %2161
  %2165 = vset.pattern.permute.xlu0 0
  %2166 = vperm.xlu0 %2165, %v2024
  %v2167 = vpop.permute.xlu0 %2166
  %2170 = vset.pattern.permute.xlu0 0
  %2171 = vperm.xlu0 %2170, %v2025
  %v2172 = vpop.permute.xlu0 %2171
  %2175 = vset.pattern.permute.xlu0 0
  %2176 = vperm.xlu0 %2175, %v2026
  %v2177 = vpop.permute.xlu0 %2176
  %2180 = vset.pattern.permute.xlu0 0
  %2181 = vperm.xlu0 %2180, %v2027
  %v2182 = vpop.permute.xlu0 %2181
  %2185 = vset.pattern.permute.xlu0 0
  %2186 = vperm.xlu0 %2185, %v2028
  %v2187 = vpop.permute.xlu0 %2186
  %v2189 = vmul.f32 %v1839, %v2032
  %v2190 = vmul.f32 %v1844, %v2037
  %v2191 = vmul.f32 %v1849, %v2042
  %v2192 = vmul.f32 %v1854, %v2047
  %v2193 = vmul.f32 %v1859, %v2052
  %v2194 = vmul.f32 %v1864, %v2057
  %v2195 = vmul.f32 %v1869, %v2062
  %v2196 = vmul.f32 %v1874, %v2067
  %v2197 = vmul.f32 %v1879, %v2072
  %v2198 = vmul.f32 %v1884, %v2077
  %v2199 = vmul.f32 %v1889, %v2082
  %v2200 = vmul.f32 %v1894, %v2087
  %v2201 = vmul.f32 %v1899, %v2092
  %v2202 = vmul.f32 %v1904, %v2097
  %v2203 = vmul.f32 %v1909, %v2102
  %v2204 = vmul.f32 %v1914, %v2107
  %v2205 = vmul.f32 %v1919, %v2112
  %v2206 = vmul.f32 %v1924, %v2117
  %v2207 = vmul.f32 %v1929, %v2122
  %v2208 = vmul.f32 %v1934, %v2127
  %v2209 = vmul.f32 %v1939, %v2132
  %v2210 = vmul.f32 %v1944, %v2137
  %v2211 = vmul.f32 %v1949, %v2142
  %v2212 = vmul.f32 %v1954, %v2147
  %v2213 = vmul.f32 %v1959, %v2152
  %v2214 = vmul.f32 %v1964, %v2157
  %v2215 = vmul.f32 %v1969, %v2162
  %v2216 = vmul.f32 %v1974, %v2167
  %v2217 = vmul.f32 %v1979, %v2172
  %v2218 = vmul.f32 %v1984, %v2177
  %v2219 = vmul.f32 %v1989, %v2182
  %v2220 = vmul.f32 %v1994, %v2187
  %v2221 = vsel %vm65, %v2189, 0.0
  %v2222 = vrot.slane %v2221, 4
  %v2223 = vadd.f32 %v2221, %v2222
  %v2224 = vrot.slane %v2223, 2
  %v2225 = vadd.f32 %v2223, %v2224
  %v2226 = vrot.slane %v2225, 1
  %v2227 = vadd.f32 %v2225, %v2226
  %v2228 = vsel %vm65, %v2190, 0.0
  %v2229 = vrot.slane %v2228, 4
  %v2230 = vadd.f32 %v2228, %v2229
  %v2231 = vrot.slane %v2230, 2
  %v2232 = vadd.f32 %v2230, %v2231
  %v2233 = vrot.slane %v2232, 1
  %v2234 = vadd.f32 %v2232, %v2233
  %v2235 = vsel %vm65, %v2191, 0.0
  %v2236 = vrot.slane %v2235, 4
  %v2237 = vadd.f32 %v2235, %v2236
  %v2238 = vrot.slane %v2237, 2
  %v2239 = vadd.f32 %v2237, %v2238
  %v2240 = vrot.slane %v2239, 1
  %v2241 = vadd.f32 %v2239, %v2240
  %v2242 = vsel %vm65, %v2192, 0.0
  %v2243 = vrot.slane %v2242, 4
  %v2244 = vadd.f32 %v2242, %v2243
  %v2245 = vrot.slane %v2244, 2
  %v2246 = vadd.f32 %v2244, %v2245
  %v2247 = vrot.slane %v2246, 1
  %v2248 = vadd.f32 %v2246, %v2247
  %v2249 = vsel %vm65, %v2193, 0.0
  %v2250 = vrot.slane %v2249, 4
  %v2251 = vadd.f32 %v2249, %v2250
  %v2252 = vrot.slane %v2251, 2
  %v2253 = vadd.f32 %v2251, %v2252
  %v2254 = vrot.slane %v2253, 1
  %v2255 = vadd.f32 %v2253, %v2254
  %v2256 = vsel %vm65, %v2194, 0.0
  %v2257 = vrot.slane %v2256, 4
  %v2258 = vadd.f32 %v2256, %v2257
  %v2259 = vrot.slane %v2258, 2
  %v2260 = vadd.f32 %v2258, %v2259
  %v2261 = vrot.slane %v2260, 1
  %v2262 = vadd.f32 %v2260, %v2261
  %v2263 = vsel %vm65, %v2195, 0.0
  %v2264 = vrot.slane %v2263, 4
  %v2265 = vadd.f32 %v2263, %v2264
  %v2266 = vrot.slane %v2265, 2
  %v2267 = vadd.f32 %v2265, %v2266
  %v2268 = vrot.slane %v2267, 1
  %v2269 = vadd.f32 %v2267, %v2268
  %v2270 = vsel %vm65, %v2196, 0.0
  %v2271 = vrot.slane %v2270, 4
  %v2272 = vadd.f32 %v2270, %v2271
  %v2273 = vrot.slane %v2272, 2
  %v2274 = vadd.f32 %v2272, %v2273
  %v2275 = vrot.slane %v2274, 1
  %v2276 = vadd.f32 %v2274, %v2275
  %v2277 = vsel %vm65, %v2197, 0.0
  %v2278 = vrot.slane %v2277, 4
  %v2279 = vadd.f32 %v2277, %v2278
  %v2280 = vrot.slane %v2279, 2
  %v2281 = vadd.f32 %v2279, %v2280
  %v2282 = vrot.slane %v2281, 1
  %v2283 = vadd.f32 %v2281, %v2282
  %v2284 = vsel %vm65, %v2198, 0.0
  %v2285 = vrot.slane %v2284, 4
  %v2286 = vadd.f32 %v2284, %v2285
  %v2287 = vrot.slane %v2286, 2
  %v2288 = vadd.f32 %v2286, %v2287
  %v2289 = vrot.slane %v2288, 1
  %v2290 = vadd.f32 %v2288, %v2289
  %v2291 = vsel %vm65, %v2199, 0.0
  %v2292 = vrot.slane %v2291, 4
  %v2293 = vadd.f32 %v2291, %v2292
  %v2294 = vrot.slane %v2293, 2
  %v2295 = vadd.f32 %v2293, %v2294
  %v2296 = vrot.slane %v2295, 1
  %v2297 = vadd.f32 %v2295, %v2296
  %v2298 = vsel %vm65, %v2200, 0.0
  %v2299 = vrot.slane %v2298, 4
  %v2300 = vadd.f32 %v2298, %v2299
  %v2301 = vrot.slane %v2300, 2
  %v2302 = vadd.f32 %v2300, %v2301
  %v2303 = vrot.slane %v2302, 1
  %v2304 = vadd.f32 %v2302, %v2303
  %v2305 = vsel %vm65, %v2201, 0.0
  %v2306 = vrot.slane %v2305, 4
  %v2307 = vadd.f32 %v2305, %v2306
  %v2308 = vrot.slane %v2307, 2
  %v2309 = vadd.f32 %v2307, %v2308
  %v2310 = vrot.slane %v2309, 1
  %v2311 = vadd.f32 %v2309, %v2310
  %v2312 = vsel %vm65, %v2202, 0.0
  %v2313 = vrot.slane %v2312, 4
  %v2314 = vadd.f32 %v2312, %v2313
  %v2315 = vrot.slane %v2314, 2
  %v2316 = vadd.f32 %v2314, %v2315
  %v2317 = vrot.slane %v2316, 1
  %v2318 = vadd.f32 %v2316, %v2317
  %v2319 = vsel %vm65, %v2203, 0.0
  %v2320 = vrot.slane %v2319, 4
  %v2321 = vadd.f32 %v2319, %v2320
  %v2322 = vrot.slane %v2321, 2
  %v2323 = vadd.f32 %v2321, %v2322
  %v2324 = vrot.slane %v2323, 1
  %v2325 = vadd.f32 %v2323, %v2324
  %v2326 = vsel %vm65, %v2204, 0.0
  %v2327 = vrot.slane %v2326, 4
  %v2328 = vadd.f32 %v2326, %v2327
  %v2329 = vrot.slane %v2328, 2
  %v2330 = vadd.f32 %v2328, %v2329
  %v2331 = vrot.slane %v2330, 1
  %v2332 = vadd.f32 %v2330, %v2331
  %v2333 = vsel %vm65, %v2205, 0.0
  %v2334 = vrot.slane %v2333, 4
  %v2335 = vadd.f32 %v2333, %v2334
  %v2336 = vrot.slane %v2335, 2
  %v2337 = vadd.f32 %v2335, %v2336
  %v2338 = vrot.slane %v2337, 1
  %v2339 = vadd.f32 %v2337, %v2338
  %v2340 = vsel %vm65, %v2206, 0.0
  %v2341 = vrot.slane %v2340, 4
  %v2342 = vadd.f32 %v2340, %v2341
  %v2343 = vrot.slane %v2342, 2
  %v2344 = vadd.f32 %v2342, %v2343
  %v2345 = vrot.slane %v2344, 1
  %v2346 = vadd.f32 %v2344, %v2345
  %v2347 = vsel %vm65, %v2207, 0.0
  %v2348 = vrot.slane %v2347, 4
  %v2349 = vadd.f32 %v2347, %v2348
  %v2350 = vrot.slane %v2349, 2
  %v2351 = vadd.f32 %v2349, %v2350
  %v2352 = vrot.slane %v2351, 1
  %v2353 = vadd.f32 %v2351, %v2352
  %v2354 = vsel %vm65, %v2208, 0.0
  %v2355 = vrot.slane %v2354, 4
  %v2356 = vadd.f32 %v2354, %v2355
  %v2357 = vrot.slane %v2356, 2
  %v2358 = vadd.f32 %v2356, %v2357
  %v2359 = vrot.slane %v2358, 1
  %v2360 = vadd.f32 %v2358, %v2359
  %v2361 = vsel %vm65, %v2209, 0.0
  %v2362 = vrot.slane %v2361, 4
  %v2363 = vadd.f32 %v2361, %v2362
  %v2364 = vrot.slane %v2363, 2
  %v2365 = vadd.f32 %v2363, %v2364
  %v2366 = vrot.slane %v2365, 1
  %v2367 = vadd.f32 %v2365, %v2366
  %v2368 = vsel %vm65, %v2210, 0.0
  %v2369 = vrot.slane %v2368, 4
  %v2370 = vadd.f32 %v2368, %v2369
  %v2371 = vrot.slane %v2370, 2
  %v2372 = vadd.f32 %v2370, %v2371
  %v2373 = vrot.slane %v2372, 1
  %v2374 = vadd.f32 %v2372, %v2373
  %v2375 = vsel %vm65, %v2211, 0.0
  %v2376 = vrot.slane %v2375, 4
  %v2377 = vadd.f32 %v2375, %v2376
  %v2378 = vrot.slane %v2377, 2
  %v2379 = vadd.f32 %v2377, %v2378
  %v2380 = vrot.slane %v2379, 1
  %v2381 = vadd.f32 %v2379, %v2380
  %v2382 = vsel %vm65, %v2212, 0.0
  %v2383 = vrot.slane %v2382, 4
  %v2384 = vadd.f32 %v2382, %v2383
  %v2385 = vrot.slane %v2384, 2
  %v2386 = vadd.f32 %v2384, %v2385
  %v2387 = vrot.slane %v2386, 1
  %v2388 = vadd.f32 %v2386, %v2387
  %v2389 = vsel %vm65, %v2213, 0.0
  %v2390 = vrot.slane %v2389, 4
  %v2391 = vadd.f32 %v2389, %v2390
  %v2392 = vrot.slane %v2391, 2
  %v2393 = vadd.f32 %v2391, %v2392
  %v2394 = vrot.slane %v2393, 1
  %v2395 = vadd.f32 %v2393, %v2394
  %v2396 = vsel %vm65, %v2214, 0.0
  %v2397 = vrot.slane %v2396, 4
  %v2398 = vadd.f32 %v2396, %v2397
  %v2399 = vrot.slane %v2398, 2
  %v2400 = vadd.f32 %v2398, %v2399
  %v2401 = vrot.slane %v2400, 1
  %v2402 = vadd.f32 %v2400, %v2401
  %v2403 = vsel %vm65, %v2215, 0.0
  %v2404 = vrot.slane %v2403, 4
  %v2405 = vadd.f32 %v2403, %v2404
  %v2406 = vrot.slane %v2405, 2
  %v2407 = vadd.f32 %v2405, %v2406
  %v2408 = vrot.slane %v2407, 1
  %v2409 = vadd.f32 %v2407, %v2408
  %v2410 = vsel %vm65, %v2216, 0.0
  %v2411 = vrot.slane %v2410, 4
  %v2412 = vadd.f32 %v2410, %v2411
  %v2413 = vrot.slane %v2412, 2
  %v2414 = vadd.f32 %v2412, %v2413
  %v2415 = vrot.slane %v2414, 1
  %v2416 = vadd.f32 %v2414, %v2415
  %v2417 = vsel %vm65, %v2217, 0.0
  %v2418 = vrot.slane %v2417, 4
  %v2419 = vadd.f32 %v2417, %v2418
  %v2420 = vrot.slane %v2419, 2
  %v2421 = vadd.f32 %v2419, %v2420
  %v2422 = vrot.slane %v2421, 1
  %v2423 = vadd.f32 %v2421, %v2422
  %v2424 = vsel %vm65, %v2218, 0.0
  %v2425 = vrot.slane %v2424, 4
  %v2426 = vadd.f32 %v2424, %v2425
  %v2427 = vrot.slane %v2426, 2
  %v2428 = vadd.f32 %v2426, %v2427
  %v2429 = vrot.slane %v2428, 1
  %v2430 = vadd.f32 %v2428, %v2429
  %v2431 = vsel %vm65, %v2219, 0.0
  %v2432 = vrot.slane %v2431, 4
  %v2433 = vadd.f32 %v2431, %v2432
  %v2434 = vrot.slane %v2433, 2
  %v2435 = vadd.f32 %v2433, %v2434
  %v2436 = vrot.slane %v2435, 1
  %v2437 = vadd.f32 %v2435, %v2436
  %v2438 = vsel %vm65, %v2220, 0.0
  %v2439 = vrot.slane %v2438, 4
  %v2440 = vadd.f32 %v2438, %v2439
  %v2441 = vrot.slane %v2440, 2
  %v2442 = vadd.f32 %v2440, %v2441
  %v2443 = vrot.slane %v2442, 1
  %v2444 = vadd.f32 %v2442, %v2443
  %v2445 = vmul.f32 %v2227, 0.125
  %v2446 = vmul.f32 %v2234, 0.125
  %v2447 = vmul.f32 %v2241, 0.125
  %v2448 = vmul.f32 %v2248, 0.125
  %v2449 = vmul.f32 %v2255, 0.125
  %v2450 = vmul.f32 %v2262, 0.125
  %v2451 = vmul.f32 %v2269, 0.125
  %v2452 = vmul.f32 %v2276, 0.125
  %v2453 = vmul.f32 %v2283, 0.125
  %v2454 = vmul.f32 %v2290, 0.125
  %v2455 = vmul.f32 %v2297, 0.125
  %v2456 = vmul.f32 %v2304, 0.125
  %v2457 = vmul.f32 %v2311, 0.125
  %v2458 = vmul.f32 %v2318, 0.125
  %v2459 = vmul.f32 %v2325, 0.125
  %v2460 = vmul.f32 %v2332, 0.125
  %v2461 = vmul.f32 %v2339, 0.125
  %v2462 = vmul.f32 %v2346, 0.125
  %v2463 = vmul.f32 %v2353, 0.125
  %v2464 = vmul.f32 %v2360, 0.125
  %v2465 = vmul.f32 %v2367, 0.125
  %v2466 = vmul.f32 %v2374, 0.125
  %v2467 = vmul.f32 %v2381, 0.125
  %v2468 = vmul.f32 %v2388, 0.125
  %v2469 = vmul.f32 %v2395, 0.125
  %v2470 = vmul.f32 %v2402, 0.125
  %v2471 = vmul.f32 %v2409, 0.125
  %v2472 = vmul.f32 %v2416, 0.125
  %v2473 = vmul.f32 %v2423, 0.125
  %v2474 = vmul.f32 %v2430, 0.125
  %v2475 = vmul.f32 %v2437, 0.125
  %v2476 = vmul.f32 %v2444, 0.125
  %vm2509 = vcmask 1041409
  %v2510 = vsel %vm2509, %v2446, %v2445
  %vm2511 = vcmask 1042434
  %v2512 = vsel %vm2511, %v2447, %v2510
  %vm2513 = vcmask 1043459
  %v2514 = vsel %vm2513, %v2448, %v2512
  %vm2515 = vcmask 1044484
  %v2516 = vsel %vm2515, %v2449, %v2514
  %vm2517 = vcmask 1045509
  %v2518 = vsel %vm2517, %v2450, %v2516
  %vm2519 = vcmask 1046534
  %v2520 = vsel %vm2519, %v2451, %v2518
  %vm2521 = vcmask 1047559
  %v2522 = vsel %vm2521, %v2452, %v2520
  %v2523 = vsel %vm2509, %v2454, %v2453
  %v2524 = vsel %vm2511, %v2455, %v2523
  %v2525 = vsel %vm2513, %v2456, %v2524
  %v2526 = vsel %vm2515, %v2457, %v2525
  %v2527 = vsel %vm2517, %v2458, %v2526
  %v2528 = vsel %vm2519, %v2459, %v2527
  %v2529 = vsel %vm2521, %v2460, %v2528
  %v2530 = vsel %vm2509, %v2462, %v2461
  %v2531 = vsel %vm2511, %v2463, %v2530
  %v2532 = vsel %vm2513, %v2464, %v2531
  %v2533 = vsel %vm2515, %v2465, %v2532
  %v2534 = vsel %vm2517, %v2466, %v2533
  %v2535 = vsel %vm2519, %v2467, %v2534
  %v2536 = vsel %vm2521, %v2468, %v2535
  %v2537 = vsel %vm2509, %v2470, %v2469
  %v2538 = vsel %vm2511, %v2471, %v2537
  %v2539 = vsel %vm2513, %v2472, %v2538
  %v2540 = vsel %vm2515, %v2473, %v2539
  %v2541 = vsel %vm2517, %v2474, %v2540
  %v2542 = vsel %vm2519, %v2475, %v2541
  %v2543 = vsel %vm2521, %v2476, %v2542
  %v2548 = vadd.f32 %v50, %v2522
  %v2549 = vadd.f32 %v51, %v2529
  %v2550 = vadd.f32 %v52, %v2536
  %v2551 = vadd.f32 %v53, %v2543
  %v2552 = vsel %vm65, %v2548, 0.0
  %2553 = vadd.xlane.f32.xlu0 %v2552
  %v2554 = vpop.xlane.xlu0 %2553
  %v2555 = vsel %vm65, %v2549, 0.0
  %2556 = vadd.xlane.f32.xlu0 %v2555
  %v2557 = vpop.xlane.xlu0 %2556
  %v2558 = vsel %vm65, %v2550, 0.0
  %2559 = vadd.xlane.f32.xlu0 %v2558
  %v2560 = vpop.xlane.xlu0 %2559
  %v2561 = vsel %vm65, %v2551, 0.0
  %2562 = vadd.xlane.f32.xlu0 %v2561
  %v2563 = vpop.xlane.xlu0 %2562
  %v2564 = vrcp.pop 32.0
  %v2565 = vmul.f32 %v2554, %v2564
  %v2566 = vmul.f32 %v2557, %v2564
  %v2567 = vmul.f32 %v2560, %v2564
  %v2568 = vmul.f32 %v2563, %v2564
  %v2569 = vsub.f32 %v2548, %v2565
  %v2570 = vsub.f32 %v2549, %v2566
  %v2571 = vsub.f32 %v2550, %v2567
  %v2572 = vsub.f32 %v2551, %v2568
  %v2573 = vmul.f32 %v2569, %v2569
  %v2574 = vmul.f32 %v2570, %v2570
  %v2575 = vmul.f32 %v2571, %v2571
  %v2576 = vmul.f32 %v2572, %v2572
  %v2577 = vsel %vm65, %v2573, 0.0
  %2578 = vadd.xlane.f32.xlu0 %v2577
  %v2579 = vpop.xlane.xlu0 %2578
  %v2580 = vsel %vm65, %v2574, 0.0
  %2581 = vadd.xlane.f32.xlu0 %v2580
  %v2582 = vpop.xlane.xlu0 %2581
  %v2583 = vsel %vm65, %v2575, 0.0
  %2584 = vadd.xlane.f32.xlu0 %v2583
  %v2585 = vpop.xlane.xlu0 %2584
  %v2586 = vsel %vm65, %v2576, 0.0
  %2587 = vadd.xlane.f32.xlu0 %v2586
  %v2588 = vpop.xlane.xlu0 %2587
  %v2589 = vmul.f32 %v2579, 0.032258064
  %v2590 = vmul.f32 %v2582, 0.032258064
  %v2591 = vmul.f32 %v2585, 0.032258064
  %v2592 = vmul.f32 %v2588, 0.032258064
  %v2593 = vadd.f32 %v2589, 1e-06
  %v2594 = vadd.f32 %v2590, 1e-06
  %v2595 = vadd.f32 %v2591, 1e-06
  %v2596 = vadd.f32 %v2592, 1e-06
  %v2597 = vrsqrt.pop %v2593
  %v2598 = vmul.f32 %v2593, %v2597
  %vm2599 = vcmp.eq.f32.partialorder %v2593, inf
  %v2600 = vsel %vm2599, %v2593, %v2598
  %vm2601 = vcmp.eq.f32.partialorder %v2593, 0.0
  %v2602 = vand.u32 %v2593, 2147483648
  %v2603 = vsel %vm2601, %v2602, %v2600
  %v2604 = vrsqrt.pop %v2594
  %v2605 = vmul.f32 %v2594, %v2604
  %vm2606 = vcmp.eq.f32.partialorder %v2594, inf
  %v2607 = vsel %vm2606, %v2594, %v2605
  %vm2608 = vcmp.eq.f32.partialorder %v2594, 0.0
  %v2609 = vand.u32 %v2594, 2147483648
  %v2610 = vsel %vm2608, %v2609, %v2607
  %v2611 = vrsqrt.pop %v2595
  %v2612 = vmul.f32 %v2595, %v2611
  %vm2613 = vcmp.eq.f32.partialorder %v2595, inf
  %v2614 = vsel %vm2613, %v2595, %v2612
  %vm2615 = vcmp.eq.f32.partialorder %v2595, 0.0
  %v2616 = vand.u32 %v2595, 2147483648
  %v2617 = vsel %vm2615, %v2616, %v2614
  %v2618 = vrsqrt.pop %v2596
  %v2619 = vmul.f32 %v2596, %v2618
  %vm2620 = vcmp.eq.f32.partialorder %v2596, inf
  %v2621 = vsel %vm2620, %v2596, %v2619
  %vm2622 = vcmp.eq.f32.partialorder %v2596, 0.0
  %v2623 = vand.u32 %v2596, 2147483648
  %v2624 = vsel %vm2622, %v2623, %v2621
  %v2625 = vadd.f32 %v2603, 1e-06
  %v2626 = vadd.f32 %v2610, 1e-06
  %v2627 = vadd.f32 %v2617, 1e-06
  %v2628 = vadd.f32 %v2624, 1e-06
  %v2629 = vrcp.pop %v2625
  %v2630 = vrcp.pop %v2626
  %v2631 = vrcp.pop %v2627
  %v2632 = vrcp.pop %v2628
  %v2633 = vld [vmem:[%s13] sm:$0x1]
  %v2635 = vlaneseq
  %v2636 = vshrl.u32 %v2635, 7
  %v2637 = vsub.s32 0, %v2636
  %v2638 = vrot.slane %v2633, %v2637
  %v2640 = vmul.f32 %v2638, %v2569
  %v2641 = vmul.f32 %v2638, %v2570
  %v2642 = vmul.f32 %v2638, %v2571
  %v2643 = vmul.f32 %v2638, %v2572
  %v2644 = vmul.f32 %v2640, %v2629
  %v2645 = vmul.f32 %v2641, %v2630
  %v2646 = vmul.f32 %v2642, %v2631
  %v2647 = vmul.f32 %v2643, %v2632
  %v2648 = vld [vmem:[%s14] sm:$0x1]
  %v2650 = vlaneseq
  %v2651 = vshrl.u32 %v2650, 7
  %v2652 = vsub.s32 0, %v2651
  %v2653 = vrot.slane %v2648, %v2652
  %v2655 = vadd.f32 %v2644, %v2653
  %v2656 = vadd.f32 %v2645, %v2653
  %v2657 = vadd.f32 %v2646, %v2653
  %v2658 = vadd.f32 %v2647, %v2653
  %v2659 = vld [vmem:[%s4] sm:$0xff]
  %v2660 = vld [vmem:[%s4 + $0x8] sm:$0xff]
  %v2661 = vld [vmem:[%s4 + $0x10] sm:$0xff]
  %v2662 = vld [vmem:[%s4 + $0x18] sm:$0xff]
  %2664 = vset.pattern.permute.xlu0 0
  %2665 = vperm.xlu0 %2664, %v2659
  %v2666 = vpop.permute.xlu0 %2665
  %2669 = vset.pattern.permute.xlu0 0
  %2670 = vperm.xlu0 %2669, %v2660
  %v2671 = vpop.permute.xlu0 %2670
  %2674 = vset.pattern.permute.xlu0 0
  %2675 = vperm.xlu0 %2674, %v2661
  %v2676 = vpop.permute.xlu0 %2675
  %2679 = vset.pattern.permute.xlu0 0
  %2680 = vperm.xlu0 %2679, %v2662
  %v2681 = vpop.permute.xlu0 %2680
  %v2683 = vmul.f32 %v2655, %v2666
  %v2684 = vmul.f32 %v2656, %v2671
  %v2685 = vmul.f32 %v2657, %v2676
  %v2686 = vmul.f32 %v2658, %v2681
  %2687 = vst.msk [vmem:[%s15] sm:$0xff] %vm65, %v2683
  %2688 = vst.msk [vmem:[%s15 + $0x8] sm:$0xff] %vm65, %v2684
  %2689 = vst.msk [vmem:[%s15 + $0x10] sm:$0xff] %vm65, %v2685
  %2690 = vst.msk [vmem:[%s15 + $0x18] sm:$0xff] %vm65, %v2686
  // Predicated region
  $region62: #{encoder_forward_pallas.6} parent=0 // pred_check
    _
  $region63: #{encoder_forward_pallas.6} parent=0 // pred_check_branch
    %2692 = sbr.rel (0) target = $region65
  $region64: #{encoder_forward_pallas.6} parent=0 // pred_region
    _
  $region65: #{encoder_forward_pallas.6} parent=0 // pred_fallthru
    _
  // Predicated region
  $region66: #{encoder_forward_pallas.6} parent=0 // pred_check
    _
  $region67: #{encoder_forward_pallas.6} parent=0 // pred_check_branch
    %2694 = sbr.rel (0) target = $region69
  $region68: #{encoder_forward_pallas.6} parent=0 // pred_region
    _
  $region69: #{encoder_forward_pallas.6} parent=0 // pred_fallthru
    _

// kernel: encoder_forward_pallas.7
$region0: #{encoder_forward_pallas.7}
  #allocation0 [shape = 'u32[]', space=smem, size = 0x4, offset = 0x4, fixed_abs, tag = 'smem constant byte address 0x4 - core index']
  #allocation1 [shape = 'u32[144,128]{1,0:T(1,128)}', space=vmem, size = 0x12000, scoped, tag = 'internal scratch']
  %s0 = inlined_call_operand.vmem [shape: f32[32,32], index: 0, kind: input, shape index: {}]
  %s1 = inlined_call_operand.vmem [shape: f32[256,32], index: 1, kind: input, shape index: {}]
  %s2 = inlined_call_operand.vmem [shape: f32[256,32], index: 2, kind: input, shape index: {}]
  %s3 = inlined_call_operand.vmem [shape: f32[256,1], index: 3, kind: input, shape index: {}]
  %s4 = inlined_call_operand.vmem [shape: f32[32,1], index: 4, kind: input, shape index: {}]
  %s5 = inlined_call_operand.vmem [shape: f32[32,32], index: 5, kind: input, shape index: {}]
  %s6 = inlined_call_operand.vmem [shape: f32[32,32], index: 6, kind: input, shape index: {}]
  %s7 = inlined_call_operand.vmem [shape: f32[32,32], index: 7, kind: input, shape index: {}]
  %s8 = inlined_call_operand.vmem [shape: f32[1,32], index: 8, kind: input, shape index: {}]
  %s9 = inlined_call_operand.vmem [shape: f32[32,32], index: 9, kind: input, shape index: {}]
  %s10 = inlined_call_operand.vmem [shape: f32[1,32], index: 10, kind: input, shape index: {}]
  %s11 = inlined_call_operand.vmem [shape: f32[32,32], index: 11, kind: input, shape index: {}]
  %s12 = inlined_call_operand.vmem [shape: f32[1,32], index: 12, kind: input, shape index: {}]
  %s13 = inlined_call_operand.vmem [shape: f32[1,32], index: 13, kind: input, shape index: {}]
  %s14 = inlined_call_operand.vmem [shape: f32[1,32], index: 14, kind: input, shape index: {}]
  %s15 = inlined_call_operand.hbm [shape: f32[32,32], index: 15, kind: output, shape index: {}]
  %s16 = sld [smem:[#allocation0]]
  $region70: #{encoder_forward_pallas.7} parent=0
    _
  %s18 = ssub.s32 1, %s16
  %s19 = scalar_select 0, %s18, %s16
  $region1: #{encoder_forward_pallas.7} parent=0
    #allocation2 [shape = 'u8[16384]{0}', space=vmem, size = 0x4000, scoped, tag = 'output window, operand 0, single buffered']
    #allocation3 [shape = 's32[1]{0}', space=sflag, size = 0x4, scoped, tag = 'scoped memory for encoder_forward_pallas.7']
    %20 = vsyncpa [#allocation3], 0
    // Predicated region
    $region2: #{encoder_forward_pallas.7} parent=1 // pred_check
      _
    $region3: #{encoder_forward_pallas.7} parent=1 // pred_check_branch
      %22 = sbr.rel (0) target = $region5
    $region4: #{encoder_forward_pallas.7} parent=1 // pred_region
      _
    $region5: #{encoder_forward_pallas.7} parent=1 // pred_fallthru
      _
    // Predicated region
    $region6: #{encoder_forward_pallas.7} parent=1 // pred_check
      _
    $region7: #{encoder_forward_pallas.7} parent=1 // pred_check_branch
      %24 = sbr.rel (0) target = $region9
    $region8: #{encoder_forward_pallas.7} parent=1 // pred_region
      _
    $region9: #{encoder_forward_pallas.7} parent=1 // pred_fallthru
      _
    // Predicated region
    $region10: #{encoder_forward_pallas.7} parent=1 // pred_check
      _
    $region11: #{encoder_forward_pallas.7} parent=1 // pred_check_branch
      %26 = sbr.rel (0) target = $region13
    $region12: #{encoder_forward_pallas.7} parent=1 // pred_region
      _
    $region13: #{encoder_forward_pallas.7} parent=1 // pred_fallthru
      _
    // Predicated region
    $region14: #{encoder_forward_pallas.7} parent=1 // pred_check
      _
    $region15: #{encoder_forward_pallas.7} parent=1 // pred_check_branch
      %28 = sbr.rel (0) target = $region17
    $region16: #{encoder_forward_pallas.7} parent=1 // pred_region
      _
    $region17: #{encoder_forward_pallas.7} parent=1 // pred_fallthru
      _
    // Predicated region
    $region18: #{encoder_forward_pallas.7} parent=1 // pred_check
      _
    $region19: #{encoder_forward_pallas.7} parent=1 // pred_check_branch
      %30 = sbr.rel (0) target = $region21
    $region20: #{encoder_forward_pallas.7} parent=1 // pred_region
      _
    $region21: #{encoder_forward_pallas.7} parent=1 // pred_fallthru
      _
    // Predicated region
    $region22: #{encoder_forward_pallas.7} parent=1 // pred_check
      _
    $region23: #{encoder_forward_pallas.7} parent=1 // pred_check_branch
      %32 = sbr.rel (0) target = $region25
    $region24: #{encoder_forward_pallas.7} parent=1 // pred_region
      _
    $region25: #{encoder_forward_pallas.7} parent=1 // pred_fallthru
      _
    // Predicated region
    $region26: #{encoder_forward_pallas.7} parent=1 // pred_check
      _
    $region27: #{encoder_forward_pallas.7} parent=1 // pred_check_branch
      %34 = sbr.rel (0) target = $region29
    $region28: #{encoder_forward_pallas.7} parent=1 // pred_region
      _
    $region29: #{encoder_forward_pallas.7} parent=1 // pred_fallthru
      _
    // Predicated region
    $region30: #{encoder_forward_pallas.7} parent=1 // pred_check
      _
    $region31: #{encoder_forward_pallas.7} parent=1 // pred_check_branch
      %36 = sbr.rel (0) target = $region33
    $region32: #{encoder_forward_pallas.7} parent=1 // pred_region
      _
    $region33: #{encoder_forward_pallas.7} parent=1 // pred_fallthru
      _
    // Predicated region
    $region34: #{encoder_forward_pallas.7} parent=1 // pred_check
      _
    $region35: #{encoder_forward_pallas.7} parent=1 // pred_check_branch
      %38 = sbr.rel (0) target = $region37
    $region36: #{encoder_forward_pallas.7} parent=1 // pred_region
      _
    $region37: #{encoder_forward_pallas.7} parent=1 // pred_fallthru
      _
    // Predicated region
    $region38: #{encoder_forward_pallas.7} parent=1 // pred_check
      _
    $region39: #{encoder_forward_pallas.7} parent=1 // pred_check_branch
      %40 = sbr.rel (0) target = $region41
    $region40: #{encoder_forward_pallas.7} parent=1 // pred_region
      _
    $region41: #{encoder_forward_pallas.7} parent=1 // pred_fallthru
      _
    // Predicated region
    $region42: #{encoder_forward_pallas.7} parent=1 // pred_check
      _
    $region43: #{encoder_forward_pallas.7} parent=1 // pred_check_branch
      %42 = sbr.rel (0) target = $region45
    $region44: #{encoder_forward_pallas.7} parent=1 // pred_region
      _
    $region45: #{encoder_forward_pallas.7} parent=1 // pred_fallthru
      _
    // Predicated region
    $region46: #{encoder_forward_pallas.7} parent=1 // pred_check
      _
    $region47: #{encoder_forward_pallas.7} parent=1 // pred_check_branch
      %44 = sbr.rel (0) target = $region49
    $region48: #{encoder_forward_pallas.7} parent=1 // pred_region
      _
    $region49: #{encoder_forward_pallas.7} parent=1 // pred_fallthru
      _
    // Predicated region
    $region50: #{encoder_forward_pallas.7} parent=1 // pred_check
      _
    $region51: #{encoder_forward_pallas.7} parent=1 // pred_check_branch
      %46 = sbr.rel (0) target = $region53
    $region52: #{encoder_forward_pallas.7} parent=1 // pred_region
      _
    $region53: #{encoder_forward_pallas.7} parent=1 // pred_fallthru
      _
    // Predicated region
    $region54: #{encoder_forward_pallas.7} parent=1 // pred_check
      _
    $region55: #{encoder_forward_pallas.7} parent=1 // pred_check_branch
      %48 = sbr.rel (0) target = $region57
    $region56: #{encoder_forward_pallas.7} parent=1 // pred_region
      _
    $region57: #{encoder_forward_pallas.7} parent=1 // pred_fallthru
      _
    // Predicated region
    $region58: #{encoder_forward_pallas.7} parent=1 // pred_check
      _
    $region59: #{encoder_forward_pallas.7} parent=1 // pred_check_branch
      %50 = sbr.rel (0) target = $region61
    $region60: #{encoder_forward_pallas.7} parent=1 // pred_region
      _
    $region61: #{encoder_forward_pallas.7} parent=1 // pred_fallthru
      _
    %v51 = vld [vmem:[%s0] sm:$0xff]
    %v52 = vld [vmem:[%s0 + $0x8] sm:$0xff]
    %v53 = vld [vmem:[%s0 + $0x10] sm:$0xff]
    %v54 = vld [vmem:[%s0 + $0x18] sm:$0xff]
    %v55 = vld [vmem:[%s5] sm:$0xff]
    %v56 = vld [vmem:[%s5 + $0x8] sm:$0xff]
    %v57 = vld [vmem:[%s5 + $0x10] sm:$0xff]
    %v58 = vld [vmem:[%s5 + $0x18] sm:$0xff]
    %v59 = vld [vmem:[%s8] sm:$0x1]
    %v61 = vlaneseq
    %v62 = vshrl.u32 %v61, 7
    %v63 = vsub.s32 0, %v62
    %v64 = vrot.slane %v59, %v63
    %vm66 = vcmask 261120
    %v68 = vsel %vm66, %v51, 0
    %v71 = vsel %vm66, %v52, 0
    %v74 = vsel %vm66, %v53, 0
    %v77 = vsel %vm66, %v54, 0
    %79 = vmatprep.subr.mxu0 0.0
    %80 = vmatpush1.msra.mxu0 %v55
    %81 = vmatprep.subr.mxu0 0.0
    %82 = vmatpush1.msra.mxu0 %v56
    %83 = vmatprep.subr.mxu0 0.0
    %84 = vmatpush1.msra.mxu0 %v57
    %85 = vmatprep.subr.mxu0 0.0
    %86 = vmatpush1.msra.mxu0 %v58
    %87 = vmatprep.subr.mxu0 0.0
    %88 = vmatpush1.msra.mxu0 0.0
    %89 = vmatprep.subr.mxu0 0.0
    %90 = vmatpush1.msra.mxu0 0.0
    %91 = vmatprep.subr.mxu0 0.0
    %92 = vmatpush1.msra.mxu0 0.0
    %93 = vmatprep.subr.mxu0 0.0
    %94 = vmatpush1.msra.mxu0 0.0
    %95 = vmatprep.subr.mxu0 0.0
    %96 = vmatpush1.msra.mxu0 0.0
    %97 = vmatprep.subr.mxu0 0.0
    %98 = vmatpush1.msra.mxu0 0.0
    %99 = vmatprep.subr.mxu0 0.0
    %100 = vmatpush1.msra.mxu0 0.0
    %101 = vmatprep.subr.mxu0 0.0
    %102 = vmatpush1.msra.mxu0 0.0
    %103 = vmatprep.subr.mxu0 0.0
    %104 = vmatpush1.msra.mxu0 0.0
    %105 = vmatprep.subr.mxu0 0.0
    %106 = vmatpush1.msra.mxu0 0.0
    %107 = vmatprep.subr.mxu0 0.0
    %108 = vmatpush1.msra.mxu0 0.0
    %109 = vmatprep.subr.mxu0 0.0
    %110 = vmatpush1.msra.mxu0 0.0
    %111 = vmatprep.subr.mxu0 0.0
    %112 = vmatpush1.msra.mxu0 0.0
    %113 = vmatprep.subr.mxu0 0.0
    %114 = vmatpush1.msra.mxu0 0.0
    %115 = vmatprep.subr.mxu0 0.0
    %116 = vmatpush1.msra.mxu0 0.0
    %117 = vmatprep.subr.mxu0 0.0
    %118 = vmatpush1.msra.mxu0 0.0
    %119 = vmatprep.subr.mxu0 0.0
    %120 = vmatpush1.msra.mxu0 0.0
    %121 = vmatprep.subr.mxu0 0.0
    %122 = vmatpush1.msra.mxu0 0.0
    %123 = vmatprep.subr.mxu0 0.0
    %124 = vmatpush1.msra.mxu0 0.0
    %125 = vmatprep.subr.mxu0 0.0
    %126 = vmatpush1.msra.mxu0 0.0
    %127 = vmatprep.subr.mxu0 0.0
    %128 = vmatpush1.msra.mxu0 0.0
    %129 = vmatprep.subr.mxu0 0.0
    %130 = vmatpush1.msra.mxu0 0.0
    %131 = vmatprep.subr.mxu0 0.0
    %132 = vmatpush1.msra.mxu0 0.0
    %133 = vmatprep.subr.mxu0 0.0
    %134 = vmatpush1.msra.mxu0 0.0
    %135 = vmatprep.subr.mxu0 0.0
    %136 = vmatpush1.msra.mxu0 0.0
    %137 = vmatprep.subr.mxu0 0.0
    %138 = vmatpush1.msra.mxu0 0.0
    %139 = vmatprep.subr.mxu0 0.0
    %140 = vmatpush1.msra.mxu0 0.0
    %141 = vmatprep.subr.mxu0 0.0
    %142 = vmatpush1.msra.mxu0 0.0
    %143 = vmatprep.mubr.f32.mxu0 0.0
    %144 = vmatmul.mubr.f32.gmra.mrb[0].mxu0 %v68
    %v145 = vpop.f32.mrb[0].mxu0
    %v146 = vadd.f32 %v64, %v145
    %v147 = vpop.f32.mrb[0].mxu0
    %148 = vmatprep.mubr.f32.mxu0 0.0
    %149 = vmatmul.mubr.f32.gmra.mrb[0].mxu0 %v71
    %v150 = vpop.f32.mrb[0].mxu0
    %v151 = vadd.f32 %v64, %v150
    %v152 = vpop.f32.mrb[0].mxu0
    %153 = vmatprep.mubr.f32.mxu0 0.0
    %154 = vmatmul.mubr.f32.gmra.mrb[0].mxu0 %v74
    %v155 = vpop.f32.mrb[0].mxu0
    %v156 = vadd.f32 %v64, %v155
    %v157 = vpop.f32.mrb[0].mxu0
    %158 = vmatprep.mubr.f32.mxu0 0.0
    %159 = vmatmul.mubr.f32.gmra.mrb[0].mxu0 %v77
    %v160 = vpop.f32.mrb[0].mxu0
    %v161 = vadd.f32 %v64, %v160
    %v162 = vpop.f32.mrb[0].mxu0
    %163 = vdwg.mxu0
    %v164 = vld [vmem:[%s1] sm:$0xff]
    %v165 = vld [vmem:[%s1 + $0x8] sm:$0xff]
    %v166 = vld [vmem:[%s1 + $0x10] sm:$0xff]
    %v167 = vld [vmem:[%s1 + $0x18] sm:$0xff]
    %v168 = vld [vmem:[%s1 + $0x20] sm:$0xff]
    %v169 = vld [vmem:[%s1 + $0x28] sm:$0xff]
    %v170 = vld [vmem:[%s1 + $0x30] sm:$0xff]
    %v171 = vld [vmem:[%s1 + $0x38] sm:$0xff]
    %v172 = vld [vmem:[%s1 + $0x40] sm:$0xff]
    %v173 = vld [vmem:[%s1 + $0x48] sm:$0xff]
    %v174 = vld [vmem:[%s1 + $0x50] sm:$0xff]
    %v175 = vld [vmem:[%s1 + $0x58] sm:$0xff]
    %v176 = vld [vmem:[%s1 + $0x60] sm:$0xff]
    %v177 = vld [vmem:[%s1 + $0x68] sm:$0xff]
    %v178 = vld [vmem:[%s1 + $0x70] sm:$0xff]
    %v179 = vld [vmem:[%s1 + $0x78] sm:$0xff]
    %v180 = vld [vmem:[%s1 + $0x80] sm:$0xff]
    %v181 = vld [vmem:[%s1 + $0x88] sm:$0xff]
    %v182 = vld [vmem:[%s1 + $0x90] sm:$0xff]
    %v183 = vld [vmem:[%s1 + $0x98] sm:$0xff]
    %v184 = vld [vmem:[%s1 + $0xa0] sm:$0xff]
    %v185 = vld [vmem:[%s1 + $0xa8] sm:$0xff]
    %v186 = vld [vmem:[%s1 + $0xb0] sm:$0xff]
    %v187 = vld [vmem:[%s1 + $0xb8] sm:$0xff]
    %v188 = vld [vmem:[%s1 + $0xc0] sm:$0xff]
    %v189 = vld [vmem:[%s1 + $0xc8] sm:$0xff]
    %v190 = vld [vmem:[%s1 + $0xd0] sm:$0xff]
    %v191 = vld [vmem:[%s1 + $0xd8] sm:$0xff]
    %v192 = vld [vmem:[%s1 + $0xe0] sm:$0xff]
    %v193 = vld [vmem:[%s1 + $0xe8] sm:$0xff]
    %v194 = vld [vmem:[%s1 + $0xf0] sm:$0xff]
    %v195 = vld [vmem:[%s1 + $0xf8] sm:$0xff]
    %v196 = vld [vmem:[%s6] sm:$0xff]
    %v197 = vld [vmem:[%s6 + $0x8] sm:$0xff]
    %v198 = vld [vmem:[%s6 + $0x10] sm:$0xff]
    %v199 = vld [vmem:[%s6 + $0x18] sm:$0xff]
    %v200 = vld [vmem:[%s2] sm:$0xff]
    %v201 = vld [vmem:[%s2 + $0x8] sm:$0xff]
    %v202 = vld [vmem:[%s2 + $0x10] sm:$0xff]
    %v203 = vld [vmem:[%s2 + $0x18] sm:$0xff]
    %v204 = vld [vmem:[%s2 + $0x20] sm:$0xff]
    %v205 = vld [vmem:[%s2 + $0x28] sm:$0xff]
    %v206 = vld [vmem:[%s2 + $0x30] sm:$0xff]
    %v207 = vld [vmem:[%s2 + $0x38] sm:$0xff]
    %v208 = vld [vmem:[%s2 + $0x40] sm:$0xff]
    %v209 = vld [vmem:[%s2 + $0x48] sm:$0xff]
    %v210 = vld [vmem:[%s2 + $0x50] sm:$0xff]
    %v211 = vld [vmem:[%s2 + $0x58] sm:$0xff]
    %v212 = vld [vmem:[%s2 + $0x60] sm:$0xff]
    %v213 = vld [vmem:[%s2 + $0x68] sm:$0xff]
    %v214 = vld [vmem:[%s2 + $0x70] sm:$0xff]
    %v215 = vld [vmem:[%s2 + $0x78] sm:$0xff]
    %v216 = vld [vmem:[%s2 + $0x80] sm:$0xff]
    %v217 = vld [vmem:[%s2 + $0x88] sm:$0xff]
    %v218 = vld [vmem:[%s2 + $0x90] sm:$0xff]
    %v219 = vld [vmem:[%s2 + $0x98] sm:$0xff]
    %v220 = vld [vmem:[%s2 + $0xa0] sm:$0xff]
    %v221 = vld [vmem:[%s2 + $0xa8] sm:$0xff]
    %v222 = vld [vmem:[%s2 + $0xb0] sm:$0xff]
    %v223 = vld [vmem:[%s2 + $0xb8] sm:$0xff]
    %v224 = vld [vmem:[%s2 + $0xc0] sm:$0xff]
    %v225 = vld [vmem:[%s2 + $0xc8] sm:$0xff]
    %v226 = vld [vmem:[%s2 + $0xd0] sm:$0xff]
    %v227 = vld [vmem:[%s2 + $0xd8] sm:$0xff]
    %v228 = vld [vmem:[%s2 + $0xe0] sm:$0xff]
    %v229 = vld [vmem:[%s2 + $0xe8] sm:$0xff]
    %v230 = vld [vmem:[%s2 + $0xf0] sm:$0xff]
    %v231 = vld [vmem:[%s2 + $0xf8] sm:$0xff]
    %v232 = vld [vmem:[%s7] sm:$0xff]
    %v233 = vld [vmem:[%s7 + $0x8] sm:$0xff]
    %v234 = vld [vmem:[%s7 + $0x10] sm:$0xff]
    %v235 = vld [vmem:[%s7 + $0x18] sm:$0xff]
    %v237 = vsel %vm66, %v200, 0
    %v240 = vsel %vm66, %v201, 0
    %v243 = vsel %vm66, %v202, 0
    %v246 = vsel %vm66, %v203, 0
    %v249 = vsel %vm66, %v204, 0
    %v252 = vsel %vm66, %v205, 0
    %v255 = vsel %vm66, %v206, 0
    %v258 = vsel %vm66, %v207, 0
    %v261 = vsel %vm66, %v208, 0
    %v264 = vsel %vm66, %v209, 0
    %v267 = vsel %vm66, %v210, 0
    %v270 = vsel %vm66, %v211, 0
    %v273 = vsel %vm66, %v212, 0
    %v276 = vsel %vm66, %v213, 0
    %v279 = vsel %vm66, %v214, 0
    %v282 = vsel %vm66, %v215, 0
    %v285 = vsel %vm66, %v216, 0
    %v288 = vsel %vm66, %v217, 0
    %v291 = vsel %vm66, %v218, 0
    %v294 = vsel %vm66, %v219, 0
    %v297 = vsel %vm66, %v220, 0
    %v300 = vsel %vm66, %v221, 0
    %v303 = vsel %vm66, %v222, 0
    %v306 = vsel %vm66, %v223, 0
    %v309 = vsel %vm66, %v224, 0
    %v312 = vsel %vm66, %v225, 0
    %v315 = vsel %vm66, %v226, 0
    %v318 = vsel %vm66, %v227, 0
    %v321 = vsel %vm66, %v228, 0
    %v324 = vsel %vm66, %v229, 0
    %v327 = vsel %vm66, %v230, 0
    %v330 = vsel %vm66, %v231, 0
    %332 = vmatprep.subr.mxu0 0.0
    %333 = vmatpush1.msra.mxu0 %v232
    %334 = vmatprep.subr.mxu0 0.0
    %335 = vmatpush1.msra.mxu0 %v233
    %336 = vmatprep.subr.mxu0 0.0
    %337 = vmatpush1.msra.mxu0 %v234
    %338 = vmatprep.subr.mxu0 0.0
    %339 = vmatpush1.msra.mxu0 %v235
    %340 = vmatprep.subr.mxu0 0.0
    %341 = vmatpush1.msra.mxu0 0.0
    %342 = vmatprep.subr.mxu0 0.0
    %343 = vmatpush1.msra.mxu0 0.0
    %344 = vmatprep.subr.mxu0 0.0
    %345 = vmatpush1.msra.mxu0 0.0
    %346 = vmatprep.subr.mxu0 0.0
    %347 = vmatpush1.msra.mxu0 0.0
    %348 = vmatprep.subr.mxu0 0.0
    %349 = vmatpush1.msra.mxu0 0.0
    %350 = vmatprep.subr.mxu0 0.0
    %351 = vmatpush1.msra.mxu0 0.0
    %352 = vmatprep.subr.mxu0 0.0
    %353 = vmatpush1.msra.mxu0 0.0
    %354 = vmatprep.subr.mxu0 0.0
    %355 = vmatpush1.msra.mxu0 0.0
    %356 = vmatprep.subr.mxu0 0.0
    %357 = vmatpush1.msra.mxu0 0.0
    %358 = vmatprep.subr.mxu0 0.0
    %359 = vmatpush1.msra.mxu0 0.0
    %360 = vmatprep.subr.mxu0 0.0
    %361 = vmatpush1.msra.mxu0 0.0
    %362 = vmatprep.subr.mxu0 0.0
    %363 = vmatpush1.msra.mxu0 0.0
    %364 = vmatprep.subr.mxu0 0.0
    %365 = vmatpush1.msra.mxu0 0.0
    %366 = vmatprep.subr.mxu0 0.0
    %367 = vmatpush1.msra.mxu0 0.0
    %368 = vmatprep.subr.mxu0 0.0
    %369 = vmatpush1.msra.mxu0 0.0
    %370 = vmatprep.subr.mxu0 0.0
    %371 = vmatpush1.msra.mxu0 0.0
    %372 = vmatprep.subr.mxu0 0.0
    %373 = vmatpush1.msra.mxu0 0.0
    %374 = vmatprep.subr.mxu0 0.0
    %375 = vmatpush1.msra.mxu0 0.0
    %376 = vmatprep.subr.mxu0 0.0
    %377 = vmatpush1.msra.mxu0 0.0
    %378 = vmatprep.subr.mxu0 0.0
    %379 = vmatpush1.msra.mxu0 0.0
    %380 = vmatprep.subr.mxu0 0.0
    %381 = vmatpush1.msra.mxu0 0.0
    %382 = vmatprep.subr.mxu0 0.0
    %383 = vmatpush1.msra.mxu0 0.0
    %384 = vmatprep.subr.mxu0 0.0
    %385 = vmatpush1.msra.mxu0 0.0
    %386 = vmatprep.subr.mxu0 0.0
    %387 = vmatpush1.msra.mxu0 0.0
    %388 = vmatprep.subr.mxu0 0.0
    %389 = vmatpush1.msra.mxu0 0.0
    %390 = vmatprep.subr.mxu0 0.0
    %391 = vmatpush1.msra.mxu0 0.0
    %392 = vmatprep.subr.mxu0 0.0
    %393 = vmatpush1.msra.mxu0 0.0
    %394 = vmatprep.subr.mxu0 0.0
    %395 = vmatpush1.msra.mxu0 0.0
    %396 = vmatprep.mubr.f32.mxu0 0.0
    %397 = vmatmul.mubr.f32.gmra.mrb[0].mxu0 %v237
    %v398 = vpop.f32.mrb[0].mxu0
    %v399 = vadd.f32 0.0, %v398
    %v400 = vpop.f32.mrb[0].mxu0
    %401 = vmatprep.mubr.f32.mxu0 0.0
    %402 = vmatmul.mubr.f32.gmra.mrb[0].mxu0 %v240
    %v403 = vpop.f32.mrb[0].mxu0
    %v404 = vadd.f32 0.0, %v403
    %v405 = vpop.f32.mrb[0].mxu0
    %406 = vmatprep.mubr.f32.mxu0 0.0
    %407 = vmatmul.mubr.f32.gmra.mrb[0].mxu0 %v243
    %v408 = vpop.f32.mrb[0].mxu0
    %v409 = vadd.f32 0.0, %v408
    %v410 = vpop.f32.mrb[0].mxu0
    %411 = vmatprep.mubr.f32.mxu0 0.0
    %412 = vmatmul.mubr.f32.gmra.mrb[0].mxu0 %v246
    %v413 = vpop.f32.mrb[0].mxu0
    %v414 = vadd.f32 0.0, %v413
    %v415 = vpop.f32.mrb[0].mxu0
    %416 = vmatprep.mubr.f32.mxu0 0.0
    %417 = vmatmul.mubr.f32.gmra.mrb[0].mxu0 %v249
    %v418 = vpop.f32.mrb[0].mxu0
    %v419 = vadd.f32 0.0, %v418
    %v420 = vpop.f32.mrb[0].mxu0
    %421 = vmatprep.mubr.f32.mxu0 0.0
    %422 = vmatmul.mubr.f32.gmra.mrb[0].mxu0 %v252
    %v423 = vpop.f32.mrb[0].mxu0
    %v424 = vadd.f32 0.0, %v423
    %v425 = vpop.f32.mrb[0].mxu0
    %426 = vmatprep.mubr.f32.mxu0 0.0
    %427 = vmatmul.mubr.f32.gmra.mrb[0].mxu0 %v255
    %v428 = vpop.f32.mrb[0].mxu0
    %v429 = vadd.f32 0.0, %v428
    %v430 = vpop.f32.mrb[0].mxu0
    %431 = vmatprep.mubr.f32.mxu0 0.0
    %432 = vmatmul.mubr.f32.gmra.mrb[0].mxu0 %v258
    %v433 = vpop.f32.mrb[0].mxu0
    %v434 = vadd.f32 0.0, %v433
    %v435 = vpop.f32.mrb[0].mxu0
    %436 = vmatprep.mubr.f32.mxu0 0.0
    %437 = vmatmul.mubr.f32.gmra.mrb[0].mxu0 %v261
    %v438 = vpop.f32.mrb[0].mxu0
    %v439 = vadd.f32 0.0, %v438
    %v440 = vpop.f32.mrb[0].mxu0
    %441 = vmatprep.mubr.f32.mxu0 0.0
    %442 = vmatmul.mubr.f32.gmra.mrb[0].mxu0 %v264
    %v443 = vpop.f32.mrb[0].mxu0
    %v444 = vadd.f32 0.0, %v443
    %v445 = vpop.f32.mrb[0].mxu0
    %446 = vmatprep.mubr.f32.mxu0 0.0
    %447 = vmatmul.mubr.f32.gmra.mrb[0].mxu0 %v267
    %v448 = vpop.f32.mrb[0].mxu0
    %v449 = vadd.f32 0.0, %v448
    %v450 = vpop.f32.mrb[0].mxu0
    %451 = vmatprep.mubr.f32.mxu0 0.0
    %452 = vmatmul.mubr.f32.gmra.mrb[0].mxu0 %v270
    %v453 = vpop.f32.mrb[0].mxu0
    %v454 = vadd.f32 0.0, %v453
    %v455 = vpop.f32.mrb[0].mxu0
    %456 = vmatprep.mubr.f32.mxu0 0.0
    %457 = vmatmul.mubr.f32.gmra.mrb[0].mxu0 %v273
    %v458 = vpop.f32.mrb[0].mxu0
    %v459 = vadd.f32 0.0, %v458
    %v460 = vpop.f32.mrb[0].mxu0
    %461 = vmatprep.mubr.f32.mxu0 0.0
    %462 = vmatmul.mubr.f32.gmra.mrb[0].mxu0 %v276
    %v463 = vpop.f32.mrb[0].mxu0
    %v464 = vadd.f32 0.0, %v463
    %v465 = vpop.f32.mrb[0].mxu0
    %466 = vmatprep.mubr.f32.mxu0 0.0
    %467 = vmatmul.mubr.f32.gmra.mrb[0].mxu0 %v279
    %v468 = vpop.f32.mrb[0].mxu0
    %v469 = vadd.f32 0.0, %v468
    %v470 = vpop.f32.mrb[0].mxu0
    %471 = vmatprep.mubr.f32.mxu0 0.0
    %472 = vmatmul.mubr.f32.gmra.mrb[0].mxu0 %v282
    %v473 = vpop.f32.mrb[0].mxu0
    %v474 = vadd.f32 0.0, %v473
    %v475 = vpop.f32.mrb[0].mxu0
    %476 = vmatprep.mubr.f32.mxu0 0.0
    %477 = vmatmul.mubr.f32.gmra.mrb[0].mxu0 %v285
    %v478 = vpop.f32.mrb[0].mxu0
    %v479 = vadd.f32 0.0, %v478
    %v480 = vpop.f32.mrb[0].mxu0
    %481 = vmatprep.mubr.f32.mxu0 0.0
    %482 = vmatmul.mubr.f32.gmra.mrb[0].mxu0 %v288
    %v483 = vpop.f32.mrb[0].mxu0
    %v484 = vadd.f32 0.0, %v483
    %v485 = vpop.f32.mrb[0].mxu0
    %486 = vmatprep.mubr.f32.mxu0 0.0
    %487 = vmatmul.mubr.f32.gmra.mrb[0].mxu0 %v291
    %v488 = vpop.f32.mrb[0].mxu0
    %v489 = vadd.f32 0.0, %v488
    %v490 = vpop.f32.mrb[0].mxu0
    %491 = vmatprep.mubr.f32.mxu0 0.0
    %492 = vmatmul.mubr.f32.gmra.mrb[0].mxu0 %v294
    %v493 = vpop.f32.mrb[0].mxu0
    %v494 = vadd.f32 0.0, %v493
    %v495 = vpop.f32.mrb[0].mxu0
    %496 = vmatprep.mubr.f32.mxu0 0.0
    %497 = vmatmul.mubr.f32.gmra.mrb[0].mxu0 %v297
    %v498 = vpop.f32.mrb[0].mxu0
    %v499 = vadd.f32 0.0, %v498
    %v500 = vpop.f32.mrb[0].mxu0
    %501 = vmatprep.mubr.f32.mxu0 0.0
    %502 = vmatmul.mubr.f32.gmra.mrb[0].mxu0 %v300
    %v503 = vpop.f32.mrb[0].mxu0
    %v504 = vadd.f32 0.0, %v503
    %v505 = vpop.f32.mrb[0].mxu0
    %506 = vmatprep.mubr.f32.mxu0 0.0
    %507 = vmatmul.mubr.f32.gmra.mrb[0].mxu0 %v303
    %v508 = vpop.f32.mrb[0].mxu0
    %v509 = vadd.f32 0.0, %v508
    %v510 = vpop.f32.mrb[0].mxu0
    %511 = vmatprep.mubr.f32.mxu0 0.0
    %512 = vmatmul.mubr.f32.gmra.mrb[0].mxu0 %v306
    %v513 = vpop.f32.mrb[0].mxu0
    %v514 = vadd.f32 0.0, %v513
    %v515 = vpop.f32.mrb[0].mxu0
    %516 = vmatprep.mubr.f32.mxu0 0.0
    %517 = vmatmul.mubr.f32.gmra.mrb[0].mxu0 %v309
    %v518 = vpop.f32.mrb[0].mxu0
    %v519 = vadd.f32 0.0, %v518
    %v520 = vpop.f32.mrb[0].mxu0
    %521 = vmatprep.mubr.f32.mxu0 0.0
    %522 = vmatmul.mubr.f32.gmra.mrb[0].mxu0 %v312
    %v523 = vpop.f32.mrb[0].mxu0
    %v524 = vadd.f32 0.0, %v523
    %v525 = vpop.f32.mrb[0].mxu0
    %526 = vmatprep.mubr.f32.mxu0 0.0
    %527 = vmatmul.mubr.f32.gmra.mrb[0].mxu0 %v315
    %v528 = vpop.f32.mrb[0].mxu0
    %v529 = vadd.f32 0.0, %v528
    %v530 = vpop.f32.mrb[0].mxu0
    %531 = vmatprep.mubr.f32.mxu0 0.0
    %532 = vmatmul.mubr.f32.gmra.mrb[0].mxu0 %v318
    %v533 = vpop.f32.mrb[0].mxu0
    %v534 = vadd.f32 0.0, %v533
    %v535 = vpop.f32.mrb[0].mxu0
    %536 = vmatprep.mubr.f32.mxu0 0.0
    %537 = vmatmul.mubr.f32.gmra.mrb[0].mxu0 %v321
    %v538 = vpop.f32.mrb[0].mxu0
    %v539 = vadd.f32 0.0, %v538
    %v540 = vpop.f32.mrb[0].mxu0
    %541 = vmatprep.mubr.f32.mxu0 0.0
    %542 = vmatmul.mubr.f32.gmra.mrb[0].mxu0 %v324
    %v543 = vpop.f32.mrb[0].mxu0
    %v544 = vadd.f32 0.0, %v543
    %v545 = vpop.f32.mrb[0].mxu0
    %546 = vmatprep.mubr.f32.mxu0 0.0
    %547 = vmatmul.mubr.f32.gmra.mrb[0].mxu0 %v327
    %v548 = vpop.f32.mrb[0].mxu0
    %v549 = vadd.f32 0.0, %v548
    %v550 = vpop.f32.mrb[0].mxu0
    %551 = vmatprep.mubr.f32.mxu0 0.0
    %552 = vmatmul.mubr.f32.gmra.mrb[0].mxu0 %v330
    %v553 = vpop.f32.mrb[0].mxu0
    %v554 = vadd.f32 0.0, %v553
    %v555 = vpop.f32.mrb[0].mxu0
    %556 = vdwg.mxu0
    %v558 = vsel %vm66, %v164, 0
    %v561 = vsel %vm66, %v165, 0
    %v564 = vsel %vm66, %v166, 0
    %v567 = vsel %vm66, %v167, 0
    %v570 = vsel %vm66, %v168, 0
    %v573 = vsel %vm66, %v169, 0
    %v576 = vsel %vm66, %v170, 0
    %v579 = vsel %vm66, %v171, 0
    %v582 = vsel %vm66, %v172, 0
    %v585 = vsel %vm66, %v173, 0
    %v588 = vsel %vm66, %v174, 0
    %v591 = vsel %vm66, %v175, 0
    %v594 = vsel %vm66, %v176, 0
    %v597 = vsel %vm66, %v177, 0
    %v600 = vsel %vm66, %v178, 0
    %v603 = vsel %vm66, %v179, 0
    %v606 = vsel %vm66, %v180, 0
    %v609 = vsel %vm66, %v181, 0
    %v612 = vsel %vm66, %v182, 0
    %v615 = vsel %vm66, %v183, 0
    %v618 = vsel %vm66, %v184, 0
    %v621 = vsel %vm66, %v185, 0
    %v624 = vsel %vm66, %v186, 0
    %v627 = vsel %vm66, %v187, 0
    %v630 = vsel %vm66, %v188, 0
    %v633 = vsel %vm66, %v189, 0
    %v636 = vsel %vm66, %v190, 0
    %v639 = vsel %vm66, %v191, 0
    %v642 = vsel %vm66, %v192, 0
    %v645 = vsel %vm66, %v193, 0
    %v648 = vsel %vm66, %v194, 0
    %v651 = vsel %vm66, %v195, 0
    %653 = vmatprep.subr.mxu0 0.0
    %654 = vmatpush1.msra.mxu0 %v196
    %655 = vmatprep.subr.mxu0 0.0
    %656 = vmatpush1.msra.mxu0 %v197
    %657 = vmatprep.subr.mxu0 0.0
    %658 = vmatpush1.msra.mxu0 %v198
    %659 = vmatprep.subr.mxu0 0.0
    %660 = vmatpush1.msra.mxu0 %v199
    %661 = vmatprep.subr.mxu0 0.0
    %662 = vmatpush1.msra.mxu0 0.0
    %663 = vmatprep.subr.mxu0 0.0
    %664 = vmatpush1.msra.mxu0 0.0
    %665 = vmatprep.subr.mxu0 0.0
    %666 = vmatpush1.msra.mxu0 0.0
    %667 = vmatprep.subr.mxu0 0.0
    %668 = vmatpush1.msra.mxu0 0.0
    %669 = vmatprep.subr.mxu0 0.0
    %670 = vmatpush1.msra.mxu0 0.0
    %671 = vmatprep.subr.mxu0 0.0
    %672 = vmatpush1.msra.mxu0 0.0
    %673 = vmatprep.subr.mxu0 0.0
    %674 = vmatpush1.msra.mxu0 0.0
    %675 = vmatprep.subr.mxu0 0.0
    %676 = vmatpush1.msra.mxu0 0.0
    %677 = vmatprep.subr.mxu0 0.0
    %678 = vmatpush1.msra.mxu0 0.0
    %679 = vmatprep.subr.mxu0 0.0
    %680 = vmatpush1.msra.mxu0 0.0
    %681 = vmatprep.subr.mxu0 0.0
    %682 = vmatpush1.msra.mxu0 0.0
    %683 = vmatprep.subr.mxu0 0.0
    %684 = vmatpush1.msra.mxu0 0.0
    %685 = vmatprep.subr.mxu0 0.0
    %686 = vmatpush1.msra.mxu0 0.0
    %687 = vmatprep.subr.mxu0 0.0
    %688 = vmatpush1.msra.mxu0 0.0
    %689 = vmatprep.subr.mxu0 0.0
    %690 = vmatpush1.msra.mxu0 0.0
    %691 = vmatprep.subr.mxu0 0.0
    %692 = vmatpush1.msra.mxu0 0.0
    %693 = vmatprep.subr.mxu0 0.0
    %694 = vmatpush1.msra.mxu0 0.0
    %695 = vmatprep.subr.mxu0 0.0
    %696 = vmatpush1.msra.mxu0 0.0
    %697 = vmatprep.subr.mxu0 0.0
    %698 = vmatpush1.msra.mxu0 0.0
    %699 = vmatprep.subr.mxu0 0.0
    %700 = vmatpush1.msra.mxu0 0.0
    %701 = vmatprep.subr.mxu0 0.0
    %702 = vmatpush1.msra.mxu0 0.0
    %703 = vmatprep.subr.mxu0 0.0
    %704 = vmatpush1.msra.mxu0 0.0
    %705 = vmatprep.subr.mxu0 0.0
    %706 = vmatpush1.msra.mxu0 0.0
    %707 = vmatprep.subr.mxu0 0.0
    %708 = vmatpush1.msra.mxu0 0.0
    %709 = vmatprep.subr.mxu0 0.0
    %710 = vmatpush1.msra.mxu0 0.0
    %711 = vmatprep.subr.mxu0 0.0
    %712 = vmatpush1.msra.mxu0 0.0
    %713 = vmatprep.subr.mxu0 0.0
    %714 = vmatpush1.msra.mxu0 0.0
    %715 = vmatprep.subr.mxu0 0.0
    %716 = vmatpush1.msra.mxu0 0.0
    %717 = vmatprep.mubr.f32.mxu0 0.0
    %718 = vmatmul.mubr.f32.gmra.mrb[0].mxu0 %v558
    %v719 = vpop.f32.mrb[0].mxu0
    %v720 = vadd.f32 %v399, %v719
    %v721 = vpop.f32.mrb[0].mxu0
    %722 = vmatprep.mubr.f32.mxu0 0.0
    %723 = vmatmul.mubr.f32.gmra.mrb[0].mxu0 %v561
    %v724 = vpop.f32.mrb[0].mxu0
    %v725 = vadd.f32 %v404, %v724
    %v726 = vpop.f32.mrb[0].mxu0
    %727 = vmatprep.mubr.f32.mxu0 0.0
    %728 = vmatmul.mubr.f32.gmra.mrb[0].mxu0 %v564
    %v729 = vpop.f32.mrb[0].mxu0
    %v730 = vadd.f32 %v409, %v729
    %v731 = vpop.f32.mrb[0].mxu0
    %732 = vmatprep.mubr.f32.mxu0 0.0
    %733 = vmatmul.mubr.f32.gmra.mrb[0].mxu0 %v567
    %v734 = vpop.f32.mrb[0].mxu0
    %v735 = vadd.f32 %v414, %v734
    %v736 = vpop.f32.mrb[0].mxu0
    %737 = vmatprep.mubr.f32.mxu0 0.0
    %738 = vmatmul.mubr.f32.gmra.mrb[0].mxu0 %v570
    %v739 = vpop.f32.mrb[0].mxu0
    %v740 = vadd.f32 %v419, %v739
    %v741 = vpop.f32.mrb[0].mxu0
    %742 = vmatprep.mubr.f32.mxu0 0.0
    %743 = vmatmul.mubr.f32.gmra.mrb[0].mxu0 %v573
    %v744 = vpop.f32.mrb[0].mxu0
    %v745 = vadd.f32 %v424, %v744
    %v746 = vpop.f32.mrb[0].mxu0
    %747 = vmatprep.mubr.f32.mxu0 0.0
    %748 = vmatmul.mubr.f32.gmra.mrb[0].mxu0 %v576
    %v749 = vpop.f32.mrb[0].mxu0
    %v750 = vadd.f32 %v429, %v749
    %v751 = vpop.f32.mrb[0].mxu0
    %752 = vmatprep.mubr.f32.mxu0 0.0
    %753 = vmatmul.mubr.f32.gmra.mrb[0].mxu0 %v579
    %v754 = vpop.f32.mrb[0].mxu0
    %v755 = vadd.f32 %v434, %v754
    %v756 = vpop.f32.mrb[0].mxu0
    %757 = vmatprep.mubr.f32.mxu0 0.0
    %758 = vmatmul.mubr.f32.gmra.mrb[0].mxu0 %v582
    %v759 = vpop.f32.mrb[0].mxu0
    %v760 = vadd.f32 %v439, %v759
    %v761 = vpop.f32.mrb[0].mxu0
    %762 = vmatprep.mubr.f32.mxu0 0.0
    %763 = vmatmul.mubr.f32.gmra.mrb[0].mxu0 %v585
    %v764 = vpop.f32.mrb[0].mxu0
    %v765 = vadd.f32 %v444, %v764
    %v766 = vpop.f32.mrb[0].mxu0
    %767 = vmatprep.mubr.f32.mxu0 0.0
    %768 = vmatmul.mubr.f32.gmra.mrb[0].mxu0 %v588
    %v769 = vpop.f32.mrb[0].mxu0
    %v770 = vadd.f32 %v449, %v769
    %v771 = vpop.f32.mrb[0].mxu0
    %772 = vmatprep.mubr.f32.mxu0 0.0
    %773 = vmatmul.mubr.f32.gmra.mrb[0].mxu0 %v591
    %v774 = vpop.f32.mrb[0].mxu0
    %v775 = vadd.f32 %v454, %v774
    %v776 = vpop.f32.mrb[0].mxu0
    %777 = vmatprep.mubr.f32.mxu0 0.0
    %778 = vmatmul.mubr.f32.gmra.mrb[0].mxu0 %v594
    %v779 = vpop.f32.mrb[0].mxu0
    %v780 = vadd.f32 %v459, %v779
    %v781 = vpop.f32.mrb[0].mxu0
    %782 = vmatprep.mubr.f32.mxu0 0.0
    %783 = vmatmul.mubr.f32.gmra.mrb[0].mxu0 %v597
    %v784 = vpop.f32.mrb[0].mxu0
    %v785 = vadd.f32 %v464, %v784
    %v786 = vpop.f32.mrb[0].mxu0
    %787 = vmatprep.mubr.f32.mxu0 0.0
    %788 = vmatmul.mubr.f32.gmra.mrb[0].mxu0 %v600
    %v789 = vpop.f32.mrb[0].mxu0
    %v790 = vadd.f32 %v469, %v789
    %v791 = vpop.f32.mrb[0].mxu0
    %792 = vmatprep.mubr.f32.mxu0 0.0
    %793 = vmatmul.mubr.f32.gmra.mrb[0].mxu0 %v603
    %v794 = vpop.f32.mrb[0].mxu0
    %v795 = vadd.f32 %v474, %v794
    %v796 = vpop.f32.mrb[0].mxu0
    %797 = vmatprep.mubr.f32.mxu0 0.0
    %798 = vmatmul.mubr.f32.gmra.mrb[0].mxu0 %v606
    %v799 = vpop.f32.mrb[0].mxu0
    %v800 = vadd.f32 %v479, %v799
    %v801 = vpop.f32.mrb[0].mxu0
    %802 = vmatprep.mubr.f32.mxu0 0.0
    %803 = vmatmul.mubr.f32.gmra.mrb[0].mxu0 %v609
    %v804 = vpop.f32.mrb[0].mxu0
    %v805 = vadd.f32 %v484, %v804
    %v806 = vpop.f32.mrb[0].mxu0
    %807 = vmatprep.mubr.f32.mxu0 0.0
    %808 = vmatmul.mubr.f32.gmra.mrb[0].mxu0 %v612
    %v809 = vpop.f32.mrb[0].mxu0
    %v810 = vadd.f32 %v489, %v809
    %v811 = vpop.f32.mrb[0].mxu0
    %812 = vmatprep.mubr.f32.mxu0 0.0
    %813 = vmatmul.mubr.f32.gmra.mrb[0].mxu0 %v615
    %v814 = vpop.f32.mrb[0].mxu0
    %v815 = vadd.f32 %v494, %v814
    %v816 = vpop.f32.mrb[0].mxu0
    %817 = vmatprep.mubr.f32.mxu0 0.0
    %818 = vmatmul.mubr.f32.gmra.mrb[0].mxu0 %v618
    %v819 = vpop.f32.mrb[0].mxu0
    %v820 = vadd.f32 %v499, %v819
    %v821 = vpop.f32.mrb[0].mxu0
    %822 = vmatprep.mubr.f32.mxu0 0.0
    %823 = vmatmul.mubr.f32.gmra.mrb[0].mxu0 %v621
    %v824 = vpop.f32.mrb[0].mxu0
    %v825 = vadd.f32 %v504, %v824
    %v826 = vpop.f32.mrb[0].mxu0
    %827 = vmatprep.mubr.f32.mxu0 0.0
    %828 = vmatmul.mubr.f32.gmra.mrb[0].mxu0 %v624
    %v829 = vpop.f32.mrb[0].mxu0
    %v830 = vadd.f32 %v509, %v829
    %v831 = vpop.f32.mrb[0].mxu0
    %832 = vmatprep.mubr.f32.mxu0 0.0
    %833 = vmatmul.mubr.f32.gmra.mrb[0].mxu0 %v627
    %v834 = vpop.f32.mrb[0].mxu0
    %v835 = vadd.f32 %v514, %v834
    %v836 = vpop.f32.mrb[0].mxu0
    %837 = vmatprep.mubr.f32.mxu0 0.0
    %838 = vmatmul.mubr.f32.gmra.mrb[0].mxu0 %v630
    %v839 = vpop.f32.mrb[0].mxu0
    %v840 = vadd.f32 %v519, %v839
    %v841 = vpop.f32.mrb[0].mxu0
    %842 = vmatprep.mubr.f32.mxu0 0.0
    %843 = vmatmul.mubr.f32.gmra.mrb[0].mxu0 %v633
    %v844 = vpop.f32.mrb[0].mxu0
    %v845 = vadd.f32 %v524, %v844
    %v846 = vpop.f32.mrb[0].mxu0
    %847 = vmatprep.mubr.f32.mxu0 0.0
    %848 = vmatmul.mubr.f32.gmra.mrb[0].mxu0 %v636
    %v849 = vpop.f32.mrb[0].mxu0
    %v850 = vadd.f32 %v529, %v849
    %v851 = vpop.f32.mrb[0].mxu0
    %852 = vmatprep.mubr.f32.mxu0 0.0
    %853 = vmatmul.mubr.f32.gmra.mrb[0].mxu0 %v639
    %v854 = vpop.f32.mrb[0].mxu0
    %v855 = vadd.f32 %v534, %v854
    %v856 = vpop.f32.mrb[0].mxu0
    %857 = vmatprep.mubr.f32.mxu0 0.0
    %858 = vmatmul.mubr.f32.gmra.mrb[0].mxu0 %v642
    %v859 = vpop.f32.mrb[0].mxu0
    %v860 = vadd.f32 %v539, %v859
    %v861 = vpop.f32.mrb[0].mxu0
    %862 = vmatprep.mubr.f32.mxu0 0.0
    %863 = vmatmul.mubr.f32.gmra.mrb[0].mxu0 %v645
    %v864 = vpop.f32.mrb[0].mxu0
    %v865 = vadd.f32 %v544, %v864
    %v866 = vpop.f32.mrb[0].mxu0
    %867 = vmatprep.mubr.f32.mxu0 0.0
    %868 = vmatmul.mubr.f32.gmra.mrb[0].mxu0 %v648
    %v869 = vpop.f32.mrb[0].mxu0
    %v870 = vadd.f32 %v549, %v869
    %v871 = vpop.f32.mrb[0].mxu0
    %872 = vmatprep.mubr.f32.mxu0 0.0
    %873 = vmatmul.mubr.f32.gmra.mrb[0].mxu0 %v651
    %v874 = vpop.f32.mrb[0].mxu0
    %v875 = vadd.f32 %v554, %v874
    %v876 = vpop.f32.mrb[0].mxu0
    %877 = vdwg.mxu0
    %v882 = vcombine.high %v146, %v146
    %v884 = vunpack.c.l.s4 1966171168
    %v885 = vunpack.c.0.s8 %v884
    %v886 = vlaneseq
    %v887 = vshrl.u32 %v886, 7
    %v888 = vsub.s32 %v885, %v887
    %v889 = vrot.slane %v146, %v888
    %v891 = vunpack.c.l.s4 1966171168
    %v892 = vunpack.c.0.s8 %v891
    %v893 = vlaneseq
    %v894 = vshrl.u32 %v893, 7
    %v895 = vsub.s32 %v892, %v894
    %v896 = vrot.slane %v882, %v895
    %v897 = vcombine.high %v889, %v889
    %v898 = vcombine.high %v896, %v896
    %v900 = vunpack.c.l.s4 1966171168
    %v901 = vunpack.c.0.s8 %v900
    %v902 = vlaneseq
    %v903 = vshrl.u32 %v902, 7
    %v904 = vsub.s32 %v901, %v903
    %v905 = vrot.slane %v889, %v904
    %v907 = vunpack.c.l.s4 1966171168
    %v908 = vunpack.c.0.s8 %v907
    %v909 = vlaneseq
    %v910 = vshrl.u32 %v909, 7
    %v911 = vsub.s32 %v908, %v910
    %v912 = vrot.slane %v896, %v911
    %v914 = vunpack.c.l.s4 1966171168
    %v915 = vunpack.c.0.s8 %v914
    %v916 = vlaneseq
    %v917 = vshrl.u32 %v916, 7
    %v918 = vsub.s32 %v915, %v917
    %v919 = vrot.slane %v897, %v918
    %v921 = vunpack.c.l.s4 1966171168
    %v922 = vunpack.c.0.s8 %v921
    %v923 = vlaneseq
    %v924 = vshrl.u32 %v923, 7
    %v925 = vsub.s32 %v922, %v924
    %v926 = vrot.slane %v898, %v925
    %v927 = vcombine.high %v905, %v905
    %v928 = vcombine.high %v912, %v912
    %v929 = vcombine.high %v919, %v919
    %v930 = vcombine.high %v926, %v926
    %v931 = vcombine.high %v151, %v151
    %v933 = vunpack.c.l.s4 1966171168
    %v934 = vunpack.c.0.s8 %v933
    %v935 = vlaneseq
    %v936 = vshrl.u32 %v935, 7
    %v937 = vsub.s32 %v934, %v936
    %v938 = vrot.slane %v151, %v937
    %v940 = vunpack.c.l.s4 1966171168
    %v941 = vunpack.c.0.s8 %v940
    %v942 = vlaneseq
    %v943 = vshrl.u32 %v942, 7
    %v944 = vsub.s32 %v941, %v943
    %v945 = vrot.slane %v931, %v944
    %v946 = vcombine.high %v938, %v938
    %v947 = vcombine.high %v945, %v945
    %v949 = vunpack.c.l.s4 1966171168
    %v950 = vunpack.c.0.s8 %v949
    %v951 = vlaneseq
    %v952 = vshrl.u32 %v951, 7
    %v953 = vsub.s32 %v950, %v952
    %v954 = vrot.slane %v938, %v953
    %v956 = vunpack.c.l.s4 1966171168
    %v957 = vunpack.c.0.s8 %v956
    %v958 = vlaneseq
    %v959 = vshrl.u32 %v958, 7
    %v960 = vsub.s32 %v957, %v959
    %v961 = vrot.slane %v945, %v960
    %v963 = vunpack.c.l.s4 1966171168
    %v964 = vunpack.c.0.s8 %v963
    %v965 = vlaneseq
    %v966 = vshrl.u32 %v965, 7
    %v967 = vsub.s32 %v964, %v966
    %v968 = vrot.slane %v946, %v967
    %v970 = vunpack.c.l.s4 1966171168
    %v971 = vunpack.c.0.s8 %v970
    %v972 = vlaneseq
    %v973 = vshrl.u32 %v972, 7
    %v974 = vsub.s32 %v971, %v973
    %v975 = vrot.slane %v947, %v974
    %v976 = vcombine.high %v954, %v954
    %v977 = vcombine.high %v961, %v961
    %v978 = vcombine.high %v968, %v968
    %v979 = vcombine.high %v975, %v975
    %v980 = vcombine.high %v156, %v156
    %v982 = vunpack.c.l.s4 1966171168
    %v983 = vunpack.c.0.s8 %v982
    %v984 = vlaneseq
    %v985 = vshrl.u32 %v984, 7
    %v986 = vsub.s32 %v983, %v985
    %v987 = vrot.slane %v156, %v986
    %v989 = vunpack.c.l.s4 1966171168
    %v990 = vunpack.c.0.s8 %v989
    %v991 = vlaneseq
    %v992 = vshrl.u32 %v991, 7
    %v993 = vsub.s32 %v990, %v992
    %v994 = vrot.slane %v980, %v993
    %v995 = vcombine.high %v987, %v987
    %v996 = vcombine.high %v994, %v994
    %v998 = vunpack.c.l.s4 1966171168
    %v999 = vunpack.c.0.s8 %v998
    %v1000 = vlaneseq
    %v1001 = vshrl.u32 %v1000, 7
    %v1002 = vsub.s32 %v999, %v1001
    %v1003 = vrot.slane %v987, %v1002
    %v1005 = vunpack.c.l.s4 1966171168
    %v1006 = vunpack.c.0.s8 %v1005
    %v1007 = vlaneseq
    %v1008 = vshrl.u32 %v1007, 7
    %v1009 = vsub.s32 %v1006, %v1008
    %v1010 = vrot.slane %v994, %v1009
    %v1012 = vunpack.c.l.s4 1966171168
    %v1013 = vunpack.c.0.s8 %v1012
    %v1014 = vlaneseq
    %v1015 = vshrl.u32 %v1014, 7
    %v1016 = vsub.s32 %v1013, %v1015
    %v1017 = vrot.slane %v995, %v1016
    %v1019 = vunpack.c.l.s4 1966171168
    %v1020 = vunpack.c.0.s8 %v1019
    %v1021 = vlaneseq
    %v1022 = vshrl.u32 %v1021, 7
    %v1023 = vsub.s32 %v1020, %v1022
    %v1024 = vrot.slane %v996, %v1023
    %v1025 = vcombine.high %v1003, %v1003
    %v1026 = vcombine.high %v1010, %v1010
    %v1027 = vcombine.high %v1017, %v1017
    %v1028 = vcombine.high %v1024, %v1024
    %v1029 = vcombine.high %v161, %v161
    %v1031 = vunpack.c.l.s4 1966171168
    %v1032 = vunpack.c.0.s8 %v1031
    %v1033 = vlaneseq
    %v1034 = vshrl.u32 %v1033, 7
    %v1035 = vsub.s32 %v1032, %v1034
    %v1036 = vrot.slane %v161, %v1035
    %v1038 = vunpack.c.l.s4 1966171168
    %v1039 = vunpack.c.0.s8 %v1038
    %v1040 = vlaneseq
    %v1041 = vshrl.u32 %v1040, 7
    %v1042 = vsub.s32 %v1039, %v1041
    %v1043 = vrot.slane %v1029, %v1042
    %v1044 = vcombine.high %v1036, %v1036
    %v1045 = vcombine.high %v1043, %v1043
    %v1047 = vunpack.c.l.s4 1966171168
    %v1048 = vunpack.c.0.s8 %v1047
    %v1049 = vlaneseq
    %v1050 = vshrl.u32 %v1049, 7
    %v1051 = vsub.s32 %v1048, %v1050
    %v1052 = vrot.slane %v1036, %v1051
    %v1054 = vunpack.c.l.s4 1966171168
    %v1055 = vunpack.c.0.s8 %v1054
    %v1056 = vlaneseq
    %v1057 = vshrl.u32 %v1056, 7
    %v1058 = vsub.s32 %v1055, %v1057
    %v1059 = vrot.slane %v1043, %v1058
    %v1061 = vunpack.c.l.s4 1966171168
    %v1062 = vunpack.c.0.s8 %v1061
    %v1063 = vlaneseq
    %v1064 = vshrl.u32 %v1063, 7
    %v1065 = vsub.s32 %v1062, %v1064
    %v1066 = vrot.slane %v1044, %v1065
    %v1068 = vunpack.c.l.s4 1966171168
    %v1069 = vunpack.c.0.s8 %v1068
    %v1070 = vlaneseq
    %v1071 = vshrl.u32 %v1070, 7
    %v1072 = vsub.s32 %v1069, %v1071
    %v1073 = vrot.slane %v1045, %v1072
    %v1074 = vcombine.high %v1052, %v1052
    %v1075 = vcombine.high %v1059, %v1059
    %v1076 = vcombine.high %v1066, %v1066
    %v1077 = vcombine.high %v1073, %v1073
    %v1078 = vlaneseq
    %v1079 = vshrl.u32 %v1078, 7
    %v1080 = vsub.s32 0, %v1079
    %v1081 = vrot.slane %v905, %v1080
    %v1082 = vlaneseq
    %v1083 = vshrl.u32 %v1082, 7
    %v1084 = vsub.s32 0, %v1083
    %v1085 = vrot.slane %v919, %v1084
    %v1086 = vlaneseq
    %v1087 = vshrl.u32 %v1086, 7
    %v1088 = vsub.s32 0, %v1087
    %v1089 = vrot.slane %v927, %v1088
    %v1090 = vlaneseq
    %v1091 = vshrl.u32 %v1090, 7
    %v1092 = vsub.s32 0, %v1091
    %v1093 = vrot.slane %v929, %v1092
    %v1094 = vlaneseq
    %v1095 = vshrl.u32 %v1094, 7
    %v1096 = vsub.s32 0, %v1095
    %v1097 = vrot.slane %v912, %v1096
    %v1098 = vlaneseq
    %v1099 = vshrl.u32 %v1098, 7
    %v1100 = vsub.s32 0, %v1099
    %v1101 = vrot.slane %v926, %v1100
    %v1102 = vlaneseq
    %v1103 = vshrl.u32 %v1102, 7
    %v1104 = vsub.s32 0, %v1103
    %v1105 = vrot.slane %v928, %v1104
    %v1106 = vlaneseq
    %v1107 = vshrl.u32 %v1106, 7
    %v1108 = vsub.s32 0, %v1107
    %v1109 = vrot.slane %v930, %v1108
    %v1110 = vlaneseq
    %v1111 = vshrl.u32 %v1110, 7
    %v1112 = vsub.s32 0, %v1111
    %v1113 = vrot.slane %v954, %v1112
    %v1114 = vlaneseq
    %v1115 = vshrl.u32 %v1114, 7
    %v1116 = vsub.s32 0, %v1115
    %v1117 = vrot.slane %v968, %v1116
    %v1118 = vlaneseq
    %v1119 = vshrl.u32 %v1118, 7
    %v1120 = vsub.s32 0, %v1119
    %v1121 = vrot.slane %v976, %v1120
    %v1122 = vlaneseq
    %v1123 = vshrl.u32 %v1122, 7
    %v1124 = vsub.s32 0, %v1123
    %v1125 = vrot.slane %v978, %v1124
    %v1126 = vlaneseq
    %v1127 = vshrl.u32 %v1126, 7
    %v1128 = vsub.s32 0, %v1127
    %v1129 = vrot.slane %v961, %v1128
    %v1130 = vlaneseq
    %v1131 = vshrl.u32 %v1130, 7
    %v1132 = vsub.s32 0, %v1131
    %v1133 = vrot.slane %v975, %v1132
    %v1134 = vlaneseq
    %v1135 = vshrl.u32 %v1134, 7
    %v1136 = vsub.s32 0, %v1135
    %v1137 = vrot.slane %v977, %v1136
    %v1138 = vlaneseq
    %v1139 = vshrl.u32 %v1138, 7
    %v1140 = vsub.s32 0, %v1139
    %v1141 = vrot.slane %v979, %v1140
    %v1142 = vlaneseq
    %v1143 = vshrl.u32 %v1142, 7
    %v1144 = vsub.s32 0, %v1143
    %v1145 = vrot.slane %v1003, %v1144
    %v1146 = vlaneseq
    %v1147 = vshrl.u32 %v1146, 7
    %v1148 = vsub.s32 0, %v1147
    %v1149 = vrot.slane %v1017, %v1148
    %v1150 = vlaneseq
    %v1151 = vshrl.u32 %v1150, 7
    %v1152 = vsub.s32 0, %v1151
    %v1153 = vrot.slane %v1025, %v1152
    %v1154 = vlaneseq
    %v1155 = vshrl.u32 %v1154, 7
    %v1156 = vsub.s32 0, %v1155
    %v1157 = vrot.slane %v1027, %v1156
    %v1158 = vlaneseq
    %v1159 = vshrl.u32 %v1158, 7
    %v1160 = vsub.s32 0, %v1159
    %v1161 = vrot.slane %v1010, %v1160
    %v1162 = vlaneseq
    %v1163 = vshrl.u32 %v1162, 7
    %v1164 = vsub.s32 0, %v1163
    %v1165 = vrot.slane %v1024, %v1164
    %v1166 = vlaneseq
    %v1167 = vshrl.u32 %v1166, 7
    %v1168 = vsub.s32 0, %v1167
    %v1169 = vrot.slane %v1026, %v1168
    %v1170 = vlaneseq
    %v1171 = vshrl.u32 %v1170, 7
    %v1172 = vsub.s32 0, %v1171
    %v1173 = vrot.slane %v1028, %v1172
    %v1174 = vlaneseq
    %v1175 = vshrl.u32 %v1174, 7
    %v1176 = vsub.s32 0, %v1175
    %v1177 = vrot.slane %v1052, %v1176
    %v1178 = vlaneseq
    %v1179 = vshrl.u32 %v1178, 7
    %v1180 = vsub.s32 0, %v1179
    %v1181 = vrot.slane %v1066, %v1180
    %v1182 = vlaneseq
    %v1183 = vshrl.u32 %v1182, 7
    %v1184 = vsub.s32 0, %v1183
    %v1185 = vrot.slane %v1074, %v1184
    %v1186 = vlaneseq
    %v1187 = vshrl.u32 %v1186, 7
    %v1188 = vsub.s32 0, %v1187
    %v1189 = vrot.slane %v1076, %v1188
    %v1190 = vlaneseq
    %v1191 = vshrl.u32 %v1190, 7
    %v1192 = vsub.s32 0, %v1191
    %v1193 = vrot.slane %v1059, %v1192
    %v1194 = vlaneseq
    %v1195 = vshrl.u32 %v1194, 7
    %v1196 = vsub.s32 0, %v1195
    %v1197 = vrot.slane %v1073, %v1196
    %v1198 = vlaneseq
    %v1199 = vshrl.u32 %v1198, 7
    %v1200 = vsub.s32 0, %v1199
    %v1201 = vrot.slane %v1075, %v1200
    %v1202 = vlaneseq
    %v1203 = vshrl.u32 %v1202, 7
    %v1204 = vsub.s32 0, %v1203
    %v1205 = vrot.slane %v1077, %v1204
    %v1238 = vadd.f32 %v720, %v1081
    %v1239 = vadd.f32 %v725, %v1085
    %v1240 = vadd.f32 %v730, %v1089
    %v1241 = vadd.f32 %v735, %v1093
    %v1242 = vadd.f32 %v740, %v1097
    %v1243 = vadd.f32 %v745, %v1101
    %v1244 = vadd.f32 %v750, %v1105
    %v1245 = vadd.f32 %v755, %v1109
    %v1246 = vadd.f32 %v760, %v1113
    %v1247 = vadd.f32 %v765, %v1117
    %v1248 = vadd.f32 %v770, %v1121
    %v1249 = vadd.f32 %v775, %v1125
    %v1250 = vadd.f32 %v780, %v1129
    %v1251 = vadd.f32 %v785, %v1133
    %v1252 = vadd.f32 %v790, %v1137
    %v1253 = vadd.f32 %v795, %v1141
    %v1254 = vadd.f32 %v800, %v1145
    %v1255 = vadd.f32 %v805, %v1149
    %v1256 = vadd.f32 %v810, %v1153
    %v1257 = vadd.f32 %v815, %v1157
    %v1258 = vadd.f32 %v820, %v1161
    %v1259 = vadd.f32 %v825, %v1165
    %v1260 = vadd.f32 %v830, %v1169
    %v1261 = vadd.f32 %v835, %v1173
    %v1262 = vadd.f32 %v840, %v1177
    %v1263 = vadd.f32 %v845, %v1181
    %v1264 = vadd.f32 %v850, %v1185
    %v1265 = vadd.f32 %v855, %v1189
    %v1266 = vadd.f32 %v860, %v1193
    %v1267 = vadd.f32 %v865, %v1197
    %v1268 = vadd.f32 %v870, %v1201
    %v1269 = vadd.f32 %v875, %v1205
    %v1270 = vmax.f32 %v1238, 0.0
    %v1271 = vmax.f32 %v1239, 0.0
    %v1272 = vmax.f32 %v1240, 0.0
    %v1273 = vmax.f32 %v1241, 0.0
    %v1274 = vmax.f32 %v1242, 0.0
    %v1275 = vmax.f32 %v1243, 0.0
    %v1276 = vmax.f32 %v1244, 0.0
    %v1277 = vmax.f32 %v1245, 0.0
    %v1278 = vmax.f32 %v1246, 0.0
    %v1279 = vmax.f32 %v1247, 0.0
    %v1280 = vmax.f32 %v1248, 0.0
    %v1281 = vmax.f32 %v1249, 0.0
    %v1282 = vmax.f32 %v1250, 0.0
    %v1283 = vmax.f32 %v1251, 0.0
    %v1284 = vmax.f32 %v1252, 0.0
    %v1285 = vmax.f32 %v1253, 0.0
    %v1286 = vmax.f32 %v1254, 0.0
    %v1287 = vmax.f32 %v1255, 0.0
    %v1288 = vmax.f32 %v1256, 0.0
    %v1289 = vmax.f32 %v1257, 0.0
    %v1290 = vmax.f32 %v1258, 0.0
    %v1291 = vmax.f32 %v1259, 0.0
    %v1292 = vmax.f32 %v1260, 0.0
    %v1293 = vmax.f32 %v1261, 0.0
    %v1294 = vmax.f32 %v1262, 0.0
    %v1295 = vmax.f32 %v1263, 0.0
    %v1296 = vmax.f32 %v1264, 0.0
    %v1297 = vmax.f32 %v1265, 0.0
    %v1298 = vmax.f32 %v1266, 0.0
    %v1299 = vmax.f32 %v1267, 0.0
    %v1300 = vmax.f32 %v1268, 0.0
    %v1301 = vmax.f32 %v1269, 0.0
    %v1302 = vld [vmem:[%s9] sm:$0xff]
    %v1303 = vld [vmem:[%s9 + $0x8] sm:$0xff]
    %v1304 = vld [vmem:[%s9 + $0x10] sm:$0xff]
    %v1305 = vld [vmem:[%s9 + $0x18] sm:$0xff]
    %v1306 = vld [vmem:[%s10] sm:$0x1]
    %v1308 = vlaneseq
    %v1309 = vshrl.u32 %v1308, 7
    %v1310 = vsub.s32 0, %v1309
    %v1311 = vrot.slane %v1306, %v1310
    %v1314 = vsel %vm66, %v1270, 0
    %v1317 = vsel %vm66, %v1271, 0
    %v1320 = vsel %vm66, %v1272, 0
    %v1323 = vsel %vm66, %v1273, 0
    %v1326 = vsel %vm66, %v1274, 0
    %v1329 = vsel %vm66, %v1275, 0
    %v1332 = vsel %vm66, %v1276, 0
    %v1335 = vsel %vm66, %v1277, 0
    %v1338 = vsel %vm66, %v1278, 0
    %v1341 = vsel %vm66, %v1279, 0
    %v1344 = vsel %vm66, %v1280, 0
    %v1347 = vsel %vm66, %v1281, 0
    %v1350 = vsel %vm66, %v1282, 0
    %v1353 = vsel %vm66, %v1283, 0
    %v1356 = vsel %vm66, %v1284, 0
    %v1359 = vsel %vm66, %v1285, 0
    %v1362 = vsel %vm66, %v1286, 0
    %v1365 = vsel %vm66, %v1287, 0
    %v1368 = vsel %vm66, %v1288, 0
    %v1371 = vsel %vm66, %v1289, 0
    %v1374 = vsel %vm66, %v1290, 0
    %v1377 = vsel %vm66, %v1291, 0
    %v1380 = vsel %vm66, %v1292, 0
    %v1383 = vsel %vm66, %v1293, 0
    %v1386 = vsel %vm66, %v1294, 0
    %v1389 = vsel %vm66, %v1295, 0
    %v1392 = vsel %vm66, %v1296, 0
    %v1395 = vsel %vm66, %v1297, 0
    %v1398 = vsel %vm66, %v1298, 0
    %v1401 = vsel %vm66, %v1299, 0
    %v1404 = vsel %vm66, %v1300, 0
    %v1407 = vsel %vm66, %v1301, 0
    %1409 = vmatprep.subr.mxu0 0.0
    %1410 = vmatpush1.msra.mxu0 %v1302
    %1411 = vmatprep.subr.mxu0 0.0
    %1412 = vmatpush1.msra.mxu0 %v1303
    %1413 = vmatprep.subr.mxu0 0.0
    %1414 = vmatpush1.msra.mxu0 %v1304
    %1415 = vmatprep.subr.mxu0 0.0
    %1416 = vmatpush1.msra.mxu0 %v1305
    %1417 = vmatprep.subr.mxu0 0.0
    %1418 = vmatpush1.msra.mxu0 0.0
    %1419 = vmatprep.subr.mxu0 0.0
    %1420 = vmatpush1.msra.mxu0 0.0
    %1421 = vmatprep.subr.mxu0 0.0
    %1422 = vmatpush1.msra.mxu0 0.0
    %1423 = vmatprep.subr.mxu0 0.0
    %1424 = vmatpush1.msra.mxu0 0.0
    %1425 = vmatprep.subr.mxu0 0.0
    %1426 = vmatpush1.msra.mxu0 0.0
    %1427 = vmatprep.subr.mxu0 0.0
    %1428 = vmatpush1.msra.mxu0 0.0
    %1429 = vmatprep.subr.mxu0 0.0
    %1430 = vmatpush1.msra.mxu0 0.0
    %1431 = vmatprep.subr.mxu0 0.0
    %1432 = vmatpush1.msra.mxu0 0.0
    %1433 = vmatprep.subr.mxu0 0.0
    %1434 = vmatpush1.msra.mxu0 0.0
    %1435 = vmatprep.subr.mxu0 0.0
    %1436 = vmatpush1.msra.mxu0 0.0
    %1437 = vmatprep.subr.mxu0 0.0
    %1438 = vmatpush1.msra.mxu0 0.0
    %1439 = vmatprep.subr.mxu0 0.0
    %1440 = vmatpush1.msra.mxu0 0.0
    %1441 = vmatprep.subr.mxu0 0.0
    %1442 = vmatpush1.msra.mxu0 0.0
    %1443 = vmatprep.subr.mxu0 0.0
    %1444 = vmatpush1.msra.mxu0 0.0
    %1445 = vmatprep.subr.mxu0 0.0
    %1446 = vmatpush1.msra.mxu0 0.0
    %1447 = vmatprep.subr.mxu0 0.0
    %1448 = vmatpush1.msra.mxu0 0.0
    %1449 = vmatprep.subr.mxu0 0.0
    %1450 = vmatpush1.msra.mxu0 0.0
    %1451 = vmatprep.subr.mxu0 0.0
    %1452 = vmatpush1.msra.mxu0 0.0
    %1453 = vmatprep.subr.mxu0 0.0
    %1454 = vmatpush1.msra.mxu0 0.0
    %1455 = vmatprep.subr.mxu0 0.0
    %1456 = vmatpush1.msra.mxu0 0.0
    %1457 = vmatprep.subr.mxu0 0.0
    %1458 = vmatpush1.msra.mxu0 0.0
    %1459 = vmatprep.subr.mxu0 0.0
    %1460 = vmatpush1.msra.mxu0 0.0
    %1461 = vmatprep.subr.mxu0 0.0
    %1462 = vmatpush1.msra.mxu0 0.0
    %1463 = vmatprep.subr.mxu0 0.0
    %1464 = vmatpush1.msra.mxu0 0.0
    %1465 = vmatprep.subr.mxu0 0.0
    %1466 = vmatpush1.msra.mxu0 0.0
    %1467 = vmatprep.subr.mxu0 0.0
    %1468 = vmatpush1.msra.mxu0 0.0
    %1469 = vmatprep.subr.mxu0 0.0
    %1470 = vmatpush1.msra.mxu0 0.0
    %1471 = vmatprep.subr.mxu0 0.0
    %1472 = vmatpush1.msra.mxu0 0.0
    %1473 = vmatprep.mubr.f32.mxu0 0.0
    %1474 = vmatmul.mubr.f32.gmra.mrb[0].mxu0 %v1314
    %v1475 = vpop.f32.mrb[0].mxu0
    %v1476 = vadd.f32 %v1311, %v1475
    %v1477 = vpop.f32.mrb[0].mxu0
    %1478 = vmatprep.mubr.f32.mxu0 0.0
    %1479 = vmatmul.mubr.f32.gmra.mrb[0].mxu0 %v1317
    %v1480 = vpop.f32.mrb[0].mxu0
    %v1481 = vadd.f32 %v1311, %v1480
    %v1482 = vpop.f32.mrb[0].mxu0
    %1483 = vmatprep.mubr.f32.mxu0 0.0
    %1484 = vmatmul.mubr.f32.gmra.mrb[0].mxu0 %v1320
    %v1485 = vpop.f32.mrb[0].mxu0
    %v1486 = vadd.f32 %v1311, %v1485
    %v1487 = vpop.f32.mrb[0].mxu0
    %1488 = vmatprep.mubr.f32.mxu0 0.0
    %1489 = vmatmul.mubr.f32.gmra.mrb[0].mxu0 %v1323
    %v1490 = vpop.f32.mrb[0].mxu0
    %v1491 = vadd.f32 %v1311, %v1490
    %v1492 = vpop.f32.mrb[0].mxu0
    %1493 = vmatprep.mubr.f32.mxu0 0.0
    %1494 = vmatmul.mubr.f32.gmra.mrb[0].mxu0 %v1326
    %v1495 = vpop.f32.mrb[0].mxu0
    %v1496 = vadd.f32 %v1311, %v1495
    %v1497 = vpop.f32.mrb[0].mxu0
    %1498 = vmatprep.mubr.f32.mxu0 0.0
    %1499 = vmatmul.mubr.f32.gmra.mrb[0].mxu0 %v1329
    %v1500 = vpop.f32.mrb[0].mxu0
    %v1501 = vadd.f32 %v1311, %v1500
    %v1502 = vpop.f32.mrb[0].mxu0
    %1503 = vmatprep.mubr.f32.mxu0 0.0
    %1504 = vmatmul.mubr.f32.gmra.mrb[0].mxu0 %v1332
    %v1505 = vpop.f32.mrb[0].mxu0
    %v1506 = vadd.f32 %v1311, %v1505
    %v1507 = vpop.f32.mrb[0].mxu0
    %1508 = vmatprep.mubr.f32.mxu0 0.0
    %1509 = vmatmul.mubr.f32.gmra.mrb[0].mxu0 %v1335
    %v1510 = vpop.f32.mrb[0].mxu0
    %v1511 = vadd.f32 %v1311, %v1510
    %v1512 = vpop.f32.mrb[0].mxu0
    %1513 = vmatprep.mubr.f32.mxu0 0.0
    %1514 = vmatmul.mubr.f32.gmra.mrb[0].mxu0 %v1338
    %v1515 = vpop.f32.mrb[0].mxu0
    %v1516 = vadd.f32 %v1311, %v1515
    %v1517 = vpop.f32.mrb[0].mxu0
    %1518 = vmatprep.mubr.f32.mxu0 0.0
    %1519 = vmatmul.mubr.f32.gmra.mrb[0].mxu0 %v1341
    %v1520 = vpop.f32.mrb[0].mxu0
    %v1521 = vadd.f32 %v1311, %v1520
    %v1522 = vpop.f32.mrb[0].mxu0
    %1523 = vmatprep.mubr.f32.mxu0 0.0
    %1524 = vmatmul.mubr.f32.gmra.mrb[0].mxu0 %v1344
    %v1525 = vpop.f32.mrb[0].mxu0
    %v1526 = vadd.f32 %v1311, %v1525
    %v1527 = vpop.f32.mrb[0].mxu0
    %1528 = vmatprep.mubr.f32.mxu0 0.0
    %1529 = vmatmul.mubr.f32.gmra.mrb[0].mxu0 %v1347
    %v1530 = vpop.f32.mrb[0].mxu0
    %v1531 = vadd.f32 %v1311, %v1530
    %v1532 = vpop.f32.mrb[0].mxu0
    %1533 = vmatprep.mubr.f32.mxu0 0.0
    %1534 = vmatmul.mubr.f32.gmra.mrb[0].mxu0 %v1350
    %v1535 = vpop.f32.mrb[0].mxu0
    %v1536 = vadd.f32 %v1311, %v1535
    %v1537 = vpop.f32.mrb[0].mxu0
    %1538 = vmatprep.mubr.f32.mxu0 0.0
    %1539 = vmatmul.mubr.f32.gmra.mrb[0].mxu0 %v1353
    %v1540 = vpop.f32.mrb[0].mxu0
    %v1541 = vadd.f32 %v1311, %v1540
    %v1542 = vpop.f32.mrb[0].mxu0
    %1543 = vmatprep.mubr.f32.mxu0 0.0
    %1544 = vmatmul.mubr.f32.gmra.mrb[0].mxu0 %v1356
    %v1545 = vpop.f32.mrb[0].mxu0
    %v1546 = vadd.f32 %v1311, %v1545
    %v1547 = vpop.f32.mrb[0].mxu0
    %1548 = vmatprep.mubr.f32.mxu0 0.0
    %1549 = vmatmul.mubr.f32.gmra.mrb[0].mxu0 %v1359
    %v1550 = vpop.f32.mrb[0].mxu0
    %v1551 = vadd.f32 %v1311, %v1550
    %v1552 = vpop.f32.mrb[0].mxu0
    %1553 = vmatprep.mubr.f32.mxu0 0.0
    %1554 = vmatmul.mubr.f32.gmra.mrb[0].mxu0 %v1362
    %v1555 = vpop.f32.mrb[0].mxu0
    %v1556 = vadd.f32 %v1311, %v1555
    %v1557 = vpop.f32.mrb[0].mxu0
    %1558 = vmatprep.mubr.f32.mxu0 0.0
    %1559 = vmatmul.mubr.f32.gmra.mrb[0].mxu0 %v1365
    %v1560 = vpop.f32.mrb[0].mxu0
    %v1561 = vadd.f32 %v1311, %v1560
    %v1562 = vpop.f32.mrb[0].mxu0
    %1563 = vmatprep.mubr.f32.mxu0 0.0
    %1564 = vmatmul.mubr.f32.gmra.mrb[0].mxu0 %v1368
    %v1565 = vpop.f32.mrb[0].mxu0
    %v1566 = vadd.f32 %v1311, %v1565
    %v1567 = vpop.f32.mrb[0].mxu0
    %1568 = vmatprep.mubr.f32.mxu0 0.0
    %1569 = vmatmul.mubr.f32.gmra.mrb[0].mxu0 %v1371
    %v1570 = vpop.f32.mrb[0].mxu0
    %v1571 = vadd.f32 %v1311, %v1570
    %v1572 = vpop.f32.mrb[0].mxu0
    %1573 = vmatprep.mubr.f32.mxu0 0.0
    %1574 = vmatmul.mubr.f32.gmra.mrb[0].mxu0 %v1374
    %v1575 = vpop.f32.mrb[0].mxu0
    %v1576 = vadd.f32 %v1311, %v1575
    %v1577 = vpop.f32.mrb[0].mxu0
    %1578 = vmatprep.mubr.f32.mxu0 0.0
    %1579 = vmatmul.mubr.f32.gmra.mrb[0].mxu0 %v1377
    %v1580 = vpop.f32.mrb[0].mxu0
    %v1581 = vadd.f32 %v1311, %v1580
    %v1582 = vpop.f32.mrb[0].mxu0
    %1583 = vmatprep.mubr.f32.mxu0 0.0
    %1584 = vmatmul.mubr.f32.gmra.mrb[0].mxu0 %v1380
    %v1585 = vpop.f32.mrb[0].mxu0
    %v1586 = vadd.f32 %v1311, %v1585
    %v1587 = vpop.f32.mrb[0].mxu0
    %1588 = vmatprep.mubr.f32.mxu0 0.0
    %1589 = vmatmul.mubr.f32.gmra.mrb[0].mxu0 %v1383
    %v1590 = vpop.f32.mrb[0].mxu0
    %v1591 = vadd.f32 %v1311, %v1590
    %v1592 = vpop.f32.mrb[0].mxu0
    %1593 = vmatprep.mubr.f32.mxu0 0.0
    %1594 = vmatmul.mubr.f32.gmra.mrb[0].mxu0 %v1386
    %v1595 = vpop.f32.mrb[0].mxu0
    %v1596 = vadd.f32 %v1311, %v1595
    %v1597 = vpop.f32.mrb[0].mxu0
    %1598 = vmatprep.mubr.f32.mxu0 0.0
    %1599 = vmatmul.mubr.f32.gmra.mrb[0].mxu0 %v1389
    %v1600 = vpop.f32.mrb[0].mxu0
    %v1601 = vadd.f32 %v1311, %v1600
    %v1602 = vpop.f32.mrb[0].mxu0
    %1603 = vmatprep.mubr.f32.mxu0 0.0
    %1604 = vmatmul.mubr.f32.gmra.mrb[0].mxu0 %v1392
    %v1605 = vpop.f32.mrb[0].mxu0
    %v1606 = vadd.f32 %v1311, %v1605
    %v1607 = vpop.f32.mrb[0].mxu0
    %1608 = vmatprep.mubr.f32.mxu0 0.0
    %1609 = vmatmul.mubr.f32.gmra.mrb[0].mxu0 %v1395
    %v1610 = vpop.f32.mrb[0].mxu0
    %v1611 = vadd.f32 %v1311, %v1610
    %v1612 = vpop.f32.mrb[0].mxu0
    %1613 = vmatprep.mubr.f32.mxu0 0.0
    %1614 = vmatmul.mubr.f32.gmra.mrb[0].mxu0 %v1398
    %v1615 = vpop.f32.mrb[0].mxu0
    %v1616 = vadd.f32 %v1311, %v1615
    %v1617 = vpop.f32.mrb[0].mxu0
    %1618 = vmatprep.mubr.f32.mxu0 0.0
    %1619 = vmatmul.mubr.f32.gmra.mrb[0].mxu0 %v1401
    %v1620 = vpop.f32.mrb[0].mxu0
    %v1621 = vadd.f32 %v1311, %v1620
    %v1622 = vpop.f32.mrb[0].mxu0
    %1623 = vmatprep.mubr.f32.mxu0 0.0
    %1624 = vmatmul.mubr.f32.gmra.mrb[0].mxu0 %v1404
    %v1625 = vpop.f32.mrb[0].mxu0
    %v1626 = vadd.f32 %v1311, %v1625
    %v1627 = vpop.f32.mrb[0].mxu0
    %1628 = vmatprep.mubr.f32.mxu0 0.0
    %1629 = vmatmul.mubr.f32.gmra.mrb[0].mxu0 %v1407
    %v1630 = vpop.f32.mrb[0].mxu0
    %v1631 = vadd.f32 %v1311, %v1630
    %v1632 = vpop.f32.mrb[0].mxu0
    %1633 = vdwg.mxu0
    %v1634 = vmax.f32 %v1476, 0.0
    %v1635 = vmax.f32 %v1481, 0.0
    %v1636 = vmax.f32 %v1486, 0.0
    %v1637 = vmax.f32 %v1491, 0.0
    %v1638 = vmax.f32 %v1496, 0.0
    %v1639 = vmax.f32 %v1501, 0.0
    %v1640 = vmax.f32 %v1506, 0.0
    %v1641 = vmax.f32 %v1511, 0.0
    %v1642 = vmax.f32 %v1516, 0.0
    %v1643 = vmax.f32 %v1521, 0.0
    %v1644 = vmax.f32 %v1526, 0.0
    %v1645 = vmax.f32 %v1531, 0.0
    %v1646 = vmax.f32 %v1536, 0.0
    %v1647 = vmax.f32 %v1541, 0.0
    %v1648 = vmax.f32 %v1546, 0.0
    %v1649 = vmax.f32 %v1551, 0.0
    %v1650 = vmax.f32 %v1556, 0.0
    %v1651 = vmax.f32 %v1561, 0.0
    %v1652 = vmax.f32 %v1566, 0.0
    %v1653 = vmax.f32 %v1571, 0.0
    %v1654 = vmax.f32 %v1576, 0.0
    %v1655 = vmax.f32 %v1581, 0.0
    %v1656 = vmax.f32 %v1586, 0.0
    %v1657 = vmax.f32 %v1591, 0.0
    %v1658 = vmax.f32 %v1596, 0.0
    %v1659 = vmax.f32 %v1601, 0.0
    %v1660 = vmax.f32 %v1606, 0.0
    %v1661 = vmax.f32 %v1611, 0.0
    %v1662 = vmax.f32 %v1616, 0.0
    %v1663 = vmax.f32 %v1621, 0.0
    %v1664 = vmax.f32 %v1626, 0.0
    %v1665 = vmax.f32 %v1631, 0.0
    %v1666 = vld [vmem:[%s11] sm:$0xff]
    %v1667 = vld [vmem:[%s11 + $0x8] sm:$0xff]
    %v1668 = vld [vmem:[%s11 + $0x10] sm:$0xff]
    %v1669 = vld [vmem:[%s11 + $0x18] sm:$0xff]
    %v1670 = vld [vmem:[%s12] sm:$0x1]
    %v1672 = vlaneseq
    %v1673 = vshrl.u32 %v1672, 7
    %v1674 = vsub.s32 0, %v1673
    %v1675 = vrot.slane %v1670, %v1674
    %v1678 = vsel %vm66, %v1634, 0
    %v1681 = vsel %vm66, %v1635, 0
    %v1684 = vsel %vm66, %v1636, 0
    %v1687 = vsel %vm66, %v1637, 0
    %v1690 = vsel %vm66, %v1638, 0
    %v1693 = vsel %vm66, %v1639, 0
    %v1696 = vsel %vm66, %v1640, 0
    %v1699 = vsel %vm66, %v1641, 0
    %v1702 = vsel %vm66, %v1642, 0
    %v1705 = vsel %vm66, %v1643, 0
    %v1708 = vsel %vm66, %v1644, 0
    %v1711 = vsel %vm66, %v1645, 0
    %v1714 = vsel %vm66, %v1646, 0
    %v1717 = vsel %vm66, %v1647, 0
    %v1720 = vsel %vm66, %v1648, 0
    %v1723 = vsel %vm66, %v1649, 0
    %v1726 = vsel %vm66, %v1650, 0
    %v1729 = vsel %vm66, %v1651, 0
    %v1732 = vsel %vm66, %v1652, 0
    %v1735 = vsel %vm66, %v1653, 0
    %v1738 = vsel %vm66, %v1654, 0
    %v1741 = vsel %vm66, %v1655, 0
    %v1744 = vsel %vm66, %v1656, 0
    %v1747 = vsel %vm66, %v1657, 0
    %v1750 = vsel %vm66, %v1658, 0
    %v1753 = vsel %vm66, %v1659, 0
    %v1756 = vsel %vm66, %v1660, 0
    %v1759 = vsel %vm66, %v1661, 0
    %v1762 = vsel %vm66, %v1662, 0
    %v1765 = vsel %vm66, %v1663, 0
    %v1768 = vsel %vm66, %v1664, 0
    %v1771 = vsel %vm66, %v1665, 0
    %1773 = vmatprep.subr.mxu0 0.0
    %1774 = vmatpush1.msra.mxu0 %v1666
    %1775 = vmatprep.subr.mxu0 0.0
    %1776 = vmatpush1.msra.mxu0 %v1667
    %1777 = vmatprep.subr.mxu0 0.0
    %1778 = vmatpush1.msra.mxu0 %v1668
    %1779 = vmatprep.subr.mxu0 0.0
    %1780 = vmatpush1.msra.mxu0 %v1669
    %1781 = vmatprep.subr.mxu0 0.0
    %1782 = vmatpush1.msra.mxu0 0.0
    %1783 = vmatprep.subr.mxu0 0.0
    %1784 = vmatpush1.msra.mxu0 0.0
    %1785 = vmatprep.subr.mxu0 0.0
    %1786 = vmatpush1.msra.mxu0 0.0
    %1787 = vmatprep.subr.mxu0 0.0
    %1788 = vmatpush1.msra.mxu0 0.0
    %1789 = vmatprep.subr.mxu0 0.0
    %1790 = vmatpush1.msra.mxu0 0.0
    %1791 = vmatprep.subr.mxu0 0.0
    %1792 = vmatpush1.msra.mxu0 0.0
    %1793 = vmatprep.subr.mxu0 0.0
    %1794 = vmatpush1.msra.mxu0 0.0
    %1795 = vmatprep.subr.mxu0 0.0
    %1796 = vmatpush1.msra.mxu0 0.0
    %1797 = vmatprep.subr.mxu0 0.0
    %1798 = vmatpush1.msra.mxu0 0.0
    %1799 = vmatprep.subr.mxu0 0.0
    %1800 = vmatpush1.msra.mxu0 0.0
    %1801 = vmatprep.subr.mxu0 0.0
    %1802 = vmatpush1.msra.mxu0 0.0
    %1803 = vmatprep.subr.mxu0 0.0
    %1804 = vmatpush1.msra.mxu0 0.0
    %1805 = vmatprep.subr.mxu0 0.0
    %1806 = vmatpush1.msra.mxu0 0.0
    %1807 = vmatprep.subr.mxu0 0.0
    %1808 = vmatpush1.msra.mxu0 0.0
    %1809 = vmatprep.subr.mxu0 0.0
    %1810 = vmatpush1.msra.mxu0 0.0
    %1811 = vmatprep.subr.mxu0 0.0
    %1812 = vmatpush1.msra.mxu0 0.0
    %1813 = vmatprep.subr.mxu0 0.0
    %1814 = vmatpush1.msra.mxu0 0.0
    %1815 = vmatprep.subr.mxu0 0.0
    %1816 = vmatpush1.msra.mxu0 0.0
    %1817 = vmatprep.subr.mxu0 0.0
    %1818 = vmatpush1.msra.mxu0 0.0
    %1819 = vmatprep.subr.mxu0 0.0
    %1820 = vmatpush1.msra.mxu0 0.0
    %1821 = vmatprep.subr.mxu0 0.0
    %1822 = vmatpush1.msra.mxu0 0.0
    %1823 = vmatprep.subr.mxu0 0.0
    %1824 = vmatpush1.msra.mxu0 0.0
    %1825 = vmatprep.subr.mxu0 0.0
    %1826 = vmatpush1.msra.mxu0 0.0
    %1827 = vmatprep.subr.mxu0 0.0
    %1828 = vmatpush1.msra.mxu0 0.0
    %1829 = vmatprep.subr.mxu0 0.0
    %1830 = vmatpush1.msra.mxu0 0.0
    %1831 = vmatprep.subr.mxu0 0.0
    %1832 = vmatpush1.msra.mxu0 0.0
    %1833 = vmatprep.subr.mxu0 0.0
    %1834 = vmatpush1.msra.mxu0 0.0
    %1835 = vmatprep.subr.mxu0 0.0
    %1836 = vmatpush1.msra.mxu0 0.0
    %1837 = vmatprep.mubr.f32.mxu0 0.0
    %1838 = vmatmul.mubr.f32.gmra.mrb[0].mxu0 %v1678
    %v1839 = vpop.f32.mrb[0].mxu0
    %v1840 = vadd.f32 %v1675, %v1839
    %v1841 = vpop.f32.mrb[0].mxu0
    %1842 = vmatprep.mubr.f32.mxu0 0.0
    %1843 = vmatmul.mubr.f32.gmra.mrb[0].mxu0 %v1681
    %v1844 = vpop.f32.mrb[0].mxu0
    %v1845 = vadd.f32 %v1675, %v1844
    %v1846 = vpop.f32.mrb[0].mxu0
    %1847 = vmatprep.mubr.f32.mxu0 0.0
    %1848 = vmatmul.mubr.f32.gmra.mrb[0].mxu0 %v1684
    %v1849 = vpop.f32.mrb[0].mxu0
    %v1850 = vadd.f32 %v1675, %v1849
    %v1851 = vpop.f32.mrb[0].mxu0
    %1852 = vmatprep.mubr.f32.mxu0 0.0
    %1853 = vmatmul.mubr.f32.gmra.mrb[0].mxu0 %v1687
    %v1854 = vpop.f32.mrb[0].mxu0
    %v1855 = vadd.f32 %v1675, %v1854
    %v1856 = vpop.f32.mrb[0].mxu0
    %1857 = vmatprep.mubr.f32.mxu0 0.0
    %1858 = vmatmul.mubr.f32.gmra.mrb[0].mxu0 %v1690
    %v1859 = vpop.f32.mrb[0].mxu0
    %v1860 = vadd.f32 %v1675, %v1859
    %v1861 = vpop.f32.mrb[0].mxu0
    %1862 = vmatprep.mubr.f32.mxu0 0.0
    %1863 = vmatmul.mubr.f32.gmra.mrb[0].mxu0 %v1693
    %v1864 = vpop.f32.mrb[0].mxu0
    %v1865 = vadd.f32 %v1675, %v1864
    %v1866 = vpop.f32.mrb[0].mxu0
    %1867 = vmatprep.mubr.f32.mxu0 0.0
    %1868 = vmatmul.mubr.f32.gmra.mrb[0].mxu0 %v1696
    %v1869 = vpop.f32.mrb[0].mxu0
    %v1870 = vadd.f32 %v1675, %v1869
    %v1871 = vpop.f32.mrb[0].mxu0
    %1872 = vmatprep.mubr.f32.mxu0 0.0
    %1873 = vmatmul.mubr.f32.gmra.mrb[0].mxu0 %v1699
    %v1874 = vpop.f32.mrb[0].mxu0
    %v1875 = vadd.f32 %v1675, %v1874
    %v1876 = vpop.f32.mrb[0].mxu0
    %1877 = vmatprep.mubr.f32.mxu0 0.0
    %1878 = vmatmul.mubr.f32.gmra.mrb[0].mxu0 %v1702
    %v1879 = vpop.f32.mrb[0].mxu0
    %v1880 = vadd.f32 %v1675, %v1879
    %v1881 = vpop.f32.mrb[0].mxu0
    %1882 = vmatprep.mubr.f32.mxu0 0.0
    %1883 = vmatmul.mubr.f32.gmra.mrb[0].mxu0 %v1705
    %v1884 = vpop.f32.mrb[0].mxu0
    %v1885 = vadd.f32 %v1675, %v1884
    %v1886 = vpop.f32.mrb[0].mxu0
    %1887 = vmatprep.mubr.f32.mxu0 0.0
    %1888 = vmatmul.mubr.f32.gmra.mrb[0].mxu0 %v1708
    %v1889 = vpop.f32.mrb[0].mxu0
    %v1890 = vadd.f32 %v1675, %v1889
    %v1891 = vpop.f32.mrb[0].mxu0
    %1892 = vmatprep.mubr.f32.mxu0 0.0
    %1893 = vmatmul.mubr.f32.gmra.mrb[0].mxu0 %v1711
    %v1894 = vpop.f32.mrb[0].mxu0
    %v1895 = vadd.f32 %v1675, %v1894
    %v1896 = vpop.f32.mrb[0].mxu0
    %1897 = vmatprep.mubr.f32.mxu0 0.0
    %1898 = vmatmul.mubr.f32.gmra.mrb[0].mxu0 %v1714
    %v1899 = vpop.f32.mrb[0].mxu0
    %v1900 = vadd.f32 %v1675, %v1899
    %v1901 = vpop.f32.mrb[0].mxu0
    %1902 = vmatprep.mubr.f32.mxu0 0.0
    %1903 = vmatmul.mubr.f32.gmra.mrb[0].mxu0 %v1717
    %v1904 = vpop.f32.mrb[0].mxu0
    %v1905 = vadd.f32 %v1675, %v1904
    %v1906 = vpop.f32.mrb[0].mxu0
    %1907 = vmatprep.mubr.f32.mxu0 0.0
    %1908 = vmatmul.mubr.f32.gmra.mrb[0].mxu0 %v1720
    %v1909 = vpop.f32.mrb[0].mxu0
    %v1910 = vadd.f32 %v1675, %v1909
    %v1911 = vpop.f32.mrb[0].mxu0
    %1912 = vmatprep.mubr.f32.mxu0 0.0
    %1913 = vmatmul.mubr.f32.gmra.mrb[0].mxu0 %v1723
    %v1914 = vpop.f32.mrb[0].mxu0
    %v1915 = vadd.f32 %v1675, %v1914
    %v1916 = vpop.f32.mrb[0].mxu0
    %1917 = vmatprep.mubr.f32.mxu0 0.0
    %1918 = vmatmul.mubr.f32.gmra.mrb[0].mxu0 %v1726
    %v1919 = vpop.f32.mrb[0].mxu0
    %v1920 = vadd.f32 %v1675, %v1919
    %v1921 = vpop.f32.mrb[0].mxu0
    %1922 = vmatprep.mubr.f32.mxu0 0.0
    %1923 = vmatmul.mubr.f32.gmra.mrb[0].mxu0 %v1729
    %v1924 = vpop.f32.mrb[0].mxu0
    %v1925 = vadd.f32 %v1675, %v1924
    %v1926 = vpop.f32.mrb[0].mxu0
    %1927 = vmatprep.mubr.f32.mxu0 0.0
    %1928 = vmatmul.mubr.f32.gmra.mrb[0].mxu0 %v1732
    %v1929 = vpop.f32.mrb[0].mxu0
    %v1930 = vadd.f32 %v1675, %v1929
    %v1931 = vpop.f32.mrb[0].mxu0
    %1932 = vmatprep.mubr.f32.mxu0 0.0
    %1933 = vmatmul.mubr.f32.gmra.mrb[0].mxu0 %v1735
    %v1934 = vpop.f32.mrb[0].mxu0
    %v1935 = vadd.f32 %v1675, %v1934
    %v1936 = vpop.f32.mrb[0].mxu0
    %1937 = vmatprep.mubr.f32.mxu0 0.0
    %1938 = vmatmul.mubr.f32.gmra.mrb[0].mxu0 %v1738
    %v1939 = vpop.f32.mrb[0].mxu0
    %v1940 = vadd.f32 %v1675, %v1939
    %v1941 = vpop.f32.mrb[0].mxu0
    %1942 = vmatprep.mubr.f32.mxu0 0.0
    %1943 = vmatmul.mubr.f32.gmra.mrb[0].mxu0 %v1741
    %v1944 = vpop.f32.mrb[0].mxu0
    %v1945 = vadd.f32 %v1675, %v1944
    %v1946 = vpop.f32.mrb[0].mxu0
    %1947 = vmatprep.mubr.f32.mxu0 0.0
    %1948 = vmatmul.mubr.f32.gmra.mrb[0].mxu0 %v1744
    %v1949 = vpop.f32.mrb[0].mxu0
    %v1950 = vadd.f32 %v1675, %v1949
    %v1951 = vpop.f32.mrb[0].mxu0
    %1952 = vmatprep.mubr.f32.mxu0 0.0
    %1953 = vmatmul.mubr.f32.gmra.mrb[0].mxu0 %v1747
    %v1954 = vpop.f32.mrb[0].mxu0
    %v1955 = vadd.f32 %v1675, %v1954
    %v1956 = vpop.f32.mrb[0].mxu0
    %1957 = vmatprep.mubr.f32.mxu0 0.0
    %1958 = vmatmul.mubr.f32.gmra.mrb[0].mxu0 %v1750
    %v1959 = vpop.f32.mrb[0].mxu0
    %v1960 = vadd.f32 %v1675, %v1959
    %v1961 = vpop.f32.mrb[0].mxu0
    %1962 = vmatprep.mubr.f32.mxu0 0.0
    %1963 = vmatmul.mubr.f32.gmra.mrb[0].mxu0 %v1753
    %v1964 = vpop.f32.mrb[0].mxu0
    %v1965 = vadd.f32 %v1675, %v1964
    %v1966 = vpop.f32.mrb[0].mxu0
    %1967 = vmatprep.mubr.f32.mxu0 0.0
    %1968 = vmatmul.mubr.f32.gmra.mrb[0].mxu0 %v1756
    %v1969 = vpop.f32.mrb[0].mxu0
    %v1970 = vadd.f32 %v1675, %v1969
    %v1971 = vpop.f32.mrb[0].mxu0
    %1972 = vmatprep.mubr.f32.mxu0 0.0
    %1973 = vmatmul.mubr.f32.gmra.mrb[0].mxu0 %v1759
    %v1974 = vpop.f32.mrb[0].mxu0
    %v1975 = vadd.f32 %v1675, %v1974
    %v1976 = vpop.f32.mrb[0].mxu0
    %1977 = vmatprep.mubr.f32.mxu0 0.0
    %1978 = vmatmul.mubr.f32.gmra.mrb[0].mxu0 %v1762
    %v1979 = vpop.f32.mrb[0].mxu0
    %v1980 = vadd.f32 %v1675, %v1979
    %v1981 = vpop.f32.mrb[0].mxu0
    %1982 = vmatprep.mubr.f32.mxu0 0.0
    %1983 = vmatmul.mubr.f32.gmra.mrb[0].mxu0 %v1765
    %v1984 = vpop.f32.mrb[0].mxu0
    %v1985 = vadd.f32 %v1675, %v1984
    %v1986 = vpop.f32.mrb[0].mxu0
    %1987 = vmatprep.mubr.f32.mxu0 0.0
    %1988 = vmatmul.mubr.f32.gmra.mrb[0].mxu0 %v1768
    %v1989 = vpop.f32.mrb[0].mxu0
    %v1990 = vadd.f32 %v1675, %v1989
    %v1991 = vpop.f32.mrb[0].mxu0
    %1992 = vmatprep.mubr.f32.mxu0 0.0
    %1993 = vmatmul.mubr.f32.gmra.mrb[0].mxu0 %v1771
    %v1994 = vpop.f32.mrb[0].mxu0
    %v1995 = vadd.f32 %v1675, %v1994
    %v1996 = vpop.f32.mrb[0].mxu0
    %1997 = vdwg.mxu0
    %v1998 = vld [vmem:[%s3] sm:$0xff]
    %v1999 = vld [vmem:[%s3 + $0x8] sm:$0xff]
    %v2000 = vld [vmem:[%s3 + $0x10] sm:$0xff]
    %v2001 = vld [vmem:[%s3 + $0x18] sm:$0xff]
    %v2002 = vld [vmem:[%s3 + $0x20] sm:$0xff]
    %v2003 = vld [vmem:[%s3 + $0x28] sm:$0xff]
    %v2004 = vld [vmem:[%s3 + $0x30] sm:$0xff]
    %v2005 = vld [vmem:[%s3 + $0x38] sm:$0xff]
    %v2006 = vld [vmem:[%s3 + $0x40] sm:$0xff]
    %v2007 = vld [vmem:[%s3 + $0x48] sm:$0xff]
    %v2008 = vld [vmem:[%s3 + $0x50] sm:$0xff]
    %v2009 = vld [vmem:[%s3 + $0x58] sm:$0xff]
    %v2010 = vld [vmem:[%s3 + $0x60] sm:$0xff]
    %v2011 = vld [vmem:[%s3 + $0x68] sm:$0xff]
    %v2012 = vld [vmem:[%s3 + $0x70] sm:$0xff]
    %v2013 = vld [vmem:[%s3 + $0x78] sm:$0xff]
    %v2014 = vld [vmem:[%s3 + $0x80] sm:$0xff]
    %v2015 = vld [vmem:[%s3 + $0x88] sm:$0xff]
    %v2016 = vld [vmem:[%s3 + $0x90] sm:$0xff]
    %v2017 = vld [vmem:[%s3 + $0x98] sm:$0xff]
    %v2018 = vld [vmem:[%s3 + $0xa0] sm:$0xff]
    %v2019 = vld [vmem:[%s3 + $0xa8] sm:$0xff]
    %v2020 = vld [vmem:[%s3 + $0xb0] sm:$0xff]
    %v2021 = vld [vmem:[%s3 + $0xb8] sm:$0xff]
    %v2022 = vld [vmem:[%s3 + $0xc0] sm:$0xff]
    %v2023 = vld [vmem:[%s3 + $0xc8] sm:$0xff]
    %v2024 = vld [vmem:[%s3 + $0xd0] sm:$0xff]
    %v2025 = vld [vmem:[%s3 + $0xd8] sm:$0xff]
    %v2026 = vld [vmem:[%s3 + $0xe0] sm:$0xff]
    %v2027 = vld [vmem:[%s3 + $0xe8] sm:$0xff]
    %v2028 = vld [vmem:[%s3 + $0xf0] sm:$0xff]
    %v2029 = vld [vmem:[%s3 + $0xf8] sm:$0xff]
    %2031 = vset.pattern.permute.xlu0 0
    %2032 = vperm.xlu0 %2031, %v1998
    %v2033 = vpop.permute.xlu0 %2032
    %2036 = vset.pattern.permute.xlu0 0
    %2037 = vperm.xlu0 %2036, %v1999
    %v2038 = vpop.permute.xlu0 %2037
    %2041 = vset.pattern.permute.xlu0 0
    %2042 = vperm.xlu0 %2041, %v2000
    %v2043 = vpop.permute.xlu0 %2042
    %2046 = vset.pattern.permute.xlu0 0
    %2047 = vperm.xlu0 %2046, %v2001
    %v2048 = vpop.permute.xlu0 %2047
    %2051 = vset.pattern.permute.xlu0 0
    %2052 = vperm.xlu0 %2051, %v2002
    %v2053 = vpop.permute.xlu0 %2052
    %2056 = vset.pattern.permute.xlu0 0
    %2057 = vperm.xlu0 %2056, %v2003
    %v2058 = vpop.permute.xlu0 %2057
    %2061 = vset.pattern.permute.xlu0 0
    %2062 = vperm.xlu0 %2061, %v2004
    %v2063 = vpop.permute.xlu0 %2062
    %2066 = vset.pattern.permute.xlu0 0
    %2067 = vperm.xlu0 %2066, %v2005
    %v2068 = vpop.permute.xlu0 %2067
    %2071 = vset.pattern.permute.xlu0 0
    %2072 = vperm.xlu0 %2071, %v2006
    %v2073 = vpop.permute.xlu0 %2072
    %2076 = vset.pattern.permute.xlu0 0
    %2077 = vperm.xlu0 %2076, %v2007
    %v2078 = vpop.permute.xlu0 %2077
    %2081 = vset.pattern.permute.xlu0 0
    %2082 = vperm.xlu0 %2081, %v2008
    %v2083 = vpop.permute.xlu0 %2082
    %2086 = vset.pattern.permute.xlu0 0
    %2087 = vperm.xlu0 %2086, %v2009
    %v2088 = vpop.permute.xlu0 %2087
    %2091 = vset.pattern.permute.xlu0 0
    %2092 = vperm.xlu0 %2091, %v2010
    %v2093 = vpop.permute.xlu0 %2092
    %2096 = vset.pattern.permute.xlu0 0
    %2097 = vperm.xlu0 %2096, %v2011
    %v2098 = vpop.permute.xlu0 %2097
    %2101 = vset.pattern.permute.xlu0 0
    %2102 = vperm.xlu0 %2101, %v2012
    %v2103 = vpop.permute.xlu0 %2102
    %2106 = vset.pattern.permute.xlu0 0
    %2107 = vperm.xlu0 %2106, %v2013
    %v2108 = vpop.permute.xlu0 %2107
    %2111 = vset.pattern.permute.xlu0 0
    %2112 = vperm.xlu0 %2111, %v2014
    %v2113 = vpop.permute.xlu0 %2112
    %2116 = vset.pattern.permute.xlu0 0
    %2117 = vperm.xlu0 %2116, %v2015
    %v2118 = vpop.permute.xlu0 %2117
    %2121 = vset.pattern.permute.xlu0 0
    %2122 = vperm.xlu0 %2121, %v2016
    %v2123 = vpop.permute.xlu0 %2122
    %2126 = vset.pattern.permute.xlu0 0
    %2127 = vperm.xlu0 %2126, %v2017
    %v2128 = vpop.permute.xlu0 %2127
    %2131 = vset.pattern.permute.xlu0 0
    %2132 = vperm.xlu0 %2131, %v2018
    %v2133 = vpop.permute.xlu0 %2132
    %2136 = vset.pattern.permute.xlu0 0
    %2137 = vperm.xlu0 %2136, %v2019
    %v2138 = vpop.permute.xlu0 %2137
    %2141 = vset.pattern.permute.xlu0 0
    %2142 = vperm.xlu0 %2141, %v2020
    %v2143 = vpop.permute.xlu0 %2142
    %2146 = vset.pattern.permute.xlu0 0
    %2147 = vperm.xlu0 %2146, %v2021
    %v2148 = vpop.permute.xlu0 %2147
    %2151 = vset.pattern.permute.xlu0 0
    %2152 = vperm.xlu0 %2151, %v2022
    %v2153 = vpop.permute.xlu0 %2152
    %2156 = vset.pattern.permute.xlu0 0
    %2157 = vperm.xlu0 %2156, %v2023
    %v2158 = vpop.permute.xlu0 %2157
    %2161 = vset.pattern.permute.xlu0 0
    %2162 = vperm.xlu0 %2161, %v2024
    %v2163 = vpop.permute.xlu0 %2162
    %2166 = vset.pattern.permute.xlu0 0
    %2167 = vperm.xlu0 %2166, %v2025
    %v2168 = vpop.permute.xlu0 %2167
    %2171 = vset.pattern.permute.xlu0 0
    %2172 = vperm.xlu0 %2171, %v2026
    %v2173 = vpop.permute.xlu0 %2172
    %2176 = vset.pattern.permute.xlu0 0
    %2177 = vperm.xlu0 %2176, %v2027
    %v2178 = vpop.permute.xlu0 %2177
    %2181 = vset.pattern.permute.xlu0 0
    %2182 = vperm.xlu0 %2181, %v2028
    %v2183 = vpop.permute.xlu0 %2182
    %2186 = vset.pattern.permute.xlu0 0
    %2187 = vperm.xlu0 %2186, %v2029
    %v2188 = vpop.permute.xlu0 %2187
    %v2190 = vmul.f32 %v1840, %v2033
    %v2191 = vmul.f32 %v1845, %v2038
    %v2192 = vmul.f32 %v1850, %v2043
    %v2193 = vmul.f32 %v1855, %v2048
    %v2194 = vmul.f32 %v1860, %v2053
    %v2195 = vmul.f32 %v1865, %v2058
    %v2196 = vmul.f32 %v1870, %v2063
    %v2197 = vmul.f32 %v1875, %v2068
    %v2198 = vmul.f32 %v1880, %v2073
    %v2199 = vmul.f32 %v1885, %v2078
    %v2200 = vmul.f32 %v1890, %v2083
    %v2201 = vmul.f32 %v1895, %v2088
    %v2202 = vmul.f32 %v1900, %v2093
    %v2203 = vmul.f32 %v1905, %v2098
    %v2204 = vmul.f32 %v1910, %v2103
    %v2205 = vmul.f32 %v1915, %v2108
    %v2206 = vmul.f32 %v1920, %v2113
    %v2207 = vmul.f32 %v1925, %v2118
    %v2208 = vmul.f32 %v1930, %v2123
    %v2209 = vmul.f32 %v1935, %v2128
    %v2210 = vmul.f32 %v1940, %v2133
    %v2211 = vmul.f32 %v1945, %v2138
    %v2212 = vmul.f32 %v1950, %v2143
    %v2213 = vmul.f32 %v1955, %v2148
    %v2214 = vmul.f32 %v1960, %v2153
    %v2215 = vmul.f32 %v1965, %v2158
    %v2216 = vmul.f32 %v1970, %v2163
    %v2217 = vmul.f32 %v1975, %v2168
    %v2218 = vmul.f32 %v1980, %v2173
    %v2219 = vmul.f32 %v1985, %v2178
    %v2220 = vmul.f32 %v1990, %v2183
    %v2221 = vmul.f32 %v1995, %v2188
    %v2222 = vsel %vm66, %v2190, 0.0
    %v2223 = vrot.slane %v2222, 4
    %v2224 = vadd.f32 %v2222, %v2223
    %v2225 = vrot.slane %v2224, 2
    %v2226 = vadd.f32 %v2224, %v2225
    %v2227 = vrot.slane %v2226, 1
    %v2228 = vadd.f32 %v2226, %v2227
    %v2229 = vsel %vm66, %v2191, 0.0
    %v2230 = vrot.slane %v2229, 4
    %v2231 = vadd.f32 %v2229, %v2230
    %v2232 = vrot.slane %v2231, 2
    %v2233 = vadd.f32 %v2231, %v2232
    %v2234 = vrot.slane %v2233, 1
    %v2235 = vadd.f32 %v2233, %v2234
    %v2236 = vsel %vm66, %v2192, 0.0
    %v2237 = vrot.slane %v2236, 4
    %v2238 = vadd.f32 %v2236, %v2237
    %v2239 = vrot.slane %v2238, 2
    %v2240 = vadd.f32 %v2238, %v2239
    %v2241 = vrot.slane %v2240, 1
    %v2242 = vadd.f32 %v2240, %v2241
    %v2243 = vsel %vm66, %v2193, 0.0
    %v2244 = vrot.slane %v2243, 4
    %v2245 = vadd.f32 %v2243, %v2244
    %v2246 = vrot.slane %v2245, 2
    %v2247 = vadd.f32 %v2245, %v2246
    %v2248 = vrot.slane %v2247, 1
    %v2249 = vadd.f32 %v2247, %v2248
    %v2250 = vsel %vm66, %v2194, 0.0
    %v2251 = vrot.slane %v2250, 4
    %v2252 = vadd.f32 %v2250, %v2251
    %v2253 = vrot.slane %v2252, 2
    %v2254 = vadd.f32 %v2252, %v2253
    %v2255 = vrot.slane %v2254, 1
    %v2256 = vadd.f32 %v2254, %v2255
    %v2257 = vsel %vm66, %v2195, 0.0
    %v2258 = vrot.slane %v2257, 4
    %v2259 = vadd.f32 %v2257, %v2258
    %v2260 = vrot.slane %v2259, 2
    %v2261 = vadd.f32 %v2259, %v2260
    %v2262 = vrot.slane %v2261, 1
    %v2263 = vadd.f32 %v2261, %v2262
    %v2264 = vsel %vm66, %v2196, 0.0
    %v2265 = vrot.slane %v2264, 4
    %v2266 = vadd.f32 %v2264, %v2265
    %v2267 = vrot.slane %v2266, 2
    %v2268 = vadd.f32 %v2266, %v2267
    %v2269 = vrot.slane %v2268, 1
    %v2270 = vadd.f32 %v2268, %v2269
    %v2271 = vsel %vm66, %v2197, 0.0
    %v2272 = vrot.slane %v2271, 4
    %v2273 = vadd.f32 %v2271, %v2272
    %v2274 = vrot.slane %v2273, 2
    %v2275 = vadd.f32 %v2273, %v2274
    %v2276 = vrot.slane %v2275, 1
    %v2277 = vadd.f32 %v2275, %v2276
    %v2278 = vsel %vm66, %v2198, 0.0
    %v2279 = vrot.slane %v2278, 4
    %v2280 = vadd.f32 %v2278, %v2279
    %v2281 = vrot.slane %v2280, 2
    %v2282 = vadd.f32 %v2280, %v2281
    %v2283 = vrot.slane %v2282, 1
    %v2284 = vadd.f32 %v2282, %v2283
    %v2285 = vsel %vm66, %v2199, 0.0
    %v2286 = vrot.slane %v2285, 4
    %v2287 = vadd.f32 %v2285, %v2286
    %v2288 = vrot.slane %v2287, 2
    %v2289 = vadd.f32 %v2287, %v2288
    %v2290 = vrot.slane %v2289, 1
    %v2291 = vadd.f32 %v2289, %v2290
    %v2292 = vsel %vm66, %v2200, 0.0
    %v2293 = vrot.slane %v2292, 4
    %v2294 = vadd.f32 %v2292, %v2293
    %v2295 = vrot.slane %v2294, 2
    %v2296 = vadd.f32 %v2294, %v2295
    %v2297 = vrot.slane %v2296, 1
    %v2298 = vadd.f32 %v2296, %v2297
    %v2299 = vsel %vm66, %v2201, 0.0
    %v2300 = vrot.slane %v2299, 4
    %v2301 = vadd.f32 %v2299, %v2300
    %v2302 = vrot.slane %v2301, 2
    %v2303 = vadd.f32 %v2301, %v2302
    %v2304 = vrot.slane %v2303, 1
    %v2305 = vadd.f32 %v2303, %v2304
    %v2306 = vsel %vm66, %v2202, 0.0
    %v2307 = vrot.slane %v2306, 4
    %v2308 = vadd.f32 %v2306, %v2307
    %v2309 = vrot.slane %v2308, 2
    %v2310 = vadd.f32 %v2308, %v2309
    %v2311 = vrot.slane %v2310, 1
    %v2312 = vadd.f32 %v2310, %v2311
    %v2313 = vsel %vm66, %v2203, 0.0
    %v2314 = vrot.slane %v2313, 4
    %v2315 = vadd.f32 %v2313, %v2314
    %v2316 = vrot.slane %v2315, 2
    %v2317 = vadd.f32 %v2315, %v2316
    %v2318 = vrot.slane %v2317, 1
    %v2319 = vadd.f32 %v2317, %v2318
    %v2320 = vsel %vm66, %v2204, 0.0
    %v2321 = vrot.slane %v2320, 4
    %v2322 = vadd.f32 %v2320, %v2321
    %v2323 = vrot.slane %v2322, 2
    %v2324 = vadd.f32 %v2322, %v2323
    %v2325 = vrot.slane %v2324, 1
    %v2326 = vadd.f32 %v2324, %v2325
    %v2327 = vsel %vm66, %v2205, 0.0
    %v2328 = vrot.slane %v2327, 4
    %v2329 = vadd.f32 %v2327, %v2328
    %v2330 = vrot.slane %v2329, 2
    %v2331 = vadd.f32 %v2329, %v2330
    %v2332 = vrot.slane %v2331, 1
    %v2333 = vadd.f32 %v2331, %v2332
    %v2334 = vsel %vm66, %v2206, 0.0
    %v2335 = vrot.slane %v2334, 4
    %v2336 = vadd.f32 %v2334, %v2335
    %v2337 = vrot.slane %v2336, 2
    %v2338 = vadd.f32 %v2336, %v2337
    %v2339 = vrot.slane %v2338, 1
    %v2340 = vadd.f32 %v2338, %v2339
    %v2341 = vsel %vm66, %v2207, 0.0
    %v2342 = vrot.slane %v2341, 4
    %v2343 = vadd.f32 %v2341, %v2342
    %v2344 = vrot.slane %v2343, 2
    %v2345 = vadd.f32 %v2343, %v2344
    %v2346 = vrot.slane %v2345, 1
    %v2347 = vadd.f32 %v2345, %v2346
    %v2348 = vsel %vm66, %v2208, 0.0
    %v2349 = vrot.slane %v2348, 4
    %v2350 = vadd.f32 %v2348, %v2349
    %v2351 = vrot.slane %v2350, 2
    %v2352 = vadd.f32 %v2350, %v2351
    %v2353 = vrot.slane %v2352, 1
    %v2354 = vadd.f32 %v2352, %v2353
    %v2355 = vsel %vm66, %v2209, 0.0
    %v2356 = vrot.slane %v2355, 4
    %v2357 = vadd.f32 %v2355, %v2356
    %v2358 = vrot.slane %v2357, 2
    %v2359 = vadd.f32 %v2357, %v2358
    %v2360 = vrot.slane %v2359, 1
    %v2361 = vadd.f32 %v2359, %v2360
    %v2362 = vsel %vm66, %v2210, 0.0
    %v2363 = vrot.slane %v2362, 4
    %v2364 = vadd.f32 %v2362, %v2363
    %v2365 = vrot.slane %v2364, 2
    %v2366 = vadd.f32 %v2364, %v2365
    %v2367 = vrot.slane %v2366, 1
    %v2368 = vadd.f32 %v2366, %v2367
    %v2369 = vsel %vm66, %v2211, 0.0
    %v2370 = vrot.slane %v2369, 4
    %v2371 = vadd.f32 %v2369, %v2370
    %v2372 = vrot.slane %v2371, 2
    %v2373 = vadd.f32 %v2371, %v2372
    %v2374 = vrot.slane %v2373, 1
    %v2375 = vadd.f32 %v2373, %v2374
    %v2376 = vsel %vm66, %v2212, 0.0
    %v2377 = vrot.slane %v2376, 4
    %v2378 = vadd.f32 %v2376, %v2377
    %v2379 = vrot.slane %v2378, 2
    %v2380 = vadd.f32 %v2378, %v2379
    %v2381 = vrot.slane %v2380, 1
    %v2382 = vadd.f32 %v2380, %v2381
    %v2383 = vsel %vm66, %v2213, 0.0
    %v2384 = vrot.slane %v2383, 4
    %v2385 = vadd.f32 %v2383, %v2384
    %v2386 = vrot.slane %v2385, 2
    %v2387 = vadd.f32 %v2385, %v2386
    %v2388 = vrot.slane %v2387, 1
    %v2389 = vadd.f32 %v2387, %v2388
    %v2390 = vsel %vm66, %v2214, 0.0
    %v2391 = vrot.slane %v2390, 4
    %v2392 = vadd.f32 %v2390, %v2391
    %v2393 = vrot.slane %v2392, 2
    %v2394 = vadd.f32 %v2392, %v2393
    %v2395 = vrot.slane %v2394, 1
    %v2396 = vadd.f32 %v2394, %v2395
    %v2397 = vsel %vm66, %v2215, 0.0
    %v2398 = vrot.slane %v2397, 4
    %v2399 = vadd.f32 %v2397, %v2398
    %v2400 = vrot.slane %v2399, 2
    %v2401 = vadd.f32 %v2399, %v2400
    %v2402 = vrot.slane %v2401, 1
    %v2403 = vadd.f32 %v2401, %v2402
    %v2404 = vsel %vm66, %v2216, 0.0
    %v2405 = vrot.slane %v2404, 4
    %v2406 = vadd.f32 %v2404, %v2405
    %v2407 = vrot.slane %v2406, 2
    %v2408 = vadd.f32 %v2406, %v2407
    %v2409 = vrot.slane %v2408, 1
    %v2410 = vadd.f32 %v2408, %v2409
    %v2411 = vsel %vm66, %v2217, 0.0
    %v2412 = vrot.slane %v2411, 4
    %v2413 = vadd.f32 %v2411, %v2412
    %v2414 = vrot.slane %v2413, 2
    %v2415 = vadd.f32 %v2413, %v2414
    %v2416 = vrot.slane %v2415, 1
    %v2417 = vadd.f32 %v2415, %v2416
    %v2418 = vsel %vm66, %v2218, 0.0
    %v2419 = vrot.slane %v2418, 4
    %v2420 = vadd.f32 %v2418, %v2419
    %v2421 = vrot.slane %v2420, 2
    %v2422 = vadd.f32 %v2420, %v2421
    %v2423 = vrot.slane %v2422, 1
    %v2424 = vadd.f32 %v2422, %v2423
    %v2425 = vsel %vm66, %v2219, 0.0
    %v2426 = vrot.slane %v2425, 4
    %v2427 = vadd.f32 %v2425, %v2426
    %v2428 = vrot.slane %v2427, 2
    %v2429 = vadd.f32 %v2427, %v2428
    %v2430 = vrot.slane %v2429, 1
    %v2431 = vadd.f32 %v2429, %v2430
    %v2432 = vsel %vm66, %v2220, 0.0
    %v2433 = vrot.slane %v2432, 4
    %v2434 = vadd.f32 %v2432, %v2433
    %v2435 = vrot.slane %v2434, 2
    %v2436 = vadd.f32 %v2434, %v2435
    %v2437 = vrot.slane %v2436, 1
    %v2438 = vadd.f32 %v2436, %v2437
    %v2439 = vsel %vm66, %v2221, 0.0
    %v2440 = vrot.slane %v2439, 4
    %v2441 = vadd.f32 %v2439, %v2440
    %v2442 = vrot.slane %v2441, 2
    %v2443 = vadd.f32 %v2441, %v2442
    %v2444 = vrot.slane %v2443, 1
    %v2445 = vadd.f32 %v2443, %v2444
    %v2446 = vmul.f32 %v2228, 0.125
    %v2447 = vmul.f32 %v2235, 0.125
    %v2448 = vmul.f32 %v2242, 0.125
    %v2449 = vmul.f32 %v2249, 0.125
    %v2450 = vmul.f32 %v2256, 0.125
    %v2451 = vmul.f32 %v2263, 0.125
    %v2452 = vmul.f32 %v2270, 0.125
    %v2453 = vmul.f32 %v2277, 0.125
    %v2454 = vmul.f32 %v2284, 0.125
    %v2455 = vmul.f32 %v2291, 0.125
    %v2456 = vmul.f32 %v2298, 0.125
    %v2457 = vmul.f32 %v2305, 0.125
    %v2458 = vmul.f32 %v2312, 0.125
    %v2459 = vmul.f32 %v2319, 0.125
    %v2460 = vmul.f32 %v2326, 0.125
    %v2461 = vmul.f32 %v2333, 0.125
    %v2462 = vmul.f32 %v2340, 0.125
    %v2463 = vmul.f32 %v2347, 0.125
    %v2464 = vmul.f32 %v2354, 0.125
    %v2465 = vmul.f32 %v2361, 0.125
    %v2466 = vmul.f32 %v2368, 0.125
    %v2467 = vmul.f32 %v2375, 0.125
    %v2468 = vmul.f32 %v2382, 0.125
    %v2469 = vmul.f32 %v2389, 0.125
    %v2470 = vmul.f32 %v2396, 0.125
    %v2471 = vmul.f32 %v2403, 0.125
    %v2472 = vmul.f32 %v2410, 0.125
    %v2473 = vmul.f32 %v2417, 0.125
    %v2474 = vmul.f32 %v2424, 0.125
    %v2475 = vmul.f32 %v2431, 0.125
    %v2476 = vmul.f32 %v2438, 0.125
    %v2477 = vmul.f32 %v2445, 0.125
    %vm2510 = vcmask 1041409
    %v2511 = vsel %vm2510, %v2447, %v2446
    %vm2512 = vcmask 1042434
    %v2513 = vsel %vm2512, %v2448, %v2511
    %vm2514 = vcmask 1043459
    %v2515 = vsel %vm2514, %v2449, %v2513
    %vm2516 = vcmask 1044484
    %v2517 = vsel %vm2516, %v2450, %v2515
    %vm2518 = vcmask 1045509
    %v2519 = vsel %vm2518, %v2451, %v2517
    %vm2520 = vcmask 1046534
    %v2521 = vsel %vm2520, %v2452, %v2519
    %vm2522 = vcmask 1047559
    %v2523 = vsel %vm2522, %v2453, %v2521
    %v2524 = vsel %vm2510, %v2455, %v2454
    %v2525 = vsel %vm2512, %v2456, %v2524
    %v2526 = vsel %vm2514, %v2457, %v2525
    %v2527 = vsel %vm2516, %v2458, %v2526
    %v2528 = vsel %vm2518, %v2459, %v2527
    %v2529 = vsel %vm2520, %v2460, %v2528
    %v2530 = vsel %vm2522, %v2461, %v2529
    %v2531 = vsel %vm2510, %v2463, %v2462
    %v2532 = vsel %vm2512, %v2464, %v2531
    %v2533 = vsel %vm2514, %v2465, %v2532
    %v2534 = vsel %vm2516, %v2466, %v2533
    %v2535 = vsel %vm2518, %v2467, %v2534
    %v2536 = vsel %vm2520, %v2468, %v2535
    %v2537 = vsel %vm2522, %v2469, %v2536
    %v2538 = vsel %vm2510, %v2471, %v2470
    %v2539 = vsel %vm2512, %v2472, %v2538
    %v2540 = vsel %vm2514, %v2473, %v2539
    %v2541 = vsel %vm2516, %v2474, %v2540
    %v2542 = vsel %vm2518, %v2475, %v2541
    %v2543 = vsel %vm2520, %v2476, %v2542
    %v2544 = vsel %vm2522, %v2477, %v2543
    %v2549 = vadd.f32 %v51, %v2523
    %v2550 = vadd.f32 %v52, %v2530
    %v2551 = vadd.f32 %v53, %v2537
    %v2552 = vadd.f32 %v54, %v2544
    %v2553 = vsel %vm66, %v2549, 0.0
    %2554 = vadd.xlane.f32.xlu0 %v2553
    %v2555 = vpop.xlane.xlu0 %2554
    %v2556 = vsel %vm66, %v2550, 0.0
    %2557 = vadd.xlane.f32.xlu0 %v2556
    %v2558 = vpop.xlane.xlu0 %2557
    %v2559 = vsel %vm66, %v2551, 0.0
    %2560 = vadd.xlane.f32.xlu0 %v2559
    %v2561 = vpop.xlane.xlu0 %2560
    %v2562 = vsel %vm66, %v2552, 0.0
    %2563 = vadd.xlane.f32.xlu0 %v2562
    %v2564 = vpop.xlane.xlu0 %2563
    %v2565 = vrcp.pop 32.0
    %v2566 = vmul.f32 %v2555, %v2565
    %v2567 = vmul.f32 %v2558, %v2565
    %v2568 = vmul.f32 %v2561, %v2565
    %v2569 = vmul.f32 %v2564, %v2565
    %v2570 = vsub.f32 %v2549, %v2566
    %v2571 = vsub.f32 %v2550, %v2567
    %v2572 = vsub.f32 %v2551, %v2568
    %v2573 = vsub.f32 %v2552, %v2569
    %v2574 = vmul.f32 %v2570, %v2570
    %v2575 = vmul.f32 %v2571, %v2571
    %v2576 = vmul.f32 %v2572, %v2572
    %v2577 = vmul.f32 %v2573, %v2573
    %v2578 = vsel %vm66, %v2574, 0.0
    %2579 = vadd.xlane.f32.xlu0 %v2578
    %v2580 = vpop.xlane.xlu0 %2579
    %v2581 = vsel %vm66, %v2575, 0.0
    %2582 = vadd.xlane.f32.xlu0 %v2581
    %v2583 = vpop.xlane.xlu0 %2582
    %v2584 = vsel %vm66, %v2576, 0.0
    %2585 = vadd.xlane.f32.xlu0 %v2584
    %v2586 = vpop.xlane.xlu0 %2585
    %v2587 = vsel %vm66, %v2577, 0.0
    %2588 = vadd.xlane.f32.xlu0 %v2587
    %v2589 = vpop.xlane.xlu0 %2588
    %v2590 = vmul.f32 %v2580, 0.032258064
    %v2591 = vmul.f32 %v2583, 0.032258064
    %v2592 = vmul.f32 %v2586, 0.032258064
    %v2593 = vmul.f32 %v2589, 0.032258064
    %v2594 = vadd.f32 %v2590, 1e-06
    %v2595 = vadd.f32 %v2591, 1e-06
    %v2596 = vadd.f32 %v2592, 1e-06
    %v2597 = vadd.f32 %v2593, 1e-06
    %v2598 = vrsqrt.pop %v2594
    %v2599 = vmul.f32 %v2594, %v2598
    %vm2600 = vcmp.eq.f32.partialorder %v2594, inf
    %v2601 = vsel %vm2600, %v2594, %v2599
    %vm2602 = vcmp.eq.f32.partialorder %v2594, 0.0
    %v2603 = vand.u32 %v2594, 2147483648
    %v2604 = vsel %vm2602, %v2603, %v2601
    %v2605 = vrsqrt.pop %v2595
    %v2606 = vmul.f32 %v2595, %v2605
    %vm2607 = vcmp.eq.f32.partialorder %v2595, inf
    %v2608 = vsel %vm2607, %v2595, %v2606
    %vm2609 = vcmp.eq.f32.partialorder %v2595, 0.0
    %v2610 = vand.u32 %v2595, 2147483648
    %v2611 = vsel %vm2609, %v2610, %v2608
    %v2612 = vrsqrt.pop %v2596
    %v2613 = vmul.f32 %v2596, %v2612
    %vm2614 = vcmp.eq.f32.partialorder %v2596, inf
    %v2615 = vsel %vm2614, %v2596, %v2613
    %vm2616 = vcmp.eq.f32.partialorder %v2596, 0.0
    %v2617 = vand.u32 %v2596, 2147483648
    %v2618 = vsel %vm2616, %v2617, %v2615
    %v2619 = vrsqrt.pop %v2597
    %v2620 = vmul.f32 %v2597, %v2619
    %vm2621 = vcmp.eq.f32.partialorder %v2597, inf
    %v2622 = vsel %vm2621, %v2597, %v2620
    %vm2623 = vcmp.eq.f32.partialorder %v2597, 0.0
    %v2624 = vand.u32 %v2597, 2147483648
    %v2625 = vsel %vm2623, %v2624, %v2622
    %v2626 = vadd.f32 %v2604, 1e-06
    %v2627 = vadd.f32 %v2611, 1e-06
    %v2628 = vadd.f32 %v2618, 1e-06
    %v2629 = vadd.f32 %v2625, 1e-06
    %v2630 = vrcp.pop %v2626
    %v2631 = vrcp.pop %v2627
    %v2632 = vrcp.pop %v2628
    %v2633 = vrcp.pop %v2629
    %v2634 = vld [vmem:[%s13] sm:$0x1]
    %v2636 = vlaneseq
    %v2637 = vshrl.u32 %v2636, 7
    %v2638 = vsub.s32 0, %v2637
    %v2639 = vrot.slane %v2634, %v2638
    %v2641 = vmul.f32 %v2639, %v2570
    %v2642 = vmul.f32 %v2639, %v2571
    %v2643 = vmul.f32 %v2639, %v2572
    %v2644 = vmul.f32 %v2639, %v2573
    %v2645 = vmul.f32 %v2641, %v2630
    %v2646 = vmul.f32 %v2642, %v2631
    %v2647 = vmul.f32 %v2643, %v2632
    %v2648 = vmul.f32 %v2644, %v2633
    %v2649 = vld [vmem:[%s14] sm:$0x1]
    %v2651 = vlaneseq
    %v2652 = vshrl.u32 %v2651, 7
    %v2653 = vsub.s32 0, %v2652
    %v2654 = vrot.slane %v2649, %v2653
    %v2656 = vadd.f32 %v2645, %v2654
    %v2657 = vadd.f32 %v2646, %v2654
    %v2658 = vadd.f32 %v2647, %v2654
    %v2659 = vadd.f32 %v2648, %v2654
    %v2660 = vld [vmem:[%s4] sm:$0xff]
    %v2661 = vld [vmem:[%s4 + $0x8] sm:$0xff]
    %v2662 = vld [vmem:[%s4 + $0x10] sm:$0xff]
    %v2663 = vld [vmem:[%s4 + $0x18] sm:$0xff]
    %2665 = vset.pattern.permute.xlu0 0
    %2666 = vperm.xlu0 %2665, %v2660
    %v2667 = vpop.permute.xlu0 %2666
    %2670 = vset.pattern.permute.xlu0 0
    %2671 = vperm.xlu0 %2670, %v2661
    %v2672 = vpop.permute.xlu0 %2671
    %2675 = vset.pattern.permute.xlu0 0
    %2676 = vperm.xlu0 %2675, %v2662
    %v2677 = vpop.permute.xlu0 %2676
    %2680 = vset.pattern.permute.xlu0 0
    %2681 = vperm.xlu0 %2680, %v2663
    %v2682 = vpop.permute.xlu0 %2681
    %v2684 = vmul.f32 %v2656, %v2667
    %v2685 = vmul.f32 %v2657, %v2672
    %v2686 = vmul.f32 %v2658, %v2677
    %v2687 = vmul.f32 %v2659, %v2682
    %2688 = vst.msk [vmem:[#allocation2] sm:$0xff] %vm66, %v2684
    %2689 = vst.msk [vmem:[#allocation2 + $0x8] sm:$0xff] %vm66, %v2685
    %2690 = vst.msk [vmem:[#allocation2 + $0x10] sm:$0xff] %vm66, %v2686
    %2691 = vst.msk [vmem:[#allocation2 + $0x18] sm:$0xff] %vm66, %v2687
    // Predicated region
    $region62: #{encoder_forward_pallas.7} parent=1 // pred_check
      _
    $region63: #{encoder_forward_pallas.7} parent=1 // pred_check_branch
      %2693 = sbr.rel (0) target = $region65
    $region64: #{encoder_forward_pallas.7} parent=1 // pred_region
      %s2695 = ssub.s32 512, 512
      %2696 = vsyncadd [#allocation3], %s2695
      %s2697 = sshll.u32 [#allocation2], 4
      %s2698 = int_to_ptr.vmem [resolvable:$true] %s2697
      %2703 = dma.vmem_to_hbm [thread:$0]  %s2698, 512, %s15, [#allocation3], 128, 128, 8
    $region65: #{encoder_forward_pallas.7} parent=1 // pred_fallthru
      _
    // Predicated region
    $region66: #{encoder_forward_pallas.7} parent=1 // pred_check
      _
    $region67: #{encoder_forward_pallas.7} parent=1 // pred_check_branch
      %2705 = sbr.rel (0) target = $region69
    $region68: #{encoder_forward_pallas.7} parent=1 // pred_region
      %2706 = dma.done [#allocation3], 512
    $region69: #{encoder_forward_pallas.7} parent=1 // pred_fallthru
      _
    %2707 = vsyncpa [#allocation3], 1

</llo_original>
